<compile_context>
chip_gen: v5e
topology: v5e:2x2
jax: 0.10.0
libtpu: 0.0.40
codegen_flags: <defaults>
</compile_context>

<pallas_src>
import functools

import jax
import jax.numpy as jnp
from jax.experimental import pallas as pl
from jax.experimental.pallas import tpu as pltpu


def _external_attention_kernel(x_ref, wqk_ref, g_ref, gt_ref, wv_ref, o_ref, *, eps):
    """One (batch, head-tile) grid step; all tiles are write-disjoint.

    x_ref  : (1, N, C_in)   queries for this batch element (bf16 or f32)
    wqk_ref: (C_in, T)      fused mq∘mk weights for this head tile, T = hpt*M_k
    g_ref  : (T, Gt) f32    group-membership one-hot, Gt = hpt*num_groups
    gt_ref : (Gt, T) f32    its transpose (broadcasts reciprocals back)
    wv_ref : (T, D)         kron(eye(hpt), Wv.T), D = hpt*dh (same for every tile)
    o_ref  : (1, N, D)      this tile's own output channels (lane-dense)
    """
    x = x_ref[0]                                                         # (N, C_in)

    # Fused mq + mk projection: one MXU matmul, contraction over C_in.
    a = jnp.dot(x, wqk_ref[...], preferred_element_type=jnp.float32)    # (N, T) f32

    # Softmax #1 over the sequence axis N (axis 0); columns are independent.
    # Exact reciprocal: its error would propagate through exp, the group norm
    # and the output.
    m = jnp.max(a, axis=0, keepdims=True)
    e = jnp.exp(a - m)
    a = e * pl.reciprocal(jnp.sum(e, axis=0, keepdims=True), approx=False)

    # Softmax #2 over N.  Its input is softmax #1's output, bounded by ~1, so
    # exp() cannot overflow and the max-subtraction is skipped on purpose.
    # TODO(synk): on v6e/v7x the two full-slab exps could run in bf16 (bf16 EUP)
    # to halve the EUP-bound portion; kept f32 here for v5e compatibility.
    e = jnp.exp(a)
    a = e * pl.reciprocal(jnp.sum(e, axis=0, keepdims=True), approx=True)

    # Grouped L1 norm along M (contiguous chunks).  a >= 0, so |a| == a.
    # Group sums via a one-hot matmul (MXU); reciprocals broadcast back with the
    # transposed one-hot — no lane-subtile slices or concat.
    denom = jnp.dot(a, g_ref[...], preferred_element_type=jnp.float32)   # (N, Gt)
    recip = pl.reciprocal(denom + eps, approx=False)   # exact: feeds output directly
    a = a * jnp.dot(recip, gt_ref[...], preferred_element_type=jnp.float32)

    # mv projection into this tile's own output channels (lane-dense store).
    o_ref[0] = jnp.dot(a.astype(wv_ref.dtype), wv_ref[...],
                       preferred_element_type=jnp.float32).astype(o_ref.dtype)


def _pick_heads_per_tile(heads, dh, C_in, M_k):
    """Smallest divisor of heads giving lane-dense output (hpt*dh % 128 == 0 or
    == C_in) and a lane-dense Wqk tile.  Small tiles minimize MXU zero-work in
    the kron'd Wv and the group one-hot matmuls (which scale with hpt)."""
    for h in range(1, heads + 1):
        if heads % h:
            continue
        out_ok = (h * dh) % 128 == 0 or h * dh == C_in
        wqk_ok = (h * M_k) % 128 == 0 or h == heads
        if out_ok and wqk_ok:
            return h
    return heads


def _vmem_capacity_bytes():
    """Physical per-core VMEM; conservative v7x value if the query fails."""
    try:
        cap = int(getattr(pltpu.get_tpu_info(), "vmem_capacity_bytes", 0))
        if cap > 0:
            return cap
    except Exception:
        pass
    return 64 * 2**20   # smallest across v5e/v6e/v7x (v7x per-TC)


def _estimate_vmem_bytes(N, C_in, hpt, dh, M_k, num_groups,
                         x_bytes, w_bytes, out_bytes):
    """Double-buffer-aware per-step VMEM footprint estimate."""
    T, Gt, D = hpt * M_k, hpt * num_groups, hpt * dh
    return (2 * N * C_in * x_bytes            # x block (double-buffered)
            + 2 * C_in * T * w_bytes          # Wqk tile
            + 2 * T * max(Gt, 128) * 4        # group one-hot (lane padding)
            + 2 * max(Gt, 8) * T * 4          # transposed one-hot (sublane padding)
            + 2 * T * D * w_bytes             # Wv tile
            + 2 * N * D * out_bytes           # output block
            + 4 * N * T * 4)                  # in-kernel f32 temporaries


def external_attention(x, wq, wk, wv, *, heads, num_groups,
                       heads_per_tile=None, matmul_dtype=jnp.bfloat16,
                       vmem_limit_bytes=None):
    """x: (B,N,C_in); wq: (C_in,C_in); wk: (M_k,dh); wv: (dh,M_v).

    nn.Linear weights are (out, in); the module's forward requires M_v == M_k.
    Returns (B, N, C_in) directly (no wrapper transpose / reshape).
    """
    B, N, C_in = x.shape
    assert C_in % heads == 0
    dh = C_in // heads
    M_k = wk.shape[0]
    assert wk.shape == (M_k, dh)
    assert wv.shape == (dh, M_k), "forward requires M_v == M_k"
    assert M_k % num_groups == 0
    gs = M_k // num_groups

    if heads_per_tile is None:
        heads_per_tile = _pick_heads_per_tile(heads, dh, C_in, M_k)
    hpt = heads_per_tile
    assert heads % hpt == 0
    assert (hpt * dh) % 128 == 0 or hpt * dh == C_in, "output tile not lane-dense"
    assert (hpt * M_k) % 128 == 0 or hpt == heads
    n_tiles = heads // hpt
    T, Gt, D = hpt * M_k, hpt * num_groups, hpt * dh

    f32 = jnp.float32
    hi = jax.lax.Precision.HIGHEST

    # Fused mq∘mk weight slab (head-major columns):
    #   (x @ Wq.T)[:, h*dh:(h+1)*dh] @ Wk.T  ==  x @ Wqk[:, h*M_k:(h+1)*M_k]
    wq_t = jnp.transpose(wq).astype(f32).reshape(C_in, heads, dh)
    wqk = jnp.einsum("chd,md->chm", wq_t, wk.astype(f32),
                     precision=hi).reshape(C_in, heads * M_k).astype(matmul_dtype)

    # Per-tile Wv slab: identical for every head tile (Wv is head-independent),
    # so it is DMA'd once with a constant index_map.
    wv_tile = jnp.kron(jnp.eye(hpt, dtype=f32),
                       jnp.transpose(wv).astype(f32)).astype(matmul_dtype)

    # Group-membership one-hot (same pattern for every head tile), kept in f32 so
    # the L1-norm group sums stay full precision.
    col_group = jnp.arange(T, dtype=jnp.int32) // gs
    g_onehot = (col_group[:, None] ==
                jnp.arange(Gt, dtype=jnp.int32)[None, :]).astype(f32)    # (T, Gt)
    g_onehot_t = jnp.transpose(g_onehot)                                 # (Gt, T)

    # bf16 MXU operand for x (also halves its resident VMEM footprint).
    x_k = x.astype(matmul_dtype)

    if vmem_limit_bytes is None:
        cap = _vmem_capacity_bytes()
        est = _estimate_vmem_bytes(N, C_in, hpt, dh, M_k, num_groups,
                                   jnp.dtype(matmul_dtype).itemsize,
                                   jnp.dtype(matmul_dtype).itemsize,
                                   jnp.dtype(x.dtype).itemsize)
        vmem_limit_bytes = int(min(cap * 4 // 5, max(est + (8 << 20), cap // 2)))

    # Grid order: keep the larger of {Wqk, x} on the axis that stays constant over
    # the inner loop so it is DMA'd only once (weight tiles are never refetched
    # per-batch, or x is never refetched per-tile, whichever saves more bytes).
    wqk_total = wqk.size * wqk.dtype.itemsize
    x_total = x_k.size * x_k.dtype.itemsize
    weights_outer = n_tiles > 1 and (B - 1) * wqk_total >= (n_tiles - 1) * x_total

    if weights_outer:
        grid = (n_tiles, B)
        x_map = lambda t, b: (b, 0, 0)
        wqk_map = lambda t, b: (0, t)
        const_map = lambda t, b: (0, 0)
        out_map = lambda t, b: (b, 0, t)
    else:
        grid = (B, n_tiles)
        x_map = lambda b, t: (b, 0, 0)
        wqk_map = lambda b, t: (0, t)
        const_map = lambda b, t: (0, 0)
        out_map = lambda b, t: (b, 0, t)

    kernel = functools.partial(_external_attention_kernel, eps=1e-8)

    out = pl.pallas_call(
        kernel,
        out_shape=jax.ShapeDtypeStruct((B, N, C_in), x.dtype),
        grid_spec=pltpu.PrefetchScalarGridSpec(
            num_scalar_prefetch=0,
            grid=grid,
            in_specs=[
                pl.BlockSpec((1, N, C_in), x_map),     # x
                pl.BlockSpec((C_in, T), wqk_map),      # fused Wqk slab tile
                pl.BlockSpec((T, Gt), const_map),      # group one-hot
                pl.BlockSpec((Gt, T), const_map),      # its transpose
                pl.BlockSpec((T, D), const_map),       # per-tile Wv slab (shared)
            ],
            out_specs=pl.BlockSpec((1, N, D), out_map),
        ),
        compiler_params=pltpu.CompilerParams(
            # Outputs are disjoint per (batch, head-tile): both axes parallel
            # (shards across both TensorCores on v7x even when B == 1).
            dimension_semantics=("parallel", "parallel"),
            vmem_limit_bytes=vmem_limit_bytes,
        ),
    )(x_k, wqk, g_onehot, g_onehot_t, wv_tile)

    return out


def external_attention_reference(x, wq, wk, wv, *, heads, num_groups):
    """Pure-JAX mirror of the PyTorch forward, for verification."""
    B, N, C = x.shape
    dh = C // heads
    attn = x @ wq.T                                              # (B,N,C)
    attn = attn.reshape(B, N, heads, dh).transpose(0, 2, 1, 3)   # (B,H,N,dh)
    attn = attn @ wk.T                                           # (B,H,N,M)
    attn = jax.nn.softmax(attn, axis=2)
    attn = jax.nn.softmax(attn, axis=2)
    M = attn.shape[-1]
    gs = M // num_groups
    groups = [attn[..., g * gs:(g + 1) * gs] for g in range(num_groups)]
    groups = [g / (jnp.sum(jnp.abs(g), axis=3, keepdims=True) + 1e-8)
              for g in groups]
    attn = jnp.concatenate(groups, axis=3)
    out = attn @ wv.T                                            # (B,H,N,dh)
    return out.transpose(0, 2, 1, 3).reshape(B, N, C)


if __name__ == "__main__":
    # Keep host-side matmuls (reference + weight fusion) and the f32 kernel path
    # at full f32 precision so the strict comparison isolates kernel error.
    jax.config.update("jax_default_matmul_precision", "highest")

    def run_case(name, B, N, C_in, heads, num_groups, M_k, seed):
        dh = C_in // heads
        key = jax.random.PRNGKey(seed)
        kx, kq, kk, kv = jax.random.split(key, 4)
        x = jax.random.normal(kx, (B, N, C_in), dtype=jnp.float32)
        # nn.Linear weight shapes: (out, in).
        # TODO(synk): the module's init_weights() is not defined in the provided
        # source; deterministic Gaussian init is used instead of a checkpoint.
        wq = 0.05 * jax.random.normal(kq, (C_in, C_in), dtype=jnp.float32)
        wk = 0.05 * jax.random.normal(kk, (M_k, dh), dtype=jnp.float32)
        wv = 0.05 * jax.random.normal(kv, (dh, M_k), dtype=jnp.float32)
        # NOTE: self.group_norm (nn.GroupNorm) is created in __init__ but never
        # used in forward, so it is intentionally not implemented.

        ref = jax.block_until_ready(external_attention_reference(
            x, wq, wk, wv, heads=heads, num_groups=num_groups))

        # f32 MXU path: strict parity (tolerance covers the approx EUP
        # reciprocal in softmax #2 only).
        out = jax.block_until_ready(external_attention(
            x, wq, wk, wv, heads=heads, num_groups=num_groups,
            matmul_dtype=jnp.float32))
        assert out.shape == (B, N, C_in)
        err = jnp.max(jnp.abs(out - ref))
        assert jnp.allclose(out, ref, rtol=2e-3, atol=2e-4), (
            f"{name} f32 path: max abs err = {err}")

        # bf16 MXU path (production default): looser tolerance for the bf16
        # rounding of x / Wqk / Wv operands (accumulation stays f32).
        out_bf = jax.block_until_ready(external_attention(
            x, wq, wk, wv, heads=heads, num_groups=num_groups,
            matmul_dtype=jnp.bfloat16))
        assert out_bf.shape == (B, N, C_in)
        err_bf = jnp.max(jnp.abs(out_bf - ref))
        assert jnp.allclose(out_bf, ref, rtol=5e-2, atol=2e-3), (
            f"{name} bf16 path: max abs err = {err_bf}")

    # Case 1: small module-consistent shapes (dh=4 forces hpt=heads, n_tiles=1).
    run_case("case1", B=2, N=16, C_in=32, heads=8, num_groups=4, M_k=128, seed=0)
    # Case 2: dh=128 -> hpt=1, n_tiles=2; exercises disjoint per-tile outputs,
    # a zero-free per-tile Wv slab, and the weights-outer grid ordering.
    run_case("case2", B=2, N=16, C_in=256, heads=2, num_groups=4, M_k=128, seed=1)

    print("KERNEL_OK")
</pallas_src>

<mosaic_0001>
module attributes {stable_mosaic.version = 11 : i64} {
  func.func @_external_attention_kernel(%arg0: i32, %arg1: i32, %arg2: memref<1x16x32xf32, #tpu.memory_space<vmem>>, %arg3: memref<32x1024xf32, #tpu.memory_space<vmem>>, %arg4: memref<1024x32xf32, #tpu.memory_space<vmem>>, %arg5: memref<32x1024xf32, #tpu.memory_space<vmem>>, %arg6: memref<1024x32xf32, #tpu.memory_space<vmem>>, %arg7: memref<1x16x32xf32, #tpu.memory_space<vmem>>) attributes {dimension_semantics = [#tpu.dimension_semantics<parallel>, #tpu.dimension_semantics<parallel>], iteration_bounds = array<i64: 2, 1>, scalar_prefetch = 0 : i64, scratch_operands = 0 : i64, tpu.core_type = #tpu.core_type<tc>, window_params = [{transform_indices = @transform_0, window_bounds = array<i64: 1, 16, 32>}, {transform_indices = @transform_1, window_bounds = array<i64: 32, 1024>}, {pipeline_mode = #tpu.pipeline_mode<synchronous>, transform_indices = @transform_2, window_bounds = array<i64: 1024, 32>}, {pipeline_mode = #tpu.pipeline_mode<synchronous>, transform_indices = @transform_3, window_bounds = array<i64: 32, 1024>}, {pipeline_mode = #tpu.pipeline_mode<synchronous>, transform_indices = @transform_4, window_bounds = array<i64: 1024, 32>}, {transform_indices = @transform_5, window_bounds = array<i64: 1, 16, 32>}]} {
    %c0 = arith.constant 0 : index
    %c0_0 = arith.constant 0 : index
    %c0_1 = arith.constant 0 : index
    %0 = vector.load %arg2[%c0, %c0_0, %c0_1] : memref<1x16x32xf32, #tpu.memory_space<vmem>>, vector<1x16x32xf32>
    %1 = vector.shape_cast %0 : vector<1x16x32xf32> to vector<16x32xf32>
    %c0_2 = arith.constant 0 : index
    %c0_3 = arith.constant 0 : index
    %2 = vector.load %arg3[%c0_2, %c0_3] : memref<32x1024xf32, #tpu.memory_space<vmem>>, vector<32x1024xf32>
    %cst = arith.constant dense<0.000000e+00> : vector<16x1024xf32>
    %3 = tpu.matmul %1, %2, %cst {dimension_numbers = #tpu.dot_dimension_numbers<[1], [0], [0], [1], [0, 0, 1, 1], [], []>, precision = #tpu.contract_precision<fp32>} : vector<16x32xf32>, vector<32x1024xf32>, vector<16x1024xf32> -> vector<16x1024xf32>
    %cst_4 = arith.constant dense<0xFF800000> : vector<1024xf32>
    %4 = vector.multi_reduction <maximumf>, %3, %cst_4 [0] : vector<16x1024xf32> to vector<1024xf32>
    %5 = vector.shape_cast %4 : vector<1024xf32> to vector<1x1024xf32>
    %6 = vector.broadcast %5 : vector<1x1024xf32> to vector<16x1024xf32>
    %7 = arith.subf %3, %6 : vector<16x1024xf32>
    %8 = math.exp %7 : vector<16x1024xf32>
    %cst_5 = arith.constant dense<0.000000e+00> : vector<1024xf32>
    %9 = vector.multi_reduction <add>, %8, %cst_5 [0] : vector<16x1024xf32> to vector<1024xf32>
    %10 = vector.shape_cast %9 : vector<1024xf32> to vector<1x1024xf32>
    %11 = tpu.reciprocal %10 : vector<1x1024xf32> -> vector<1x1024xf32>
    %12 = vector.broadcast %11 : vector<1x1024xf32> to vector<16x1024xf32>
    %13 = arith.mulf %8, %12 : vector<16x1024xf32>
    %14 = math.exp %13 : vector<16x1024xf32>
    %cst_6 = arith.constant dense<0.000000e+00> : vector<1024xf32>
    %15 = vector.multi_reduction <add>, %14, %cst_6 [0] : vector<16x1024xf32> to vector<1024xf32>
    %16 = vector.shape_cast %15 : vector<1024xf32> to vector<1x1024xf32>
    %17 = tpu.reciprocal %16 {approx = true} : vector<1x1024xf32> -> vector<1x1024xf32>
    %18 = vector.broadcast %17 : vector<1x1024xf32> to vector<16x1024xf32>
    %19 = arith.mulf %14, %18 : vector<16x1024xf32>
    %c0_7 = arith.constant 0 : index
    %c0_8 = arith.constant 0 : index
    %20 = vector.load %arg4[%c0_7, %c0_8] : memref<1024x32xf32, #tpu.memory_space<vmem>>, vector<1024x32xf32>
    %cst_9 = arith.constant dense<0.000000e+00> : vector<16x32xf32>
    %21 = tpu.matmul %19, %20, %cst_9 {dimension_numbers = #tpu.dot_dimension_numbers<[1], [0], [0], [1], [0, 0, 1, 1], [], []>, precision = #tpu.contract_precision<fp32>} : vector<16x1024xf32>, vector<1024x32xf32>, vector<16x32xf32> -> vector<16x32xf32>
    %cst_10 = arith.constant 9.99999993E-9 : f32
    %22 = vector.broadcast %cst_10 : f32 to vector<16x32xf32>
    %23 = arith.addf %21, %22 : vector<16x32xf32>
    %24 = tpu.reciprocal %23 : vector<16x32xf32> -> vector<16x32xf32>
    %c0_11 = arith.constant 0 : index
    %c0_12 = arith.constant 0 : index
    %25 = vector.load %arg5[%c0_11, %c0_12] : memref<32x1024xf32, #tpu.memory_space<vmem>>, vector<32x1024xf32>
    %cst_13 = arith.constant dense<0.000000e+00> : vector<16x1024xf32>
    %26 = tpu.matmul %24, %25, %cst_13 {dimension_numbers = #tpu.dot_dimension_numbers<[1], [0], [0], [1], [0, 0, 1, 1], [], []>, precision = #tpu.contract_precision<fp32>} : vector<16x32xf32>, vector<32x1024xf32>, vector<16x1024xf32> -> vector<16x1024xf32>
    %27 = arith.mulf %19, %26 : vector<16x1024xf32>
    %c0_14 = arith.constant 0 : index
    %c0_15 = arith.constant 0 : index
    %28 = vector.load %arg6[%c0_14, %c0_15] : memref<1024x32xf32, #tpu.memory_space<vmem>>, vector<1024x32xf32>
    %cst_16 = arith.constant dense<0.000000e+00> : vector<16x32xf32>
    %29 = tpu.matmul %27, %28, %cst_16 {dimension_numbers = #tpu.dot_dimension_numbers<[1], [0], [0], [1], [0, 0, 1, 1], [], []>, precision = #tpu.contract_precision<fp32>} : vector<16x1024xf32>, vector<1024x32xf32>, vector<16x32xf32> -> vector<16x32xf32>
    %c0_17 = arith.constant 0 : index
    %c0_18 = arith.constant 0 : index
    %c0_19 = arith.constant 0 : index
    %30 = vector.load %arg7[%c0_17, %c0_18, %c0_19] : memref<1x16x32xf32, #tpu.memory_space<vmem>>, vector<1x16x32xf32>
    %31 = vector.shape_cast %30 : vector<1x16x32xf32> to vector<16x32xf32>
    %32 = vector.shape_cast %29 : vector<16x32xf32> to vector<1x16x32xf32>
    tpu.vector_store %arg7[%c0_17, %c0_18, %c0_19], %32 {strides = array<i32>} : memref<1x16x32xf32, #tpu.memory_space<vmem>>, vector<1x16x32xf32>,
    return
  }
  func.func @transform_0(%arg0: i32, %arg1: i32) -> (i32, i32, i32) {
    %c0_i32 = arith.constant 0 : i32
    %c0_i32_0 = arith.constant 0 : i32
    %c0_i32_1 = arith.constant 0 : i32
    return %arg0, %c0_i32, %c0_i32_0 : i32, i32, i32
  }
  func.func @transform_1(%arg0: i32, %arg1: i32) -> (i32, i32) {
    %c0_i32 = arith.constant 0 : i32
    %c0_i32_0 = arith.constant 0 : i32
    return %c0_i32, %arg1 : i32, i32
  }
  func.func @transform_2(%arg0: i32, %arg1: i32) -> (i32, i32) {
    %c0_i32 = arith.constant 0 : i32
    %c0_i32_0 = arith.constant 0 : i32
    %c0_i32_1 = arith.constant 0 : i32
    return %c0_i32, %c0_i32_0 : i32, i32
  }
  func.func @transform_3(%arg0: i32, %arg1: i32) -> (i32, i32) {
    %c0_i32 = arith.constant 0 : i32
    %c0_i32_0 = arith.constant 0 : i32
    %c0_i32_1 = arith.constant 0 : i32
    return %c0_i32, %c0_i32_0 : i32, i32
  }
  func.func @transform_4(%arg0: i32, %arg1: i32) -> (i32, i32) {
    %c0_i32 = arith.constant 0 : i32
    %c0_i32_0 = arith.constant 0 : i32
    %c0_i32_1 = arith.constant 0 : i32
    return %c0_i32, %c0_i32_0 : i32, i32
  }
  func.func @transform_5(%arg0: i32, %arg1: i32) -> (i32, i32, i32) {
    %c0_i32 = arith.constant 0 : i32
    %c0_i32_0 = arith.constant 0 : i32
    return %arg0, %c0_i32, %arg1 : i32, i32, i32
  }
}

</mosaic_0001>

<llo_original>
// kernel: tpu_custom_call.1
$region0: #{tpu_custom_call.1}
  #allocation0 [shape = 'u32[]', space=smem, size = 0x4, offset = 0x4, fixed_abs, tag = 'smem constant byte address 0x4 - core index']
  #allocation1 [shape = 'u32[72,128]{1,0:T(1,128)}', space=vmem, size = 0x9000, scoped, tag = 'internal scratch']
  %s0 = inlined_call_operand.vmem [shape: f32[2,16,32], index: 0, kind: input, shape index: {}]
  %s1 = inlined_call_operand.vmem [shape: f32[32,1024], index: 1, kind: input, shape index: {}]
  %s2 = inlined_call_operand.vmem [shape: f32[1024,32], index: 2, kind: input, shape index: {}]
  %s3 = inlined_call_operand.vmem [shape: f32[32,1024], index: 3, kind: input, shape index: {}]
  %s4 = inlined_call_operand.vmem [shape: f32[1024,32], index: 4, kind: input, shape index: {}]
  %s5 = inlined_call_operand.hbm [shape: f32[2,16,32], index: 5, kind: output, shape index: {}]
  %s6 = sld [smem:[#allocation0]]
  $region53: #{tpu_custom_call.1} parent=0
    _
  %s8 = ssub.s32 1, %s6
  %s9 = scalar_select 0, %s8, %s6
  $region1: #{tpu_custom_call.1} parent=0
    #allocation2 [shape = 'u8[16384]{0}', space=vmem, size = 0x4000, scoped, tag = 'output window, operand 0']
    #allocation3 [shape = 's32[2]{0}', space=sflag, size = 0x8, scoped, tag = 'scoped memory for tpu_custom_call.1']
    %10 = vsyncpa [#allocation3], 0
    %s11 = scalar_lea.sflag [#allocation3], 1
    %12 = vsyncpa %s11, 0
    loop: start=0, step=1, limit=4
    $region2: #{tpu_custom_call.1} parent=1 // loop_pre_header
      _
    $region3: #{tpu_custom_call.1} parent=1 // loop_header
      %s14 = sphi 0, %s18
      %p15 = scmp.ge.s32.totalorder %s14, 4
      %s21 = sphi 0, %s33
      %s22 = sphi 0, %s29
      %s23 = sphi 0, %s21
      %s24 = sphi 0, %s22
      %s25 = sphi 0, %s23
      %s26 = sphi 0, %s24
      %s36 = sphi 0, %s38
      %s39 = sphi 0, %s36
      %s40 = sphi 0, %s39
      %s56 = sphi 0, %s40
      %s62 = sphi 0, %s64
      %s65 = sphi 0, %s62
      %s66 = sphi 0, %s65
      %s82 = sphi 0, %s66
      %s86 = sphi 0, %s86
      %s88 = sphi 0, %s86
      %s89 = sphi 0, %s88
      %s103 = sphi 0, %s89
      %s107 = sphi 0, %s107
      %s109 = sphi 0, %s107
      %s110 = sphi 0, %s109
      %s124 = sphi 0, %s110
      %s128 = sphi 0, %s128
      %s130 = sphi 0, %s128
      %s131 = sphi 0, %s130
      %s145 = sphi 0, %s131
      %s153 = sphi 0, %s155
      %s156 = sphi 0, %s153
      %s157 = sphi 0, %s156
      %s173 = sphi 0, %s157
    $region4: #{tpu_custom_call.1} parent=1 // loop_header_branch
      %17 = sbr.rel (%p15) target = $region8
    $region5: #{tpu_custom_call.1} parent=1 // loop_body
      %s19 = ssub.s32 %s14, 1
      %s20 = ssub.s32 %s14, 2
      %s27 = sadd.s32 1, %s22
      %p28 = scmp.ge.s32.totalorder %s27, 1
      %s29 = scalar_select %p28, 0, %s27
      %s30 = sadd.s32 1, %s21
      %s31 = scalar_select %p28, %s30, %s21
      %p32 = scmp.ge.s32.totalorder %s31, 2
      %s33 = scalar_select %p32, 0, %s31
      %s34 = ssub.s32 %s21, %s33
      %p35 = scmp.eq.s32.totalorder %s34, 0
      %s37 = sadd.s32 %s36, 1
      %s38 = scalar_select %p35, %s36, %s37
      %p41 = pneg %p35
      %p42 = scmp.eq.s32.totalorder %s14, 1
      %p43 = por %p41, %p42
      %p44 = scmp.ne.s32.totalorder %s36, %s39
      %p45 = scmp.eq.s32.totalorder %s14, 0
      %p46 = por %p44, %p45
      %p47 = scmp.ne.s32.totalorder %s36, %s39
      %p48 = scmp.eq.s32.totalorder %s19, 1
      %p49 = por %p47, %p48
      %p50 = scmp.ne.s32.totalorder %s39, %s40
      %p51 = scmp.eq.s32.totalorder %s19, 0
      %p52 = por %p50, %p51
      %p53 = scmp.ne.s32.totalorder %s39, %s40
      %p54 = scmp.eq.s32.totalorder %s20, 1
      %p55 = por %p53, %p54
      %p57 = scmp.ne.s32.totalorder %s40, %s56
      %p58 = scmp.eq.s32.totalorder %s20, 0
      %p59 = por %p57, %p58
      %s60 = ssub.s32 %s22, %s29
      %p61 = scmp.eq.s32.totalorder %s60, 0
      %s63 = sadd.s32 %s62, 1
      %s64 = scalar_select %p61, %s62, %s63
      %p67 = pneg %p61
      %p68 = scmp.eq.s32.totalorder %s14, 1
      %p69 = por %p67, %p68
      %p70 = scmp.ne.s32.totalorder %s62, %s65
      %p71 = scmp.eq.s32.totalorder %s14, 0
      %p72 = por %p70, %p71
      %p73 = scmp.ne.s32.totalorder %s62, %s65
      %p74 = scmp.eq.s32.totalorder %s19, 1
      %p75 = por %p73, %p74
      %p76 = scmp.ne.s32.totalorder %s65, %s66
      %p77 = scmp.eq.s32.totalorder %s19, 0
      %p78 = por %p76, %p77
      %p79 = scmp.ne.s32.totalorder %s65, %s66
      %p80 = scmp.eq.s32.totalorder %s20, 1
      %p81 = por %p79, %p80
      %p83 = scmp.ne.s32.totalorder %s66, %s82
      %p84 = scmp.eq.s32.totalorder %s20, 0
      %p85 = por %p83, %p84
      %s87 = sadd.s32 %s86, 1
      %p90 = scmp.eq.s32.totalorder %s14, 1
      %p91 = scmp.ne.s32.totalorder %s86, %s88
      %p92 = scmp.eq.s32.totalorder %s14, 0
      %p93 = por %p91, %p92
      %p94 = scmp.ne.s32.totalorder %s86, %s88
      %p95 = scmp.eq.s32.totalorder %s19, 1
      %p96 = por %p94, %p95
      %p97 = scmp.ne.s32.totalorder %s88, %s89
      %p98 = scmp.eq.s32.totalorder %s19, 0
      %p99 = por %p97, %p98
      %p100 = scmp.ne.s32.totalorder %s88, %s89
      %p101 = scmp.eq.s32.totalorder %s20, 1
      %p102 = por %p100, %p101
      %p104 = scmp.ne.s32.totalorder %s89, %s103
      %p105 = scmp.eq.s32.totalorder %s20, 0
      %p106 = por %p104, %p105
      %s108 = sadd.s32 %s107, 1
      %p111 = scmp.eq.s32.totalorder %s14, 1
      %p112 = scmp.ne.s32.totalorder %s107, %s109
      %p113 = scmp.eq.s32.totalorder %s14, 0
      %p114 = por %p112, %p113
      %p115 = scmp.ne.s32.totalorder %s107, %s109
      %p116 = scmp.eq.s32.totalorder %s19, 1
      %p117 = por %p115, %p116
      %p118 = scmp.ne.s32.totalorder %s109, %s110
      %p119 = scmp.eq.s32.totalorder %s19, 0
      %p120 = por %p118, %p119
      %p121 = scmp.ne.s32.totalorder %s109, %s110
      %p122 = scmp.eq.s32.totalorder %s20, 1
      %p123 = por %p121, %p122
      %p125 = scmp.ne.s32.totalorder %s110, %s124
      %p126 = scmp.eq.s32.totalorder %s20, 0
      %p127 = por %p125, %p126
      %s129 = sadd.s32 %s128, 1
      %p132 = scmp.eq.s32.totalorder %s14, 1
      %p133 = scmp.ne.s32.totalorder %s128, %s130
      %p134 = scmp.eq.s32.totalorder %s14, 0
      %p135 = por %p133, %p134
      %p136 = scmp.ne.s32.totalorder %s128, %s130
      %p137 = scmp.eq.s32.totalorder %s19, 1
      %p138 = por %p136, %p137
      %p139 = scmp.ne.s32.totalorder %s130, %s131
      %p140 = scmp.eq.s32.totalorder %s19, 0
      %p141 = por %p139, %p140
      %p142 = scmp.ne.s32.totalorder %s130, %s131
      %p143 = scmp.eq.s32.totalorder %s20, 1
      %p144 = por %p142, %p143
      %p146 = scmp.ne.s32.totalorder %s131, %s145
      %p147 = scmp.eq.s32.totalorder %s20, 0
      %p148 = por %p146, %p147
      %s149 = ssub.s32 %s21, %s33
      %s150 = ssub.s32 %s22, %s29
      %s151 = sor.u32 %s149, %s150
      %p152 = scmp.eq.s32.totalorder %s151, 0
      %s154 = sadd.s32 %s153, 1
      %s155 = scalar_select %p152, %s153, %s154
      %p158 = pneg %p152
      %p159 = scmp.eq.s32.totalorder %s14, 1
      %p160 = por %p158, %p159
      %p161 = scmp.ne.s32.totalorder %s153, %s156
      %p162 = scmp.eq.s32.totalorder %s14, 0
      %p163 = por %p161, %p162
      %p164 = scmp.ne.s32.totalorder %s153, %s156
      %p165 = scmp.eq.s32.totalorder %s19, 1
      %p166 = por %p164, %p165
      %p167 = scmp.ne.s32.totalorder %s156, %s157
      %p168 = scmp.eq.s32.totalorder %s19, 0
      %p169 = por %p167, %p168
      %p170 = scmp.ne.s32.totalorder %s156, %s157
      %p171 = scmp.eq.s32.totalorder %s20, 1
      %p172 = por %p170, %p171
      %p174 = scmp.ne.s32.totalorder %s157, %s173
      %p175 = scmp.eq.s32.totalorder %s20, 0
      %p176 = por %p174, %p175
      %p177 = scmp.le.s32.totalorder 1, %s14
      %p178 = scmp.lt.s32.totalorder %s14, 3
      %p179 = pnand %p177, %p178
      %p180 = pneg %p179
      // Predicated region
      $region9: #{tpu_custom_call.1} parent=5 // pred_check
        _
      $region10: #{tpu_custom_call.1} parent=5 // pred_check_branch
        %182 = sbr.rel (%p179) target = $region12
      $region11: #{tpu_custom_call.1} parent=5 // pred_region
        %s183 = ssub.s32 %s14, 1
        // Predicated region
        $region13: #{tpu_custom_call.1} parent=11 // pred_check
          %p184 = pneg %p78
        $region14: #{tpu_custom_call.1} parent=11 // pred_check_branch
          %186 = sbr.rel (%p184) target = $region16
        $region15: #{tpu_custom_call.1} parent=11 // pred_region
          %s187 = smul.u32 8, %s24
          %p188 = scmp.lt.s32.totalorder %s187, 7
          %s189 = scalar_select %p188, %s187, 7
          %s190 = smul.addr %s189, 8
          %s191 = scalar_lea.vmem %s1, %s190
          %s192 = smul.u32 8, %s24
        $region16: #{tpu_custom_call.1} parent=11 // pred_fallthru
          _
        // Predicated region
        $region17: #{tpu_custom_call.1} parent=11 // pred_check
          %p193 = pneg %p99
        $region18: #{tpu_custom_call.1} parent=11 // pred_check_branch
          %195 = sbr.rel (%p193) target = $region20
        $region19: #{tpu_custom_call.1} parent=11 // pred_region
          _
        $region20: #{tpu_custom_call.1} parent=11 // pred_fallthru
          _
        // Predicated region
        $region21: #{tpu_custom_call.1} parent=11 // pred_check
          %p196 = pneg %p120
        $region22: #{tpu_custom_call.1} parent=11 // pred_check_branch
          %198 = sbr.rel (%p196) target = $region24
        $region23: #{tpu_custom_call.1} parent=11 // pred_region
          _
        $region24: #{tpu_custom_call.1} parent=11 // pred_fallthru
          _
        // Predicated region
        $region25: #{tpu_custom_call.1} parent=11 // pred_check
          %p199 = pneg %p141
        $region26: #{tpu_custom_call.1} parent=11 // pred_check_branch
          %201 = sbr.rel (%p199) target = $region28
        $region27: #{tpu_custom_call.1} parent=11 // pred_region
          _
        $region28: #{tpu_custom_call.1} parent=11 // pred_fallthru
          _
      $region12: #{tpu_custom_call.1} parent=5 // pred_fallthru
        _
      %p202 = scmp.lt.s32.totalorder %s14, 2
      // Predicated region
      $region29: #{tpu_custom_call.1} parent=5 // pred_check
        %p203 = pneg %p202
      $region30: #{tpu_custom_call.1} parent=5 // pred_check_branch
        %205 = sbr.rel (%p203) target = $region32
      $region31: #{tpu_custom_call.1} parent=5 // pred_region
        // Predicated region
        $region33: #{tpu_custom_call.1} parent=31 // pred_check
          %p206 = pneg %p46
        $region34: #{tpu_custom_call.1} parent=31 // pred_check_branch
          %208 = sbr.rel (%p206) target = $region36
        $region35: #{tpu_custom_call.1} parent=31 // pred_region
          %p209 = scmp.lt.s32.totalorder %s21, 1
          %s210 = scalar_select %p209, %s21, 1
          %s211 = smul.addr %s210, 2
          %s212 = smul.addr %s211, 8
          %s213 = scalar_lea.vmem %s0, %s212
        $region36: #{tpu_custom_call.1} parent=31 // pred_fallthru
          _
      $region32: #{tpu_custom_call.1} parent=5 // pred_fallthru
        _
      %p214 = scmp.le.s32.totalorder 1, %s14
      %p215 = scmp.lt.s32.totalorder %s14, 3
      %p216 = pnand %p214, %p215
      %p217 = pneg %p216
      // Predicated region
      $region37: #{tpu_custom_call.1} parent=5 // pred_check
        _
      $region38: #{tpu_custom_call.1} parent=5 // pred_check_branch
        %219 = sbr.rel (%p216) target = $region40
      $region39: #{tpu_custom_call.1} parent=5 // pred_region
        %s220 = ssub.s32 %s14, 1
        %p221 = scmp.lt.s32.totalorder %s23, 1
        %s222 = scalar_select %p221, %s23, 1
        %s223 = smul.addr %s222, 2
        %s224 = smul.addr %s223, 8
        %s225 = scalar_lea.vmem %s0, %s224
        %p226 = pneg %p52
        %p227 = pneg %p49
        %s228 = smul.u32 8, %s24
        %p229 = scmp.lt.s32.totalorder %s228, 7
        %s230 = scalar_select %p229, %s228, 7
        %s231 = smul.addr %s230, 8
        %s232 = scalar_lea.vmem %s1, %s231
        %p233 = pneg %p78
        %p234 = pneg %p75
        %p235 = pneg %p99
        %p236 = pneg %p96
        %p237 = pneg %p120
        %p238 = pneg %p117
        %p239 = pneg %p141
        %p240 = pneg %p138
        %p241 = pneg %p169
        %p242 = pneg %p166
        %s243 = sand.u32 %s156, 1
        %s244 = scalar_lea.sflag [#allocation3], %s243
        %s245 = sand.u32 %s156, 1
        %s246 = smul.addr %s245, 16
        %s247 = scalar_lea.vmem [#allocation2], %s246
        %p248 = scmp.lt.s32.totalorder %s23, 1
        %s249 = scalar_select %p248, %s23, 1
        %s250 = smul.addr %s249, 2
        %s251 = smul.addr %s250, 8
        %s252 = scalar_lea.vmem %s0, %s251
        %s253 = smul.u32 8, %s24
        %p254 = scmp.lt.s32.totalorder %s253, 7
        %s255 = scalar_select %p254, %s253, 7
        %s256 = smul.addr %s255, 8
        %s257 = scalar_lea.vmem %s1, %s256
        %s258 = smul.u32 8, %s24
        %v259 = vld [vmem:[%s252] sm:$0xff]
        %v260 = vld [vmem:[%s252 + $0x8] sm:$0xff]
        %v261 = vld [vmem:[%s257] sm:$0xff]
        %v262 = vld [vmem:[%s257 + $0x8] sm:$0xff]
        %v263 = vld [vmem:[%s257 + $0x10] sm:$0xff]
        %v264 = vld [vmem:[%s257 + $0x18] sm:$0xff]
        %v265 = vld [vmem:[%s257 + $0x20] sm:$0xff]
        %v266 = vld [vmem:[%s257 + $0x28] sm:$0xff]
        %v267 = vld [vmem:[%s257 + $0x30] sm:$0xff]
        %v268 = vld [vmem:[%s257 + $0x38] sm:$0xff]
        %v269 = vld [vmem:[%s257 + $0x40] sm:$0xff]
        %v270 = vld [vmem:[%s257 + $0x48] sm:$0xff]
        %v271 = vld [vmem:[%s257 + $0x50] sm:$0xff]
        %v272 = vld [vmem:[%s257 + $0x58] sm:$0xff]
        %v273 = vld [vmem:[%s257 + $0x60] sm:$0xff]
        %v274 = vld [vmem:[%s257 + $0x68] sm:$0xff]
        %v275 = vld [vmem:[%s257 + $0x70] sm:$0xff]
        %v276 = vld [vmem:[%s257 + $0x78] sm:$0xff]
        %v277 = vld [vmem:[%s257 + $0x80] sm:$0xff]
        %v278 = vld [vmem:[%s257 + $0x88] sm:$0xff]
        %v279 = vld [vmem:[%s257 + $0x90] sm:$0xff]
        %v280 = vld [vmem:[%s257 + $0x98] sm:$0xff]
        %v281 = vld [vmem:[%s257 + $0xa0] sm:$0xff]
        %v282 = vld [vmem:[%s257 + $0xa8] sm:$0xff]
        %v283 = vld [vmem:[%s257 + $0xb0] sm:$0xff]
        %v284 = vld [vmem:[%s257 + $0xb8] sm:$0xff]
        %v285 = vld [vmem:[%s257 + $0xc0] sm:$0xff]
        %v286 = vld [vmem:[%s257 + $0xc8] sm:$0xff]
        %v287 = vld [vmem:[%s257 + $0xd0] sm:$0xff]
        %v288 = vld [vmem:[%s257 + $0xd8] sm:$0xff]
        %v289 = vld [vmem:[%s257 + $0xe0] sm:$0xff]
        %v290 = vld [vmem:[%s257 + $0xe8] sm:$0xff]
        %v291 = vld [vmem:[%s257 + $0xf0] sm:$0xff]
        %v292 = vld [vmem:[%s257 + $0xf8] sm:$0xff]
        %vm293 = vcmask 261120
        %v295 = vsel %vm293, %v259, 0
        %v298 = vsel %vm293, %v260, 0
        %300 = vmatpush.msra.mxu0 0.0
        %301 = vmatpush.msra.mxu0 0.0
        %302 = vmatpush.msra.mxu0 0.0
        %303 = vmatpush.msra.mxu0 0.0
        %304 = vmatpush.msra.mxu0 0.0
        %305 = vmatpush.msra.mxu0 0.0
        %306 = vmatpush.msra.mxu0 0.0
        %307 = vmatpush.msra.mxu0 0.0
        %308 = vmatpush.msra.mxu0 0.0
        %309 = vmatpush.msra.mxu0 0.0
        %310 = vmatpush.msra.mxu0 0.0
        %311 = vmatpush.msra.mxu0 0.0
        %v312 = vand.u32 %v285, 4294901760
        %313 = vmatpush.msra.mxu0 %v312
        %v314 = vand.u32 %v277, 4294901760
        %315 = vmatpush.msra.mxu0 %v314
        %v316 = vand.u32 %v269, 4294901760
        %317 = vmatpush.msra.mxu0 %v316
        %v318 = vand.u32 %v261, 4294901760
        %319 = vmatpush.msra.mxu0 %v318
        %v320 = vand.u32 %v295, 4294901760
        %v321 = vsub.f32 %v295, %v320
        %v322 = vand.u32 %v321, 4294901760
        %v323 = vsub.f32 %v321, %v322
        %v324 = vand.u32 %v323, 4294901760
        %325 = vmatmul.f32.gmra.mxu0 %v324
        %v326 = vpop.f32.mrf.mxu0
        %v327 = vadd.f32 0.0, %v326
        %v328 = vand.u32 %v298, 4294901760
        %v329 = vsub.f32 %v298, %v328
        %v330 = vand.u32 %v329, 4294901760
        %v331 = vsub.f32 %v329, %v330
        %v332 = vand.u32 %v331, 4294901760
        %333 = vmatmul.f32.gmra.mxu0 %v332
        %v334 = vpop.f32.mrf.mxu0
        %v335 = vadd.f32 0.0, %v334
        %336 = vdwg.mxu0
        %337 = vmatpush.msra.mxu0 0.0
        %338 = vmatpush.msra.mxu0 0.0
        %339 = vmatpush.msra.mxu0 0.0
        %340 = vmatpush.msra.mxu0 0.0
        %341 = vmatpush.msra.mxu0 0.0
        %342 = vmatpush.msra.mxu0 0.0
        %343 = vmatpush.msra.mxu0 0.0
        %344 = vmatpush.msra.mxu0 0.0
        %345 = vmatpush.msra.mxu0 0.0
        %346 = vmatpush.msra.mxu0 0.0
        %347 = vmatpush.msra.mxu0 0.0
        %348 = vmatpush.msra.mxu0 0.0
        %v349 = vand.u32 %v285, 4294901760
        %v350 = vsub.f32 %v285, %v349
        %v351 = vand.u32 %v350, 4294901760
        %v352 = vsub.f32 %v350, %v351
        %v353 = vand.u32 %v352, 4294901760
        %354 = vmatpush.msra.mxu0 %v353
        %v355 = vand.u32 %v277, 4294901760
        %v356 = vsub.f32 %v277, %v355
        %v357 = vand.u32 %v356, 4294901760
        %v358 = vsub.f32 %v356, %v357
        %v359 = vand.u32 %v358, 4294901760
        %360 = vmatpush.msra.mxu0 %v359
        %v361 = vand.u32 %v269, 4294901760
        %v362 = vsub.f32 %v269, %v361
        %v363 = vand.u32 %v362, 4294901760
        %v364 = vsub.f32 %v362, %v363
        %v365 = vand.u32 %v364, 4294901760
        %366 = vmatpush.msra.mxu0 %v365
        %v367 = vand.u32 %v261, 4294901760
        %v368 = vsub.f32 %v261, %v367
        %v369 = vand.u32 %v368, 4294901760
        %v370 = vsub.f32 %v368, %v369
        %v371 = vand.u32 %v370, 4294901760
        %372 = vmatpush.msra.mxu0 %v371
        %v373 = vand.u32 %v295, 4294901760
        %374 = vmatmul.f32.gmra.mxu0 %v373
        %v375 = vpop.f32.mrf.mxu0
        %v376 = vadd.f32 %v327, %v375
        %v377 = vand.u32 %v298, 4294901760
        %378 = vmatmul.f32.gmra.mxu0 %v377
        %v379 = vpop.f32.mrf.mxu0
        %v380 = vadd.f32 %v335, %v379
        %381 = vdwg.mxu0
        %382 = vmatpush.msra.mxu0 0.0
        %383 = vmatpush.msra.mxu0 0.0
        %384 = vmatpush.msra.mxu0 0.0
        %385 = vmatpush.msra.mxu0 0.0
        %386 = vmatpush.msra.mxu0 0.0
        %387 = vmatpush.msra.mxu0 0.0
        %388 = vmatpush.msra.mxu0 0.0
        %389 = vmatpush.msra.mxu0 0.0
        %390 = vmatpush.msra.mxu0 0.0
        %391 = vmatpush.msra.mxu0 0.0
        %392 = vmatpush.msra.mxu0 0.0
        %393 = vmatpush.msra.mxu0 0.0
        %v394 = vand.u32 %v285, 4294901760
        %v395 = vsub.f32 %v285, %v394
        %396 = vmatpush.msra.mxu0 %v395
        %v397 = vand.u32 %v277, 4294901760
        %v398 = vsub.f32 %v277, %v397
        %399 = vmatpush.msra.mxu0 %v398
        %v400 = vand.u32 %v269, 4294901760
        %v401 = vsub.f32 %v269, %v400
        %402 = vmatpush.msra.mxu0 %v401
        %v403 = vand.u32 %v261, 4294901760
        %v404 = vsub.f32 %v261, %v403
        %405 = vmatpush.msra.mxu0 %v404
        %v406 = vand.u32 %v295, 4294901760
        %v407 = vsub.f32 %v295, %v406
        %408 = vmatmul.f32.gmra.mxu0 %v407
        %v409 = vpop.f32.mrf.mxu0
        %v410 = vadd.f32 %v376, %v409
        %v411 = vand.u32 %v298, 4294901760
        %v412 = vsub.f32 %v298, %v411
        %413 = vmatmul.f32.gmra.mxu0 %v412
        %v414 = vpop.f32.mrf.mxu0
        %v415 = vadd.f32 %v380, %v414
        %416 = vdwg.mxu0
        %417 = vmatpush.msra.mxu0 0.0
        %418 = vmatpush.msra.mxu0 0.0
        %419 = vmatpush.msra.mxu0 0.0
        %420 = vmatpush.msra.mxu0 0.0
        %421 = vmatpush.msra.mxu0 0.0
        %422 = vmatpush.msra.mxu0 0.0
        %423 = vmatpush.msra.mxu0 0.0
        %424 = vmatpush.msra.mxu0 0.0
        %425 = vmatpush.msra.mxu0 0.0
        %426 = vmatpush.msra.mxu0 0.0
        %427 = vmatpush.msra.mxu0 0.0
        %428 = vmatpush.msra.mxu0 0.0
        %v429 = vand.u32 %v285, 4294901760
        %430 = vmatpush.msra.mxu0 %v429
        %v431 = vand.u32 %v277, 4294901760
        %432 = vmatpush.msra.mxu0 %v431
        %v433 = vand.u32 %v269, 4294901760
        %434 = vmatpush.msra.mxu0 %v433
        %v435 = vand.u32 %v261, 4294901760
        %436 = vmatpush.msra.mxu0 %v435
        %v437 = vand.u32 %v295, 4294901760
        %v438 = vsub.f32 %v295, %v437
        %v439 = vand.u32 %v438, 4294901760
        %440 = vmatmul.f32.gmra.mxu0 %v439
        %v441 = vpop.f32.mrf.mxu0
        %v442 = vadd.f32 %v410, %v441
        %v443 = vand.u32 %v298, 4294901760
        %v444 = vsub.f32 %v298, %v443
        %v445 = vand.u32 %v444, 4294901760
        %446 = vmatmul.f32.gmra.mxu0 %v445
        %v447 = vpop.f32.mrf.mxu0
        %v448 = vadd.f32 %v415, %v447
        %449 = vdwg.mxu0
        %450 = vmatpush.msra.mxu0 0.0
        %451 = vmatpush.msra.mxu0 0.0
        %452 = vmatpush.msra.mxu0 0.0
        %453 = vmatpush.msra.mxu0 0.0
        %454 = vmatpush.msra.mxu0 0.0
        %455 = vmatpush.msra.mxu0 0.0
        %456 = vmatpush.msra.mxu0 0.0
        %457 = vmatpush.msra.mxu0 0.0
        %458 = vmatpush.msra.mxu0 0.0
        %459 = vmatpush.msra.mxu0 0.0
        %460 = vmatpush.msra.mxu0 0.0
        %461 = vmatpush.msra.mxu0 0.0
        %v462 = vand.u32 %v285, 4294901760
        %v463 = vsub.f32 %v285, %v462
        %v464 = vand.u32 %v463, 4294901760
        %465 = vmatpush.msra.mxu0 %v464
        %v466 = vand.u32 %v277, 4294901760
        %v467 = vsub.f32 %v277, %v466
        %v468 = vand.u32 %v467, 4294901760
        %469 = vmatpush.msra.mxu0 %v468
        %v470 = vand.u32 %v269, 4294901760
        %v471 = vsub.f32 %v269, %v470
        %v472 = vand.u32 %v471, 4294901760
        %473 = vmatpush.msra.mxu0 %v472
        %v474 = vand.u32 %v261, 4294901760
        %v475 = vsub.f32 %v261, %v474
        %v476 = vand.u32 %v475, 4294901760
        %477 = vmatpush.msra.mxu0 %v476
        %v478 = vand.u32 %v295, 4294901760
        %479 = vmatmul.f32.gmra.mxu0 %v478
        %v480 = vpop.f32.mrf.mxu0
        %v481 = vadd.f32 %v442, %v480
        %v482 = vand.u32 %v298, 4294901760
        %483 = vmatmul.f32.gmra.mxu0 %v482
        %v484 = vpop.f32.mrf.mxu0
        %v485 = vadd.f32 %v448, %v484
        %486 = vdwg.mxu0
        %487 = vmatpush.msra.mxu0 0.0
        %488 = vmatpush.msra.mxu0 0.0
        %489 = vmatpush.msra.mxu0 0.0
        %490 = vmatpush.msra.mxu0 0.0
        %491 = vmatpush.msra.mxu0 0.0
        %492 = vmatpush.msra.mxu0 0.0
        %493 = vmatpush.msra.mxu0 0.0
        %494 = vmatpush.msra.mxu0 0.0
        %495 = vmatpush.msra.mxu0 0.0
        %496 = vmatpush.msra.mxu0 0.0
        %497 = vmatpush.msra.mxu0 0.0
        %498 = vmatpush.msra.mxu0 0.0
        %v499 = vand.u32 %v285, 4294901760
        %500 = vmatpush.msra.mxu0 %v499
        %v501 = vand.u32 %v277, 4294901760
        %502 = vmatpush.msra.mxu0 %v501
        %v503 = vand.u32 %v269, 4294901760
        %504 = vmatpush.msra.mxu0 %v503
        %v505 = vand.u32 %v261, 4294901760
        %506 = vmatpush.msra.mxu0 %v505
        %v507 = vand.u32 %v295, 4294901760
        %508 = vmatmul.f32.gmra.mxu0 %v507
        %v509 = vpop.f32.mrf.mxu0
        %v510 = vadd.f32 %v481, %v509
        %v511 = vand.u32 %v298, 4294901760
        %512 = vmatmul.f32.gmra.mxu0 %v511
        %v513 = vpop.f32.mrf.mxu0
        %v514 = vadd.f32 %v485, %v513
        %515 = vdwg.mxu0
        %516 = vmatpush.msra.mxu0 0.0
        %517 = vmatpush.msra.mxu0 0.0
        %518 = vmatpush.msra.mxu0 0.0
        %519 = vmatpush.msra.mxu0 0.0
        %520 = vmatpush.msra.mxu0 0.0
        %521 = vmatpush.msra.mxu0 0.0
        %522 = vmatpush.msra.mxu0 0.0
        %523 = vmatpush.msra.mxu0 0.0
        %524 = vmatpush.msra.mxu0 0.0
        %525 = vmatpush.msra.mxu0 0.0
        %526 = vmatpush.msra.mxu0 0.0
        %527 = vmatpush.msra.mxu0 0.0
        %v528 = vand.u32 %v286, 4294901760
        %529 = vmatpush.msra.mxu0 %v528
        %v530 = vand.u32 %v278, 4294901760
        %531 = vmatpush.msra.mxu0 %v530
        %v532 = vand.u32 %v270, 4294901760
        %533 = vmatpush.msra.mxu0 %v532
        %v534 = vand.u32 %v262, 4294901760
        %535 = vmatpush.msra.mxu0 %v534
        %v536 = vand.u32 %v295, 4294901760
        %v537 = vsub.f32 %v295, %v536
        %v538 = vand.u32 %v537, 4294901760
        %v539 = vsub.f32 %v537, %v538
        %v540 = vand.u32 %v539, 4294901760
        %541 = vmatmul.f32.gmra.mxu0 %v540
        %v542 = vpop.f32.mrf.mxu0
        %v543 = vadd.f32 0.0, %v542
        %v544 = vand.u32 %v298, 4294901760
        %v545 = vsub.f32 %v298, %v544
        %v546 = vand.u32 %v545, 4294901760
        %v547 = vsub.f32 %v545, %v546
        %v548 = vand.u32 %v547, 4294901760
        %549 = vmatmul.f32.gmra.mxu0 %v548
        %v550 = vpop.f32.mrf.mxu0
        %v551 = vadd.f32 0.0, %v550
        %552 = vdwg.mxu0
        %553 = vmatpush.msra.mxu0 0.0
        %554 = vmatpush.msra.mxu0 0.0
        %555 = vmatpush.msra.mxu0 0.0
        %556 = vmatpush.msra.mxu0 0.0
        %557 = vmatpush.msra.mxu0 0.0
        %558 = vmatpush.msra.mxu0 0.0
        %559 = vmatpush.msra.mxu0 0.0
        %560 = vmatpush.msra.mxu0 0.0
        %561 = vmatpush.msra.mxu0 0.0
        %562 = vmatpush.msra.mxu0 0.0
        %563 = vmatpush.msra.mxu0 0.0
        %564 = vmatpush.msra.mxu0 0.0
        %v565 = vand.u32 %v286, 4294901760
        %v566 = vsub.f32 %v286, %v565
        %v567 = vand.u32 %v566, 4294901760
        %v568 = vsub.f32 %v566, %v567
        %v569 = vand.u32 %v568, 4294901760
        %570 = vmatpush.msra.mxu0 %v569
        %v571 = vand.u32 %v278, 4294901760
        %v572 = vsub.f32 %v278, %v571
        %v573 = vand.u32 %v572, 4294901760
        %v574 = vsub.f32 %v572, %v573
        %v575 = vand.u32 %v574, 4294901760
        %576 = vmatpush.msra.mxu0 %v575
        %v577 = vand.u32 %v270, 4294901760
        %v578 = vsub.f32 %v270, %v577
        %v579 = vand.u32 %v578, 4294901760
        %v580 = vsub.f32 %v578, %v579
        %v581 = vand.u32 %v580, 4294901760
        %582 = vmatpush.msra.mxu0 %v581
        %v583 = vand.u32 %v262, 4294901760
        %v584 = vsub.f32 %v262, %v583
        %v585 = vand.u32 %v584, 4294901760
        %v586 = vsub.f32 %v584, %v585
        %v587 = vand.u32 %v586, 4294901760
        %588 = vmatpush.msra.mxu0 %v587
        %v589 = vand.u32 %v295, 4294901760
        %590 = vmatmul.f32.gmra.mxu0 %v589
        %v591 = vpop.f32.mrf.mxu0
        %v592 = vadd.f32 %v543, %v591
        %v593 = vand.u32 %v298, 4294901760
        %594 = vmatmul.f32.gmra.mxu0 %v593
        %v595 = vpop.f32.mrf.mxu0
        %v596 = vadd.f32 %v551, %v595
        %597 = vdwg.mxu0
        %598 = vmatpush.msra.mxu0 0.0
        %599 = vmatpush.msra.mxu0 0.0
        %600 = vmatpush.msra.mxu0 0.0
        %601 = vmatpush.msra.mxu0 0.0
        %602 = vmatpush.msra.mxu0 0.0
        %603 = vmatpush.msra.mxu0 0.0
        %604 = vmatpush.msra.mxu0 0.0
        %605 = vmatpush.msra.mxu0 0.0
        %606 = vmatpush.msra.mxu0 0.0
        %607 = vmatpush.msra.mxu0 0.0
        %608 = vmatpush.msra.mxu0 0.0
        %609 = vmatpush.msra.mxu0 0.0
        %v610 = vand.u32 %v286, 4294901760
        %v611 = vsub.f32 %v286, %v610
        %612 = vmatpush.msra.mxu0 %v611
        %v613 = vand.u32 %v278, 4294901760
        %v614 = vsub.f32 %v278, %v613
        %615 = vmatpush.msra.mxu0 %v614
        %v616 = vand.u32 %v270, 4294901760
        %v617 = vsub.f32 %v270, %v616
        %618 = vmatpush.msra.mxu0 %v617
        %v619 = vand.u32 %v262, 4294901760
        %v620 = vsub.f32 %v262, %v619
        %621 = vmatpush.msra.mxu0 %v620
        %v622 = vand.u32 %v295, 4294901760
        %v623 = vsub.f32 %v295, %v622
        %624 = vmatmul.f32.gmra.mxu0 %v623
        %v625 = vpop.f32.mrf.mxu0
        %v626 = vadd.f32 %v592, %v625
        %v627 = vand.u32 %v298, 4294901760
        %v628 = vsub.f32 %v298, %v627
        %629 = vmatmul.f32.gmra.mxu0 %v628
        %v630 = vpop.f32.mrf.mxu0
        %v631 = vadd.f32 %v596, %v630
        %632 = vdwg.mxu0
        %633 = vmatpush.msra.mxu0 0.0
        %634 = vmatpush.msra.mxu0 0.0
        %635 = vmatpush.msra.mxu0 0.0
        %636 = vmatpush.msra.mxu0 0.0
        %637 = vmatpush.msra.mxu0 0.0
        %638 = vmatpush.msra.mxu0 0.0
        %639 = vmatpush.msra.mxu0 0.0
        %640 = vmatpush.msra.mxu0 0.0
        %641 = vmatpush.msra.mxu0 0.0
        %642 = vmatpush.msra.mxu0 0.0
        %643 = vmatpush.msra.mxu0 0.0
        %644 = vmatpush.msra.mxu0 0.0
        %v645 = vand.u32 %v286, 4294901760
        %646 = vmatpush.msra.mxu0 %v645
        %v647 = vand.u32 %v278, 4294901760
        %648 = vmatpush.msra.mxu0 %v647
        %v649 = vand.u32 %v270, 4294901760
        %650 = vmatpush.msra.mxu0 %v649
        %v651 = vand.u32 %v262, 4294901760
        %652 = vmatpush.msra.mxu0 %v651
        %v653 = vand.u32 %v295, 4294901760
        %v654 = vsub.f32 %v295, %v653
        %v655 = vand.u32 %v654, 4294901760
        %656 = vmatmul.f32.gmra.mxu0 %v655
        %v657 = vpop.f32.mrf.mxu0
        %v658 = vadd.f32 %v626, %v657
        %v659 = vand.u32 %v298, 4294901760
        %v660 = vsub.f32 %v298, %v659
        %v661 = vand.u32 %v660, 4294901760
        %662 = vmatmul.f32.gmra.mxu0 %v661
        %v663 = vpop.f32.mrf.mxu0
        %v664 = vadd.f32 %v631, %v663
        %665 = vdwg.mxu0
        %666 = vmatpush.msra.mxu0 0.0
        %667 = vmatpush.msra.mxu0 0.0
        %668 = vmatpush.msra.mxu0 0.0
        %669 = vmatpush.msra.mxu0 0.0
        %670 = vmatpush.msra.mxu0 0.0
        %671 = vmatpush.msra.mxu0 0.0
        %672 = vmatpush.msra.mxu0 0.0
        %673 = vmatpush.msra.mxu0 0.0
        %674 = vmatpush.msra.mxu0 0.0
        %675 = vmatpush.msra.mxu0 0.0
        %676 = vmatpush.msra.mxu0 0.0
        %677 = vmatpush.msra.mxu0 0.0
        %v678 = vand.u32 %v286, 4294901760
        %v679 = vsub.f32 %v286, %v678
        %v680 = vand.u32 %v679, 4294901760
        %681 = vmatpush.msra.mxu0 %v680
        %v682 = vand.u32 %v278, 4294901760
        %v683 = vsub.f32 %v278, %v682
        %v684 = vand.u32 %v683, 4294901760
        %685 = vmatpush.msra.mxu0 %v684
        %v686 = vand.u32 %v270, 4294901760
        %v687 = vsub.f32 %v270, %v686
        %v688 = vand.u32 %v687, 4294901760
        %689 = vmatpush.msra.mxu0 %v688
        %v690 = vand.u32 %v262, 4294901760
        %v691 = vsub.f32 %v262, %v690
        %v692 = vand.u32 %v691, 4294901760
        %693 = vmatpush.msra.mxu0 %v692
        %v694 = vand.u32 %v295, 4294901760
        %695 = vmatmul.f32.gmra.mxu0 %v694
        %v696 = vpop.f32.mrf.mxu0
        %v697 = vadd.f32 %v658, %v696
        %v698 = vand.u32 %v298, 4294901760
        %699 = vmatmul.f32.gmra.mxu0 %v698
        %v700 = vpop.f32.mrf.mxu0
        %v701 = vadd.f32 %v664, %v700
        %702 = vdwg.mxu0
        %703 = vmatpush.msra.mxu0 0.0
        %704 = vmatpush.msra.mxu0 0.0
        %705 = vmatpush.msra.mxu0 0.0
        %706 = vmatpush.msra.mxu0 0.0
        %707 = vmatpush.msra.mxu0 0.0
        %708 = vmatpush.msra.mxu0 0.0
        %709 = vmatpush.msra.mxu0 0.0
        %710 = vmatpush.msra.mxu0 0.0
        %711 = vmatpush.msra.mxu0 0.0
        %712 = vmatpush.msra.mxu0 0.0
        %713 = vmatpush.msra.mxu0 0.0
        %714 = vmatpush.msra.mxu0 0.0
        %v715 = vand.u32 %v286, 4294901760
        %716 = vmatpush.msra.mxu0 %v715
        %v717 = vand.u32 %v278, 4294901760
        %718 = vmatpush.msra.mxu0 %v717
        %v719 = vand.u32 %v270, 4294901760
        %720 = vmatpush.msra.mxu0 %v719
        %v721 = vand.u32 %v262, 4294901760
        %722 = vmatpush.msra.mxu0 %v721
        %v723 = vand.u32 %v295, 4294901760
        %724 = vmatmul.f32.gmra.mxu0 %v723
        %v725 = vpop.f32.mrf.mxu0
        %v726 = vadd.f32 %v697, %v725
        %v727 = vand.u32 %v298, 4294901760
        %728 = vmatmul.f32.gmra.mxu0 %v727
        %v729 = vpop.f32.mrf.mxu0
        %v730 = vadd.f32 %v701, %v729
        %731 = vdwg.mxu0
        %732 = vmatpush.msra.mxu0 0.0
        %733 = vmatpush.msra.mxu0 0.0
        %734 = vmatpush.msra.mxu0 0.0
        %735 = vmatpush.msra.mxu0 0.0
        %736 = vmatpush.msra.mxu0 0.0
        %737 = vmatpush.msra.mxu0 0.0
        %738 = vmatpush.msra.mxu0 0.0
        %739 = vmatpush.msra.mxu0 0.0
        %740 = vmatpush.msra.mxu0 0.0
        %741 = vmatpush.msra.mxu0 0.0
        %742 = vmatpush.msra.mxu0 0.0
        %743 = vmatpush.msra.mxu0 0.0
        %v744 = vand.u32 %v287, 4294901760
        %745 = vmatpush.msra.mxu0 %v744
        %v746 = vand.u32 %v279, 4294901760
        %747 = vmatpush.msra.mxu0 %v746
        %v748 = vand.u32 %v271, 4294901760
        %749 = vmatpush.msra.mxu0 %v748
        %v750 = vand.u32 %v263, 4294901760
        %751 = vmatpush.msra.mxu0 %v750
        %v752 = vand.u32 %v295, 4294901760
        %v753 = vsub.f32 %v295, %v752
        %v754 = vand.u32 %v753, 4294901760
        %v755 = vsub.f32 %v753, %v754
        %v756 = vand.u32 %v755, 4294901760
        %757 = vmatmul.f32.gmra.mxu0 %v756
        %v758 = vpop.f32.mrf.mxu0
        %v759 = vadd.f32 0.0, %v758
        %v760 = vand.u32 %v298, 4294901760
        %v761 = vsub.f32 %v298, %v760
        %v762 = vand.u32 %v761, 4294901760
        %v763 = vsub.f32 %v761, %v762
        %v764 = vand.u32 %v763, 4294901760
        %765 = vmatmul.f32.gmra.mxu0 %v764
        %v766 = vpop.f32.mrf.mxu0
        %v767 = vadd.f32 0.0, %v766
        %768 = vdwg.mxu0
        %769 = vmatpush.msra.mxu0 0.0
        %770 = vmatpush.msra.mxu0 0.0
        %771 = vmatpush.msra.mxu0 0.0
        %772 = vmatpush.msra.mxu0 0.0
        %773 = vmatpush.msra.mxu0 0.0
        %774 = vmatpush.msra.mxu0 0.0
        %775 = vmatpush.msra.mxu0 0.0
        %776 = vmatpush.msra.mxu0 0.0
        %777 = vmatpush.msra.mxu0 0.0
        %778 = vmatpush.msra.mxu0 0.0
        %779 = vmatpush.msra.mxu0 0.0
        %780 = vmatpush.msra.mxu0 0.0
        %v781 = vand.u32 %v287, 4294901760
        %v782 = vsub.f32 %v287, %v781
        %v783 = vand.u32 %v782, 4294901760
        %v784 = vsub.f32 %v782, %v783
        %v785 = vand.u32 %v784, 4294901760
        %786 = vmatpush.msra.mxu0 %v785
        %v787 = vand.u32 %v279, 4294901760
        %v788 = vsub.f32 %v279, %v787
        %v789 = vand.u32 %v788, 4294901760
        %v790 = vsub.f32 %v788, %v789
        %v791 = vand.u32 %v790, 4294901760
        %792 = vmatpush.msra.mxu0 %v791
        %v793 = vand.u32 %v271, 4294901760
        %v794 = vsub.f32 %v271, %v793
        %v795 = vand.u32 %v794, 4294901760
        %v796 = vsub.f32 %v794, %v795
        %v797 = vand.u32 %v796, 4294901760
        %798 = vmatpush.msra.mxu0 %v797
        %v799 = vand.u32 %v263, 4294901760
        %v800 = vsub.f32 %v263, %v799
        %v801 = vand.u32 %v800, 4294901760
        %v802 = vsub.f32 %v800, %v801
        %v803 = vand.u32 %v802, 4294901760
        %804 = vmatpush.msra.mxu0 %v803
        %v805 = vand.u32 %v295, 4294901760
        %806 = vmatmul.f32.gmra.mxu0 %v805
        %v807 = vpop.f32.mrf.mxu0
        %v808 = vadd.f32 %v759, %v807
        %v809 = vand.u32 %v298, 4294901760
        %810 = vmatmul.f32.gmra.mxu0 %v809
        %v811 = vpop.f32.mrf.mxu0
        %v812 = vadd.f32 %v767, %v811
        %813 = vdwg.mxu0
        %814 = vmatpush.msra.mxu0 0.0
        %815 = vmatpush.msra.mxu0 0.0
        %816 = vmatpush.msra.mxu0 0.0
        %817 = vmatpush.msra.mxu0 0.0
        %818 = vmatpush.msra.mxu0 0.0
        %819 = vmatpush.msra.mxu0 0.0
        %820 = vmatpush.msra.mxu0 0.0
        %821 = vmatpush.msra.mxu0 0.0
        %822 = vmatpush.msra.mxu0 0.0
        %823 = vmatpush.msra.mxu0 0.0
        %824 = vmatpush.msra.mxu0 0.0
        %825 = vmatpush.msra.mxu0 0.0
        %v826 = vand.u32 %v287, 4294901760
        %v827 = vsub.f32 %v287, %v826
        %828 = vmatpush.msra.mxu0 %v827
        %v829 = vand.u32 %v279, 4294901760
        %v830 = vsub.f32 %v279, %v829
        %831 = vmatpush.msra.mxu0 %v830
        %v832 = vand.u32 %v271, 4294901760
        %v833 = vsub.f32 %v271, %v832
        %834 = vmatpush.msra.mxu0 %v833
        %v835 = vand.u32 %v263, 4294901760
        %v836 = vsub.f32 %v263, %v835
        %837 = vmatpush.msra.mxu0 %v836
        %v838 = vand.u32 %v295, 4294901760
        %v839 = vsub.f32 %v295, %v838
        %840 = vmatmul.f32.gmra.mxu0 %v839
        %v841 = vpop.f32.mrf.mxu0
        %v842 = vadd.f32 %v808, %v841
        %v843 = vand.u32 %v298, 4294901760
        %v844 = vsub.f32 %v298, %v843
        %845 = vmatmul.f32.gmra.mxu0 %v844
        %v846 = vpop.f32.mrf.mxu0
        %v847 = vadd.f32 %v812, %v846
        %848 = vdwg.mxu0
        %849 = vmatpush.msra.mxu0 0.0
        %850 = vmatpush.msra.mxu0 0.0
        %851 = vmatpush.msra.mxu0 0.0
        %852 = vmatpush.msra.mxu0 0.0
        %853 = vmatpush.msra.mxu0 0.0
        %854 = vmatpush.msra.mxu0 0.0
        %855 = vmatpush.msra.mxu0 0.0
        %856 = vmatpush.msra.mxu0 0.0
        %857 = vmatpush.msra.mxu0 0.0
        %858 = vmatpush.msra.mxu0 0.0
        %859 = vmatpush.msra.mxu0 0.0
        %860 = vmatpush.msra.mxu0 0.0
        %v861 = vand.u32 %v287, 4294901760
        %862 = vmatpush.msra.mxu0 %v861
        %v863 = vand.u32 %v279, 4294901760
        %864 = vmatpush.msra.mxu0 %v863
        %v865 = vand.u32 %v271, 4294901760
        %866 = vmatpush.msra.mxu0 %v865
        %v867 = vand.u32 %v263, 4294901760
        %868 = vmatpush.msra.mxu0 %v867
        %v869 = vand.u32 %v295, 4294901760
        %v870 = vsub.f32 %v295, %v869
        %v871 = vand.u32 %v870, 4294901760
        %872 = vmatmul.f32.gmra.mxu0 %v871
        %v873 = vpop.f32.mrf.mxu0
        %v874 = vadd.f32 %v842, %v873
        %v875 = vand.u32 %v298, 4294901760
        %v876 = vsub.f32 %v298, %v875
        %v877 = vand.u32 %v876, 4294901760
        %878 = vmatmul.f32.gmra.mxu0 %v877
        %v879 = vpop.f32.mrf.mxu0
        %v880 = vadd.f32 %v847, %v879
        %881 = vdwg.mxu0
        %882 = vmatpush.msra.mxu0 0.0
        %883 = vmatpush.msra.mxu0 0.0
        %884 = vmatpush.msra.mxu0 0.0
        %885 = vmatpush.msra.mxu0 0.0
        %886 = vmatpush.msra.mxu0 0.0
        %887 = vmatpush.msra.mxu0 0.0
        %888 = vmatpush.msra.mxu0 0.0
        %889 = vmatpush.msra.mxu0 0.0
        %890 = vmatpush.msra.mxu0 0.0
        %891 = vmatpush.msra.mxu0 0.0
        %892 = vmatpush.msra.mxu0 0.0
        %893 = vmatpush.msra.mxu0 0.0
        %v894 = vand.u32 %v287, 4294901760
        %v895 = vsub.f32 %v287, %v894
        %v896 = vand.u32 %v895, 4294901760
        %897 = vmatpush.msra.mxu0 %v896
        %v898 = vand.u32 %v279, 4294901760
        %v899 = vsub.f32 %v279, %v898
        %v900 = vand.u32 %v899, 4294901760
        %901 = vmatpush.msra.mxu0 %v900
        %v902 = vand.u32 %v271, 4294901760
        %v903 = vsub.f32 %v271, %v902
        %v904 = vand.u32 %v903, 4294901760
        %905 = vmatpush.msra.mxu0 %v904
        %v906 = vand.u32 %v263, 4294901760
        %v907 = vsub.f32 %v263, %v906
        %v908 = vand.u32 %v907, 4294901760
        %909 = vmatpush.msra.mxu0 %v908
        %v910 = vand.u32 %v295, 4294901760
        %911 = vmatmul.f32.gmra.mxu0 %v910
        %v912 = vpop.f32.mrf.mxu0
        %v913 = vadd.f32 %v874, %v912
        %v914 = vand.u32 %v298, 4294901760
        %915 = vmatmul.f32.gmra.mxu0 %v914
        %v916 = vpop.f32.mrf.mxu0
        %v917 = vadd.f32 %v880, %v916
        %918 = vdwg.mxu0
        %919 = vmatpush.msra.mxu0 0.0
        %920 = vmatpush.msra.mxu0 0.0
        %921 = vmatpush.msra.mxu0 0.0
        %922 = vmatpush.msra.mxu0 0.0
        %923 = vmatpush.msra.mxu0 0.0
        %924 = vmatpush.msra.mxu0 0.0
        %925 = vmatpush.msra.mxu0 0.0
        %926 = vmatpush.msra.mxu0 0.0
        %927 = vmatpush.msra.mxu0 0.0
        %928 = vmatpush.msra.mxu0 0.0
        %929 = vmatpush.msra.mxu0 0.0
        %930 = vmatpush.msra.mxu0 0.0
        %v931 = vand.u32 %v287, 4294901760
        %932 = vmatpush.msra.mxu0 %v931
        %v933 = vand.u32 %v279, 4294901760
        %934 = vmatpush.msra.mxu0 %v933
        %v935 = vand.u32 %v271, 4294901760
        %936 = vmatpush.msra.mxu0 %v935
        %v937 = vand.u32 %v263, 4294901760
        %938 = vmatpush.msra.mxu0 %v937
        %v939 = vand.u32 %v295, 4294901760
        %940 = vmatmul.f32.gmra.mxu0 %v939
        %v941 = vpop.f32.mrf.mxu0
        %v942 = vadd.f32 %v913, %v941
        %v943 = vand.u32 %v298, 4294901760
        %944 = vmatmul.f32.gmra.mxu0 %v943
        %v945 = vpop.f32.mrf.mxu0
        %v946 = vadd.f32 %v917, %v945
        %947 = vdwg.mxu0
        %948 = vmatpush.msra.mxu0 0.0
        %949 = vmatpush.msra.mxu0 0.0
        %950 = vmatpush.msra.mxu0 0.0
        %951 = vmatpush.msra.mxu0 0.0
        %952 = vmatpush.msra.mxu0 0.0
        %953 = vmatpush.msra.mxu0 0.0
        %954 = vmatpush.msra.mxu0 0.0
        %955 = vmatpush.msra.mxu0 0.0
        %956 = vmatpush.msra.mxu0 0.0
        %957 = vmatpush.msra.mxu0 0.0
        %958 = vmatpush.msra.mxu0 0.0
        %959 = vmatpush.msra.mxu0 0.0
        %v960 = vand.u32 %v288, 4294901760
        %961 = vmatpush.msra.mxu0 %v960
        %v962 = vand.u32 %v280, 4294901760
        %963 = vmatpush.msra.mxu0 %v962
        %v964 = vand.u32 %v272, 4294901760
        %965 = vmatpush.msra.mxu0 %v964
        %v966 = vand.u32 %v264, 4294901760
        %967 = vmatpush.msra.mxu0 %v966
        %v968 = vand.u32 %v295, 4294901760
        %v969 = vsub.f32 %v295, %v968
        %v970 = vand.u32 %v969, 4294901760
        %v971 = vsub.f32 %v969, %v970
        %v972 = vand.u32 %v971, 4294901760
        %973 = vmatmul.f32.gmra.mxu0 %v972
        %v974 = vpop.f32.mrf.mxu0
        %v975 = vadd.f32 0.0, %v974
        %v976 = vand.u32 %v298, 4294901760
        %v977 = vsub.f32 %v298, %v976
        %v978 = vand.u32 %v977, 4294901760
        %v979 = vsub.f32 %v977, %v978
        %v980 = vand.u32 %v979, 4294901760
        %981 = vmatmul.f32.gmra.mxu0 %v980
        %v982 = vpop.f32.mrf.mxu0
        %v983 = vadd.f32 0.0, %v982
        %984 = vdwg.mxu0
        %985 = vmatpush.msra.mxu0 0.0
        %986 = vmatpush.msra.mxu0 0.0
        %987 = vmatpush.msra.mxu0 0.0
        %988 = vmatpush.msra.mxu0 0.0
        %989 = vmatpush.msra.mxu0 0.0
        %990 = vmatpush.msra.mxu0 0.0
        %991 = vmatpush.msra.mxu0 0.0
        %992 = vmatpush.msra.mxu0 0.0
        %993 = vmatpush.msra.mxu0 0.0
        %994 = vmatpush.msra.mxu0 0.0
        %995 = vmatpush.msra.mxu0 0.0
        %996 = vmatpush.msra.mxu0 0.0
        %v997 = vand.u32 %v288, 4294901760
        %v998 = vsub.f32 %v288, %v997
        %v999 = vand.u32 %v998, 4294901760
        %v1000 = vsub.f32 %v998, %v999
        %v1001 = vand.u32 %v1000, 4294901760
        %1002 = vmatpush.msra.mxu0 %v1001
        %v1003 = vand.u32 %v280, 4294901760
        %v1004 = vsub.f32 %v280, %v1003
        %v1005 = vand.u32 %v1004, 4294901760
        %v1006 = vsub.f32 %v1004, %v1005
        %v1007 = vand.u32 %v1006, 4294901760
        %1008 = vmatpush.msra.mxu0 %v1007
        %v1009 = vand.u32 %v272, 4294901760
        %v1010 = vsub.f32 %v272, %v1009
        %v1011 = vand.u32 %v1010, 4294901760
        %v1012 = vsub.f32 %v1010, %v1011
        %v1013 = vand.u32 %v1012, 4294901760
        %1014 = vmatpush.msra.mxu0 %v1013
        %v1015 = vand.u32 %v264, 4294901760
        %v1016 = vsub.f32 %v264, %v1015
        %v1017 = vand.u32 %v1016, 4294901760
        %v1018 = vsub.f32 %v1016, %v1017
        %v1019 = vand.u32 %v1018, 4294901760
        %1020 = vmatpush.msra.mxu0 %v1019
        %v1021 = vand.u32 %v295, 4294901760
        %1022 = vmatmul.f32.gmra.mxu0 %v1021
        %v1023 = vpop.f32.mrf.mxu0
        %v1024 = vadd.f32 %v975, %v1023
        %v1025 = vand.u32 %v298, 4294901760
        %1026 = vmatmul.f32.gmra.mxu0 %v1025
        %v1027 = vpop.f32.mrf.mxu0
        %v1028 = vadd.f32 %v983, %v1027
        %1029 = vdwg.mxu0
        %1030 = vmatpush.msra.mxu0 0.0
        %1031 = vmatpush.msra.mxu0 0.0
        %1032 = vmatpush.msra.mxu0 0.0
        %1033 = vmatpush.msra.mxu0 0.0
        %1034 = vmatpush.msra.mxu0 0.0
        %1035 = vmatpush.msra.mxu0 0.0
        %1036 = vmatpush.msra.mxu0 0.0
        %1037 = vmatpush.msra.mxu0 0.0
        %1038 = vmatpush.msra.mxu0 0.0
        %1039 = vmatpush.msra.mxu0 0.0
        %1040 = vmatpush.msra.mxu0 0.0
        %1041 = vmatpush.msra.mxu0 0.0
        %v1042 = vand.u32 %v288, 4294901760
        %v1043 = vsub.f32 %v288, %v1042
        %1044 = vmatpush.msra.mxu0 %v1043
        %v1045 = vand.u32 %v280, 4294901760
        %v1046 = vsub.f32 %v280, %v1045
        %1047 = vmatpush.msra.mxu0 %v1046
        %v1048 = vand.u32 %v272, 4294901760
        %v1049 = vsub.f32 %v272, %v1048
        %1050 = vmatpush.msra.mxu0 %v1049
        %v1051 = vand.u32 %v264, 4294901760
        %v1052 = vsub.f32 %v264, %v1051
        %1053 = vmatpush.msra.mxu0 %v1052
        %v1054 = vand.u32 %v295, 4294901760
        %v1055 = vsub.f32 %v295, %v1054
        %1056 = vmatmul.f32.gmra.mxu0 %v1055
        %v1057 = vpop.f32.mrf.mxu0
        %v1058 = vadd.f32 %v1024, %v1057
        %v1059 = vand.u32 %v298, 4294901760
        %v1060 = vsub.f32 %v298, %v1059
        %1061 = vmatmul.f32.gmra.mxu0 %v1060
        %v1062 = vpop.f32.mrf.mxu0
        %v1063 = vadd.f32 %v1028, %v1062
        %1064 = vdwg.mxu0
        %1065 = vmatpush.msra.mxu0 0.0
        %1066 = vmatpush.msra.mxu0 0.0
        %1067 = vmatpush.msra.mxu0 0.0
        %1068 = vmatpush.msra.mxu0 0.0
        %1069 = vmatpush.msra.mxu0 0.0
        %1070 = vmatpush.msra.mxu0 0.0
        %1071 = vmatpush.msra.mxu0 0.0
        %1072 = vmatpush.msra.mxu0 0.0
        %1073 = vmatpush.msra.mxu0 0.0
        %1074 = vmatpush.msra.mxu0 0.0
        %1075 = vmatpush.msra.mxu0 0.0
        %1076 = vmatpush.msra.mxu0 0.0
        %v1077 = vand.u32 %v288, 4294901760
        %1078 = vmatpush.msra.mxu0 %v1077
        %v1079 = vand.u32 %v280, 4294901760
        %1080 = vmatpush.msra.mxu0 %v1079
        %v1081 = vand.u32 %v272, 4294901760
        %1082 = vmatpush.msra.mxu0 %v1081
        %v1083 = vand.u32 %v264, 4294901760
        %1084 = vmatpush.msra.mxu0 %v1083
        %v1085 = vand.u32 %v295, 4294901760
        %v1086 = vsub.f32 %v295, %v1085
        %v1087 = vand.u32 %v1086, 4294901760
        %1088 = vmatmul.f32.gmra.mxu0 %v1087
        %v1089 = vpop.f32.mrf.mxu0
        %v1090 = vadd.f32 %v1058, %v1089
        %v1091 = vand.u32 %v298, 4294901760
        %v1092 = vsub.f32 %v298, %v1091
        %v1093 = vand.u32 %v1092, 4294901760
        %1094 = vmatmul.f32.gmra.mxu0 %v1093
        %v1095 = vpop.f32.mrf.mxu0
        %v1096 = vadd.f32 %v1063, %v1095
        %1097 = vdwg.mxu0
        %1098 = vmatpush.msra.mxu0 0.0
        %1099 = vmatpush.msra.mxu0 0.0
        %1100 = vmatpush.msra.mxu0 0.0
        %1101 = vmatpush.msra.mxu0 0.0
        %1102 = vmatpush.msra.mxu0 0.0
        %1103 = vmatpush.msra.mxu0 0.0
        %1104 = vmatpush.msra.mxu0 0.0
        %1105 = vmatpush.msra.mxu0 0.0
        %1106 = vmatpush.msra.mxu0 0.0
        %1107 = vmatpush.msra.mxu0 0.0
        %1108 = vmatpush.msra.mxu0 0.0
        %1109 = vmatpush.msra.mxu0 0.0
        %v1110 = vand.u32 %v288, 4294901760
        %v1111 = vsub.f32 %v288, %v1110
        %v1112 = vand.u32 %v1111, 4294901760
        %1113 = vmatpush.msra.mxu0 %v1112
        %v1114 = vand.u32 %v280, 4294901760
        %v1115 = vsub.f32 %v280, %v1114
        %v1116 = vand.u32 %v1115, 4294901760
        %1117 = vmatpush.msra.mxu0 %v1116
        %v1118 = vand.u32 %v272, 4294901760
        %v1119 = vsub.f32 %v272, %v1118
        %v1120 = vand.u32 %v1119, 4294901760
        %1121 = vmatpush.msra.mxu0 %v1120
        %v1122 = vand.u32 %v264, 4294901760
        %v1123 = vsub.f32 %v264, %v1122
        %v1124 = vand.u32 %v1123, 4294901760
        %1125 = vmatpush.msra.mxu0 %v1124
        %v1126 = vand.u32 %v295, 4294901760
        %1127 = vmatmul.f32.gmra.mxu0 %v1126
        %v1128 = vpop.f32.mrf.mxu0
        %v1129 = vadd.f32 %v1090, %v1128
        %v1130 = vand.u32 %v298, 4294901760
        %1131 = vmatmul.f32.gmra.mxu0 %v1130
        %v1132 = vpop.f32.mrf.mxu0
        %v1133 = vadd.f32 %v1096, %v1132
        %1134 = vdwg.mxu0
        %1135 = vmatpush.msra.mxu0 0.0
        %1136 = vmatpush.msra.mxu0 0.0
        %1137 = vmatpush.msra.mxu0 0.0
        %1138 = vmatpush.msra.mxu0 0.0
        %1139 = vmatpush.msra.mxu0 0.0
        %1140 = vmatpush.msra.mxu0 0.0
        %1141 = vmatpush.msra.mxu0 0.0
        %1142 = vmatpush.msra.mxu0 0.0
        %1143 = vmatpush.msra.mxu0 0.0
        %1144 = vmatpush.msra.mxu0 0.0
        %1145 = vmatpush.msra.mxu0 0.0
        %1146 = vmatpush.msra.mxu0 0.0
        %v1147 = vand.u32 %v288, 4294901760
        %1148 = vmatpush.msra.mxu0 %v1147
        %v1149 = vand.u32 %v280, 4294901760
        %1150 = vmatpush.msra.mxu0 %v1149
        %v1151 = vand.u32 %v272, 4294901760
        %1152 = vmatpush.msra.mxu0 %v1151
        %v1153 = vand.u32 %v264, 4294901760
        %1154 = vmatpush.msra.mxu0 %v1153
        %v1155 = vand.u32 %v295, 4294901760
        %1156 = vmatmul.f32.gmra.mxu0 %v1155
        %v1157 = vpop.f32.mrf.mxu0
        %v1158 = vadd.f32 %v1129, %v1157
        %v1159 = vand.u32 %v298, 4294901760
        %1160 = vmatmul.f32.gmra.mxu0 %v1159
        %v1161 = vpop.f32.mrf.mxu0
        %v1162 = vadd.f32 %v1133, %v1161
        %1163 = vdwg.mxu0
        %1164 = vmatpush.msra.mxu0 0.0
        %1165 = vmatpush.msra.mxu0 0.0
        %1166 = vmatpush.msra.mxu0 0.0
        %1167 = vmatpush.msra.mxu0 0.0
        %1168 = vmatpush.msra.mxu0 0.0
        %1169 = vmatpush.msra.mxu0 0.0
        %1170 = vmatpush.msra.mxu0 0.0
        %1171 = vmatpush.msra.mxu0 0.0
        %1172 = vmatpush.msra.mxu0 0.0
        %1173 = vmatpush.msra.mxu0 0.0
        %1174 = vmatpush.msra.mxu0 0.0
        %1175 = vmatpush.msra.mxu0 0.0
        %v1176 = vand.u32 %v289, 4294901760
        %1177 = vmatpush.msra.mxu0 %v1176
        %v1178 = vand.u32 %v281, 4294901760
        %1179 = vmatpush.msra.mxu0 %v1178
        %v1180 = vand.u32 %v273, 4294901760
        %1181 = vmatpush.msra.mxu0 %v1180
        %v1182 = vand.u32 %v265, 4294901760
        %1183 = vmatpush.msra.mxu0 %v1182
        %v1184 = vand.u32 %v295, 4294901760
        %v1185 = vsub.f32 %v295, %v1184
        %v1186 = vand.u32 %v1185, 4294901760
        %v1187 = vsub.f32 %v1185, %v1186
        %v1188 = vand.u32 %v1187, 4294901760
        %1189 = vmatmul.f32.gmra.mxu0 %v1188
        %v1190 = vpop.f32.mrf.mxu0
        %v1191 = vadd.f32 0.0, %v1190
        %v1192 = vand.u32 %v298, 4294901760
        %v1193 = vsub.f32 %v298, %v1192
        %v1194 = vand.u32 %v1193, 4294901760
        %v1195 = vsub.f32 %v1193, %v1194
        %v1196 = vand.u32 %v1195, 4294901760
        %1197 = vmatmul.f32.gmra.mxu0 %v1196
        %v1198 = vpop.f32.mrf.mxu0
        %v1199 = vadd.f32 0.0, %v1198
        %1200 = vdwg.mxu0
        %1201 = vmatpush.msra.mxu0 0.0
        %1202 = vmatpush.msra.mxu0 0.0
        %1203 = vmatpush.msra.mxu0 0.0
        %1204 = vmatpush.msra.mxu0 0.0
        %1205 = vmatpush.msra.mxu0 0.0
        %1206 = vmatpush.msra.mxu0 0.0
        %1207 = vmatpush.msra.mxu0 0.0
        %1208 = vmatpush.msra.mxu0 0.0
        %1209 = vmatpush.msra.mxu0 0.0
        %1210 = vmatpush.msra.mxu0 0.0
        %1211 = vmatpush.msra.mxu0 0.0
        %1212 = vmatpush.msra.mxu0 0.0
        %v1213 = vand.u32 %v289, 4294901760
        %v1214 = vsub.f32 %v289, %v1213
        %v1215 = vand.u32 %v1214, 4294901760
        %v1216 = vsub.f32 %v1214, %v1215
        %v1217 = vand.u32 %v1216, 4294901760
        %1218 = vmatpush.msra.mxu0 %v1217
        %v1219 = vand.u32 %v281, 4294901760
        %v1220 = vsub.f32 %v281, %v1219
        %v1221 = vand.u32 %v1220, 4294901760
        %v1222 = vsub.f32 %v1220, %v1221
        %v1223 = vand.u32 %v1222, 4294901760
        %1224 = vmatpush.msra.mxu0 %v1223
        %v1225 = vand.u32 %v273, 4294901760
        %v1226 = vsub.f32 %v273, %v1225
        %v1227 = vand.u32 %v1226, 4294901760
        %v1228 = vsub.f32 %v1226, %v1227
        %v1229 = vand.u32 %v1228, 4294901760
        %1230 = vmatpush.msra.mxu0 %v1229
        %v1231 = vand.u32 %v265, 4294901760
        %v1232 = vsub.f32 %v265, %v1231
        %v1233 = vand.u32 %v1232, 4294901760
        %v1234 = vsub.f32 %v1232, %v1233
        %v1235 = vand.u32 %v1234, 4294901760
        %1236 = vmatpush.msra.mxu0 %v1235
        %v1237 = vand.u32 %v295, 4294901760
        %1238 = vmatmul.f32.gmra.mxu0 %v1237
        %v1239 = vpop.f32.mrf.mxu0
        %v1240 = vadd.f32 %v1191, %v1239
        %v1241 = vand.u32 %v298, 4294901760
        %1242 = vmatmul.f32.gmra.mxu0 %v1241
        %v1243 = vpop.f32.mrf.mxu0
        %v1244 = vadd.f32 %v1199, %v1243
        %1245 = vdwg.mxu0
        %1246 = vmatpush.msra.mxu0 0.0
        %1247 = vmatpush.msra.mxu0 0.0
        %1248 = vmatpush.msra.mxu0 0.0
        %1249 = vmatpush.msra.mxu0 0.0
        %1250 = vmatpush.msra.mxu0 0.0
        %1251 = vmatpush.msra.mxu0 0.0
        %1252 = vmatpush.msra.mxu0 0.0
        %1253 = vmatpush.msra.mxu0 0.0
        %1254 = vmatpush.msra.mxu0 0.0
        %1255 = vmatpush.msra.mxu0 0.0
        %1256 = vmatpush.msra.mxu0 0.0
        %1257 = vmatpush.msra.mxu0 0.0
        %v1258 = vand.u32 %v289, 4294901760
        %v1259 = vsub.f32 %v289, %v1258
        %1260 = vmatpush.msra.mxu0 %v1259
        %v1261 = vand.u32 %v281, 4294901760
        %v1262 = vsub.f32 %v281, %v1261
        %1263 = vmatpush.msra.mxu0 %v1262
        %v1264 = vand.u32 %v273, 4294901760
        %v1265 = vsub.f32 %v273, %v1264
        %1266 = vmatpush.msra.mxu0 %v1265
        %v1267 = vand.u32 %v265, 4294901760
        %v1268 = vsub.f32 %v265, %v1267
        %1269 = vmatpush.msra.mxu0 %v1268
        %v1270 = vand.u32 %v295, 4294901760
        %v1271 = vsub.f32 %v295, %v1270
        %1272 = vmatmul.f32.gmra.mxu0 %v1271
        %v1273 = vpop.f32.mrf.mxu0
        %v1274 = vadd.f32 %v1240, %v1273
        %v1275 = vand.u32 %v298, 4294901760
        %v1276 = vsub.f32 %v298, %v1275
        %1277 = vmatmul.f32.gmra.mxu0 %v1276
        %v1278 = vpop.f32.mrf.mxu0
        %v1279 = vadd.f32 %v1244, %v1278
        %1280 = vdwg.mxu0
        %1281 = vmatpush.msra.mxu0 0.0
        %1282 = vmatpush.msra.mxu0 0.0
        %1283 = vmatpush.msra.mxu0 0.0
        %1284 = vmatpush.msra.mxu0 0.0
        %1285 = vmatpush.msra.mxu0 0.0
        %1286 = vmatpush.msra.mxu0 0.0
        %1287 = vmatpush.msra.mxu0 0.0
        %1288 = vmatpush.msra.mxu0 0.0
        %1289 = vmatpush.msra.mxu0 0.0
        %1290 = vmatpush.msra.mxu0 0.0
        %1291 = vmatpush.msra.mxu0 0.0
        %1292 = vmatpush.msra.mxu0 0.0
        %v1293 = vand.u32 %v289, 4294901760
        %1294 = vmatpush.msra.mxu0 %v1293
        %v1295 = vand.u32 %v281, 4294901760
        %1296 = vmatpush.msra.mxu0 %v1295
        %v1297 = vand.u32 %v273, 4294901760
        %1298 = vmatpush.msra.mxu0 %v1297
        %v1299 = vand.u32 %v265, 4294901760
        %1300 = vmatpush.msra.mxu0 %v1299
        %v1301 = vand.u32 %v295, 4294901760
        %v1302 = vsub.f32 %v295, %v1301
        %v1303 = vand.u32 %v1302, 4294901760
        %1304 = vmatmul.f32.gmra.mxu0 %v1303
        %v1305 = vpop.f32.mrf.mxu0
        %v1306 = vadd.f32 %v1274, %v1305
        %v1307 = vand.u32 %v298, 4294901760
        %v1308 = vsub.f32 %v298, %v1307
        %v1309 = vand.u32 %v1308, 4294901760
        %1310 = vmatmul.f32.gmra.mxu0 %v1309
        %v1311 = vpop.f32.mrf.mxu0
        %v1312 = vadd.f32 %v1279, %v1311
        %1313 = vdwg.mxu0
        %1314 = vmatpush.msra.mxu0 0.0
        %1315 = vmatpush.msra.mxu0 0.0
        %1316 = vmatpush.msra.mxu0 0.0
        %1317 = vmatpush.msra.mxu0 0.0
        %1318 = vmatpush.msra.mxu0 0.0
        %1319 = vmatpush.msra.mxu0 0.0
        %1320 = vmatpush.msra.mxu0 0.0
        %1321 = vmatpush.msra.mxu0 0.0
        %1322 = vmatpush.msra.mxu0 0.0
        %1323 = vmatpush.msra.mxu0 0.0
        %1324 = vmatpush.msra.mxu0 0.0
        %1325 = vmatpush.msra.mxu0 0.0
        %v1326 = vand.u32 %v289, 4294901760
        %v1327 = vsub.f32 %v289, %v1326
        %v1328 = vand.u32 %v1327, 4294901760
        %1329 = vmatpush.msra.mxu0 %v1328
        %v1330 = vand.u32 %v281, 4294901760
        %v1331 = vsub.f32 %v281, %v1330
        %v1332 = vand.u32 %v1331, 4294901760
        %1333 = vmatpush.msra.mxu0 %v1332
        %v1334 = vand.u32 %v273, 4294901760
        %v1335 = vsub.f32 %v273, %v1334
        %v1336 = vand.u32 %v1335, 4294901760
        %1337 = vmatpush.msra.mxu0 %v1336
        %v1338 = vand.u32 %v265, 4294901760
        %v1339 = vsub.f32 %v265, %v1338
        %v1340 = vand.u32 %v1339, 4294901760
        %1341 = vmatpush.msra.mxu0 %v1340
        %v1342 = vand.u32 %v295, 4294901760
        %1343 = vmatmul.f32.gmra.mxu0 %v1342
        %v1344 = vpop.f32.mrf.mxu0
        %v1345 = vadd.f32 %v1306, %v1344
        %v1346 = vand.u32 %v298, 4294901760
        %1347 = vmatmul.f32.gmra.mxu0 %v1346
        %v1348 = vpop.f32.mrf.mxu0
        %v1349 = vadd.f32 %v1312, %v1348
        %1350 = vdwg.mxu0
        %1351 = vmatpush.msra.mxu0 0.0
        %1352 = vmatpush.msra.mxu0 0.0
        %1353 = vmatpush.msra.mxu0 0.0
        %1354 = vmatpush.msra.mxu0 0.0
        %1355 = vmatpush.msra.mxu0 0.0
        %1356 = vmatpush.msra.mxu0 0.0
        %1357 = vmatpush.msra.mxu0 0.0
        %1358 = vmatpush.msra.mxu0 0.0
        %1359 = vmatpush.msra.mxu0 0.0
        %1360 = vmatpush.msra.mxu0 0.0
        %1361 = vmatpush.msra.mxu0 0.0
        %1362 = vmatpush.msra.mxu0 0.0
        %v1363 = vand.u32 %v289, 4294901760
        %1364 = vmatpush.msra.mxu0 %v1363
        %v1365 = vand.u32 %v281, 4294901760
        %1366 = vmatpush.msra.mxu0 %v1365
        %v1367 = vand.u32 %v273, 4294901760
        %1368 = vmatpush.msra.mxu0 %v1367
        %v1369 = vand.u32 %v265, 4294901760
        %1370 = vmatpush.msra.mxu0 %v1369
        %v1371 = vand.u32 %v295, 4294901760
        %1372 = vmatmul.f32.gmra.mxu0 %v1371
        %v1373 = vpop.f32.mrf.mxu0
        %v1374 = vadd.f32 %v1345, %v1373
        %v1375 = vand.u32 %v298, 4294901760
        %1376 = vmatmul.f32.gmra.mxu0 %v1375
        %v1377 = vpop.f32.mrf.mxu0
        %v1378 = vadd.f32 %v1349, %v1377
        %1379 = vdwg.mxu0
        %1380 = vmatpush.msra.mxu0 0.0
        %1381 = vmatpush.msra.mxu0 0.0
        %1382 = vmatpush.msra.mxu0 0.0
        %1383 = vmatpush.msra.mxu0 0.0
        %1384 = vmatpush.msra.mxu0 0.0
        %1385 = vmatpush.msra.mxu0 0.0
        %1386 = vmatpush.msra.mxu0 0.0
        %1387 = vmatpush.msra.mxu0 0.0
        %1388 = vmatpush.msra.mxu0 0.0
        %1389 = vmatpush.msra.mxu0 0.0
        %1390 = vmatpush.msra.mxu0 0.0
        %1391 = vmatpush.msra.mxu0 0.0
        %v1392 = vand.u32 %v290, 4294901760
        %1393 = vmatpush.msra.mxu0 %v1392
        %v1394 = vand.u32 %v282, 4294901760
        %1395 = vmatpush.msra.mxu0 %v1394
        %v1396 = vand.u32 %v274, 4294901760
        %1397 = vmatpush.msra.mxu0 %v1396
        %v1398 = vand.u32 %v266, 4294901760
        %1399 = vmatpush.msra.mxu0 %v1398
        %v1400 = vand.u32 %v295, 4294901760
        %v1401 = vsub.f32 %v295, %v1400
        %v1402 = vand.u32 %v1401, 4294901760
        %v1403 = vsub.f32 %v1401, %v1402
        %v1404 = vand.u32 %v1403, 4294901760
        %1405 = vmatmul.f32.gmra.mxu0 %v1404
        %v1406 = vpop.f32.mrf.mxu0
        %v1407 = vadd.f32 0.0, %v1406
        %v1408 = vand.u32 %v298, 4294901760
        %v1409 = vsub.f32 %v298, %v1408
        %v1410 = vand.u32 %v1409, 4294901760
        %v1411 = vsub.f32 %v1409, %v1410
        %v1412 = vand.u32 %v1411, 4294901760
        %1413 = vmatmul.f32.gmra.mxu0 %v1412
        %v1414 = vpop.f32.mrf.mxu0
        %v1415 = vadd.f32 0.0, %v1414
        %1416 = vdwg.mxu0
        %1417 = vmatpush.msra.mxu0 0.0
        %1418 = vmatpush.msra.mxu0 0.0
        %1419 = vmatpush.msra.mxu0 0.0
        %1420 = vmatpush.msra.mxu0 0.0
        %1421 = vmatpush.msra.mxu0 0.0
        %1422 = vmatpush.msra.mxu0 0.0
        %1423 = vmatpush.msra.mxu0 0.0
        %1424 = vmatpush.msra.mxu0 0.0
        %1425 = vmatpush.msra.mxu0 0.0
        %1426 = vmatpush.msra.mxu0 0.0
        %1427 = vmatpush.msra.mxu0 0.0
        %1428 = vmatpush.msra.mxu0 0.0
        %v1429 = vand.u32 %v290, 4294901760
        %v1430 = vsub.f32 %v290, %v1429
        %v1431 = vand.u32 %v1430, 4294901760
        %v1432 = vsub.f32 %v1430, %v1431
        %v1433 = vand.u32 %v1432, 4294901760
        %1434 = vmatpush.msra.mxu0 %v1433
        %v1435 = vand.u32 %v282, 4294901760
        %v1436 = vsub.f32 %v282, %v1435
        %v1437 = vand.u32 %v1436, 4294901760
        %v1438 = vsub.f32 %v1436, %v1437
        %v1439 = vand.u32 %v1438, 4294901760
        %1440 = vmatpush.msra.mxu0 %v1439
        %v1441 = vand.u32 %v274, 4294901760
        %v1442 = vsub.f32 %v274, %v1441
        %v1443 = vand.u32 %v1442, 4294901760
        %v1444 = vsub.f32 %v1442, %v1443
        %v1445 = vand.u32 %v1444, 4294901760
        %1446 = vmatpush.msra.mxu0 %v1445
        %v1447 = vand.u32 %v266, 4294901760
        %v1448 = vsub.f32 %v266, %v1447
        %v1449 = vand.u32 %v1448, 4294901760
        %v1450 = vsub.f32 %v1448, %v1449
        %v1451 = vand.u32 %v1450, 4294901760
        %1452 = vmatpush.msra.mxu0 %v1451
        %v1453 = vand.u32 %v295, 4294901760
        %1454 = vmatmul.f32.gmra.mxu0 %v1453
        %v1455 = vpop.f32.mrf.mxu0
        %v1456 = vadd.f32 %v1407, %v1455
        %v1457 = vand.u32 %v298, 4294901760
        %1458 = vmatmul.f32.gmra.mxu0 %v1457
        %v1459 = vpop.f32.mrf.mxu0
        %v1460 = vadd.f32 %v1415, %v1459
        %1461 = vdwg.mxu0
        %1462 = vmatpush.msra.mxu0 0.0
        %1463 = vmatpush.msra.mxu0 0.0
        %1464 = vmatpush.msra.mxu0 0.0
        %1465 = vmatpush.msra.mxu0 0.0
        %1466 = vmatpush.msra.mxu0 0.0
        %1467 = vmatpush.msra.mxu0 0.0
        %1468 = vmatpush.msra.mxu0 0.0
        %1469 = vmatpush.msra.mxu0 0.0
        %1470 = vmatpush.msra.mxu0 0.0
        %1471 = vmatpush.msra.mxu0 0.0
        %1472 = vmatpush.msra.mxu0 0.0
        %1473 = vmatpush.msra.mxu0 0.0
        %v1474 = vand.u32 %v290, 4294901760
        %v1475 = vsub.f32 %v290, %v1474
        %1476 = vmatpush.msra.mxu0 %v1475
        %v1477 = vand.u32 %v282, 4294901760
        %v1478 = vsub.f32 %v282, %v1477
        %1479 = vmatpush.msra.mxu0 %v1478
        %v1480 = vand.u32 %v274, 4294901760
        %v1481 = vsub.f32 %v274, %v1480
        %1482 = vmatpush.msra.mxu0 %v1481
        %v1483 = vand.u32 %v266, 4294901760
        %v1484 = vsub.f32 %v266, %v1483
        %1485 = vmatpush.msra.mxu0 %v1484
        %v1486 = vand.u32 %v295, 4294901760
        %v1487 = vsub.f32 %v295, %v1486
        %1488 = vmatmul.f32.gmra.mxu0 %v1487
        %v1489 = vpop.f32.mrf.mxu0
        %v1490 = vadd.f32 %v1456, %v1489
        %v1491 = vand.u32 %v298, 4294901760
        %v1492 = vsub.f32 %v298, %v1491
        %1493 = vmatmul.f32.gmra.mxu0 %v1492
        %v1494 = vpop.f32.mrf.mxu0
        %v1495 = vadd.f32 %v1460, %v1494
        %1496 = vdwg.mxu0
        %1497 = vmatpush.msra.mxu0 0.0
        %1498 = vmatpush.msra.mxu0 0.0
        %1499 = vmatpush.msra.mxu0 0.0
        %1500 = vmatpush.msra.mxu0 0.0
        %1501 = vmatpush.msra.mxu0 0.0
        %1502 = vmatpush.msra.mxu0 0.0
        %1503 = vmatpush.msra.mxu0 0.0
        %1504 = vmatpush.msra.mxu0 0.0
        %1505 = vmatpush.msra.mxu0 0.0
        %1506 = vmatpush.msra.mxu0 0.0
        %1507 = vmatpush.msra.mxu0 0.0
        %1508 = vmatpush.msra.mxu0 0.0
        %v1509 = vand.u32 %v290, 4294901760
        %1510 = vmatpush.msra.mxu0 %v1509
        %v1511 = vand.u32 %v282, 4294901760
        %1512 = vmatpush.msra.mxu0 %v1511
        %v1513 = vand.u32 %v274, 4294901760
        %1514 = vmatpush.msra.mxu0 %v1513
        %v1515 = vand.u32 %v266, 4294901760
        %1516 = vmatpush.msra.mxu0 %v1515
        %v1517 = vand.u32 %v295, 4294901760
        %v1518 = vsub.f32 %v295, %v1517
        %v1519 = vand.u32 %v1518, 4294901760
        %1520 = vmatmul.f32.gmra.mxu0 %v1519
        %v1521 = vpop.f32.mrf.mxu0
        %v1522 = vadd.f32 %v1490, %v1521
        %v1523 = vand.u32 %v298, 4294901760
        %v1524 = vsub.f32 %v298, %v1523
        %v1525 = vand.u32 %v1524, 4294901760
        %1526 = vmatmul.f32.gmra.mxu0 %v1525
        %v1527 = vpop.f32.mrf.mxu0
        %v1528 = vadd.f32 %v1495, %v1527
        %1529 = vdwg.mxu0
        %1530 = vmatpush.msra.mxu0 0.0
        %1531 = vmatpush.msra.mxu0 0.0
        %1532 = vmatpush.msra.mxu0 0.0
        %1533 = vmatpush.msra.mxu0 0.0
        %1534 = vmatpush.msra.mxu0 0.0
        %1535 = vmatpush.msra.mxu0 0.0
        %1536 = vmatpush.msra.mxu0 0.0
        %1537 = vmatpush.msra.mxu0 0.0
        %1538 = vmatpush.msra.mxu0 0.0
        %1539 = vmatpush.msra.mxu0 0.0
        %1540 = vmatpush.msra.mxu0 0.0
        %1541 = vmatpush.msra.mxu0 0.0
        %v1542 = vand.u32 %v290, 4294901760
        %v1543 = vsub.f32 %v290, %v1542
        %v1544 = vand.u32 %v1543, 4294901760
        %1545 = vmatpush.msra.mxu0 %v1544
        %v1546 = vand.u32 %v282, 4294901760
        %v1547 = vsub.f32 %v282, %v1546
        %v1548 = vand.u32 %v1547, 4294901760
        %1549 = vmatpush.msra.mxu0 %v1548
        %v1550 = vand.u32 %v274, 4294901760
        %v1551 = vsub.f32 %v274, %v1550
        %v1552 = vand.u32 %v1551, 4294901760
        %1553 = vmatpush.msra.mxu0 %v1552
        %v1554 = vand.u32 %v266, 4294901760
        %v1555 = vsub.f32 %v266, %v1554
        %v1556 = vand.u32 %v1555, 4294901760
        %1557 = vmatpush.msra.mxu0 %v1556
        %v1558 = vand.u32 %v295, 4294901760
        %1559 = vmatmul.f32.gmra.mxu0 %v1558
        %v1560 = vpop.f32.mrf.mxu0
        %v1561 = vadd.f32 %v1522, %v1560
        %v1562 = vand.u32 %v298, 4294901760
        %1563 = vmatmul.f32.gmra.mxu0 %v1562
        %v1564 = vpop.f32.mrf.mxu0
        %v1565 = vadd.f32 %v1528, %v1564
        %1566 = vdwg.mxu0
        %1567 = vmatpush.msra.mxu0 0.0
        %1568 = vmatpush.msra.mxu0 0.0
        %1569 = vmatpush.msra.mxu0 0.0
        %1570 = vmatpush.msra.mxu0 0.0
        %1571 = vmatpush.msra.mxu0 0.0
        %1572 = vmatpush.msra.mxu0 0.0
        %1573 = vmatpush.msra.mxu0 0.0
        %1574 = vmatpush.msra.mxu0 0.0
        %1575 = vmatpush.msra.mxu0 0.0
        %1576 = vmatpush.msra.mxu0 0.0
        %1577 = vmatpush.msra.mxu0 0.0
        %1578 = vmatpush.msra.mxu0 0.0
        %v1579 = vand.u32 %v290, 4294901760
        %1580 = vmatpush.msra.mxu0 %v1579
        %v1581 = vand.u32 %v282, 4294901760
        %1582 = vmatpush.msra.mxu0 %v1581
        %v1583 = vand.u32 %v274, 4294901760
        %1584 = vmatpush.msra.mxu0 %v1583
        %v1585 = vand.u32 %v266, 4294901760
        %1586 = vmatpush.msra.mxu0 %v1585
        %v1587 = vand.u32 %v295, 4294901760
        %1588 = vmatmul.f32.gmra.mxu0 %v1587
        %v1589 = vpop.f32.mrf.mxu0
        %v1590 = vadd.f32 %v1561, %v1589
        %v1591 = vand.u32 %v298, 4294901760
        %1592 = vmatmul.f32.gmra.mxu0 %v1591
        %v1593 = vpop.f32.mrf.mxu0
        %v1594 = vadd.f32 %v1565, %v1593
        %1595 = vdwg.mxu0
        %1596 = vmatpush.msra.mxu0 0.0
        %1597 = vmatpush.msra.mxu0 0.0
        %1598 = vmatpush.msra.mxu0 0.0
        %1599 = vmatpush.msra.mxu0 0.0
        %1600 = vmatpush.msra.mxu0 0.0
        %1601 = vmatpush.msra.mxu0 0.0
        %1602 = vmatpush.msra.mxu0 0.0
        %1603 = vmatpush.msra.mxu0 0.0
        %1604 = vmatpush.msra.mxu0 0.0
        %1605 = vmatpush.msra.mxu0 0.0
        %1606 = vmatpush.msra.mxu0 0.0
        %1607 = vmatpush.msra.mxu0 0.0
        %v1608 = vand.u32 %v291, 4294901760
        %1609 = vmatpush.msra.mxu0 %v1608
        %v1610 = vand.u32 %v283, 4294901760
        %1611 = vmatpush.msra.mxu0 %v1610
        %v1612 = vand.u32 %v275, 4294901760
        %1613 = vmatpush.msra.mxu0 %v1612
        %v1614 = vand.u32 %v267, 4294901760
        %1615 = vmatpush.msra.mxu0 %v1614
        %v1616 = vand.u32 %v295, 4294901760
        %v1617 = vsub.f32 %v295, %v1616
        %v1618 = vand.u32 %v1617, 4294901760
        %v1619 = vsub.f32 %v1617, %v1618
        %v1620 = vand.u32 %v1619, 4294901760
        %1621 = vmatmul.f32.gmra.mxu0 %v1620
        %v1622 = vpop.f32.mrf.mxu0
        %v1623 = vadd.f32 0.0, %v1622
        %v1624 = vand.u32 %v298, 4294901760
        %v1625 = vsub.f32 %v298, %v1624
        %v1626 = vand.u32 %v1625, 4294901760
        %v1627 = vsub.f32 %v1625, %v1626
        %v1628 = vand.u32 %v1627, 4294901760
        %1629 = vmatmul.f32.gmra.mxu0 %v1628
        %v1630 = vpop.f32.mrf.mxu0
        %v1631 = vadd.f32 0.0, %v1630
        %1632 = vdwg.mxu0
        %1633 = vmatpush.msra.mxu0 0.0
        %1634 = vmatpush.msra.mxu0 0.0
        %1635 = vmatpush.msra.mxu0 0.0
        %1636 = vmatpush.msra.mxu0 0.0
        %1637 = vmatpush.msra.mxu0 0.0
        %1638 = vmatpush.msra.mxu0 0.0
        %1639 = vmatpush.msra.mxu0 0.0
        %1640 = vmatpush.msra.mxu0 0.0
        %1641 = vmatpush.msra.mxu0 0.0
        %1642 = vmatpush.msra.mxu0 0.0
        %1643 = vmatpush.msra.mxu0 0.0
        %1644 = vmatpush.msra.mxu0 0.0
        %v1645 = vand.u32 %v291, 4294901760
        %v1646 = vsub.f32 %v291, %v1645
        %v1647 = vand.u32 %v1646, 4294901760
        %v1648 = vsub.f32 %v1646, %v1647
        %v1649 = vand.u32 %v1648, 4294901760
        %1650 = vmatpush.msra.mxu0 %v1649
        %v1651 = vand.u32 %v283, 4294901760
        %v1652 = vsub.f32 %v283, %v1651
        %v1653 = vand.u32 %v1652, 4294901760
        %v1654 = vsub.f32 %v1652, %v1653
        %v1655 = vand.u32 %v1654, 4294901760
        %1656 = vmatpush.msra.mxu0 %v1655
        %v1657 = vand.u32 %v275, 4294901760
        %v1658 = vsub.f32 %v275, %v1657
        %v1659 = vand.u32 %v1658, 4294901760
        %v1660 = vsub.f32 %v1658, %v1659
        %v1661 = vand.u32 %v1660, 4294901760
        %1662 = vmatpush.msra.mxu0 %v1661
        %v1663 = vand.u32 %v267, 4294901760
        %v1664 = vsub.f32 %v267, %v1663
        %v1665 = vand.u32 %v1664, 4294901760
        %v1666 = vsub.f32 %v1664, %v1665
        %v1667 = vand.u32 %v1666, 4294901760
        %1668 = vmatpush.msra.mxu0 %v1667
        %v1669 = vand.u32 %v295, 4294901760
        %1670 = vmatmul.f32.gmra.mxu0 %v1669
        %v1671 = vpop.f32.mrf.mxu0
        %v1672 = vadd.f32 %v1623, %v1671
        %v1673 = vand.u32 %v298, 4294901760
        %1674 = vmatmul.f32.gmra.mxu0 %v1673
        %v1675 = vpop.f32.mrf.mxu0
        %v1676 = vadd.f32 %v1631, %v1675
        %1677 = vdwg.mxu0
        %1678 = vmatpush.msra.mxu0 0.0
        %1679 = vmatpush.msra.mxu0 0.0
        %1680 = vmatpush.msra.mxu0 0.0
        %1681 = vmatpush.msra.mxu0 0.0
        %1682 = vmatpush.msra.mxu0 0.0
        %1683 = vmatpush.msra.mxu0 0.0
        %1684 = vmatpush.msra.mxu0 0.0
        %1685 = vmatpush.msra.mxu0 0.0
        %1686 = vmatpush.msra.mxu0 0.0
        %1687 = vmatpush.msra.mxu0 0.0
        %1688 = vmatpush.msra.mxu0 0.0
        %1689 = vmatpush.msra.mxu0 0.0
        %v1690 = vand.u32 %v291, 4294901760
        %v1691 = vsub.f32 %v291, %v1690
        %1692 = vmatpush.msra.mxu0 %v1691
        %v1693 = vand.u32 %v283, 4294901760
        %v1694 = vsub.f32 %v283, %v1693
        %1695 = vmatpush.msra.mxu0 %v1694
        %v1696 = vand.u32 %v275, 4294901760
        %v1697 = vsub.f32 %v275, %v1696
        %1698 = vmatpush.msra.mxu0 %v1697
        %v1699 = vand.u32 %v267, 4294901760
        %v1700 = vsub.f32 %v267, %v1699
        %1701 = vmatpush.msra.mxu0 %v1700
        %v1702 = vand.u32 %v295, 4294901760
        %v1703 = vsub.f32 %v295, %v1702
        %1704 = vmatmul.f32.gmra.mxu0 %v1703
        %v1705 = vpop.f32.mrf.mxu0
        %v1706 = vadd.f32 %v1672, %v1705
        %v1707 = vand.u32 %v298, 4294901760
        %v1708 = vsub.f32 %v298, %v1707
        %1709 = vmatmul.f32.gmra.mxu0 %v1708
        %v1710 = vpop.f32.mrf.mxu0
        %v1711 = vadd.f32 %v1676, %v1710
        %1712 = vdwg.mxu0
        %1713 = vmatpush.msra.mxu0 0.0
        %1714 = vmatpush.msra.mxu0 0.0
        %1715 = vmatpush.msra.mxu0 0.0
        %1716 = vmatpush.msra.mxu0 0.0
        %1717 = vmatpush.msra.mxu0 0.0
        %1718 = vmatpush.msra.mxu0 0.0
        %1719 = vmatpush.msra.mxu0 0.0
        %1720 = vmatpush.msra.mxu0 0.0
        %1721 = vmatpush.msra.mxu0 0.0
        %1722 = vmatpush.msra.mxu0 0.0
        %1723 = vmatpush.msra.mxu0 0.0
        %1724 = vmatpush.msra.mxu0 0.0
        %v1725 = vand.u32 %v291, 4294901760
        %1726 = vmatpush.msra.mxu0 %v1725
        %v1727 = vand.u32 %v283, 4294901760
        %1728 = vmatpush.msra.mxu0 %v1727
        %v1729 = vand.u32 %v275, 4294901760
        %1730 = vmatpush.msra.mxu0 %v1729
        %v1731 = vand.u32 %v267, 4294901760
        %1732 = vmatpush.msra.mxu0 %v1731
        %v1733 = vand.u32 %v295, 4294901760
        %v1734 = vsub.f32 %v295, %v1733
        %v1735 = vand.u32 %v1734, 4294901760
        %1736 = vmatmul.f32.gmra.mxu0 %v1735
        %v1737 = vpop.f32.mrf.mxu0
        %v1738 = vadd.f32 %v1706, %v1737
        %v1739 = vand.u32 %v298, 4294901760
        %v1740 = vsub.f32 %v298, %v1739
        %v1741 = vand.u32 %v1740, 4294901760
        %1742 = vmatmul.f32.gmra.mxu0 %v1741
        %v1743 = vpop.f32.mrf.mxu0
        %v1744 = vadd.f32 %v1711, %v1743
        %1745 = vdwg.mxu0
        %1746 = vmatpush.msra.mxu0 0.0
        %1747 = vmatpush.msra.mxu0 0.0
        %1748 = vmatpush.msra.mxu0 0.0
        %1749 = vmatpush.msra.mxu0 0.0
        %1750 = vmatpush.msra.mxu0 0.0
        %1751 = vmatpush.msra.mxu0 0.0
        %1752 = vmatpush.msra.mxu0 0.0
        %1753 = vmatpush.msra.mxu0 0.0
        %1754 = vmatpush.msra.mxu0 0.0
        %1755 = vmatpush.msra.mxu0 0.0
        %1756 = vmatpush.msra.mxu0 0.0
        %1757 = vmatpush.msra.mxu0 0.0
        %v1758 = vand.u32 %v291, 4294901760
        %v1759 = vsub.f32 %v291, %v1758
        %v1760 = vand.u32 %v1759, 4294901760
        %1761 = vmatpush.msra.mxu0 %v1760
        %v1762 = vand.u32 %v283, 4294901760
        %v1763 = vsub.f32 %v283, %v1762
        %v1764 = vand.u32 %v1763, 4294901760
        %1765 = vmatpush.msra.mxu0 %v1764
        %v1766 = vand.u32 %v275, 4294901760
        %v1767 = vsub.f32 %v275, %v1766
        %v1768 = vand.u32 %v1767, 4294901760
        %1769 = vmatpush.msra.mxu0 %v1768
        %v1770 = vand.u32 %v267, 4294901760
        %v1771 = vsub.f32 %v267, %v1770
        %v1772 = vand.u32 %v1771, 4294901760
        %1773 = vmatpush.msra.mxu0 %v1772
        %v1774 = vand.u32 %v295, 4294901760
        %1775 = vmatmul.f32.gmra.mxu0 %v1774
        %v1776 = vpop.f32.mrf.mxu0
        %v1777 = vadd.f32 %v1738, %v1776
        %v1778 = vand.u32 %v298, 4294901760
        %1779 = vmatmul.f32.gmra.mxu0 %v1778
        %v1780 = vpop.f32.mrf.mxu0
        %v1781 = vadd.f32 %v1744, %v1780
        %1782 = vdwg.mxu0
        %1783 = vmatpush.msra.mxu0 0.0
        %1784 = vmatpush.msra.mxu0 0.0
        %1785 = vmatpush.msra.mxu0 0.0
        %1786 = vmatpush.msra.mxu0 0.0
        %1787 = vmatpush.msra.mxu0 0.0
        %1788 = vmatpush.msra.mxu0 0.0
        %1789 = vmatpush.msra.mxu0 0.0
        %1790 = vmatpush.msra.mxu0 0.0
        %1791 = vmatpush.msra.mxu0 0.0
        %1792 = vmatpush.msra.mxu0 0.0
        %1793 = vmatpush.msra.mxu0 0.0
        %1794 = vmatpush.msra.mxu0 0.0
        %v1795 = vand.u32 %v291, 4294901760
        %1796 = vmatpush.msra.mxu0 %v1795
        %v1797 = vand.u32 %v283, 4294901760
        %1798 = vmatpush.msra.mxu0 %v1797
        %v1799 = vand.u32 %v275, 4294901760
        %1800 = vmatpush.msra.mxu0 %v1799
        %v1801 = vand.u32 %v267, 4294901760
        %1802 = vmatpush.msra.mxu0 %v1801
        %v1803 = vand.u32 %v295, 4294901760
        %1804 = vmatmul.f32.gmra.mxu0 %v1803
        %v1805 = vpop.f32.mrf.mxu0
        %v1806 = vadd.f32 %v1777, %v1805
        %v1807 = vand.u32 %v298, 4294901760
        %1808 = vmatmul.f32.gmra.mxu0 %v1807
        %v1809 = vpop.f32.mrf.mxu0
        %v1810 = vadd.f32 %v1781, %v1809
        %1811 = vdwg.mxu0
        %1812 = vmatpush.msra.mxu0 0.0
        %1813 = vmatpush.msra.mxu0 0.0
        %1814 = vmatpush.msra.mxu0 0.0
        %1815 = vmatpush.msra.mxu0 0.0
        %1816 = vmatpush.msra.mxu0 0.0
        %1817 = vmatpush.msra.mxu0 0.0
        %1818 = vmatpush.msra.mxu0 0.0
        %1819 = vmatpush.msra.mxu0 0.0
        %1820 = vmatpush.msra.mxu0 0.0
        %1821 = vmatpush.msra.mxu0 0.0
        %1822 = vmatpush.msra.mxu0 0.0
        %1823 = vmatpush.msra.mxu0 0.0
        %v1824 = vand.u32 %v292, 4294901760
        %1825 = vmatpush.msra.mxu0 %v1824
        %v1826 = vand.u32 %v284, 4294901760
        %1827 = vmatpush.msra.mxu0 %v1826
        %v1828 = vand.u32 %v276, 4294901760
        %1829 = vmatpush.msra.mxu0 %v1828
        %v1830 = vand.u32 %v268, 4294901760
        %1831 = vmatpush.msra.mxu0 %v1830
        %v1832 = vand.u32 %v295, 4294901760
        %v1833 = vsub.f32 %v295, %v1832
        %v1834 = vand.u32 %v1833, 4294901760
        %v1835 = vsub.f32 %v1833, %v1834
        %v1836 = vand.u32 %v1835, 4294901760
        %1837 = vmatmul.f32.gmra.mxu0 %v1836
        %v1838 = vpop.f32.mrf.mxu0
        %v1839 = vadd.f32 0.0, %v1838
        %v1840 = vand.u32 %v298, 4294901760
        %v1841 = vsub.f32 %v298, %v1840
        %v1842 = vand.u32 %v1841, 4294901760
        %v1843 = vsub.f32 %v1841, %v1842
        %v1844 = vand.u32 %v1843, 4294901760
        %1845 = vmatmul.f32.gmra.mxu0 %v1844
        %v1846 = vpop.f32.mrf.mxu0
        %v1847 = vadd.f32 0.0, %v1846
        %1848 = vdwg.mxu0
        %1849 = vmatpush.msra.mxu0 0.0
        %1850 = vmatpush.msra.mxu0 0.0
        %1851 = vmatpush.msra.mxu0 0.0
        %1852 = vmatpush.msra.mxu0 0.0
        %1853 = vmatpush.msra.mxu0 0.0
        %1854 = vmatpush.msra.mxu0 0.0
        %1855 = vmatpush.msra.mxu0 0.0
        %1856 = vmatpush.msra.mxu0 0.0
        %1857 = vmatpush.msra.mxu0 0.0
        %1858 = vmatpush.msra.mxu0 0.0
        %1859 = vmatpush.msra.mxu0 0.0
        %1860 = vmatpush.msra.mxu0 0.0
        %v1861 = vand.u32 %v292, 4294901760
        %v1862 = vsub.f32 %v292, %v1861
        %v1863 = vand.u32 %v1862, 4294901760
        %v1864 = vsub.f32 %v1862, %v1863
        %v1865 = vand.u32 %v1864, 4294901760
        %1866 = vmatpush.msra.mxu0 %v1865
        %v1867 = vand.u32 %v284, 4294901760
        %v1868 = vsub.f32 %v284, %v1867
        %v1869 = vand.u32 %v1868, 4294901760
        %v1870 = vsub.f32 %v1868, %v1869
        %v1871 = vand.u32 %v1870, 4294901760
        %1872 = vmatpush.msra.mxu0 %v1871
        %v1873 = vand.u32 %v276, 4294901760
        %v1874 = vsub.f32 %v276, %v1873
        %v1875 = vand.u32 %v1874, 4294901760
        %v1876 = vsub.f32 %v1874, %v1875
        %v1877 = vand.u32 %v1876, 4294901760
        %1878 = vmatpush.msra.mxu0 %v1877
        %v1879 = vand.u32 %v268, 4294901760
        %v1880 = vsub.f32 %v268, %v1879
        %v1881 = vand.u32 %v1880, 4294901760
        %v1882 = vsub.f32 %v1880, %v1881
        %v1883 = vand.u32 %v1882, 4294901760
        %1884 = vmatpush.msra.mxu0 %v1883
        %v1885 = vand.u32 %v295, 4294901760
        %1886 = vmatmul.f32.gmra.mxu0 %v1885
        %v1887 = vpop.f32.mrf.mxu0
        %v1888 = vadd.f32 %v1839, %v1887
        %v1889 = vand.u32 %v298, 4294901760
        %1890 = vmatmul.f32.gmra.mxu0 %v1889
        %v1891 = vpop.f32.mrf.mxu0
        %v1892 = vadd.f32 %v1847, %v1891
        %1893 = vdwg.mxu0
        %1894 = vmatpush.msra.mxu0 0.0
        %1895 = vmatpush.msra.mxu0 0.0
        %1896 = vmatpush.msra.mxu0 0.0
        %1897 = vmatpush.msra.mxu0 0.0
        %1898 = vmatpush.msra.mxu0 0.0
        %1899 = vmatpush.msra.mxu0 0.0
        %1900 = vmatpush.msra.mxu0 0.0
        %1901 = vmatpush.msra.mxu0 0.0
        %1902 = vmatpush.msra.mxu0 0.0
        %1903 = vmatpush.msra.mxu0 0.0
        %1904 = vmatpush.msra.mxu0 0.0
        %1905 = vmatpush.msra.mxu0 0.0
        %v1906 = vand.u32 %v292, 4294901760
        %v1907 = vsub.f32 %v292, %v1906
        %1908 = vmatpush.msra.mxu0 %v1907
        %v1909 = vand.u32 %v284, 4294901760
        %v1910 = vsub.f32 %v284, %v1909
        %1911 = vmatpush.msra.mxu0 %v1910
        %v1912 = vand.u32 %v276, 4294901760
        %v1913 = vsub.f32 %v276, %v1912
        %1914 = vmatpush.msra.mxu0 %v1913
        %v1915 = vand.u32 %v268, 4294901760
        %v1916 = vsub.f32 %v268, %v1915
        %1917 = vmatpush.msra.mxu0 %v1916
        %v1918 = vand.u32 %v295, 4294901760
        %v1919 = vsub.f32 %v295, %v1918
        %1920 = vmatmul.f32.gmra.mxu0 %v1919
        %v1921 = vpop.f32.mrf.mxu0
        %v1922 = vadd.f32 %v1888, %v1921
        %v1923 = vand.u32 %v298, 4294901760
        %v1924 = vsub.f32 %v298, %v1923
        %1925 = vmatmul.f32.gmra.mxu0 %v1924
        %v1926 = vpop.f32.mrf.mxu0
        %v1927 = vadd.f32 %v1892, %v1926
        %1928 = vdwg.mxu0
        %1929 = vmatpush.msra.mxu0 0.0
        %1930 = vmatpush.msra.mxu0 0.0
        %1931 = vmatpush.msra.mxu0 0.0
        %1932 = vmatpush.msra.mxu0 0.0
        %1933 = vmatpush.msra.mxu0 0.0
        %1934 = vmatpush.msra.mxu0 0.0
        %1935 = vmatpush.msra.mxu0 0.0
        %1936 = vmatpush.msra.mxu0 0.0
        %1937 = vmatpush.msra.mxu0 0.0
        %1938 = vmatpush.msra.mxu0 0.0
        %1939 = vmatpush.msra.mxu0 0.0
        %1940 = vmatpush.msra.mxu0 0.0
        %v1941 = vand.u32 %v292, 4294901760
        %1942 = vmatpush.msra.mxu0 %v1941
        %v1943 = vand.u32 %v284, 4294901760
        %1944 = vmatpush.msra.mxu0 %v1943
        %v1945 = vand.u32 %v276, 4294901760
        %1946 = vmatpush.msra.mxu0 %v1945
        %v1947 = vand.u32 %v268, 4294901760
        %1948 = vmatpush.msra.mxu0 %v1947
        %v1949 = vand.u32 %v295, 4294901760
        %v1950 = vsub.f32 %v295, %v1949
        %v1951 = vand.u32 %v1950, 4294901760
        %1952 = vmatmul.f32.gmra.mxu0 %v1951
        %v1953 = vpop.f32.mrf.mxu0
        %v1954 = vadd.f32 %v1922, %v1953
        %v1955 = vand.u32 %v298, 4294901760
        %v1956 = vsub.f32 %v298, %v1955
        %v1957 = vand.u32 %v1956, 4294901760
        %1958 = vmatmul.f32.gmra.mxu0 %v1957
        %v1959 = vpop.f32.mrf.mxu0
        %v1960 = vadd.f32 %v1927, %v1959
        %1961 = vdwg.mxu0
        %1962 = vmatpush.msra.mxu0 0.0
        %1963 = vmatpush.msra.mxu0 0.0
        %1964 = vmatpush.msra.mxu0 0.0
        %1965 = vmatpush.msra.mxu0 0.0
        %1966 = vmatpush.msra.mxu0 0.0
        %1967 = vmatpush.msra.mxu0 0.0
        %1968 = vmatpush.msra.mxu0 0.0
        %1969 = vmatpush.msra.mxu0 0.0
        %1970 = vmatpush.msra.mxu0 0.0
        %1971 = vmatpush.msra.mxu0 0.0
        %1972 = vmatpush.msra.mxu0 0.0
        %1973 = vmatpush.msra.mxu0 0.0
        %v1974 = vand.u32 %v292, 4294901760
        %v1975 = vsub.f32 %v292, %v1974
        %v1976 = vand.u32 %v1975, 4294901760
        %1977 = vmatpush.msra.mxu0 %v1976
        %v1978 = vand.u32 %v284, 4294901760
        %v1979 = vsub.f32 %v284, %v1978
        %v1980 = vand.u32 %v1979, 4294901760
        %1981 = vmatpush.msra.mxu0 %v1980
        %v1982 = vand.u32 %v276, 4294901760
        %v1983 = vsub.f32 %v276, %v1982
        %v1984 = vand.u32 %v1983, 4294901760
        %1985 = vmatpush.msra.mxu0 %v1984
        %v1986 = vand.u32 %v268, 4294901760
        %v1987 = vsub.f32 %v268, %v1986
        %v1988 = vand.u32 %v1987, 4294901760
        %1989 = vmatpush.msra.mxu0 %v1988
        %v1990 = vand.u32 %v295, 4294901760
        %1991 = vmatmul.f32.gmra.mxu0 %v1990
        %v1992 = vpop.f32.mrf.mxu0
        %v1993 = vadd.f32 %v1954, %v1992
        %v1994 = vand.u32 %v298, 4294901760
        %1995 = vmatmul.f32.gmra.mxu0 %v1994
        %v1996 = vpop.f32.mrf.mxu0
        %v1997 = vadd.f32 %v1960, %v1996
        %1998 = vdwg.mxu0
        %1999 = vmatpush.msra.mxu0 0.0
        %2000 = vmatpush.msra.mxu0 0.0
        %2001 = vmatpush.msra.mxu0 0.0
        %2002 = vmatpush.msra.mxu0 0.0
        %2003 = vmatpush.msra.mxu0 0.0
        %2004 = vmatpush.msra.mxu0 0.0
        %2005 = vmatpush.msra.mxu0 0.0
        %2006 = vmatpush.msra.mxu0 0.0
        %2007 = vmatpush.msra.mxu0 0.0
        %2008 = vmatpush.msra.mxu0 0.0
        %2009 = vmatpush.msra.mxu0 0.0
        %2010 = vmatpush.msra.mxu0 0.0
        %v2011 = vand.u32 %v292, 4294901760
        %2012 = vmatpush.msra.mxu0 %v2011
        %v2013 = vand.u32 %v284, 4294901760
        %2014 = vmatpush.msra.mxu0 %v2013
        %v2015 = vand.u32 %v276, 4294901760
        %2016 = vmatpush.msra.mxu0 %v2015
        %v2017 = vand.u32 %v268, 4294901760
        %2018 = vmatpush.msra.mxu0 %v2017
        %v2019 = vand.u32 %v295, 4294901760
        %2020 = vmatmul.f32.gmra.mxu0 %v2019
        %v2021 = vpop.f32.mrf.mxu0
        %v2022 = vadd.f32 %v1993, %v2021
        %v2023 = vand.u32 %v298, 4294901760
        %2024 = vmatmul.f32.gmra.mxu0 %v2023
        %v2025 = vpop.f32.mrf.mxu0
        %v2026 = vadd.f32 %v1997, %v2025
        %2027 = vdwg.mxu0
        %v2028 = vmax.f32 %v510, %v514
        %v2029 = vrot.slane %v2028, 4
        %v2030 = vmax.f32 %v2028, %v2029
        %v2031 = vrot.slane %v2030, 2
        %v2032 = vmax.f32 %v2030, %v2031
        %v2033 = vrot.slane %v2032, 1
        %v2034 = vmax.f32 %v2032, %v2033
        %v2035 = vmax.f32 %v726, %v730
        %v2036 = vrot.slane %v2035, 4
        %v2037 = vmax.f32 %v2035, %v2036
        %v2038 = vrot.slane %v2037, 2
        %v2039 = vmax.f32 %v2037, %v2038
        %v2040 = vrot.slane %v2039, 1
        %v2041 = vmax.f32 %v2039, %v2040
        %v2042 = vmax.f32 %v942, %v946
        %v2043 = vrot.slane %v2042, 4
        %v2044 = vmax.f32 %v2042, %v2043
        %v2045 = vrot.slane %v2044, 2
        %v2046 = vmax.f32 %v2044, %v2045
        %v2047 = vrot.slane %v2046, 1
        %v2048 = vmax.f32 %v2046, %v2047
        %v2049 = vmax.f32 %v1158, %v1162
        %v2050 = vrot.slane %v2049, 4
        %v2051 = vmax.f32 %v2049, %v2050
        %v2052 = vrot.slane %v2051, 2
        %v2053 = vmax.f32 %v2051, %v2052
        %v2054 = vrot.slane %v2053, 1
        %v2055 = vmax.f32 %v2053, %v2054
        %v2056 = vmax.f32 %v1374, %v1378
        %v2057 = vrot.slane %v2056, 4
        %v2058 = vmax.f32 %v2056, %v2057
        %v2059 = vrot.slane %v2058, 2
        %v2060 = vmax.f32 %v2058, %v2059
        %v2061 = vrot.slane %v2060, 1
        %v2062 = vmax.f32 %v2060, %v2061
        %v2063 = vmax.f32 %v1590, %v1594
        %v2064 = vrot.slane %v2063, 4
        %v2065 = vmax.f32 %v2063, %v2064
        %v2066 = vrot.slane %v2065, 2
        %v2067 = vmax.f32 %v2065, %v2066
        %v2068 = vrot.slane %v2067, 1
        %v2069 = vmax.f32 %v2067, %v2068
        %v2070 = vmax.f32 %v1806, %v1810
        %v2071 = vrot.slane %v2070, 4
        %v2072 = vmax.f32 %v2070, %v2071
        %v2073 = vrot.slane %v2072, 2
        %v2074 = vmax.f32 %v2072, %v2073
        %v2075 = vrot.slane %v2074, 1
        %v2076 = vmax.f32 %v2074, %v2075
        %v2077 = vmax.f32 %v2022, %v2026
        %v2078 = vrot.slane %v2077, 4
        %v2079 = vmax.f32 %v2077, %v2078
        %v2080 = vrot.slane %v2079, 2
        %v2081 = vmax.f32 %v2079, %v2080
        %v2082 = vrot.slane %v2081, 1
        %v2083 = vmax.f32 %v2081, %v2082
        %v2084 = vsub.f32 %v510, %v2034
        %v2085 = vsub.f32 %v726, %v2041
        %v2086 = vsub.f32 %v942, %v2048
        %v2087 = vsub.f32 %v1158, %v2055
        %v2088 = vsub.f32 %v1374, %v2062
        %v2089 = vsub.f32 %v1590, %v2069
        %v2090 = vsub.f32 %v1806, %v2076
        %v2091 = vsub.f32 %v2022, %v2083
        %v2092 = vsub.f32 %v514, %v2034
        %v2093 = vsub.f32 %v730, %v2041
        %v2094 = vsub.f32 %v946, %v2048
        %v2095 = vsub.f32 %v1162, %v2055
        %v2096 = vsub.f32 %v1378, %v2062
        %v2097 = vsub.f32 %v1594, %v2069
        %v2098 = vsub.f32 %v1810, %v2076
        %v2099 = vsub.f32 %v2026, %v2083
        %v2100 = vmul.f32 %v2084, 1.442695
        %v2101 = vpow.pop %v2100
        %v2102 = vmul.f32 %v2085, 1.442695
        %v2103 = vpow.pop %v2102
        %v2104 = vmul.f32 %v2086, 1.442695
        %v2105 = vpow.pop %v2104
        %v2106 = vmul.f32 %v2087, 1.442695
        %v2107 = vpow.pop %v2106
        %v2108 = vmul.f32 %v2088, 1.442695
        %v2109 = vpow.pop %v2108
        %v2110 = vmul.f32 %v2089, 1.442695
        %v2111 = vpow.pop %v2110
        %v2112 = vmul.f32 %v2090, 1.442695
        %v2113 = vpow.pop %v2112
        %v2114 = vmul.f32 %v2091, 1.442695
        %v2115 = vpow.pop %v2114
        %v2116 = vmul.f32 %v2092, 1.442695
        %v2117 = vpow.pop %v2116
        %v2118 = vmul.f32 %v2093, 1.442695
        %v2119 = vpow.pop %v2118
        %v2120 = vmul.f32 %v2094, 1.442695
        %v2121 = vpow.pop %v2120
        %v2122 = vmul.f32 %v2095, 1.442695
        %v2123 = vpow.pop %v2122
        %v2124 = vmul.f32 %v2096, 1.442695
        %v2125 = vpow.pop %v2124
        %v2126 = vmul.f32 %v2097, 1.442695
        %v2127 = vpow.pop %v2126
        %v2128 = vmul.f32 %v2098, 1.442695
        %v2129 = vpow.pop %v2128
        %v2130 = vmul.f32 %v2099, 1.442695
        %v2131 = vpow.pop %v2130
        %v2132 = vadd.f32 %v2101, %v2117
        %v2133 = vrot.slane %v2132, 4
        %v2134 = vadd.f32 %v2132, %v2133
        %v2135 = vrot.slane %v2134, 2
        %v2136 = vadd.f32 %v2134, %v2135
        %v2137 = vrot.slane %v2136, 1
        %v2138 = vadd.f32 %v2136, %v2137
        %v2139 = vadd.f32 %v2103, %v2119
        %v2140 = vrot.slane %v2139, 4
        %v2141 = vadd.f32 %v2139, %v2140
        %v2142 = vrot.slane %v2141, 2
        %v2143 = vadd.f32 %v2141, %v2142
        %v2144 = vrot.slane %v2143, 1
        %v2145 = vadd.f32 %v2143, %v2144
        %v2146 = vadd.f32 %v2105, %v2121
        %v2147 = vrot.slane %v2146, 4
        %v2148 = vadd.f32 %v2146, %v2147
        %v2149 = vrot.slane %v2148, 2
        %v2150 = vadd.f32 %v2148, %v2149
        %v2151 = vrot.slane %v2150, 1
        %v2152 = vadd.f32 %v2150, %v2151
        %v2153 = vadd.f32 %v2107, %v2123
        %v2154 = vrot.slane %v2153, 4
        %v2155 = vadd.f32 %v2153, %v2154
        %v2156 = vrot.slane %v2155, 2
        %v2157 = vadd.f32 %v2155, %v2156
        %v2158 = vrot.slane %v2157, 1
        %v2159 = vadd.f32 %v2157, %v2158
        %v2160 = vadd.f32 %v2109, %v2125
        %v2161 = vrot.slane %v2160, 4
        %v2162 = vadd.f32 %v2160, %v2161
        %v2163 = vrot.slane %v2162, 2
        %v2164 = vadd.f32 %v2162, %v2163
        %v2165 = vrot.slane %v2164, 1
        %v2166 = vadd.f32 %v2164, %v2165
        %v2167 = vadd.f32 %v2111, %v2127
        %v2168 = vrot.slane %v2167, 4
        %v2169 = vadd.f32 %v2167, %v2168
        %v2170 = vrot.slane %v2169, 2
        %v2171 = vadd.f32 %v2169, %v2170
        %v2172 = vrot.slane %v2171, 1
        %v2173 = vadd.f32 %v2171, %v2172
        %v2174 = vadd.f32 %v2113, %v2129
        %v2175 = vrot.slane %v2174, 4
        %v2176 = vadd.f32 %v2174, %v2175
        %v2177 = vrot.slane %v2176, 2
        %v2178 = vadd.f32 %v2176, %v2177
        %v2179 = vrot.slane %v2178, 1
        %v2180 = vadd.f32 %v2178, %v2179
        %v2181 = vadd.f32 %v2115, %v2131
        %v2182 = vrot.slane %v2181, 4
        %v2183 = vadd.f32 %v2181, %v2182
        %v2184 = vrot.slane %v2183, 2
        %v2185 = vadd.f32 %v2183, %v2184
        %v2186 = vrot.slane %v2185, 1
        %v2187 = vadd.f32 %v2185, %v2186
        %v2188 = vrcp.pop %v2138
        %v2189 = vmul.f32 %v2138, %v2188
        %v2190 = vsub.f32 1.0, %v2189
        %v2191 = vmul.f32 %v2188, %v2190
        %v2192 = vadd.f32 %v2188, %v2191
        %vm2193 = vweird.f32 %v2138
        %vm2194 = vweird.f32 %v2188
        %vm2195 = vmor %vm2193, %vm2194
        %v2196 = vsel %vm2195, %v2188, %v2192
        %v2197 = vand.u32 2147483647, %v2138
        %vm2198 = vcmp.eq.f32.partialorder %v2197, 8.507059e+37
        %v2199 = vand.u32 %v2138, 2147483648
        %v2200 = vor.u32 1.1754944e-38, %v2199
        %v2201 = vsel %vm2198, %v2200, %v2196
        %v2202 = vrcp.pop %v2145
        %v2203 = vmul.f32 %v2145, %v2202
        %v2204 = vsub.f32 1.0, %v2203
        %v2205 = vmul.f32 %v2202, %v2204
        %v2206 = vadd.f32 %v2202, %v2205
        %vm2207 = vweird.f32 %v2145
        %vm2208 = vweird.f32 %v2202
        %vm2209 = vmor %vm2207, %vm2208
        %v2210 = vsel %vm2209, %v2202, %v2206
        %v2211 = vand.u32 2147483647, %v2145
        %vm2212 = vcmp.eq.f32.partialorder %v2211, 8.507059e+37
        %v2213 = vand.u32 %v2145, 2147483648
        %v2214 = vor.u32 1.1754944e-38, %v2213
        %v2215 = vsel %vm2212, %v2214, %v2210
        %v2216 = vrcp.pop %v2152
        %v2217 = vmul.f32 %v2152, %v2216
        %v2218 = vsub.f32 1.0, %v2217
        %v2219 = vmul.f32 %v2216, %v2218
        %v2220 = vadd.f32 %v2216, %v2219
        %vm2221 = vweird.f32 %v2152
        %vm2222 = vweird.f32 %v2216
        %vm2223 = vmor %vm2221, %vm2222
        %v2224 = vsel %vm2223, %v2216, %v2220
        %v2225 = vand.u32 2147483647, %v2152
        %vm2226 = vcmp.eq.f32.partialorder %v2225, 8.507059e+37
        %v2227 = vand.u32 %v2152, 2147483648
        %v2228 = vor.u32 1.1754944e-38, %v2227
        %v2229 = vsel %vm2226, %v2228, %v2224
        %v2230 = vrcp.pop %v2159
        %v2231 = vmul.f32 %v2159, %v2230
        %v2232 = vsub.f32 1.0, %v2231
        %v2233 = vmul.f32 %v2230, %v2232
        %v2234 = vadd.f32 %v2230, %v2233
        %vm2235 = vweird.f32 %v2159
        %vm2236 = vweird.f32 %v2230
        %vm2237 = vmor %vm2235, %vm2236
        %v2238 = vsel %vm2237, %v2230, %v2234
        %v2239 = vand.u32 2147483647, %v2159
        %vm2240 = vcmp.eq.f32.partialorder %v2239, 8.507059e+37
        %v2241 = vand.u32 %v2159, 2147483648
        %v2242 = vor.u32 1.1754944e-38, %v2241
        %v2243 = vsel %vm2240, %v2242, %v2238
        %v2244 = vrcp.pop %v2166
        %v2245 = vmul.f32 %v2166, %v2244
        %v2246 = vsub.f32 1.0, %v2245
        %v2247 = vmul.f32 %v2244, %v2246
        %v2248 = vadd.f32 %v2244, %v2247
        %vm2249 = vweird.f32 %v2166
        %vm2250 = vweird.f32 %v2244
        %vm2251 = vmor %vm2249, %vm2250
        %v2252 = vsel %vm2251, %v2244, %v2248
        %v2253 = vand.u32 2147483647, %v2166
        %vm2254 = vcmp.eq.f32.partialorder %v2253, 8.507059e+37
        %v2255 = vand.u32 %v2166, 2147483648
        %v2256 = vor.u32 1.1754944e-38, %v2255
        %v2257 = vsel %vm2254, %v2256, %v2252
        %v2258 = vrcp.pop %v2173
        %v2259 = vmul.f32 %v2173, %v2258
        %v2260 = vsub.f32 1.0, %v2259
        %v2261 = vmul.f32 %v2258, %v2260
        %v2262 = vadd.f32 %v2258, %v2261
        %vm2263 = vweird.f32 %v2173
        %vm2264 = vweird.f32 %v2258
        %vm2265 = vmor %vm2263, %vm2264
        %v2266 = vsel %vm2265, %v2258, %v2262
        %v2267 = vand.u32 2147483647, %v2173
        %vm2268 = vcmp.eq.f32.partialorder %v2267, 8.507059e+37
        %v2269 = vand.u32 %v2173, 2147483648
        %v2270 = vor.u32 1.1754944e-38, %v2269
        %v2271 = vsel %vm2268, %v2270, %v2266
        %v2272 = vrcp.pop %v2180
        %v2273 = vmul.f32 %v2180, %v2272
        %v2274 = vsub.f32 1.0, %v2273
        %v2275 = vmul.f32 %v2272, %v2274
        %v2276 = vadd.f32 %v2272, %v2275
        %vm2277 = vweird.f32 %v2180
        %vm2278 = vweird.f32 %v2272
        %vm2279 = vmor %vm2277, %vm2278
        %v2280 = vsel %vm2279, %v2272, %v2276
        %v2281 = vand.u32 2147483647, %v2180
        %vm2282 = vcmp.eq.f32.partialorder %v2281, 8.507059e+37
        %v2283 = vand.u32 %v2180, 2147483648
        %v2284 = vor.u32 1.1754944e-38, %v2283
        %v2285 = vsel %vm2282, %v2284, %v2280
        %v2286 = vrcp.pop %v2187
        %v2287 = vmul.f32 %v2187, %v2286
        %v2288 = vsub.f32 1.0, %v2287
        %v2289 = vmul.f32 %v2286, %v2288
        %v2290 = vadd.f32 %v2286, %v2289
        %vm2291 = vweird.f32 %v2187
        %vm2292 = vweird.f32 %v2286
        %vm2293 = vmor %vm2291, %vm2292
        %v2294 = vsel %vm2293, %v2286, %v2290
        %v2295 = vand.u32 2147483647, %v2187
        %vm2296 = vcmp.eq.f32.partialorder %v2295, 8.507059e+37
        %v2297 = vand.u32 %v2187, 2147483648
        %v2298 = vor.u32 1.1754944e-38, %v2297
        %v2299 = vsel %vm2296, %v2298, %v2294
        %v2300 = vmul.f32 %v2101, %v2201
        %v2301 = vmul.f32 %v2103, %v2215
        %v2302 = vmul.f32 %v2105, %v2229
        %v2303 = vmul.f32 %v2107, %v2243
        %v2304 = vmul.f32 %v2109, %v2257
        %v2305 = vmul.f32 %v2111, %v2271
        %v2306 = vmul.f32 %v2113, %v2285
        %v2307 = vmul.f32 %v2115, %v2299
        %v2308 = vmul.f32 %v2117, %v2201
        %v2309 = vmul.f32 %v2119, %v2215
        %v2310 = vmul.f32 %v2121, %v2229
        %v2311 = vmul.f32 %v2123, %v2243
        %v2312 = vmul.f32 %v2125, %v2257
        %v2313 = vmul.f32 %v2127, %v2271
        %v2314 = vmul.f32 %v2129, %v2285
        %v2315 = vmul.f32 %v2131, %v2299
        %v2316 = vmul.f32 %v2300, 1.442695
        %v2317 = vpow.pop %v2316
        %v2318 = vmul.f32 %v2301, 1.442695
        %v2319 = vpow.pop %v2318
        %v2320 = vmul.f32 %v2302, 1.442695
        %v2321 = vpow.pop %v2320
        %v2322 = vmul.f32 %v2303, 1.442695
        %v2323 = vpow.pop %v2322
        %v2324 = vmul.f32 %v2304, 1.442695
        %v2325 = vpow.pop %v2324
        %v2326 = vmul.f32 %v2305, 1.442695
        %v2327 = vpow.pop %v2326
        %v2328 = vmul.f32 %v2306, 1.442695
        %v2329 = vpow.pop %v2328
        %v2330 = vmul.f32 %v2307, 1.442695
        %v2331 = vpow.pop %v2330
        %v2332 = vmul.f32 %v2308, 1.442695
        %v2333 = vpow.pop %v2332
        %v2334 = vmul.f32 %v2309, 1.442695
        %v2335 = vpow.pop %v2334
        %v2336 = vmul.f32 %v2310, 1.442695
        %v2337 = vpow.pop %v2336
        %v2338 = vmul.f32 %v2311, 1.442695
        %v2339 = vpow.pop %v2338
        %v2340 = vmul.f32 %v2312, 1.442695
        %v2341 = vpow.pop %v2340
        %v2342 = vmul.f32 %v2313, 1.442695
        %v2343 = vpow.pop %v2342
        %v2344 = vmul.f32 %v2314, 1.442695
        %v2345 = vpow.pop %v2344
        %v2346 = vmul.f32 %v2315, 1.442695
        %v2347 = vpow.pop %v2346
        %v2348 = vadd.f32 %v2317, %v2333
        %v2349 = vrot.slane %v2348, 4
        %v2350 = vadd.f32 %v2348, %v2349
        %v2351 = vrot.slane %v2350, 2
        %v2352 = vadd.f32 %v2350, %v2351
        %v2353 = vrot.slane %v2352, 1
        %v2354 = vadd.f32 %v2352, %v2353
        %v2355 = vadd.f32 %v2319, %v2335
        %v2356 = vrot.slane %v2355, 4
        %v2357 = vadd.f32 %v2355, %v2356
        %v2358 = vrot.slane %v2357, 2
        %v2359 = vadd.f32 %v2357, %v2358
        %v2360 = vrot.slane %v2359, 1
        %v2361 = vadd.f32 %v2359, %v2360
        %v2362 = vadd.f32 %v2321, %v2337
        %v2363 = vrot.slane %v2362, 4
        %v2364 = vadd.f32 %v2362, %v2363
        %v2365 = vrot.slane %v2364, 2
        %v2366 = vadd.f32 %v2364, %v2365
        %v2367 = vrot.slane %v2366, 1
        %v2368 = vadd.f32 %v2366, %v2367
        %v2369 = vadd.f32 %v2323, %v2339
        %v2370 = vrot.slane %v2369, 4
        %v2371 = vadd.f32 %v2369, %v2370
        %v2372 = vrot.slane %v2371, 2
        %v2373 = vadd.f32 %v2371, %v2372
        %v2374 = vrot.slane %v2373, 1
        %v2375 = vadd.f32 %v2373, %v2374
        %v2376 = vadd.f32 %v2325, %v2341
        %v2377 = vrot.slane %v2376, 4
        %v2378 = vadd.f32 %v2376, %v2377
        %v2379 = vrot.slane %v2378, 2
        %v2380 = vadd.f32 %v2378, %v2379
        %v2381 = vrot.slane %v2380, 1
        %v2382 = vadd.f32 %v2380, %v2381
        %v2383 = vadd.f32 %v2327, %v2343
        %v2384 = vrot.slane %v2383, 4
        %v2385 = vadd.f32 %v2383, %v2384
        %v2386 = vrot.slane %v2385, 2
        %v2387 = vadd.f32 %v2385, %v2386
        %v2388 = vrot.slane %v2387, 1
        %v2389 = vadd.f32 %v2387, %v2388
        %v2390 = vadd.f32 %v2329, %v2345
        %v2391 = vrot.slane %v2390, 4
        %v2392 = vadd.f32 %v2390, %v2391
        %v2393 = vrot.slane %v2392, 2
        %v2394 = vadd.f32 %v2392, %v2393
        %v2395 = vrot.slane %v2394, 1
        %v2396 = vadd.f32 %v2394, %v2395
        %v2397 = vadd.f32 %v2331, %v2347
        %v2398 = vrot.slane %v2397, 4
        %v2399 = vadd.f32 %v2397, %v2398
        %v2400 = vrot.slane %v2399, 2
        %v2401 = vadd.f32 %v2399, %v2400
        %v2402 = vrot.slane %v2401, 1
        %v2403 = vadd.f32 %v2401, %v2402
        %v2404 = vrcp.pop %v2354
        %v2405 = vrcp.pop %v2361
        %v2406 = vrcp.pop %v2368
        %v2407 = vrcp.pop %v2375
        %v2408 = vrcp.pop %v2382
        %v2409 = vrcp.pop %v2389
        %v2410 = vrcp.pop %v2396
        %v2411 = vrcp.pop %v2403
        %v2412 = vmul.f32 %v2317, %v2404
        %v2413 = vmul.f32 %v2319, %v2405
        %v2414 = vmul.f32 %v2321, %v2406
        %v2415 = vmul.f32 %v2323, %v2407
        %v2416 = vmul.f32 %v2325, %v2408
        %v2417 = vmul.f32 %v2327, %v2409
        %v2418 = vmul.f32 %v2329, %v2410
        %v2419 = vmul.f32 %v2331, %v2411
        %v2420 = vmul.f32 %v2333, %v2404
        %v2421 = vmul.f32 %v2335, %v2405
        %v2422 = vmul.f32 %v2337, %v2406
        %v2423 = vmul.f32 %v2339, %v2407
        %v2424 = vmul.f32 %v2341, %v2408
        %v2425 = vmul.f32 %v2343, %v2409
        %v2426 = vmul.f32 %v2345, %v2410
        %v2427 = vmul.f32 %v2347, %v2411
        %v2428 = vld [vmem:[%s2] sm:$0xff]
        %v2429 = vld [vmem:[%s2 + $0x8] sm:$0xff]
        %v2430 = vld [vmem:[%s2 + $0x10] sm:$0xff]
        %v2431 = vld [vmem:[%s2 + $0x18] sm:$0xff]
        %v2432 = vld [vmem:[%s2 + $0x20] sm:$0xff]
        %v2433 = vld [vmem:[%s2 + $0x28] sm:$0xff]
        %v2434 = vld [vmem:[%s2 + $0x30] sm:$0xff]
        %v2435 = vld [vmem:[%s2 + $0x38] sm:$0xff]
        %v2436 = vld [vmem:[%s2 + $0x40] sm:$0xff]
        %v2437 = vld [vmem:[%s2 + $0x48] sm:$0xff]
        %v2438 = vld [vmem:[%s2 + $0x50] sm:$0xff]
        %v2439 = vld [vmem:[%s2 + $0x58] sm:$0xff]
        %v2440 = vld [vmem:[%s2 + $0x60] sm:$0xff]
        %v2441 = vld [vmem:[%s2 + $0x68] sm:$0xff]
        %v2442 = vld [vmem:[%s2 + $0x70] sm:$0xff]
        %v2443 = vld [vmem:[%s2 + $0x78] sm:$0xff]
        %v2444 = vld [vmem:[%s2 + $0x80] sm:$0xff]
        %v2445 = vld [vmem:[%s2 + $0x88] sm:$0xff]
        %v2446 = vld [vmem:[%s2 + $0x90] sm:$0xff]
        %v2447 = vld [vmem:[%s2 + $0x98] sm:$0xff]
        %v2448 = vld [vmem:[%s2 + $0xa0] sm:$0xff]
        %v2449 = vld [vmem:[%s2 + $0xa8] sm:$0xff]
        %v2450 = vld [vmem:[%s2 + $0xb0] sm:$0xff]
        %v2451 = vld [vmem:[%s2 + $0xb8] sm:$0xff]
        %v2452 = vld [vmem:[%s2 + $0xc0] sm:$0xff]
        %v2453 = vld [vmem:[%s2 + $0xc8] sm:$0xff]
        %v2454 = vld [vmem:[%s2 + $0xd0] sm:$0xff]
        %v2455 = vld [vmem:[%s2 + $0xd8] sm:$0xff]
        %v2456 = vld [vmem:[%s2 + $0xe0] sm:$0xff]
        %v2457 = vld [vmem:[%s2 + $0xe8] sm:$0xff]
        %v2458 = vld [vmem:[%s2 + $0xf0] sm:$0xff]
        %v2459 = vld [vmem:[%s2 + $0xf8] sm:$0xff]
        %v2460 = vld [vmem:[%s2 + $0x100] sm:$0xff]
        %v2461 = vld [vmem:[%s2 + $0x108] sm:$0xff]
        %v2462 = vld [vmem:[%s2 + $0x110] sm:$0xff]
        %v2463 = vld [vmem:[%s2 + $0x118] sm:$0xff]
        %v2464 = vld [vmem:[%s2 + $0x120] sm:$0xff]
        %v2465 = vld [vmem:[%s2 + $0x128] sm:$0xff]
        %v2466 = vld [vmem:[%s2 + $0x130] sm:$0xff]
        %v2467 = vld [vmem:[%s2 + $0x138] sm:$0xff]
        %v2468 = vld [vmem:[%s2 + $0x140] sm:$0xff]
        %v2469 = vld [vmem:[%s2 + $0x148] sm:$0xff]
        %v2470 = vld [vmem:[%s2 + $0x150] sm:$0xff]
        %v2471 = vld [vmem:[%s2 + $0x158] sm:$0xff]
        %v2472 = vld [vmem:[%s2 + $0x160] sm:$0xff]
        %v2473 = vld [vmem:[%s2 + $0x168] sm:$0xff]
        %v2474 = vld [vmem:[%s2 + $0x170] sm:$0xff]
        %v2475 = vld [vmem:[%s2 + $0x178] sm:$0xff]
        %v2476 = vld [vmem:[%s2 + $0x180] sm:$0xff]
        %v2477 = vld [vmem:[%s2 + $0x188] sm:$0xff]
        %v2478 = vld [vmem:[%s2 + $0x190] sm:$0xff]
        %v2479 = vld [vmem:[%s2 + $0x198] sm:$0xff]
        %v2480 = vld [vmem:[%s2 + $0x1a0] sm:$0xff]
        %v2481 = vld [vmem:[%s2 + $0x1a8] sm:$0xff]
        %v2482 = vld [vmem:[%s2 + $0x1b0] sm:$0xff]
        %v2483 = vld [vmem:[%s2 + $0x1b8] sm:$0xff]
        %v2484 = vld [vmem:[%s2 + $0x1c0] sm:$0xff]
        %v2485 = vld [vmem:[%s2 + $0x1c8] sm:$0xff]
        %v2486 = vld [vmem:[%s2 + $0x1d0] sm:$0xff]
        %v2487 = vld [vmem:[%s2 + $0x1d8] sm:$0xff]
        %v2488 = vld [vmem:[%s2 + $0x1e0] sm:$0xff]
        %v2489 = vld [vmem:[%s2 + $0x1e8] sm:$0xff]
        %v2490 = vld [vmem:[%s2 + $0x1f0] sm:$0xff]
        %v2491 = vld [vmem:[%s2 + $0x1f8] sm:$0xff]
        %v2492 = vld [vmem:[%s2 + $0x200] sm:$0xff]
        %v2493 = vld [vmem:[%s2 + $0x208] sm:$0xff]
        %v2494 = vld [vmem:[%s2 + $0x210] sm:$0xff]
        %v2495 = vld [vmem:[%s2 + $0x218] sm:$0xff]
        %v2496 = vld [vmem:[%s2 + $0x220] sm:$0xff]
        %v2497 = vld [vmem:[%s2 + $0x228] sm:$0xff]
        %v2498 = vld [vmem:[%s2 + $0x230] sm:$0xff]
        %v2499 = vld [vmem:[%s2 + $0x238] sm:$0xff]
        %v2500 = vld [vmem:[%s2 + $0x240] sm:$0xff]
        %v2501 = vld [vmem:[%s2 + $0x248] sm:$0xff]
        %v2502 = vld [vmem:[%s2 + $0x250] sm:$0xff]
        %v2503 = vld [vmem:[%s2 + $0x258] sm:$0xff]
        %v2504 = vld [vmem:[%s2 + $0x260] sm:$0xff]
        %v2505 = vld [vmem:[%s2 + $0x268] sm:$0xff]
        %v2506 = vld [vmem:[%s2 + $0x270] sm:$0xff]
        %v2507 = vld [vmem:[%s2 + $0x278] sm:$0xff]
        %v2508 = vld [vmem:[%s2 + $0x280] sm:$0xff]
        %v2509 = vld [vmem:[%s2 + $0x288] sm:$0xff]
        %v2510 = vld [vmem:[%s2 + $0x290] sm:$0xff]
        %v2511 = vld [vmem:[%s2 + $0x298] sm:$0xff]
        %v2512 = vld [vmem:[%s2 + $0x2a0] sm:$0xff]
        %v2513 = vld [vmem:[%s2 + $0x2a8] sm:$0xff]
        %v2514 = vld [vmem:[%s2 + $0x2b0] sm:$0xff]
        %v2515 = vld [vmem:[%s2 + $0x2b8] sm:$0xff]
        %v2516 = vld [vmem:[%s2 + $0x2c0] sm:$0xff]
        %v2517 = vld [vmem:[%s2 + $0x2c8] sm:$0xff]
        %v2518 = vld [vmem:[%s2 + $0x2d0] sm:$0xff]
        %v2519 = vld [vmem:[%s2 + $0x2d8] sm:$0xff]
        %v2520 = vld [vmem:[%s2 + $0x2e0] sm:$0xff]
        %v2521 = vld [vmem:[%s2 + $0x2e8] sm:$0xff]
        %v2522 = vld [vmem:[%s2 + $0x2f0] sm:$0xff]
        %v2523 = vld [vmem:[%s2 + $0x2f8] sm:$0xff]
        %v2524 = vld [vmem:[%s2 + $0x300] sm:$0xff]
        %v2525 = vld [vmem:[%s2 + $0x308] sm:$0xff]
        %v2526 = vld [vmem:[%s2 + $0x310] sm:$0xff]
        %v2527 = vld [vmem:[%s2 + $0x318] sm:$0xff]
        %v2528 = vld [vmem:[%s2 + $0x320] sm:$0xff]
        %v2529 = vld [vmem:[%s2 + $0x328] sm:$0xff]
        %v2530 = vld [vmem:[%s2 + $0x330] sm:$0xff]
        %v2531 = vld [vmem:[%s2 + $0x338] sm:$0xff]
        %v2532 = vld [vmem:[%s2 + $0x340] sm:$0xff]
        %v2533 = vld [vmem:[%s2 + $0x348] sm:$0xff]
        %v2534 = vld [vmem:[%s2 + $0x350] sm:$0xff]
        %v2535 = vld [vmem:[%s2 + $0x358] sm:$0xff]
        %v2536 = vld [vmem:[%s2 + $0x360] sm:$0xff]
        %v2537 = vld [vmem:[%s2 + $0x368] sm:$0xff]
        %v2538 = vld [vmem:[%s2 + $0x370] sm:$0xff]
        %v2539 = vld [vmem:[%s2 + $0x378] sm:$0xff]
        %v2540 = vld [vmem:[%s2 + $0x380] sm:$0xff]
        %v2541 = vld [vmem:[%s2 + $0x388] sm:$0xff]
        %v2542 = vld [vmem:[%s2 + $0x390] sm:$0xff]
        %v2543 = vld [vmem:[%s2 + $0x398] sm:$0xff]
        %v2544 = vld [vmem:[%s2 + $0x3a0] sm:$0xff]
        %v2545 = vld [vmem:[%s2 + $0x3a8] sm:$0xff]
        %v2546 = vld [vmem:[%s2 + $0x3b0] sm:$0xff]
        %v2547 = vld [vmem:[%s2 + $0x3b8] sm:$0xff]
        %v2548 = vld [vmem:[%s2 + $0x3c0] sm:$0xff]
        %v2549 = vld [vmem:[%s2 + $0x3c8] sm:$0xff]
        %v2550 = vld [vmem:[%s2 + $0x3d0] sm:$0xff]
        %v2551 = vld [vmem:[%s2 + $0x3d8] sm:$0xff]
        %v2552 = vld [vmem:[%s2 + $0x3e0] sm:$0xff]
        %v2553 = vld [vmem:[%s2 + $0x3e8] sm:$0xff]
        %v2554 = vld [vmem:[%s2 + $0x3f0] sm:$0xff]
        %v2555 = vld [vmem:[%s2 + $0x3f8] sm:$0xff]
        %v2556 = vand.u32 %v2443, 4294901760
        %2557 = vmatpush.msra.mxu0 %v2556
        %v2558 = vand.u32 %v2442, 4294901760
        %2559 = vmatpush.msra.mxu0 %v2558
        %v2560 = vand.u32 %v2441, 4294901760
        %2561 = vmatpush.msra.mxu0 %v2560
        %v2562 = vand.u32 %v2440, 4294901760
        %2563 = vmatpush.msra.mxu0 %v2562
        %v2564 = vand.u32 %v2439, 4294901760
        %2565 = vmatpush.msra.mxu0 %v2564
        %v2566 = vand.u32 %v2438, 4294901760
        %2567 = vmatpush.msra.mxu0 %v2566
        %v2568 = vand.u32 %v2437, 4294901760
        %2569 = vmatpush.msra.mxu0 %v2568
        %v2570 = vand.u32 %v2436, 4294901760
        %2571 = vmatpush.msra.mxu0 %v2570
        %v2572 = vand.u32 %v2435, 4294901760
        %2573 = vmatpush.msra.mxu0 %v2572
        %v2574 = vand.u32 %v2434, 4294901760
        %2575 = vmatpush.msra.mxu0 %v2574
        %v2576 = vand.u32 %v2433, 4294901760
        %2577 = vmatpush.msra.mxu0 %v2576
        %v2578 = vand.u32 %v2432, 4294901760
        %2579 = vmatpush.msra.mxu0 %v2578
        %v2580 = vand.u32 %v2431, 4294901760
        %2581 = vmatpush.msra.mxu0 %v2580
        %v2582 = vand.u32 %v2430, 4294901760
        %2583 = vmatpush.msra.mxu0 %v2582
        %v2584 = vand.u32 %v2429, 4294901760
        %2585 = vmatpush.msra.mxu0 %v2584
        %v2586 = vand.u32 %v2428, 4294901760
        %2587 = vmatpush.msra.mxu0 %v2586
        %v2588 = vand.u32 %v2412, 4294901760
        %v2589 = vsub.f32 %v2412, %v2588
        %v2590 = vand.u32 %v2589, 4294901760
        %v2591 = vsub.f32 %v2589, %v2590
        %v2592 = vand.u32 %v2591, 4294901760
        %2593 = vmatmul.f32.gmra.mxu0 %v2592
        %v2594 = vpop.f32.mrf.mxu0
        %v2595 = vadd.f32 1e-08, %v2594
        %v2596 = vand.u32 %v2420, 4294901760
        %v2597 = vsub.f32 %v2420, %v2596
        %v2598 = vand.u32 %v2597, 4294901760
        %v2599 = vsub.f32 %v2597, %v2598
        %v2600 = vand.u32 %v2599, 4294901760
        %2601 = vmatmul.f32.gmra.mxu0 %v2600
        %v2602 = vpop.f32.mrf.mxu0
        %v2603 = vadd.f32 1e-08, %v2602
        %2604 = vdwg.mxu0
        %v2605 = vand.u32 %v2443, 4294901760
        %v2606 = vsub.f32 %v2443, %v2605
        %v2607 = vand.u32 %v2606, 4294901760
        %v2608 = vsub.f32 %v2606, %v2607
        %v2609 = vand.u32 %v2608, 4294901760
        %2610 = vmatpush.msra.mxu0 %v2609
        %v2611 = vand.u32 %v2442, 4294901760
        %v2612 = vsub.f32 %v2442, %v2611
        %v2613 = vand.u32 %v2612, 4294901760
        %v2614 = vsub.f32 %v2612, %v2613
        %v2615 = vand.u32 %v2614, 4294901760
        %2616 = vmatpush.msra.mxu0 %v2615
        %v2617 = vand.u32 %v2441, 4294901760
        %v2618 = vsub.f32 %v2441, %v2617
        %v2619 = vand.u32 %v2618, 4294901760
        %v2620 = vsub.f32 %v2618, %v2619
        %v2621 = vand.u32 %v2620, 4294901760
        %2622 = vmatpush.msra.mxu0 %v2621
        %v2623 = vand.u32 %v2440, 4294901760
        %v2624 = vsub.f32 %v2440, %v2623
        %v2625 = vand.u32 %v2624, 4294901760
        %v2626 = vsub.f32 %v2624, %v2625
        %v2627 = vand.u32 %v2626, 4294901760
        %2628 = vmatpush.msra.mxu0 %v2627
        %v2629 = vand.u32 %v2439, 4294901760
        %v2630 = vsub.f32 %v2439, %v2629
        %v2631 = vand.u32 %v2630, 4294901760
        %v2632 = vsub.f32 %v2630, %v2631
        %v2633 = vand.u32 %v2632, 4294901760
        %2634 = vmatpush.msra.mxu0 %v2633
        %v2635 = vand.u32 %v2438, 4294901760
        %v2636 = vsub.f32 %v2438, %v2635
        %v2637 = vand.u32 %v2636, 4294901760
        %v2638 = vsub.f32 %v2636, %v2637
        %v2639 = vand.u32 %v2638, 4294901760
        %2640 = vmatpush.msra.mxu0 %v2639
        %v2641 = vand.u32 %v2437, 4294901760
        %v2642 = vsub.f32 %v2437, %v2641
        %v2643 = vand.u32 %v2642, 4294901760
        %v2644 = vsub.f32 %v2642, %v2643
        %v2645 = vand.u32 %v2644, 4294901760
        %2646 = vmatpush.msra.mxu0 %v2645
        %v2647 = vand.u32 %v2436, 4294901760
        %v2648 = vsub.f32 %v2436, %v2647
        %v2649 = vand.u32 %v2648, 4294901760
        %v2650 = vsub.f32 %v2648, %v2649
        %v2651 = vand.u32 %v2650, 4294901760
        %2652 = vmatpush.msra.mxu0 %v2651
        %v2653 = vand.u32 %v2435, 4294901760
        %v2654 = vsub.f32 %v2435, %v2653
        %v2655 = vand.u32 %v2654, 4294901760
        %v2656 = vsub.f32 %v2654, %v2655
        %v2657 = vand.u32 %v2656, 4294901760
        %2658 = vmatpush.msra.mxu0 %v2657
        %v2659 = vand.u32 %v2434, 4294901760
        %v2660 = vsub.f32 %v2434, %v2659
        %v2661 = vand.u32 %v2660, 4294901760
        %v2662 = vsub.f32 %v2660, %v2661
        %v2663 = vand.u32 %v2662, 4294901760
        %2664 = vmatpush.msra.mxu0 %v2663
        %v2665 = vand.u32 %v2433, 4294901760
        %v2666 = vsub.f32 %v2433, %v2665
        %v2667 = vand.u32 %v2666, 4294901760
        %v2668 = vsub.f32 %v2666, %v2667
        %v2669 = vand.u32 %v2668, 4294901760
        %2670 = vmatpush.msra.mxu0 %v2669
        %v2671 = vand.u32 %v2432, 4294901760
        %v2672 = vsub.f32 %v2432, %v2671
        %v2673 = vand.u32 %v2672, 4294901760
        %v2674 = vsub.f32 %v2672, %v2673
        %v2675 = vand.u32 %v2674, 4294901760
        %2676 = vmatpush.msra.mxu0 %v2675
        %v2677 = vand.u32 %v2431, 4294901760
        %v2678 = vsub.f32 %v2431, %v2677
        %v2679 = vand.u32 %v2678, 4294901760
        %v2680 = vsub.f32 %v2678, %v2679
        %v2681 = vand.u32 %v2680, 4294901760
        %2682 = vmatpush.msra.mxu0 %v2681
        %v2683 = vand.u32 %v2430, 4294901760
        %v2684 = vsub.f32 %v2430, %v2683
        %v2685 = vand.u32 %v2684, 4294901760
        %v2686 = vsub.f32 %v2684, %v2685
        %v2687 = vand.u32 %v2686, 4294901760
        %2688 = vmatpush.msra.mxu0 %v2687
        %v2689 = vand.u32 %v2429, 4294901760
        %v2690 = vsub.f32 %v2429, %v2689
        %v2691 = vand.u32 %v2690, 4294901760
        %v2692 = vsub.f32 %v2690, %v2691
        %v2693 = vand.u32 %v2692, 4294901760
        %2694 = vmatpush.msra.mxu0 %v2693
        %v2695 = vand.u32 %v2428, 4294901760
        %v2696 = vsub.f32 %v2428, %v2695
        %v2697 = vand.u32 %v2696, 4294901760
        %v2698 = vsub.f32 %v2696, %v2697
        %v2699 = vand.u32 %v2698, 4294901760
        %2700 = vmatpush.msra.mxu0 %v2699
        %v2701 = vand.u32 %v2412, 4294901760
        %2702 = vmatmul.f32.gmra.mxu0 %v2701
        %v2703 = vpop.f32.mrf.mxu0
        %v2704 = vadd.f32 %v2595, %v2703
        %v2705 = vand.u32 %v2420, 4294901760
        %2706 = vmatmul.f32.gmra.mxu0 %v2705
        %v2707 = vpop.f32.mrf.mxu0
        %v2708 = vadd.f32 %v2603, %v2707
        %2709 = vdwg.mxu0
        %v2710 = vand.u32 %v2443, 4294901760
        %v2711 = vsub.f32 %v2443, %v2710
        %2712 = vmatpush.msra.mxu0 %v2711
        %v2713 = vand.u32 %v2442, 4294901760
        %v2714 = vsub.f32 %v2442, %v2713
        %2715 = vmatpush.msra.mxu0 %v2714
        %v2716 = vand.u32 %v2441, 4294901760
        %v2717 = vsub.f32 %v2441, %v2716
        %2718 = vmatpush.msra.mxu0 %v2717
        %v2719 = vand.u32 %v2440, 4294901760
        %v2720 = vsub.f32 %v2440, %v2719
        %2721 = vmatpush.msra.mxu0 %v2720
        %v2722 = vand.u32 %v2439, 4294901760
        %v2723 = vsub.f32 %v2439, %v2722
        %2724 = vmatpush.msra.mxu0 %v2723
        %v2725 = vand.u32 %v2438, 4294901760
        %v2726 = vsub.f32 %v2438, %v2725
        %2727 = vmatpush.msra.mxu0 %v2726
        %v2728 = vand.u32 %v2437, 4294901760
        %v2729 = vsub.f32 %v2437, %v2728
        %2730 = vmatpush.msra.mxu0 %v2729
        %v2731 = vand.u32 %v2436, 4294901760
        %v2732 = vsub.f32 %v2436, %v2731
        %2733 = vmatpush.msra.mxu0 %v2732
        %v2734 = vand.u32 %v2435, 4294901760
        %v2735 = vsub.f32 %v2435, %v2734
        %2736 = vmatpush.msra.mxu0 %v2735
        %v2737 = vand.u32 %v2434, 4294901760
        %v2738 = vsub.f32 %v2434, %v2737
        %2739 = vmatpush.msra.mxu0 %v2738
        %v2740 = vand.u32 %v2433, 4294901760
        %v2741 = vsub.f32 %v2433, %v2740
        %2742 = vmatpush.msra.mxu0 %v2741
        %v2743 = vand.u32 %v2432, 4294901760
        %v2744 = vsub.f32 %v2432, %v2743
        %2745 = vmatpush.msra.mxu0 %v2744
        %v2746 = vand.u32 %v2431, 4294901760
        %v2747 = vsub.f32 %v2431, %v2746
        %2748 = vmatpush.msra.mxu0 %v2747
        %v2749 = vand.u32 %v2430, 4294901760
        %v2750 = vsub.f32 %v2430, %v2749
        %2751 = vmatpush.msra.mxu0 %v2750
        %v2752 = vand.u32 %v2429, 4294901760
        %v2753 = vsub.f32 %v2429, %v2752
        %2754 = vmatpush.msra.mxu0 %v2753
        %v2755 = vand.u32 %v2428, 4294901760
        %v2756 = vsub.f32 %v2428, %v2755
        %2757 = vmatpush.msra.mxu0 %v2756
        %v2758 = vand.u32 %v2412, 4294901760
        %v2759 = vsub.f32 %v2412, %v2758
        %2760 = vmatmul.f32.gmra.mxu0 %v2759
        %v2761 = vpop.f32.mrf.mxu0
        %v2762 = vadd.f32 %v2704, %v2761
        %v2763 = vand.u32 %v2420, 4294901760
        %v2764 = vsub.f32 %v2420, %v2763
        %2765 = vmatmul.f32.gmra.mxu0 %v2764
        %v2766 = vpop.f32.mrf.mxu0
        %v2767 = vadd.f32 %v2708, %v2766
        %2768 = vdwg.mxu0
        %v2769 = vand.u32 %v2443, 4294901760
        %2770 = vmatpush.msra.mxu0 %v2769
        %v2771 = vand.u32 %v2442, 4294901760
        %2772 = vmatpush.msra.mxu0 %v2771
        %v2773 = vand.u32 %v2441, 4294901760
        %2774 = vmatpush.msra.mxu0 %v2773
        %v2775 = vand.u32 %v2440, 4294901760
        %2776 = vmatpush.msra.mxu0 %v2775
        %v2777 = vand.u32 %v2439, 4294901760
        %2778 = vmatpush.msra.mxu0 %v2777
        %v2779 = vand.u32 %v2438, 4294901760
        %2780 = vmatpush.msra.mxu0 %v2779
        %v2781 = vand.u32 %v2437, 4294901760
        %2782 = vmatpush.msra.mxu0 %v2781
        %v2783 = vand.u32 %v2436, 4294901760
        %2784 = vmatpush.msra.mxu0 %v2783
        %v2785 = vand.u32 %v2435, 4294901760
        %2786 = vmatpush.msra.mxu0 %v2785
        %v2787 = vand.u32 %v2434, 4294901760
        %2788 = vmatpush.msra.mxu0 %v2787
        %v2789 = vand.u32 %v2433, 4294901760
        %2790 = vmatpush.msra.mxu0 %v2789
        %v2791 = vand.u32 %v2432, 4294901760
        %2792 = vmatpush.msra.mxu0 %v2791
        %v2793 = vand.u32 %v2431, 4294901760
        %2794 = vmatpush.msra.mxu0 %v2793
        %v2795 = vand.u32 %v2430, 4294901760
        %2796 = vmatpush.msra.mxu0 %v2795
        %v2797 = vand.u32 %v2429, 4294901760
        %2798 = vmatpush.msra.mxu0 %v2797
        %v2799 = vand.u32 %v2428, 4294901760
        %2800 = vmatpush.msra.mxu0 %v2799
        %v2801 = vand.u32 %v2412, 4294901760
        %v2802 = vsub.f32 %v2412, %v2801
        %v2803 = vand.u32 %v2802, 4294901760
        %2804 = vmatmul.f32.gmra.mxu0 %v2803
        %v2805 = vpop.f32.mrf.mxu0
        %v2806 = vadd.f32 %v2762, %v2805
        %v2807 = vand.u32 %v2420, 4294901760
        %v2808 = vsub.f32 %v2420, %v2807
        %v2809 = vand.u32 %v2808, 4294901760
        %2810 = vmatmul.f32.gmra.mxu0 %v2809
        %v2811 = vpop.f32.mrf.mxu0
        %v2812 = vadd.f32 %v2767, %v2811
        %2813 = vdwg.mxu0
        %v2814 = vand.u32 %v2443, 4294901760
        %v2815 = vsub.f32 %v2443, %v2814
        %v2816 = vand.u32 %v2815, 4294901760
        %2817 = vmatpush.msra.mxu0 %v2816
        %v2818 = vand.u32 %v2442, 4294901760
        %v2819 = vsub.f32 %v2442, %v2818
        %v2820 = vand.u32 %v2819, 4294901760
        %2821 = vmatpush.msra.mxu0 %v2820
        %v2822 = vand.u32 %v2441, 4294901760
        %v2823 = vsub.f32 %v2441, %v2822
        %v2824 = vand.u32 %v2823, 4294901760
        %2825 = vmatpush.msra.mxu0 %v2824
        %v2826 = vand.u32 %v2440, 4294901760
        %v2827 = vsub.f32 %v2440, %v2826
        %v2828 = vand.u32 %v2827, 4294901760
        %2829 = vmatpush.msra.mxu0 %v2828
        %v2830 = vand.u32 %v2439, 4294901760
        %v2831 = vsub.f32 %v2439, %v2830
        %v2832 = vand.u32 %v2831, 4294901760
        %2833 = vmatpush.msra.mxu0 %v2832
        %v2834 = vand.u32 %v2438, 4294901760
        %v2835 = vsub.f32 %v2438, %v2834
        %v2836 = vand.u32 %v2835, 4294901760
        %2837 = vmatpush.msra.mxu0 %v2836
        %v2838 = vand.u32 %v2437, 4294901760
        %v2839 = vsub.f32 %v2437, %v2838
        %v2840 = vand.u32 %v2839, 4294901760
        %2841 = vmatpush.msra.mxu0 %v2840
        %v2842 = vand.u32 %v2436, 4294901760
        %v2843 = vsub.f32 %v2436, %v2842
        %v2844 = vand.u32 %v2843, 4294901760
        %2845 = vmatpush.msra.mxu0 %v2844
        %v2846 = vand.u32 %v2435, 4294901760
        %v2847 = vsub.f32 %v2435, %v2846
        %v2848 = vand.u32 %v2847, 4294901760
        %2849 = vmatpush.msra.mxu0 %v2848
        %v2850 = vand.u32 %v2434, 4294901760
        %v2851 = vsub.f32 %v2434, %v2850
        %v2852 = vand.u32 %v2851, 4294901760
        %2853 = vmatpush.msra.mxu0 %v2852
        %v2854 = vand.u32 %v2433, 4294901760
        %v2855 = vsub.f32 %v2433, %v2854
        %v2856 = vand.u32 %v2855, 4294901760
        %2857 = vmatpush.msra.mxu0 %v2856
        %v2858 = vand.u32 %v2432, 4294901760
        %v2859 = vsub.f32 %v2432, %v2858
        %v2860 = vand.u32 %v2859, 4294901760
        %2861 = vmatpush.msra.mxu0 %v2860
        %v2862 = vand.u32 %v2431, 4294901760
        %v2863 = vsub.f32 %v2431, %v2862
        %v2864 = vand.u32 %v2863, 4294901760
        %2865 = vmatpush.msra.mxu0 %v2864
        %v2866 = vand.u32 %v2430, 4294901760
        %v2867 = vsub.f32 %v2430, %v2866
        %v2868 = vand.u32 %v2867, 4294901760
        %2869 = vmatpush.msra.mxu0 %v2868
        %v2870 = vand.u32 %v2429, 4294901760
        %v2871 = vsub.f32 %v2429, %v2870
        %v2872 = vand.u32 %v2871, 4294901760
        %2873 = vmatpush.msra.mxu0 %v2872
        %v2874 = vand.u32 %v2428, 4294901760
        %v2875 = vsub.f32 %v2428, %v2874
        %v2876 = vand.u32 %v2875, 4294901760
        %2877 = vmatpush.msra.mxu0 %v2876
        %v2878 = vand.u32 %v2412, 4294901760
        %2879 = vmatmul.f32.gmra.mxu0 %v2878
        %v2880 = vpop.f32.mrf.mxu0
        %v2881 = vadd.f32 %v2806, %v2880
        %v2882 = vand.u32 %v2420, 4294901760
        %2883 = vmatmul.f32.gmra.mxu0 %v2882
        %v2884 = vpop.f32.mrf.mxu0
        %v2885 = vadd.f32 %v2812, %v2884
        %2886 = vdwg.mxu0
        %v2887 = vand.u32 %v2443, 4294901760
        %2888 = vmatpush.msra.mxu0 %v2887
        %v2889 = vand.u32 %v2442, 4294901760
        %2890 = vmatpush.msra.mxu0 %v2889
        %v2891 = vand.u32 %v2441, 4294901760
        %2892 = vmatpush.msra.mxu0 %v2891
        %v2893 = vand.u32 %v2440, 4294901760
        %2894 = vmatpush.msra.mxu0 %v2893
        %v2895 = vand.u32 %v2439, 4294901760
        %2896 = vmatpush.msra.mxu0 %v2895
        %v2897 = vand.u32 %v2438, 4294901760
        %2898 = vmatpush.msra.mxu0 %v2897
        %v2899 = vand.u32 %v2437, 4294901760
        %2900 = vmatpush.msra.mxu0 %v2899
        %v2901 = vand.u32 %v2436, 4294901760
        %2902 = vmatpush.msra.mxu0 %v2901
        %v2903 = vand.u32 %v2435, 4294901760
        %2904 = vmatpush.msra.mxu0 %v2903
        %v2905 = vand.u32 %v2434, 4294901760
        %2906 = vmatpush.msra.mxu0 %v2905
        %v2907 = vand.u32 %v2433, 4294901760
        %2908 = vmatpush.msra.mxu0 %v2907
        %v2909 = vand.u32 %v2432, 4294901760
        %2910 = vmatpush.msra.mxu0 %v2909
        %v2911 = vand.u32 %v2431, 4294901760
        %2912 = vmatpush.msra.mxu0 %v2911
        %v2913 = vand.u32 %v2430, 4294901760
        %2914 = vmatpush.msra.mxu0 %v2913
        %v2915 = vand.u32 %v2429, 4294901760
        %2916 = vmatpush.msra.mxu0 %v2915
        %v2917 = vand.u32 %v2428, 4294901760
        %2918 = vmatpush.msra.mxu0 %v2917
        %v2919 = vand.u32 %v2412, 4294901760
        %2920 = vmatmul.f32.gmra.mxu0 %v2919
        %v2921 = vpop.f32.mrf.mxu0
        %v2922 = vadd.f32 %v2881, %v2921
        %v2923 = vand.u32 %v2420, 4294901760
        %2924 = vmatmul.f32.gmra.mxu0 %v2923
        %v2925 = vpop.f32.mrf.mxu0
        %v2926 = vadd.f32 %v2885, %v2925
        %2927 = vdwg.mxu0
        %v2928 = vand.u32 %v2459, 4294901760
        %2929 = vmatpush.msra.mxu0 %v2928
        %v2930 = vand.u32 %v2458, 4294901760
        %2931 = vmatpush.msra.mxu0 %v2930
        %v2932 = vand.u32 %v2457, 4294901760
        %2933 = vmatpush.msra.mxu0 %v2932
        %v2934 = vand.u32 %v2456, 4294901760
        %2935 = vmatpush.msra.mxu0 %v2934
        %v2936 = vand.u32 %v2455, 4294901760
        %2937 = vmatpush.msra.mxu0 %v2936
        %v2938 = vand.u32 %v2454, 4294901760
        %2939 = vmatpush.msra.mxu0 %v2938
        %v2940 = vand.u32 %v2453, 4294901760
        %2941 = vmatpush.msra.mxu0 %v2940
        %v2942 = vand.u32 %v2452, 4294901760
        %2943 = vmatpush.msra.mxu0 %v2942
        %v2944 = vand.u32 %v2451, 4294901760
        %2945 = vmatpush.msra.mxu0 %v2944
        %v2946 = vand.u32 %v2450, 4294901760
        %2947 = vmatpush.msra.mxu0 %v2946
        %v2948 = vand.u32 %v2449, 4294901760
        %2949 = vmatpush.msra.mxu0 %v2948
        %v2950 = vand.u32 %v2448, 4294901760
        %2951 = vmatpush.msra.mxu0 %v2950
        %v2952 = vand.u32 %v2447, 4294901760
        %2953 = vmatpush.msra.mxu0 %v2952
        %v2954 = vand.u32 %v2446, 4294901760
        %2955 = vmatpush.msra.mxu0 %v2954
        %v2956 = vand.u32 %v2445, 4294901760
        %2957 = vmatpush.msra.mxu0 %v2956
        %v2958 = vand.u32 %v2444, 4294901760
        %2959 = vmatpush.msra.mxu0 %v2958
        %v2960 = vand.u32 %v2413, 4294901760
        %v2961 = vsub.f32 %v2413, %v2960
        %v2962 = vand.u32 %v2961, 4294901760
        %v2963 = vsub.f32 %v2961, %v2962
        %v2964 = vand.u32 %v2963, 4294901760
        %2965 = vmatmul.f32.gmra.mxu0 %v2964
        %v2966 = vpop.f32.mrf.mxu0
        %v2967 = vadd.f32 %v2922, %v2966
        %v2968 = vand.u32 %v2421, 4294901760
        %v2969 = vsub.f32 %v2421, %v2968
        %v2970 = vand.u32 %v2969, 4294901760
        %v2971 = vsub.f32 %v2969, %v2970
        %v2972 = vand.u32 %v2971, 4294901760
        %2973 = vmatmul.f32.gmra.mxu0 %v2972
        %v2974 = vpop.f32.mrf.mxu0
        %v2975 = vadd.f32 %v2926, %v2974
        %2976 = vdwg.mxu0
        %v2977 = vand.u32 %v2459, 4294901760
        %v2978 = vsub.f32 %v2459, %v2977
        %v2979 = vand.u32 %v2978, 4294901760
        %v2980 = vsub.f32 %v2978, %v2979
        %v2981 = vand.u32 %v2980, 4294901760
        %2982 = vmatpush.msra.mxu0 %v2981
        %v2983 = vand.u32 %v2458, 4294901760
        %v2984 = vsub.f32 %v2458, %v2983
        %v2985 = vand.u32 %v2984, 4294901760
        %v2986 = vsub.f32 %v2984, %v2985
        %v2987 = vand.u32 %v2986, 4294901760
        %2988 = vmatpush.msra.mxu0 %v2987
        %v2989 = vand.u32 %v2457, 4294901760
        %v2990 = vsub.f32 %v2457, %v2989
        %v2991 = vand.u32 %v2990, 4294901760
        %v2992 = vsub.f32 %v2990, %v2991
        %v2993 = vand.u32 %v2992, 4294901760
        %2994 = vmatpush.msra.mxu0 %v2993
        %v2995 = vand.u32 %v2456, 4294901760
        %v2996 = vsub.f32 %v2456, %v2995
        %v2997 = vand.u32 %v2996, 4294901760
        %v2998 = vsub.f32 %v2996, %v2997
        %v2999 = vand.u32 %v2998, 4294901760
        %3000 = vmatpush.msra.mxu0 %v2999
        %v3001 = vand.u32 %v2455, 4294901760
        %v3002 = vsub.f32 %v2455, %v3001
        %v3003 = vand.u32 %v3002, 4294901760
        %v3004 = vsub.f32 %v3002, %v3003
        %v3005 = vand.u32 %v3004, 4294901760
        %3006 = vmatpush.msra.mxu0 %v3005
        %v3007 = vand.u32 %v2454, 4294901760
        %v3008 = vsub.f32 %v2454, %v3007
        %v3009 = vand.u32 %v3008, 4294901760
        %v3010 = vsub.f32 %v3008, %v3009
        %v3011 = vand.u32 %v3010, 4294901760
        %3012 = vmatpush.msra.mxu0 %v3011
        %v3013 = vand.u32 %v2453, 4294901760
        %v3014 = vsub.f32 %v2453, %v3013
        %v3015 = vand.u32 %v3014, 4294901760
        %v3016 = vsub.f32 %v3014, %v3015
        %v3017 = vand.u32 %v3016, 4294901760
        %3018 = vmatpush.msra.mxu0 %v3017
        %v3019 = vand.u32 %v2452, 4294901760
        %v3020 = vsub.f32 %v2452, %v3019
        %v3021 = vand.u32 %v3020, 4294901760
        %v3022 = vsub.f32 %v3020, %v3021
        %v3023 = vand.u32 %v3022, 4294901760
        %3024 = vmatpush.msra.mxu0 %v3023
        %v3025 = vand.u32 %v2451, 4294901760
        %v3026 = vsub.f32 %v2451, %v3025
        %v3027 = vand.u32 %v3026, 4294901760
        %v3028 = vsub.f32 %v3026, %v3027
        %v3029 = vand.u32 %v3028, 4294901760
        %3030 = vmatpush.msra.mxu0 %v3029
        %v3031 = vand.u32 %v2450, 4294901760
        %v3032 = vsub.f32 %v2450, %v3031
        %v3033 = vand.u32 %v3032, 4294901760
        %v3034 = vsub.f32 %v3032, %v3033
        %v3035 = vand.u32 %v3034, 4294901760
        %3036 = vmatpush.msra.mxu0 %v3035
        %v3037 = vand.u32 %v2449, 4294901760
        %v3038 = vsub.f32 %v2449, %v3037
        %v3039 = vand.u32 %v3038, 4294901760
        %v3040 = vsub.f32 %v3038, %v3039
        %v3041 = vand.u32 %v3040, 4294901760
        %3042 = vmatpush.msra.mxu0 %v3041
        %v3043 = vand.u32 %v2448, 4294901760
        %v3044 = vsub.f32 %v2448, %v3043
        %v3045 = vand.u32 %v3044, 4294901760
        %v3046 = vsub.f32 %v3044, %v3045
        %v3047 = vand.u32 %v3046, 4294901760
        %3048 = vmatpush.msra.mxu0 %v3047
        %v3049 = vand.u32 %v2447, 4294901760
        %v3050 = vsub.f32 %v2447, %v3049
        %v3051 = vand.u32 %v3050, 4294901760
        %v3052 = vsub.f32 %v3050, %v3051
        %v3053 = vand.u32 %v3052, 4294901760
        %3054 = vmatpush.msra.mxu0 %v3053
        %v3055 = vand.u32 %v2446, 4294901760
        %v3056 = vsub.f32 %v2446, %v3055
        %v3057 = vand.u32 %v3056, 4294901760
        %v3058 = vsub.f32 %v3056, %v3057
        %v3059 = vand.u32 %v3058, 4294901760
        %3060 = vmatpush.msra.mxu0 %v3059
        %v3061 = vand.u32 %v2445, 4294901760
        %v3062 = vsub.f32 %v2445, %v3061
        %v3063 = vand.u32 %v3062, 4294901760
        %v3064 = vsub.f32 %v3062, %v3063
        %v3065 = vand.u32 %v3064, 4294901760
        %3066 = vmatpush.msra.mxu0 %v3065
        %v3067 = vand.u32 %v2444, 4294901760
        %v3068 = vsub.f32 %v2444, %v3067
        %v3069 = vand.u32 %v3068, 4294901760
        %v3070 = vsub.f32 %v3068, %v3069
        %v3071 = vand.u32 %v3070, 4294901760
        %3072 = vmatpush.msra.mxu0 %v3071
        %v3073 = vand.u32 %v2413, 4294901760
        %3074 = vmatmul.f32.gmra.mxu0 %v3073
        %v3075 = vpop.f32.mrf.mxu0
        %v3076 = vadd.f32 %v2967, %v3075
        %v3077 = vand.u32 %v2421, 4294901760
        %3078 = vmatmul.f32.gmra.mxu0 %v3077
        %v3079 = vpop.f32.mrf.mxu0
        %v3080 = vadd.f32 %v2975, %v3079
        %3081 = vdwg.mxu0
        %v3082 = vand.u32 %v2459, 4294901760
        %v3083 = vsub.f32 %v2459, %v3082
        %3084 = vmatpush.msra.mxu0 %v3083
        %v3085 = vand.u32 %v2458, 4294901760
        %v3086 = vsub.f32 %v2458, %v3085
        %3087 = vmatpush.msra.mxu0 %v3086
        %v3088 = vand.u32 %v2457, 4294901760
        %v3089 = vsub.f32 %v2457, %v3088
        %3090 = vmatpush.msra.mxu0 %v3089
        %v3091 = vand.u32 %v2456, 4294901760
        %v3092 = vsub.f32 %v2456, %v3091
        %3093 = vmatpush.msra.mxu0 %v3092
        %v3094 = vand.u32 %v2455, 4294901760
        %v3095 = vsub.f32 %v2455, %v3094
        %3096 = vmatpush.msra.mxu0 %v3095
        %v3097 = vand.u32 %v2454, 4294901760
        %v3098 = vsub.f32 %v2454, %v3097
        %3099 = vmatpush.msra.mxu0 %v3098
        %v3100 = vand.u32 %v2453, 4294901760
        %v3101 = vsub.f32 %v2453, %v3100
        %3102 = vmatpush.msra.mxu0 %v3101
        %v3103 = vand.u32 %v2452, 4294901760
        %v3104 = vsub.f32 %v2452, %v3103
        %3105 = vmatpush.msra.mxu0 %v3104
        %v3106 = vand.u32 %v2451, 4294901760
        %v3107 = vsub.f32 %v2451, %v3106
        %3108 = vmatpush.msra.mxu0 %v3107
        %v3109 = vand.u32 %v2450, 4294901760
        %v3110 = vsub.f32 %v2450, %v3109
        %3111 = vmatpush.msra.mxu0 %v3110
        %v3112 = vand.u32 %v2449, 4294901760
        %v3113 = vsub.f32 %v2449, %v3112
        %3114 = vmatpush.msra.mxu0 %v3113
        %v3115 = vand.u32 %v2448, 4294901760
        %v3116 = vsub.f32 %v2448, %v3115
        %3117 = vmatpush.msra.mxu0 %v3116
        %v3118 = vand.u32 %v2447, 4294901760
        %v3119 = vsub.f32 %v2447, %v3118
        %3120 = vmatpush.msra.mxu0 %v3119
        %v3121 = vand.u32 %v2446, 4294901760
        %v3122 = vsub.f32 %v2446, %v3121
        %3123 = vmatpush.msra.mxu0 %v3122
        %v3124 = vand.u32 %v2445, 4294901760
        %v3125 = vsub.f32 %v2445, %v3124
        %3126 = vmatpush.msra.mxu0 %v3125
        %v3127 = vand.u32 %v2444, 4294901760
        %v3128 = vsub.f32 %v2444, %v3127
        %3129 = vmatpush.msra.mxu0 %v3128
        %v3130 = vand.u32 %v2413, 4294901760
        %v3131 = vsub.f32 %v2413, %v3130
        %3132 = vmatmul.f32.gmra.mxu0 %v3131
        %v3133 = vpop.f32.mrf.mxu0
        %v3134 = vadd.f32 %v3076, %v3133
        %v3135 = vand.u32 %v2421, 4294901760
        %v3136 = vsub.f32 %v2421, %v3135
        %3137 = vmatmul.f32.gmra.mxu0 %v3136
        %v3138 = vpop.f32.mrf.mxu0
        %v3139 = vadd.f32 %v3080, %v3138
        %3140 = vdwg.mxu0
        %v3141 = vand.u32 %v2459, 4294901760
        %3142 = vmatpush.msra.mxu0 %v3141
        %v3143 = vand.u32 %v2458, 4294901760
        %3144 = vmatpush.msra.mxu0 %v3143
        %v3145 = vand.u32 %v2457, 4294901760
        %3146 = vmatpush.msra.mxu0 %v3145
        %v3147 = vand.u32 %v2456, 4294901760
        %3148 = vmatpush.msra.mxu0 %v3147
        %v3149 = vand.u32 %v2455, 4294901760
        %3150 = vmatpush.msra.mxu0 %v3149
        %v3151 = vand.u32 %v2454, 4294901760
        %3152 = vmatpush.msra.mxu0 %v3151
        %v3153 = vand.u32 %v2453, 4294901760
        %3154 = vmatpush.msra.mxu0 %v3153
        %v3155 = vand.u32 %v2452, 4294901760
        %3156 = vmatpush.msra.mxu0 %v3155
        %v3157 = vand.u32 %v2451, 4294901760
        %3158 = vmatpush.msra.mxu0 %v3157
        %v3159 = vand.u32 %v2450, 4294901760
        %3160 = vmatpush.msra.mxu0 %v3159
        %v3161 = vand.u32 %v2449, 4294901760
        %3162 = vmatpush.msra.mxu0 %v3161
        %v3163 = vand.u32 %v2448, 4294901760
        %3164 = vmatpush.msra.mxu0 %v3163
        %v3165 = vand.u32 %v2447, 4294901760
        %3166 = vmatpush.msra.mxu0 %v3165
        %v3167 = vand.u32 %v2446, 4294901760
        %3168 = vmatpush.msra.mxu0 %v3167
        %v3169 = vand.u32 %v2445, 4294901760
        %3170 = vmatpush.msra.mxu0 %v3169
        %v3171 = vand.u32 %v2444, 4294901760
        %3172 = vmatpush.msra.mxu0 %v3171
        %v3173 = vand.u32 %v2413, 4294901760
        %v3174 = vsub.f32 %v2413, %v3173
        %v3175 = vand.u32 %v3174, 4294901760
        %3176 = vmatmul.f32.gmra.mxu0 %v3175
        %v3177 = vpop.f32.mrf.mxu0
        %v3178 = vadd.f32 %v3134, %v3177
        %v3179 = vand.u32 %v2421, 4294901760
        %v3180 = vsub.f32 %v2421, %v3179
        %v3181 = vand.u32 %v3180, 4294901760
        %3182 = vmatmul.f32.gmra.mxu0 %v3181
        %v3183 = vpop.f32.mrf.mxu0
        %v3184 = vadd.f32 %v3139, %v3183
        %3185 = vdwg.mxu0
        %v3186 = vand.u32 %v2459, 4294901760
        %v3187 = vsub.f32 %v2459, %v3186
        %v3188 = vand.u32 %v3187, 4294901760
        %3189 = vmatpush.msra.mxu0 %v3188
        %v3190 = vand.u32 %v2458, 4294901760
        %v3191 = vsub.f32 %v2458, %v3190
        %v3192 = vand.u32 %v3191, 4294901760
        %3193 = vmatpush.msra.mxu0 %v3192
        %v3194 = vand.u32 %v2457, 4294901760
        %v3195 = vsub.f32 %v2457, %v3194
        %v3196 = vand.u32 %v3195, 4294901760
        %3197 = vmatpush.msra.mxu0 %v3196
        %v3198 = vand.u32 %v2456, 4294901760
        %v3199 = vsub.f32 %v2456, %v3198
        %v3200 = vand.u32 %v3199, 4294901760
        %3201 = vmatpush.msra.mxu0 %v3200
        %v3202 = vand.u32 %v2455, 4294901760
        %v3203 = vsub.f32 %v2455, %v3202
        %v3204 = vand.u32 %v3203, 4294901760
        %3205 = vmatpush.msra.mxu0 %v3204
        %v3206 = vand.u32 %v2454, 4294901760
        %v3207 = vsub.f32 %v2454, %v3206
        %v3208 = vand.u32 %v3207, 4294901760
        %3209 = vmatpush.msra.mxu0 %v3208
        %v3210 = vand.u32 %v2453, 4294901760
        %v3211 = vsub.f32 %v2453, %v3210
        %v3212 = vand.u32 %v3211, 4294901760
        %3213 = vmatpush.msra.mxu0 %v3212
        %v3214 = vand.u32 %v2452, 4294901760
        %v3215 = vsub.f32 %v2452, %v3214
        %v3216 = vand.u32 %v3215, 4294901760
        %3217 = vmatpush.msra.mxu0 %v3216
        %v3218 = vand.u32 %v2451, 4294901760
        %v3219 = vsub.f32 %v2451, %v3218
        %v3220 = vand.u32 %v3219, 4294901760
        %3221 = vmatpush.msra.mxu0 %v3220
        %v3222 = vand.u32 %v2450, 4294901760
        %v3223 = vsub.f32 %v2450, %v3222
        %v3224 = vand.u32 %v3223, 4294901760
        %3225 = vmatpush.msra.mxu0 %v3224
        %v3226 = vand.u32 %v2449, 4294901760
        %v3227 = vsub.f32 %v2449, %v3226
        %v3228 = vand.u32 %v3227, 4294901760
        %3229 = vmatpush.msra.mxu0 %v3228
        %v3230 = vand.u32 %v2448, 4294901760
        %v3231 = vsub.f32 %v2448, %v3230
        %v3232 = vand.u32 %v3231, 4294901760
        %3233 = vmatpush.msra.mxu0 %v3232
        %v3234 = vand.u32 %v2447, 4294901760
        %v3235 = vsub.f32 %v2447, %v3234
        %v3236 = vand.u32 %v3235, 4294901760
        %3237 = vmatpush.msra.mxu0 %v3236
        %v3238 = vand.u32 %v2446, 4294901760
        %v3239 = vsub.f32 %v2446, %v3238
        %v3240 = vand.u32 %v3239, 4294901760
        %3241 = vmatpush.msra.mxu0 %v3240
        %v3242 = vand.u32 %v2445, 4294901760
        %v3243 = vsub.f32 %v2445, %v3242
        %v3244 = vand.u32 %v3243, 4294901760
        %3245 = vmatpush.msra.mxu0 %v3244
        %v3246 = vand.u32 %v2444, 4294901760
        %v3247 = vsub.f32 %v2444, %v3246
        %v3248 = vand.u32 %v3247, 4294901760
        %3249 = vmatpush.msra.mxu0 %v3248
        %v3250 = vand.u32 %v2413, 4294901760
        %3251 = vmatmul.f32.gmra.mxu0 %v3250
        %v3252 = vpop.f32.mrf.mxu0
        %v3253 = vadd.f32 %v3178, %v3252
        %v3254 = vand.u32 %v2421, 4294901760
        %3255 = vmatmul.f32.gmra.mxu0 %v3254
        %v3256 = vpop.f32.mrf.mxu0
        %v3257 = vadd.f32 %v3184, %v3256
        %3258 = vdwg.mxu0
        %v3259 = vand.u32 %v2459, 4294901760
        %3260 = vmatpush.msra.mxu0 %v3259
        %v3261 = vand.u32 %v2458, 4294901760
        %3262 = vmatpush.msra.mxu0 %v3261
        %v3263 = vand.u32 %v2457, 4294901760
        %3264 = vmatpush.msra.mxu0 %v3263
        %v3265 = vand.u32 %v2456, 4294901760
        %3266 = vmatpush.msra.mxu0 %v3265
        %v3267 = vand.u32 %v2455, 4294901760
        %3268 = vmatpush.msra.mxu0 %v3267
        %v3269 = vand.u32 %v2454, 4294901760
        %3270 = vmatpush.msra.mxu0 %v3269
        %v3271 = vand.u32 %v2453, 4294901760
        %3272 = vmatpush.msra.mxu0 %v3271
        %v3273 = vand.u32 %v2452, 4294901760
        %3274 = vmatpush.msra.mxu0 %v3273
        %v3275 = vand.u32 %v2451, 4294901760
        %3276 = vmatpush.msra.mxu0 %v3275
        %v3277 = vand.u32 %v2450, 4294901760
        %3278 = vmatpush.msra.mxu0 %v3277
        %v3279 = vand.u32 %v2449, 4294901760
        %3280 = vmatpush.msra.mxu0 %v3279
        %v3281 = vand.u32 %v2448, 4294901760
        %3282 = vmatpush.msra.mxu0 %v3281
        %v3283 = vand.u32 %v2447, 4294901760
        %3284 = vmatpush.msra.mxu0 %v3283
        %v3285 = vand.u32 %v2446, 4294901760
        %3286 = vmatpush.msra.mxu0 %v3285
        %v3287 = vand.u32 %v2445, 4294901760
        %3288 = vmatpush.msra.mxu0 %v3287
        %v3289 = vand.u32 %v2444, 4294901760
        %3290 = vmatpush.msra.mxu0 %v3289
        %v3291 = vand.u32 %v2413, 4294901760
        %3292 = vmatmul.f32.gmra.mxu0 %v3291
        %v3293 = vpop.f32.mrf.mxu0
        %v3294 = vadd.f32 %v3253, %v3293
        %v3295 = vand.u32 %v2421, 4294901760
        %3296 = vmatmul.f32.gmra.mxu0 %v3295
        %v3297 = vpop.f32.mrf.mxu0
        %v3298 = vadd.f32 %v3257, %v3297
        %3299 = vdwg.mxu0
        %v3300 = vand.u32 %v2475, 4294901760
        %3301 = vmatpush.msra.mxu0 %v3300
        %v3302 = vand.u32 %v2474, 4294901760
        %3303 = vmatpush.msra.mxu0 %v3302
        %v3304 = vand.u32 %v2473, 4294901760
        %3305 = vmatpush.msra.mxu0 %v3304
        %v3306 = vand.u32 %v2472, 4294901760
        %3307 = vmatpush.msra.mxu0 %v3306
        %v3308 = vand.u32 %v2471, 4294901760
        %3309 = vmatpush.msra.mxu0 %v3308
        %v3310 = vand.u32 %v2470, 4294901760
        %3311 = vmatpush.msra.mxu0 %v3310
        %v3312 = vand.u32 %v2469, 4294901760
        %3313 = vmatpush.msra.mxu0 %v3312
        %v3314 = vand.u32 %v2468, 4294901760
        %3315 = vmatpush.msra.mxu0 %v3314
        %v3316 = vand.u32 %v2467, 4294901760
        %3317 = vmatpush.msra.mxu0 %v3316
        %v3318 = vand.u32 %v2466, 4294901760
        %3319 = vmatpush.msra.mxu0 %v3318
        %v3320 = vand.u32 %v2465, 4294901760
        %3321 = vmatpush.msra.mxu0 %v3320
        %v3322 = vand.u32 %v2464, 4294901760
        %3323 = vmatpush.msra.mxu0 %v3322
        %v3324 = vand.u32 %v2463, 4294901760
        %3325 = vmatpush.msra.mxu0 %v3324
        %v3326 = vand.u32 %v2462, 4294901760
        %3327 = vmatpush.msra.mxu0 %v3326
        %v3328 = vand.u32 %v2461, 4294901760
        %3329 = vmatpush.msra.mxu0 %v3328
        %v3330 = vand.u32 %v2460, 4294901760
        %3331 = vmatpush.msra.mxu0 %v3330
        %v3332 = vand.u32 %v2414, 4294901760
        %v3333 = vsub.f32 %v2414, %v3332
        %v3334 = vand.u32 %v3333, 4294901760
        %v3335 = vsub.f32 %v3333, %v3334
        %v3336 = vand.u32 %v3335, 4294901760
        %3337 = vmatmul.f32.gmra.mxu0 %v3336
        %v3338 = vpop.f32.mrf.mxu0
        %v3339 = vadd.f32 %v3294, %v3338
        %v3340 = vand.u32 %v2422, 4294901760
        %v3341 = vsub.f32 %v2422, %v3340
        %v3342 = vand.u32 %v3341, 4294901760
        %v3343 = vsub.f32 %v3341, %v3342
        %v3344 = vand.u32 %v3343, 4294901760
        %3345 = vmatmul.f32.gmra.mxu0 %v3344
        %v3346 = vpop.f32.mrf.mxu0
        %v3347 = vadd.f32 %v3298, %v3346
        %3348 = vdwg.mxu0
        %v3349 = vand.u32 %v2475, 4294901760
        %v3350 = vsub.f32 %v2475, %v3349
        %v3351 = vand.u32 %v3350, 4294901760
        %v3352 = vsub.f32 %v3350, %v3351
        %v3353 = vand.u32 %v3352, 4294901760
        %3354 = vmatpush.msra.mxu0 %v3353
        %v3355 = vand.u32 %v2474, 4294901760
        %v3356 = vsub.f32 %v2474, %v3355
        %v3357 = vand.u32 %v3356, 4294901760
        %v3358 = vsub.f32 %v3356, %v3357
        %v3359 = vand.u32 %v3358, 4294901760
        %3360 = vmatpush.msra.mxu0 %v3359
        %v3361 = vand.u32 %v2473, 4294901760
        %v3362 = vsub.f32 %v2473, %v3361
        %v3363 = vand.u32 %v3362, 4294901760
        %v3364 = vsub.f32 %v3362, %v3363
        %v3365 = vand.u32 %v3364, 4294901760
        %3366 = vmatpush.msra.mxu0 %v3365
        %v3367 = vand.u32 %v2472, 4294901760
        %v3368 = vsub.f32 %v2472, %v3367
        %v3369 = vand.u32 %v3368, 4294901760
        %v3370 = vsub.f32 %v3368, %v3369
        %v3371 = vand.u32 %v3370, 4294901760
        %3372 = vmatpush.msra.mxu0 %v3371
        %v3373 = vand.u32 %v2471, 4294901760
        %v3374 = vsub.f32 %v2471, %v3373
        %v3375 = vand.u32 %v3374, 4294901760
        %v3376 = vsub.f32 %v3374, %v3375
        %v3377 = vand.u32 %v3376, 4294901760
        %3378 = vmatpush.msra.mxu0 %v3377
        %v3379 = vand.u32 %v2470, 4294901760
        %v3380 = vsub.f32 %v2470, %v3379
        %v3381 = vand.u32 %v3380, 4294901760
        %v3382 = vsub.f32 %v3380, %v3381
        %v3383 = vand.u32 %v3382, 4294901760
        %3384 = vmatpush.msra.mxu0 %v3383
        %v3385 = vand.u32 %v2469, 4294901760
        %v3386 = vsub.f32 %v2469, %v3385
        %v3387 = vand.u32 %v3386, 4294901760
        %v3388 = vsub.f32 %v3386, %v3387
        %v3389 = vand.u32 %v3388, 4294901760
        %3390 = vmatpush.msra.mxu0 %v3389
        %v3391 = vand.u32 %v2468, 4294901760
        %v3392 = vsub.f32 %v2468, %v3391
        %v3393 = vand.u32 %v3392, 4294901760
        %v3394 = vsub.f32 %v3392, %v3393
        %v3395 = vand.u32 %v3394, 4294901760
        %3396 = vmatpush.msra.mxu0 %v3395
        %v3397 = vand.u32 %v2467, 4294901760
        %v3398 = vsub.f32 %v2467, %v3397
        %v3399 = vand.u32 %v3398, 4294901760
        %v3400 = vsub.f32 %v3398, %v3399
        %v3401 = vand.u32 %v3400, 4294901760
        %3402 = vmatpush.msra.mxu0 %v3401
        %v3403 = vand.u32 %v2466, 4294901760
        %v3404 = vsub.f32 %v2466, %v3403
        %v3405 = vand.u32 %v3404, 4294901760
        %v3406 = vsub.f32 %v3404, %v3405
        %v3407 = vand.u32 %v3406, 4294901760
        %3408 = vmatpush.msra.mxu0 %v3407
        %v3409 = vand.u32 %v2465, 4294901760
        %v3410 = vsub.f32 %v2465, %v3409
        %v3411 = vand.u32 %v3410, 4294901760
        %v3412 = vsub.f32 %v3410, %v3411
        %v3413 = vand.u32 %v3412, 4294901760
        %3414 = vmatpush.msra.mxu0 %v3413
        %v3415 = vand.u32 %v2464, 4294901760
        %v3416 = vsub.f32 %v2464, %v3415
        %v3417 = vand.u32 %v3416, 4294901760
        %v3418 = vsub.f32 %v3416, %v3417
        %v3419 = vand.u32 %v3418, 4294901760
        %3420 = vmatpush.msra.mxu0 %v3419
        %v3421 = vand.u32 %v2463, 4294901760
        %v3422 = vsub.f32 %v2463, %v3421
        %v3423 = vand.u32 %v3422, 4294901760
        %v3424 = vsub.f32 %v3422, %v3423
        %v3425 = vand.u32 %v3424, 4294901760
        %3426 = vmatpush.msra.mxu0 %v3425
        %v3427 = vand.u32 %v2462, 4294901760
        %v3428 = vsub.f32 %v2462, %v3427
        %v3429 = vand.u32 %v3428, 4294901760
        %v3430 = vsub.f32 %v3428, %v3429
        %v3431 = vand.u32 %v3430, 4294901760
        %3432 = vmatpush.msra.mxu0 %v3431
        %v3433 = vand.u32 %v2461, 4294901760
        %v3434 = vsub.f32 %v2461, %v3433
        %v3435 = vand.u32 %v3434, 4294901760
        %v3436 = vsub.f32 %v3434, %v3435
        %v3437 = vand.u32 %v3436, 4294901760
        %3438 = vmatpush.msra.mxu0 %v3437
        %v3439 = vand.u32 %v2460, 4294901760
        %v3440 = vsub.f32 %v2460, %v3439
        %v3441 = vand.u32 %v3440, 4294901760
        %v3442 = vsub.f32 %v3440, %v3441
        %v3443 = vand.u32 %v3442, 4294901760
        %3444 = vmatpush.msra.mxu0 %v3443
        %v3445 = vand.u32 %v2414, 4294901760
        %3446 = vmatmul.f32.gmra.mxu0 %v3445
        %v3447 = vpop.f32.mrf.mxu0
        %v3448 = vadd.f32 %v3339, %v3447
        %v3449 = vand.u32 %v2422, 4294901760
        %3450 = vmatmul.f32.gmra.mxu0 %v3449
        %v3451 = vpop.f32.mrf.mxu0
        %v3452 = vadd.f32 %v3347, %v3451
        %3453 = vdwg.mxu0
        %v3454 = vand.u32 %v2475, 4294901760
        %v3455 = vsub.f32 %v2475, %v3454
        %3456 = vmatpush.msra.mxu0 %v3455
        %v3457 = vand.u32 %v2474, 4294901760
        %v3458 = vsub.f32 %v2474, %v3457
        %3459 = vmatpush.msra.mxu0 %v3458
        %v3460 = vand.u32 %v2473, 4294901760
        %v3461 = vsub.f32 %v2473, %v3460
        %3462 = vmatpush.msra.mxu0 %v3461
        %v3463 = vand.u32 %v2472, 4294901760
        %v3464 = vsub.f32 %v2472, %v3463
        %3465 = vmatpush.msra.mxu0 %v3464
        %v3466 = vand.u32 %v2471, 4294901760
        %v3467 = vsub.f32 %v2471, %v3466
        %3468 = vmatpush.msra.mxu0 %v3467
        %v3469 = vand.u32 %v2470, 4294901760
        %v3470 = vsub.f32 %v2470, %v3469
        %3471 = vmatpush.msra.mxu0 %v3470
        %v3472 = vand.u32 %v2469, 4294901760
        %v3473 = vsub.f32 %v2469, %v3472
        %3474 = vmatpush.msra.mxu0 %v3473
        %v3475 = vand.u32 %v2468, 4294901760
        %v3476 = vsub.f32 %v2468, %v3475
        %3477 = vmatpush.msra.mxu0 %v3476
        %v3478 = vand.u32 %v2467, 4294901760
        %v3479 = vsub.f32 %v2467, %v3478
        %3480 = vmatpush.msra.mxu0 %v3479
        %v3481 = vand.u32 %v2466, 4294901760
        %v3482 = vsub.f32 %v2466, %v3481
        %3483 = vmatpush.msra.mxu0 %v3482
        %v3484 = vand.u32 %v2465, 4294901760
        %v3485 = vsub.f32 %v2465, %v3484
        %3486 = vmatpush.msra.mxu0 %v3485
        %v3487 = vand.u32 %v2464, 4294901760
        %v3488 = vsub.f32 %v2464, %v3487
        %3489 = vmatpush.msra.mxu0 %v3488
        %v3490 = vand.u32 %v2463, 4294901760
        %v3491 = vsub.f32 %v2463, %v3490
        %3492 = vmatpush.msra.mxu0 %v3491
        %v3493 = vand.u32 %v2462, 4294901760
        %v3494 = vsub.f32 %v2462, %v3493
        %3495 = vmatpush.msra.mxu0 %v3494
        %v3496 = vand.u32 %v2461, 4294901760
        %v3497 = vsub.f32 %v2461, %v3496
        %3498 = vmatpush.msra.mxu0 %v3497
        %v3499 = vand.u32 %v2460, 4294901760
        %v3500 = vsub.f32 %v2460, %v3499
        %3501 = vmatpush.msra.mxu0 %v3500
        %v3502 = vand.u32 %v2414, 4294901760
        %v3503 = vsub.f32 %v2414, %v3502
        %3504 = vmatmul.f32.gmra.mxu0 %v3503
        %v3505 = vpop.f32.mrf.mxu0
        %v3506 = vadd.f32 %v3448, %v3505
        %v3507 = vand.u32 %v2422, 4294901760
        %v3508 = vsub.f32 %v2422, %v3507
        %3509 = vmatmul.f32.gmra.mxu0 %v3508
        %v3510 = vpop.f32.mrf.mxu0
        %v3511 = vadd.f32 %v3452, %v3510
        %3512 = vdwg.mxu0
        %v3513 = vand.u32 %v2475, 4294901760
        %3514 = vmatpush.msra.mxu0 %v3513
        %v3515 = vand.u32 %v2474, 4294901760
        %3516 = vmatpush.msra.mxu0 %v3515
        %v3517 = vand.u32 %v2473, 4294901760
        %3518 = vmatpush.msra.mxu0 %v3517
        %v3519 = vand.u32 %v2472, 4294901760
        %3520 = vmatpush.msra.mxu0 %v3519
        %v3521 = vand.u32 %v2471, 4294901760
        %3522 = vmatpush.msra.mxu0 %v3521
        %v3523 = vand.u32 %v2470, 4294901760
        %3524 = vmatpush.msra.mxu0 %v3523
        %v3525 = vand.u32 %v2469, 4294901760
        %3526 = vmatpush.msra.mxu0 %v3525
        %v3527 = vand.u32 %v2468, 4294901760
        %3528 = vmatpush.msra.mxu0 %v3527
        %v3529 = vand.u32 %v2467, 4294901760
        %3530 = vmatpush.msra.mxu0 %v3529
        %v3531 = vand.u32 %v2466, 4294901760
        %3532 = vmatpush.msra.mxu0 %v3531
        %v3533 = vand.u32 %v2465, 4294901760
        %3534 = vmatpush.msra.mxu0 %v3533
        %v3535 = vand.u32 %v2464, 4294901760
        %3536 = vmatpush.msra.mxu0 %v3535
        %v3537 = vand.u32 %v2463, 4294901760
        %3538 = vmatpush.msra.mxu0 %v3537
        %v3539 = vand.u32 %v2462, 4294901760
        %3540 = vmatpush.msra.mxu0 %v3539
        %v3541 = vand.u32 %v2461, 4294901760
        %3542 = vmatpush.msra.mxu0 %v3541
        %v3543 = vand.u32 %v2460, 4294901760
        %3544 = vmatpush.msra.mxu0 %v3543
        %v3545 = vand.u32 %v2414, 4294901760
        %v3546 = vsub.f32 %v2414, %v3545
        %v3547 = vand.u32 %v3546, 4294901760
        %3548 = vmatmul.f32.gmra.mxu0 %v3547
        %v3549 = vpop.f32.mrf.mxu0
        %v3550 = vadd.f32 %v3506, %v3549
        %v3551 = vand.u32 %v2422, 4294901760
        %v3552 = vsub.f32 %v2422, %v3551
        %v3553 = vand.u32 %v3552, 4294901760
        %3554 = vmatmul.f32.gmra.mxu0 %v3553
        %v3555 = vpop.f32.mrf.mxu0
        %v3556 = vadd.f32 %v3511, %v3555
        %3557 = vdwg.mxu0
        %v3558 = vand.u32 %v2475, 4294901760
        %v3559 = vsub.f32 %v2475, %v3558
        %v3560 = vand.u32 %v3559, 4294901760
        %3561 = vmatpush.msra.mxu0 %v3560
        %v3562 = vand.u32 %v2474, 4294901760
        %v3563 = vsub.f32 %v2474, %v3562
        %v3564 = vand.u32 %v3563, 4294901760
        %3565 = vmatpush.msra.mxu0 %v3564
        %v3566 = vand.u32 %v2473, 4294901760
        %v3567 = vsub.f32 %v2473, %v3566
        %v3568 = vand.u32 %v3567, 4294901760
        %3569 = vmatpush.msra.mxu0 %v3568
        %v3570 = vand.u32 %v2472, 4294901760
        %v3571 = vsub.f32 %v2472, %v3570
        %v3572 = vand.u32 %v3571, 4294901760
        %3573 = vmatpush.msra.mxu0 %v3572
        %v3574 = vand.u32 %v2471, 4294901760
        %v3575 = vsub.f32 %v2471, %v3574
        %v3576 = vand.u32 %v3575, 4294901760
        %3577 = vmatpush.msra.mxu0 %v3576
        %v3578 = vand.u32 %v2470, 4294901760
        %v3579 = vsub.f32 %v2470, %v3578
        %v3580 = vand.u32 %v3579, 4294901760
        %3581 = vmatpush.msra.mxu0 %v3580
        %v3582 = vand.u32 %v2469, 4294901760
        %v3583 = vsub.f32 %v2469, %v3582
        %v3584 = vand.u32 %v3583, 4294901760
        %3585 = vmatpush.msra.mxu0 %v3584
        %v3586 = vand.u32 %v2468, 4294901760
        %v3587 = vsub.f32 %v2468, %v3586
        %v3588 = vand.u32 %v3587, 4294901760
        %3589 = vmatpush.msra.mxu0 %v3588
        %v3590 = vand.u32 %v2467, 4294901760
        %v3591 = vsub.f32 %v2467, %v3590
        %v3592 = vand.u32 %v3591, 4294901760
        %3593 = vmatpush.msra.mxu0 %v3592
        %v3594 = vand.u32 %v2466, 4294901760
        %v3595 = vsub.f32 %v2466, %v3594
        %v3596 = vand.u32 %v3595, 4294901760
        %3597 = vmatpush.msra.mxu0 %v3596
        %v3598 = vand.u32 %v2465, 4294901760
        %v3599 = vsub.f32 %v2465, %v3598
        %v3600 = vand.u32 %v3599, 4294901760
        %3601 = vmatpush.msra.mxu0 %v3600
        %v3602 = vand.u32 %v2464, 4294901760
        %v3603 = vsub.f32 %v2464, %v3602
        %v3604 = vand.u32 %v3603, 4294901760
        %3605 = vmatpush.msra.mxu0 %v3604
        %v3606 = vand.u32 %v2463, 4294901760
        %v3607 = vsub.f32 %v2463, %v3606
        %v3608 = vand.u32 %v3607, 4294901760
        %3609 = vmatpush.msra.mxu0 %v3608
        %v3610 = vand.u32 %v2462, 4294901760
        %v3611 = vsub.f32 %v2462, %v3610
        %v3612 = vand.u32 %v3611, 4294901760
        %3613 = vmatpush.msra.mxu0 %v3612
        %v3614 = vand.u32 %v2461, 4294901760
        %v3615 = vsub.f32 %v2461, %v3614
        %v3616 = vand.u32 %v3615, 4294901760
        %3617 = vmatpush.msra.mxu0 %v3616
        %v3618 = vand.u32 %v2460, 4294901760
        %v3619 = vsub.f32 %v2460, %v3618
        %v3620 = vand.u32 %v3619, 4294901760
        %3621 = vmatpush.msra.mxu0 %v3620
        %v3622 = vand.u32 %v2414, 4294901760
        %3623 = vmatmul.f32.gmra.mxu0 %v3622
        %v3624 = vpop.f32.mrf.mxu0
        %v3625 = vadd.f32 %v3550, %v3624
        %v3626 = vand.u32 %v2422, 4294901760
        %3627 = vmatmul.f32.gmra.mxu0 %v3626
        %v3628 = vpop.f32.mrf.mxu0
        %v3629 = vadd.f32 %v3556, %v3628
        %3630 = vdwg.mxu0
        %v3631 = vand.u32 %v2475, 4294901760
        %3632 = vmatpush.msra.mxu0 %v3631
        %v3633 = vand.u32 %v2474, 4294901760
        %3634 = vmatpush.msra.mxu0 %v3633
        %v3635 = vand.u32 %v2473, 4294901760
        %3636 = vmatpush.msra.mxu0 %v3635
        %v3637 = vand.u32 %v2472, 4294901760
        %3638 = vmatpush.msra.mxu0 %v3637
        %v3639 = vand.u32 %v2471, 4294901760
        %3640 = vmatpush.msra.mxu0 %v3639
        %v3641 = vand.u32 %v2470, 4294901760
        %3642 = vmatpush.msra.mxu0 %v3641
        %v3643 = vand.u32 %v2469, 4294901760
        %3644 = vmatpush.msra.mxu0 %v3643
        %v3645 = vand.u32 %v2468, 4294901760
        %3646 = vmatpush.msra.mxu0 %v3645
        %v3647 = vand.u32 %v2467, 4294901760
        %3648 = vmatpush.msra.mxu0 %v3647
        %v3649 = vand.u32 %v2466, 4294901760
        %3650 = vmatpush.msra.mxu0 %v3649
        %v3651 = vand.u32 %v2465, 4294901760
        %3652 = vmatpush.msra.mxu0 %v3651
        %v3653 = vand.u32 %v2464, 4294901760
        %3654 = vmatpush.msra.mxu0 %v3653
        %v3655 = vand.u32 %v2463, 4294901760
        %3656 = vmatpush.msra.mxu0 %v3655
        %v3657 = vand.u32 %v2462, 4294901760
        %3658 = vmatpush.msra.mxu0 %v3657
        %v3659 = vand.u32 %v2461, 4294901760
        %3660 = vmatpush.msra.mxu0 %v3659
        %v3661 = vand.u32 %v2460, 4294901760
        %3662 = vmatpush.msra.mxu0 %v3661
        %v3663 = vand.u32 %v2414, 4294901760
        %3664 = vmatmul.f32.gmra.mxu0 %v3663
        %v3665 = vpop.f32.mrf.mxu0
        %v3666 = vadd.f32 %v3625, %v3665
        %v3667 = vand.u32 %v2422, 4294901760
        %3668 = vmatmul.f32.gmra.mxu0 %v3667
        %v3669 = vpop.f32.mrf.mxu0
        %v3670 = vadd.f32 %v3629, %v3669
        %3671 = vdwg.mxu0
        %v3672 = vand.u32 %v2491, 4294901760
        %3673 = vmatpush.msra.mxu0 %v3672
        %v3674 = vand.u32 %v2490, 4294901760
        %3675 = vmatpush.msra.mxu0 %v3674
        %v3676 = vand.u32 %v2489, 4294901760
        %3677 = vmatpush.msra.mxu0 %v3676
        %v3678 = vand.u32 %v2488, 4294901760
        %3679 = vmatpush.msra.mxu0 %v3678
        %v3680 = vand.u32 %v2487, 4294901760
        %3681 = vmatpush.msra.mxu0 %v3680
        %v3682 = vand.u32 %v2486, 4294901760
        %3683 = vmatpush.msra.mxu0 %v3682
        %v3684 = vand.u32 %v2485, 4294901760
        %3685 = vmatpush.msra.mxu0 %v3684
        %v3686 = vand.u32 %v2484, 4294901760
        %3687 = vmatpush.msra.mxu0 %v3686
        %v3688 = vand.u32 %v2483, 4294901760
        %3689 = vmatpush.msra.mxu0 %v3688
        %v3690 = vand.u32 %v2482, 4294901760
        %3691 = vmatpush.msra.mxu0 %v3690
        %v3692 = vand.u32 %v2481, 4294901760
        %3693 = vmatpush.msra.mxu0 %v3692
        %v3694 = vand.u32 %v2480, 4294901760
        %3695 = vmatpush.msra.mxu0 %v3694
        %v3696 = vand.u32 %v2479, 4294901760
        %3697 = vmatpush.msra.mxu0 %v3696
        %v3698 = vand.u32 %v2478, 4294901760
        %3699 = vmatpush.msra.mxu0 %v3698
        %v3700 = vand.u32 %v2477, 4294901760
        %3701 = vmatpush.msra.mxu0 %v3700
        %v3702 = vand.u32 %v2476, 4294901760
        %3703 = vmatpush.msra.mxu0 %v3702
        %v3704 = vand.u32 %v2415, 4294901760
        %v3705 = vsub.f32 %v2415, %v3704
        %v3706 = vand.u32 %v3705, 4294901760
        %v3707 = vsub.f32 %v3705, %v3706
        %v3708 = vand.u32 %v3707, 4294901760
        %3709 = vmatmul.f32.gmra.mxu0 %v3708
        %v3710 = vpop.f32.mrf.mxu0
        %v3711 = vadd.f32 %v3666, %v3710
        %v3712 = vand.u32 %v2423, 4294901760
        %v3713 = vsub.f32 %v2423, %v3712
        %v3714 = vand.u32 %v3713, 4294901760
        %v3715 = vsub.f32 %v3713, %v3714
        %v3716 = vand.u32 %v3715, 4294901760
        %3717 = vmatmul.f32.gmra.mxu0 %v3716
        %v3718 = vpop.f32.mrf.mxu0
        %v3719 = vadd.f32 %v3670, %v3718
        %3720 = vdwg.mxu0
        %v3721 = vand.u32 %v2491, 4294901760
        %v3722 = vsub.f32 %v2491, %v3721
        %v3723 = vand.u32 %v3722, 4294901760
        %v3724 = vsub.f32 %v3722, %v3723
        %v3725 = vand.u32 %v3724, 4294901760
        %3726 = vmatpush.msra.mxu0 %v3725
        %v3727 = vand.u32 %v2490, 4294901760
        %v3728 = vsub.f32 %v2490, %v3727
        %v3729 = vand.u32 %v3728, 4294901760
        %v3730 = vsub.f32 %v3728, %v3729
        %v3731 = vand.u32 %v3730, 4294901760
        %3732 = vmatpush.msra.mxu0 %v3731
        %v3733 = vand.u32 %v2489, 4294901760
        %v3734 = vsub.f32 %v2489, %v3733
        %v3735 = vand.u32 %v3734, 4294901760
        %v3736 = vsub.f32 %v3734, %v3735
        %v3737 = vand.u32 %v3736, 4294901760
        %3738 = vmatpush.msra.mxu0 %v3737
        %v3739 = vand.u32 %v2488, 4294901760
        %v3740 = vsub.f32 %v2488, %v3739
        %v3741 = vand.u32 %v3740, 4294901760
        %v3742 = vsub.f32 %v3740, %v3741
        %v3743 = vand.u32 %v3742, 4294901760
        %3744 = vmatpush.msra.mxu0 %v3743
        %v3745 = vand.u32 %v2487, 4294901760
        %v3746 = vsub.f32 %v2487, %v3745
        %v3747 = vand.u32 %v3746, 4294901760
        %v3748 = vsub.f32 %v3746, %v3747
        %v3749 = vand.u32 %v3748, 4294901760
        %3750 = vmatpush.msra.mxu0 %v3749
        %v3751 = vand.u32 %v2486, 4294901760
        %v3752 = vsub.f32 %v2486, %v3751
        %v3753 = vand.u32 %v3752, 4294901760
        %v3754 = vsub.f32 %v3752, %v3753
        %v3755 = vand.u32 %v3754, 4294901760
        %3756 = vmatpush.msra.mxu0 %v3755
        %v3757 = vand.u32 %v2485, 4294901760
        %v3758 = vsub.f32 %v2485, %v3757
        %v3759 = vand.u32 %v3758, 4294901760
        %v3760 = vsub.f32 %v3758, %v3759
        %v3761 = vand.u32 %v3760, 4294901760
        %3762 = vmatpush.msra.mxu0 %v3761
        %v3763 = vand.u32 %v2484, 4294901760
        %v3764 = vsub.f32 %v2484, %v3763
        %v3765 = vand.u32 %v3764, 4294901760
        %v3766 = vsub.f32 %v3764, %v3765
        %v3767 = vand.u32 %v3766, 4294901760
        %3768 = vmatpush.msra.mxu0 %v3767
        %v3769 = vand.u32 %v2483, 4294901760
        %v3770 = vsub.f32 %v2483, %v3769
        %v3771 = vand.u32 %v3770, 4294901760
        %v3772 = vsub.f32 %v3770, %v3771
        %v3773 = vand.u32 %v3772, 4294901760
        %3774 = vmatpush.msra.mxu0 %v3773
        %v3775 = vand.u32 %v2482, 4294901760
        %v3776 = vsub.f32 %v2482, %v3775
        %v3777 = vand.u32 %v3776, 4294901760
        %v3778 = vsub.f32 %v3776, %v3777
        %v3779 = vand.u32 %v3778, 4294901760
        %3780 = vmatpush.msra.mxu0 %v3779
        %v3781 = vand.u32 %v2481, 4294901760
        %v3782 = vsub.f32 %v2481, %v3781
        %v3783 = vand.u32 %v3782, 4294901760
        %v3784 = vsub.f32 %v3782, %v3783
        %v3785 = vand.u32 %v3784, 4294901760
        %3786 = vmatpush.msra.mxu0 %v3785
        %v3787 = vand.u32 %v2480, 4294901760
        %v3788 = vsub.f32 %v2480, %v3787
        %v3789 = vand.u32 %v3788, 4294901760
        %v3790 = vsub.f32 %v3788, %v3789
        %v3791 = vand.u32 %v3790, 4294901760
        %3792 = vmatpush.msra.mxu0 %v3791
        %v3793 = vand.u32 %v2479, 4294901760
        %v3794 = vsub.f32 %v2479, %v3793
        %v3795 = vand.u32 %v3794, 4294901760
        %v3796 = vsub.f32 %v3794, %v3795
        %v3797 = vand.u32 %v3796, 4294901760
        %3798 = vmatpush.msra.mxu0 %v3797
        %v3799 = vand.u32 %v2478, 4294901760
        %v3800 = vsub.f32 %v2478, %v3799
        %v3801 = vand.u32 %v3800, 4294901760
        %v3802 = vsub.f32 %v3800, %v3801
        %v3803 = vand.u32 %v3802, 4294901760
        %3804 = vmatpush.msra.mxu0 %v3803
        %v3805 = vand.u32 %v2477, 4294901760
        %v3806 = vsub.f32 %v2477, %v3805
        %v3807 = vand.u32 %v3806, 4294901760
        %v3808 = vsub.f32 %v3806, %v3807
        %v3809 = vand.u32 %v3808, 4294901760
        %3810 = vmatpush.msra.mxu0 %v3809
        %v3811 = vand.u32 %v2476, 4294901760
        %v3812 = vsub.f32 %v2476, %v3811
        %v3813 = vand.u32 %v3812, 4294901760
        %v3814 = vsub.f32 %v3812, %v3813
        %v3815 = vand.u32 %v3814, 4294901760
        %3816 = vmatpush.msra.mxu0 %v3815
        %v3817 = vand.u32 %v2415, 4294901760
        %3818 = vmatmul.f32.gmra.mxu0 %v3817
        %v3819 = vpop.f32.mrf.mxu0
        %v3820 = vadd.f32 %v3711, %v3819
        %v3821 = vand.u32 %v2423, 4294901760
        %3822 = vmatmul.f32.gmra.mxu0 %v3821
        %v3823 = vpop.f32.mrf.mxu0
        %v3824 = vadd.f32 %v3719, %v3823
        %3825 = vdwg.mxu0
        %v3826 = vand.u32 %v2491, 4294901760
        %v3827 = vsub.f32 %v2491, %v3826
        %3828 = vmatpush.msra.mxu0 %v3827
        %v3829 = vand.u32 %v2490, 4294901760
        %v3830 = vsub.f32 %v2490, %v3829
        %3831 = vmatpush.msra.mxu0 %v3830
        %v3832 = vand.u32 %v2489, 4294901760
        %v3833 = vsub.f32 %v2489, %v3832
        %3834 = vmatpush.msra.mxu0 %v3833
        %v3835 = vand.u32 %v2488, 4294901760
        %v3836 = vsub.f32 %v2488, %v3835
        %3837 = vmatpush.msra.mxu0 %v3836
        %v3838 = vand.u32 %v2487, 4294901760
        %v3839 = vsub.f32 %v2487, %v3838
        %3840 = vmatpush.msra.mxu0 %v3839
        %v3841 = vand.u32 %v2486, 4294901760
        %v3842 = vsub.f32 %v2486, %v3841
        %3843 = vmatpush.msra.mxu0 %v3842
        %v3844 = vand.u32 %v2485, 4294901760
        %v3845 = vsub.f32 %v2485, %v3844
        %3846 = vmatpush.msra.mxu0 %v3845
        %v3847 = vand.u32 %v2484, 4294901760
        %v3848 = vsub.f32 %v2484, %v3847
        %3849 = vmatpush.msra.mxu0 %v3848
        %v3850 = vand.u32 %v2483, 4294901760
        %v3851 = vsub.f32 %v2483, %v3850
        %3852 = vmatpush.msra.mxu0 %v3851
        %v3853 = vand.u32 %v2482, 4294901760
        %v3854 = vsub.f32 %v2482, %v3853
        %3855 = vmatpush.msra.mxu0 %v3854
        %v3856 = vand.u32 %v2481, 4294901760
        %v3857 = vsub.f32 %v2481, %v3856
        %3858 = vmatpush.msra.mxu0 %v3857
        %v3859 = vand.u32 %v2480, 4294901760
        %v3860 = vsub.f32 %v2480, %v3859
        %3861 = vmatpush.msra.mxu0 %v3860
        %v3862 = vand.u32 %v2479, 4294901760
        %v3863 = vsub.f32 %v2479, %v3862
        %3864 = vmatpush.msra.mxu0 %v3863
        %v3865 = vand.u32 %v2478, 4294901760
        %v3866 = vsub.f32 %v2478, %v3865
        %3867 = vmatpush.msra.mxu0 %v3866
        %v3868 = vand.u32 %v2477, 4294901760
        %v3869 = vsub.f32 %v2477, %v3868
        %3870 = vmatpush.msra.mxu0 %v3869
        %v3871 = vand.u32 %v2476, 4294901760
        %v3872 = vsub.f32 %v2476, %v3871
        %3873 = vmatpush.msra.mxu0 %v3872
        %v3874 = vand.u32 %v2415, 4294901760
        %v3875 = vsub.f32 %v2415, %v3874
        %3876 = vmatmul.f32.gmra.mxu0 %v3875
        %v3877 = vpop.f32.mrf.mxu0
        %v3878 = vadd.f32 %v3820, %v3877
        %v3879 = vand.u32 %v2423, 4294901760
        %v3880 = vsub.f32 %v2423, %v3879
        %3881 = vmatmul.f32.gmra.mxu0 %v3880
        %v3882 = vpop.f32.mrf.mxu0
        %v3883 = vadd.f32 %v3824, %v3882
        %3884 = vdwg.mxu0
        %v3885 = vand.u32 %v2491, 4294901760
        %3886 = vmatpush.msra.mxu0 %v3885
        %v3887 = vand.u32 %v2490, 4294901760
        %3888 = vmatpush.msra.mxu0 %v3887
        %v3889 = vand.u32 %v2489, 4294901760
        %3890 = vmatpush.msra.mxu0 %v3889
        %v3891 = vand.u32 %v2488, 4294901760
        %3892 = vmatpush.msra.mxu0 %v3891
        %v3893 = vand.u32 %v2487, 4294901760
        %3894 = vmatpush.msra.mxu0 %v3893
        %v3895 = vand.u32 %v2486, 4294901760
        %3896 = vmatpush.msra.mxu0 %v3895
        %v3897 = vand.u32 %v2485, 4294901760
        %3898 = vmatpush.msra.mxu0 %v3897
        %v3899 = vand.u32 %v2484, 4294901760
        %3900 = vmatpush.msra.mxu0 %v3899
        %v3901 = vand.u32 %v2483, 4294901760
        %3902 = vmatpush.msra.mxu0 %v3901
        %v3903 = vand.u32 %v2482, 4294901760
        %3904 = vmatpush.msra.mxu0 %v3903
        %v3905 = vand.u32 %v2481, 4294901760
        %3906 = vmatpush.msra.mxu0 %v3905
        %v3907 = vand.u32 %v2480, 4294901760
        %3908 = vmatpush.msra.mxu0 %v3907
        %v3909 = vand.u32 %v2479, 4294901760
        %3910 = vmatpush.msra.mxu0 %v3909
        %v3911 = vand.u32 %v2478, 4294901760
        %3912 = vmatpush.msra.mxu0 %v3911
        %v3913 = vand.u32 %v2477, 4294901760
        %3914 = vmatpush.msra.mxu0 %v3913
        %v3915 = vand.u32 %v2476, 4294901760
        %3916 = vmatpush.msra.mxu0 %v3915
        %v3917 = vand.u32 %v2415, 4294901760
        %v3918 = vsub.f32 %v2415, %v3917
        %v3919 = vand.u32 %v3918, 4294901760
        %3920 = vmatmul.f32.gmra.mxu0 %v3919
        %v3921 = vpop.f32.mrf.mxu0
        %v3922 = vadd.f32 %v3878, %v3921
        %v3923 = vand.u32 %v2423, 4294901760
        %v3924 = vsub.f32 %v2423, %v3923
        %v3925 = vand.u32 %v3924, 4294901760
        %3926 = vmatmul.f32.gmra.mxu0 %v3925
        %v3927 = vpop.f32.mrf.mxu0
        %v3928 = vadd.f32 %v3883, %v3927
        %3929 = vdwg.mxu0
        %v3930 = vand.u32 %v2491, 4294901760
        %v3931 = vsub.f32 %v2491, %v3930
        %v3932 = vand.u32 %v3931, 4294901760
        %3933 = vmatpush.msra.mxu0 %v3932
        %v3934 = vand.u32 %v2490, 4294901760
        %v3935 = vsub.f32 %v2490, %v3934
        %v3936 = vand.u32 %v3935, 4294901760
        %3937 = vmatpush.msra.mxu0 %v3936
        %v3938 = vand.u32 %v2489, 4294901760
        %v3939 = vsub.f32 %v2489, %v3938
        %v3940 = vand.u32 %v3939, 4294901760
        %3941 = vmatpush.msra.mxu0 %v3940
        %v3942 = vand.u32 %v2488, 4294901760
        %v3943 = vsub.f32 %v2488, %v3942
        %v3944 = vand.u32 %v3943, 4294901760
        %3945 = vmatpush.msra.mxu0 %v3944
        %v3946 = vand.u32 %v2487, 4294901760
        %v3947 = vsub.f32 %v2487, %v3946
        %v3948 = vand.u32 %v3947, 4294901760
        %3949 = vmatpush.msra.mxu0 %v3948
        %v3950 = vand.u32 %v2486, 4294901760
        %v3951 = vsub.f32 %v2486, %v3950
        %v3952 = vand.u32 %v3951, 4294901760
        %3953 = vmatpush.msra.mxu0 %v3952
        %v3954 = vand.u32 %v2485, 4294901760
        %v3955 = vsub.f32 %v2485, %v3954
        %v3956 = vand.u32 %v3955, 4294901760
        %3957 = vmatpush.msra.mxu0 %v3956
        %v3958 = vand.u32 %v2484, 4294901760
        %v3959 = vsub.f32 %v2484, %v3958
        %v3960 = vand.u32 %v3959, 4294901760
        %3961 = vmatpush.msra.mxu0 %v3960
        %v3962 = vand.u32 %v2483, 4294901760
        %v3963 = vsub.f32 %v2483, %v3962
        %v3964 = vand.u32 %v3963, 4294901760
        %3965 = vmatpush.msra.mxu0 %v3964
        %v3966 = vand.u32 %v2482, 4294901760
        %v3967 = vsub.f32 %v2482, %v3966
        %v3968 = vand.u32 %v3967, 4294901760
        %3969 = vmatpush.msra.mxu0 %v3968
        %v3970 = vand.u32 %v2481, 4294901760
        %v3971 = vsub.f32 %v2481, %v3970
        %v3972 = vand.u32 %v3971, 4294901760
        %3973 = vmatpush.msra.mxu0 %v3972
        %v3974 = vand.u32 %v2480, 4294901760
        %v3975 = vsub.f32 %v2480, %v3974
        %v3976 = vand.u32 %v3975, 4294901760
        %3977 = vmatpush.msra.mxu0 %v3976
        %v3978 = vand.u32 %v2479, 4294901760
        %v3979 = vsub.f32 %v2479, %v3978
        %v3980 = vand.u32 %v3979, 4294901760
        %3981 = vmatpush.msra.mxu0 %v3980
        %v3982 = vand.u32 %v2478, 4294901760
        %v3983 = vsub.f32 %v2478, %v3982
        %v3984 = vand.u32 %v3983, 4294901760
        %3985 = vmatpush.msra.mxu0 %v3984
        %v3986 = vand.u32 %v2477, 4294901760
        %v3987 = vsub.f32 %v2477, %v3986
        %v3988 = vand.u32 %v3987, 4294901760
        %3989 = vmatpush.msra.mxu0 %v3988
        %v3990 = vand.u32 %v2476, 4294901760
        %v3991 = vsub.f32 %v2476, %v3990
        %v3992 = vand.u32 %v3991, 4294901760
        %3993 = vmatpush.msra.mxu0 %v3992
        %v3994 = vand.u32 %v2415, 4294901760
        %3995 = vmatmul.f32.gmra.mxu0 %v3994
        %v3996 = vpop.f32.mrf.mxu0
        %v3997 = vadd.f32 %v3922, %v3996
        %v3998 = vand.u32 %v2423, 4294901760
        %3999 = vmatmul.f32.gmra.mxu0 %v3998
        %v4000 = vpop.f32.mrf.mxu0
        %v4001 = vadd.f32 %v3928, %v4000
        %4002 = vdwg.mxu0
        %v4003 = vand.u32 %v2491, 4294901760
        %4004 = vmatpush.msra.mxu0 %v4003
        %v4005 = vand.u32 %v2490, 4294901760
        %4006 = vmatpush.msra.mxu0 %v4005
        %v4007 = vand.u32 %v2489, 4294901760
        %4008 = vmatpush.msra.mxu0 %v4007
        %v4009 = vand.u32 %v2488, 4294901760
        %4010 = vmatpush.msra.mxu0 %v4009
        %v4011 = vand.u32 %v2487, 4294901760
        %4012 = vmatpush.msra.mxu0 %v4011
        %v4013 = vand.u32 %v2486, 4294901760
        %4014 = vmatpush.msra.mxu0 %v4013
        %v4015 = vand.u32 %v2485, 4294901760
        %4016 = vmatpush.msra.mxu0 %v4015
        %v4017 = vand.u32 %v2484, 4294901760
        %4018 = vmatpush.msra.mxu0 %v4017
        %v4019 = vand.u32 %v2483, 4294901760
        %4020 = vmatpush.msra.mxu0 %v4019
        %v4021 = vand.u32 %v2482, 4294901760
        %4022 = vmatpush.msra.mxu0 %v4021
        %v4023 = vand.u32 %v2481, 4294901760
        %4024 = vmatpush.msra.mxu0 %v4023
        %v4025 = vand.u32 %v2480, 4294901760
        %4026 = vmatpush.msra.mxu0 %v4025
        %v4027 = vand.u32 %v2479, 4294901760
        %4028 = vmatpush.msra.mxu0 %v4027
        %v4029 = vand.u32 %v2478, 4294901760
        %4030 = vmatpush.msra.mxu0 %v4029
        %v4031 = vand.u32 %v2477, 4294901760
        %4032 = vmatpush.msra.mxu0 %v4031
        %v4033 = vand.u32 %v2476, 4294901760
        %4034 = vmatpush.msra.mxu0 %v4033
        %v4035 = vand.u32 %v2415, 4294901760
        %4036 = vmatmul.f32.gmra.mxu0 %v4035
        %v4037 = vpop.f32.mrf.mxu0
        %v4038 = vadd.f32 %v3997, %v4037
        %v4039 = vand.u32 %v2423, 4294901760
        %4040 = vmatmul.f32.gmra.mxu0 %v4039
        %v4041 = vpop.f32.mrf.mxu0
        %v4042 = vadd.f32 %v4001, %v4041
        %4043 = vdwg.mxu0
        %v4044 = vand.u32 %v2507, 4294901760
        %4045 = vmatpush.msra.mxu0 %v4044
        %v4046 = vand.u32 %v2506, 4294901760
        %4047 = vmatpush.msra.mxu0 %v4046
        %v4048 = vand.u32 %v2505, 4294901760
        %4049 = vmatpush.msra.mxu0 %v4048
        %v4050 = vand.u32 %v2504, 4294901760
        %4051 = vmatpush.msra.mxu0 %v4050
        %v4052 = vand.u32 %v2503, 4294901760
        %4053 = vmatpush.msra.mxu0 %v4052
        %v4054 = vand.u32 %v2502, 4294901760
        %4055 = vmatpush.msra.mxu0 %v4054
        %v4056 = vand.u32 %v2501, 4294901760
        %4057 = vmatpush.msra.mxu0 %v4056
        %v4058 = vand.u32 %v2500, 4294901760
        %4059 = vmatpush.msra.mxu0 %v4058
        %v4060 = vand.u32 %v2499, 4294901760
        %4061 = vmatpush.msra.mxu0 %v4060
        %v4062 = vand.u32 %v2498, 4294901760
        %4063 = vmatpush.msra.mxu0 %v4062
        %v4064 = vand.u32 %v2497, 4294901760
        %4065 = vmatpush.msra.mxu0 %v4064
        %v4066 = vand.u32 %v2496, 4294901760
        %4067 = vmatpush.msra.mxu0 %v4066
        %v4068 = vand.u32 %v2495, 4294901760
        %4069 = vmatpush.msra.mxu0 %v4068
        %v4070 = vand.u32 %v2494, 4294901760
        %4071 = vmatpush.msra.mxu0 %v4070
        %v4072 = vand.u32 %v2493, 4294901760
        %4073 = vmatpush.msra.mxu0 %v4072
        %v4074 = vand.u32 %v2492, 4294901760
        %4075 = vmatpush.msra.mxu0 %v4074
        %v4076 = vand.u32 %v2416, 4294901760
        %v4077 = vsub.f32 %v2416, %v4076
        %v4078 = vand.u32 %v4077, 4294901760
        %v4079 = vsub.f32 %v4077, %v4078
        %v4080 = vand.u32 %v4079, 4294901760
        %4081 = vmatmul.f32.gmra.mxu0 %v4080
        %v4082 = vpop.f32.mrf.mxu0
        %v4083 = vadd.f32 %v4038, %v4082
        %v4084 = vand.u32 %v2424, 4294901760
        %v4085 = vsub.f32 %v2424, %v4084
        %v4086 = vand.u32 %v4085, 4294901760
        %v4087 = vsub.f32 %v4085, %v4086
        %v4088 = vand.u32 %v4087, 4294901760
        %4089 = vmatmul.f32.gmra.mxu0 %v4088
        %v4090 = vpop.f32.mrf.mxu0
        %v4091 = vadd.f32 %v4042, %v4090
        %4092 = vdwg.mxu0
        %v4093 = vand.u32 %v2507, 4294901760
        %v4094 = vsub.f32 %v2507, %v4093
        %v4095 = vand.u32 %v4094, 4294901760
        %v4096 = vsub.f32 %v4094, %v4095
        %v4097 = vand.u32 %v4096, 4294901760
        %4098 = vmatpush.msra.mxu0 %v4097
        %v4099 = vand.u32 %v2506, 4294901760
        %v4100 = vsub.f32 %v2506, %v4099
        %v4101 = vand.u32 %v4100, 4294901760
        %v4102 = vsub.f32 %v4100, %v4101
        %v4103 = vand.u32 %v4102, 4294901760
        %4104 = vmatpush.msra.mxu0 %v4103
        %v4105 = vand.u32 %v2505, 4294901760
        %v4106 = vsub.f32 %v2505, %v4105
        %v4107 = vand.u32 %v4106, 4294901760
        %v4108 = vsub.f32 %v4106, %v4107
        %v4109 = vand.u32 %v4108, 4294901760
        %4110 = vmatpush.msra.mxu0 %v4109
        %v4111 = vand.u32 %v2504, 4294901760
        %v4112 = vsub.f32 %v2504, %v4111
        %v4113 = vand.u32 %v4112, 4294901760
        %v4114 = vsub.f32 %v4112, %v4113
        %v4115 = vand.u32 %v4114, 4294901760
        %4116 = vmatpush.msra.mxu0 %v4115
        %v4117 = vand.u32 %v2503, 4294901760
        %v4118 = vsub.f32 %v2503, %v4117
        %v4119 = vand.u32 %v4118, 4294901760
        %v4120 = vsub.f32 %v4118, %v4119
        %v4121 = vand.u32 %v4120, 4294901760
        %4122 = vmatpush.msra.mxu0 %v4121
        %v4123 = vand.u32 %v2502, 4294901760
        %v4124 = vsub.f32 %v2502, %v4123
        %v4125 = vand.u32 %v4124, 4294901760
        %v4126 = vsub.f32 %v4124, %v4125
        %v4127 = vand.u32 %v4126, 4294901760
        %4128 = vmatpush.msra.mxu0 %v4127
        %v4129 = vand.u32 %v2501, 4294901760
        %v4130 = vsub.f32 %v2501, %v4129
        %v4131 = vand.u32 %v4130, 4294901760
        %v4132 = vsub.f32 %v4130, %v4131
        %v4133 = vand.u32 %v4132, 4294901760
        %4134 = vmatpush.msra.mxu0 %v4133
        %v4135 = vand.u32 %v2500, 4294901760
        %v4136 = vsub.f32 %v2500, %v4135
        %v4137 = vand.u32 %v4136, 4294901760
        %v4138 = vsub.f32 %v4136, %v4137
        %v4139 = vand.u32 %v4138, 4294901760
        %4140 = vmatpush.msra.mxu0 %v4139
        %v4141 = vand.u32 %v2499, 4294901760
        %v4142 = vsub.f32 %v2499, %v4141
        %v4143 = vand.u32 %v4142, 4294901760
        %v4144 = vsub.f32 %v4142, %v4143
        %v4145 = vand.u32 %v4144, 4294901760
        %4146 = vmatpush.msra.mxu0 %v4145
        %v4147 = vand.u32 %v2498, 4294901760
        %v4148 = vsub.f32 %v2498, %v4147
        %v4149 = vand.u32 %v4148, 4294901760
        %v4150 = vsub.f32 %v4148, %v4149
        %v4151 = vand.u32 %v4150, 4294901760
        %4152 = vmatpush.msra.mxu0 %v4151
        %v4153 = vand.u32 %v2497, 4294901760
        %v4154 = vsub.f32 %v2497, %v4153
        %v4155 = vand.u32 %v4154, 4294901760
        %v4156 = vsub.f32 %v4154, %v4155
        %v4157 = vand.u32 %v4156, 4294901760
        %4158 = vmatpush.msra.mxu0 %v4157
        %v4159 = vand.u32 %v2496, 4294901760
        %v4160 = vsub.f32 %v2496, %v4159
        %v4161 = vand.u32 %v4160, 4294901760
        %v4162 = vsub.f32 %v4160, %v4161
        %v4163 = vand.u32 %v4162, 4294901760
        %4164 = vmatpush.msra.mxu0 %v4163
        %v4165 = vand.u32 %v2495, 4294901760
        %v4166 = vsub.f32 %v2495, %v4165
        %v4167 = vand.u32 %v4166, 4294901760
        %v4168 = vsub.f32 %v4166, %v4167
        %v4169 = vand.u32 %v4168, 4294901760
        %4170 = vmatpush.msra.mxu0 %v4169
        %v4171 = vand.u32 %v2494, 4294901760
        %v4172 = vsub.f32 %v2494, %v4171
        %v4173 = vand.u32 %v4172, 4294901760
        %v4174 = vsub.f32 %v4172, %v4173
        %v4175 = vand.u32 %v4174, 4294901760
        %4176 = vmatpush.msra.mxu0 %v4175
        %v4177 = vand.u32 %v2493, 4294901760
        %v4178 = vsub.f32 %v2493, %v4177
        %v4179 = vand.u32 %v4178, 4294901760
        %v4180 = vsub.f32 %v4178, %v4179
        %v4181 = vand.u32 %v4180, 4294901760
        %4182 = vmatpush.msra.mxu0 %v4181
        %v4183 = vand.u32 %v2492, 4294901760
        %v4184 = vsub.f32 %v2492, %v4183
        %v4185 = vand.u32 %v4184, 4294901760
        %v4186 = vsub.f32 %v4184, %v4185
        %v4187 = vand.u32 %v4186, 4294901760
        %4188 = vmatpush.msra.mxu0 %v4187
        %v4189 = vand.u32 %v2416, 4294901760
        %4190 = vmatmul.f32.gmra.mxu0 %v4189
        %v4191 = vpop.f32.mrf.mxu0
        %v4192 = vadd.f32 %v4083, %v4191
        %v4193 = vand.u32 %v2424, 4294901760
        %4194 = vmatmul.f32.gmra.mxu0 %v4193
        %v4195 = vpop.f32.mrf.mxu0
        %v4196 = vadd.f32 %v4091, %v4195
        %4197 = vdwg.mxu0
        %v4198 = vand.u32 %v2507, 4294901760
        %v4199 = vsub.f32 %v2507, %v4198
        %4200 = vmatpush.msra.mxu0 %v4199
        %v4201 = vand.u32 %v2506, 4294901760
        %v4202 = vsub.f32 %v2506, %v4201
        %4203 = vmatpush.msra.mxu0 %v4202
        %v4204 = vand.u32 %v2505, 4294901760
        %v4205 = vsub.f32 %v2505, %v4204
        %4206 = vmatpush.msra.mxu0 %v4205
        %v4207 = vand.u32 %v2504, 4294901760
        %v4208 = vsub.f32 %v2504, %v4207
        %4209 = vmatpush.msra.mxu0 %v4208
        %v4210 = vand.u32 %v2503, 4294901760
        %v4211 = vsub.f32 %v2503, %v4210
        %4212 = vmatpush.msra.mxu0 %v4211
        %v4213 = vand.u32 %v2502, 4294901760
        %v4214 = vsub.f32 %v2502, %v4213
        %4215 = vmatpush.msra.mxu0 %v4214
        %v4216 = vand.u32 %v2501, 4294901760
        %v4217 = vsub.f32 %v2501, %v4216
        %4218 = vmatpush.msra.mxu0 %v4217
        %v4219 = vand.u32 %v2500, 4294901760
        %v4220 = vsub.f32 %v2500, %v4219
        %4221 = vmatpush.msra.mxu0 %v4220
        %v4222 = vand.u32 %v2499, 4294901760
        %v4223 = vsub.f32 %v2499, %v4222
        %4224 = vmatpush.msra.mxu0 %v4223
        %v4225 = vand.u32 %v2498, 4294901760
        %v4226 = vsub.f32 %v2498, %v4225
        %4227 = vmatpush.msra.mxu0 %v4226
        %v4228 = vand.u32 %v2497, 4294901760
        %v4229 = vsub.f32 %v2497, %v4228
        %4230 = vmatpush.msra.mxu0 %v4229
        %v4231 = vand.u32 %v2496, 4294901760
        %v4232 = vsub.f32 %v2496, %v4231
        %4233 = vmatpush.msra.mxu0 %v4232
        %v4234 = vand.u32 %v2495, 4294901760
        %v4235 = vsub.f32 %v2495, %v4234
        %4236 = vmatpush.msra.mxu0 %v4235
        %v4237 = vand.u32 %v2494, 4294901760
        %v4238 = vsub.f32 %v2494, %v4237
        %4239 = vmatpush.msra.mxu0 %v4238
        %v4240 = vand.u32 %v2493, 4294901760
        %v4241 = vsub.f32 %v2493, %v4240
        %4242 = vmatpush.msra.mxu0 %v4241
        %v4243 = vand.u32 %v2492, 4294901760
        %v4244 = vsub.f32 %v2492, %v4243
        %4245 = vmatpush.msra.mxu0 %v4244
        %v4246 = vand.u32 %v2416, 4294901760
        %v4247 = vsub.f32 %v2416, %v4246
        %4248 = vmatmul.f32.gmra.mxu0 %v4247
        %v4249 = vpop.f32.mrf.mxu0
        %v4250 = vadd.f32 %v4192, %v4249
        %v4251 = vand.u32 %v2424, 4294901760
        %v4252 = vsub.f32 %v2424, %v4251
        %4253 = vmatmul.f32.gmra.mxu0 %v4252
        %v4254 = vpop.f32.mrf.mxu0
        %v4255 = vadd.f32 %v4196, %v4254
        %4256 = vdwg.mxu0
        %v4257 = vand.u32 %v2507, 4294901760
        %4258 = vmatpush.msra.mxu0 %v4257
        %v4259 = vand.u32 %v2506, 4294901760
        %4260 = vmatpush.msra.mxu0 %v4259
        %v4261 = vand.u32 %v2505, 4294901760
        %4262 = vmatpush.msra.mxu0 %v4261
        %v4263 = vand.u32 %v2504, 4294901760
        %4264 = vmatpush.msra.mxu0 %v4263
        %v4265 = vand.u32 %v2503, 4294901760
        %4266 = vmatpush.msra.mxu0 %v4265
        %v4267 = vand.u32 %v2502, 4294901760
        %4268 = vmatpush.msra.mxu0 %v4267
        %v4269 = vand.u32 %v2501, 4294901760
        %4270 = vmatpush.msra.mxu0 %v4269
        %v4271 = vand.u32 %v2500, 4294901760
        %4272 = vmatpush.msra.mxu0 %v4271
        %v4273 = vand.u32 %v2499, 4294901760
        %4274 = vmatpush.msra.mxu0 %v4273
        %v4275 = vand.u32 %v2498, 4294901760
        %4276 = vmatpush.msra.mxu0 %v4275
        %v4277 = vand.u32 %v2497, 4294901760
        %4278 = vmatpush.msra.mxu0 %v4277
        %v4279 = vand.u32 %v2496, 4294901760
        %4280 = vmatpush.msra.mxu0 %v4279
        %v4281 = vand.u32 %v2495, 4294901760
        %4282 = vmatpush.msra.mxu0 %v4281
        %v4283 = vand.u32 %v2494, 4294901760
        %4284 = vmatpush.msra.mxu0 %v4283
        %v4285 = vand.u32 %v2493, 4294901760
        %4286 = vmatpush.msra.mxu0 %v4285
        %v4287 = vand.u32 %v2492, 4294901760
        %4288 = vmatpush.msra.mxu0 %v4287
        %v4289 = vand.u32 %v2416, 4294901760
        %v4290 = vsub.f32 %v2416, %v4289
        %v4291 = vand.u32 %v4290, 4294901760
        %4292 = vmatmul.f32.gmra.mxu0 %v4291
        %v4293 = vpop.f32.mrf.mxu0
        %v4294 = vadd.f32 %v4250, %v4293
        %v4295 = vand.u32 %v2424, 4294901760
        %v4296 = vsub.f32 %v2424, %v4295
        %v4297 = vand.u32 %v4296, 4294901760
        %4298 = vmatmul.f32.gmra.mxu0 %v4297
        %v4299 = vpop.f32.mrf.mxu0
        %v4300 = vadd.f32 %v4255, %v4299
        %4301 = vdwg.mxu0
        %v4302 = vand.u32 %v2507, 4294901760
        %v4303 = vsub.f32 %v2507, %v4302
        %v4304 = vand.u32 %v4303, 4294901760
        %4305 = vmatpush.msra.mxu0 %v4304
        %v4306 = vand.u32 %v2506, 4294901760
        %v4307 = vsub.f32 %v2506, %v4306
        %v4308 = vand.u32 %v4307, 4294901760
        %4309 = vmatpush.msra.mxu0 %v4308
        %v4310 = vand.u32 %v2505, 4294901760
        %v4311 = vsub.f32 %v2505, %v4310
        %v4312 = vand.u32 %v4311, 4294901760
        %4313 = vmatpush.msra.mxu0 %v4312
        %v4314 = vand.u32 %v2504, 4294901760
        %v4315 = vsub.f32 %v2504, %v4314
        %v4316 = vand.u32 %v4315, 4294901760
        %4317 = vmatpush.msra.mxu0 %v4316
        %v4318 = vand.u32 %v2503, 4294901760
        %v4319 = vsub.f32 %v2503, %v4318
        %v4320 = vand.u32 %v4319, 4294901760
        %4321 = vmatpush.msra.mxu0 %v4320
        %v4322 = vand.u32 %v2502, 4294901760
        %v4323 = vsub.f32 %v2502, %v4322
        %v4324 = vand.u32 %v4323, 4294901760
        %4325 = vmatpush.msra.mxu0 %v4324
        %v4326 = vand.u32 %v2501, 4294901760
        %v4327 = vsub.f32 %v2501, %v4326
        %v4328 = vand.u32 %v4327, 4294901760
        %4329 = vmatpush.msra.mxu0 %v4328
        %v4330 = vand.u32 %v2500, 4294901760
        %v4331 = vsub.f32 %v2500, %v4330
        %v4332 = vand.u32 %v4331, 4294901760
        %4333 = vmatpush.msra.mxu0 %v4332
        %v4334 = vand.u32 %v2499, 4294901760
        %v4335 = vsub.f32 %v2499, %v4334
        %v4336 = vand.u32 %v4335, 4294901760
        %4337 = vmatpush.msra.mxu0 %v4336
        %v4338 = vand.u32 %v2498, 4294901760
        %v4339 = vsub.f32 %v2498, %v4338
        %v4340 = vand.u32 %v4339, 4294901760
        %4341 = vmatpush.msra.mxu0 %v4340
        %v4342 = vand.u32 %v2497, 4294901760
        %v4343 = vsub.f32 %v2497, %v4342
        %v4344 = vand.u32 %v4343, 4294901760
        %4345 = vmatpush.msra.mxu0 %v4344
        %v4346 = vand.u32 %v2496, 4294901760
        %v4347 = vsub.f32 %v2496, %v4346
        %v4348 = vand.u32 %v4347, 4294901760
        %4349 = vmatpush.msra.mxu0 %v4348
        %v4350 = vand.u32 %v2495, 4294901760
        %v4351 = vsub.f32 %v2495, %v4350
        %v4352 = vand.u32 %v4351, 4294901760
        %4353 = vmatpush.msra.mxu0 %v4352
        %v4354 = vand.u32 %v2494, 4294901760
        %v4355 = vsub.f32 %v2494, %v4354
        %v4356 = vand.u32 %v4355, 4294901760
        %4357 = vmatpush.msra.mxu0 %v4356
        %v4358 = vand.u32 %v2493, 4294901760
        %v4359 = vsub.f32 %v2493, %v4358
        %v4360 = vand.u32 %v4359, 4294901760
        %4361 = vmatpush.msra.mxu0 %v4360
        %v4362 = vand.u32 %v2492, 4294901760
        %v4363 = vsub.f32 %v2492, %v4362
        %v4364 = vand.u32 %v4363, 4294901760
        %4365 = vmatpush.msra.mxu0 %v4364
        %v4366 = vand.u32 %v2416, 4294901760
        %4367 = vmatmul.f32.gmra.mxu0 %v4366
        %v4368 = vpop.f32.mrf.mxu0
        %v4369 = vadd.f32 %v4294, %v4368
        %v4370 = vand.u32 %v2424, 4294901760
        %4371 = vmatmul.f32.gmra.mxu0 %v4370
        %v4372 = vpop.f32.mrf.mxu0
        %v4373 = vadd.f32 %v4300, %v4372
        %4374 = vdwg.mxu0
        %v4375 = vand.u32 %v2507, 4294901760
        %4376 = vmatpush.msra.mxu0 %v4375
        %v4377 = vand.u32 %v2506, 4294901760
        %4378 = vmatpush.msra.mxu0 %v4377
        %v4379 = vand.u32 %v2505, 4294901760
        %4380 = vmatpush.msra.mxu0 %v4379
        %v4381 = vand.u32 %v2504, 4294901760
        %4382 = vmatpush.msra.mxu0 %v4381
        %v4383 = vand.u32 %v2503, 4294901760
        %4384 = vmatpush.msra.mxu0 %v4383
        %v4385 = vand.u32 %v2502, 4294901760
        %4386 = vmatpush.msra.mxu0 %v4385
        %v4387 = vand.u32 %v2501, 4294901760
        %4388 = vmatpush.msra.mxu0 %v4387
        %v4389 = vand.u32 %v2500, 4294901760
        %4390 = vmatpush.msra.mxu0 %v4389
        %v4391 = vand.u32 %v2499, 4294901760
        %4392 = vmatpush.msra.mxu0 %v4391
        %v4393 = vand.u32 %v2498, 4294901760
        %4394 = vmatpush.msra.mxu0 %v4393
        %v4395 = vand.u32 %v2497, 4294901760
        %4396 = vmatpush.msra.mxu0 %v4395
        %v4397 = vand.u32 %v2496, 4294901760
        %4398 = vmatpush.msra.mxu0 %v4397
        %v4399 = vand.u32 %v2495, 4294901760
        %4400 = vmatpush.msra.mxu0 %v4399
        %v4401 = vand.u32 %v2494, 4294901760
        %4402 = vmatpush.msra.mxu0 %v4401
        %v4403 = vand.u32 %v2493, 4294901760
        %4404 = vmatpush.msra.mxu0 %v4403
        %v4405 = vand.u32 %v2492, 4294901760
        %4406 = vmatpush.msra.mxu0 %v4405
        %v4407 = vand.u32 %v2416, 4294901760
        %4408 = vmatmul.f32.gmra.mxu0 %v4407
        %v4409 = vpop.f32.mrf.mxu0
        %v4410 = vadd.f32 %v4369, %v4409
        %v4411 = vand.u32 %v2424, 4294901760
        %4412 = vmatmul.f32.gmra.mxu0 %v4411
        %v4413 = vpop.f32.mrf.mxu0
        %v4414 = vadd.f32 %v4373, %v4413
        %4415 = vdwg.mxu0
        %v4416 = vand.u32 %v2523, 4294901760
        %4417 = vmatpush.msra.mxu0 %v4416
        %v4418 = vand.u32 %v2522, 4294901760
        %4419 = vmatpush.msra.mxu0 %v4418
        %v4420 = vand.u32 %v2521, 4294901760
        %4421 = vmatpush.msra.mxu0 %v4420
        %v4422 = vand.u32 %v2520, 4294901760
        %4423 = vmatpush.msra.mxu0 %v4422
        %v4424 = vand.u32 %v2519, 4294901760
        %4425 = vmatpush.msra.mxu0 %v4424
        %v4426 = vand.u32 %v2518, 4294901760
        %4427 = vmatpush.msra.mxu0 %v4426
        %v4428 = vand.u32 %v2517, 4294901760
        %4429 = vmatpush.msra.mxu0 %v4428
        %v4430 = vand.u32 %v2516, 4294901760
        %4431 = vmatpush.msra.mxu0 %v4430
        %v4432 = vand.u32 %v2515, 4294901760
        %4433 = vmatpush.msra.mxu0 %v4432
        %v4434 = vand.u32 %v2514, 4294901760
        %4435 = vmatpush.msra.mxu0 %v4434
        %v4436 = vand.u32 %v2513, 4294901760
        %4437 = vmatpush.msra.mxu0 %v4436
        %v4438 = vand.u32 %v2512, 4294901760
        %4439 = vmatpush.msra.mxu0 %v4438
        %v4440 = vand.u32 %v2511, 4294901760
        %4441 = vmatpush.msra.mxu0 %v4440
        %v4442 = vand.u32 %v2510, 4294901760
        %4443 = vmatpush.msra.mxu0 %v4442
        %v4444 = vand.u32 %v2509, 4294901760
        %4445 = vmatpush.msra.mxu0 %v4444
        %v4446 = vand.u32 %v2508, 4294901760
        %4447 = vmatpush.msra.mxu0 %v4446
        %v4448 = vand.u32 %v2417, 4294901760
        %v4449 = vsub.f32 %v2417, %v4448
        %v4450 = vand.u32 %v4449, 4294901760
        %v4451 = vsub.f32 %v4449, %v4450
        %v4452 = vand.u32 %v4451, 4294901760
        %4453 = vmatmul.f32.gmra.mxu0 %v4452
        %v4454 = vpop.f32.mrf.mxu0
        %v4455 = vadd.f32 %v4410, %v4454
        %v4456 = vand.u32 %v2425, 4294901760
        %v4457 = vsub.f32 %v2425, %v4456
        %v4458 = vand.u32 %v4457, 4294901760
        %v4459 = vsub.f32 %v4457, %v4458
        %v4460 = vand.u32 %v4459, 4294901760
        %4461 = vmatmul.f32.gmra.mxu0 %v4460
        %v4462 = vpop.f32.mrf.mxu0
        %v4463 = vadd.f32 %v4414, %v4462
        %4464 = vdwg.mxu0
        %v4465 = vand.u32 %v2523, 4294901760
        %v4466 = vsub.f32 %v2523, %v4465
        %v4467 = vand.u32 %v4466, 4294901760
        %v4468 = vsub.f32 %v4466, %v4467
        %v4469 = vand.u32 %v4468, 4294901760
        %4470 = vmatpush.msra.mxu0 %v4469
        %v4471 = vand.u32 %v2522, 4294901760
        %v4472 = vsub.f32 %v2522, %v4471
        %v4473 = vand.u32 %v4472, 4294901760
        %v4474 = vsub.f32 %v4472, %v4473
        %v4475 = vand.u32 %v4474, 4294901760
        %4476 = vmatpush.msra.mxu0 %v4475
        %v4477 = vand.u32 %v2521, 4294901760
        %v4478 = vsub.f32 %v2521, %v4477
        %v4479 = vand.u32 %v4478, 4294901760
        %v4480 = vsub.f32 %v4478, %v4479
        %v4481 = vand.u32 %v4480, 4294901760
        %4482 = vmatpush.msra.mxu0 %v4481
        %v4483 = vand.u32 %v2520, 4294901760
        %v4484 = vsub.f32 %v2520, %v4483
        %v4485 = vand.u32 %v4484, 4294901760
        %v4486 = vsub.f32 %v4484, %v4485
        %v4487 = vand.u32 %v4486, 4294901760
        %4488 = vmatpush.msra.mxu0 %v4487
        %v4489 = vand.u32 %v2519, 4294901760
        %v4490 = vsub.f32 %v2519, %v4489
        %v4491 = vand.u32 %v4490, 4294901760
        %v4492 = vsub.f32 %v4490, %v4491
        %v4493 = vand.u32 %v4492, 4294901760
        %4494 = vmatpush.msra.mxu0 %v4493
        %v4495 = vand.u32 %v2518, 4294901760
        %v4496 = vsub.f32 %v2518, %v4495
        %v4497 = vand.u32 %v4496, 4294901760
        %v4498 = vsub.f32 %v4496, %v4497
        %v4499 = vand.u32 %v4498, 4294901760
        %4500 = vmatpush.msra.mxu0 %v4499
        %v4501 = vand.u32 %v2517, 4294901760
        %v4502 = vsub.f32 %v2517, %v4501
        %v4503 = vand.u32 %v4502, 4294901760
        %v4504 = vsub.f32 %v4502, %v4503
        %v4505 = vand.u32 %v4504, 4294901760
        %4506 = vmatpush.msra.mxu0 %v4505
        %v4507 = vand.u32 %v2516, 4294901760
        %v4508 = vsub.f32 %v2516, %v4507
        %v4509 = vand.u32 %v4508, 4294901760
        %v4510 = vsub.f32 %v4508, %v4509
        %v4511 = vand.u32 %v4510, 4294901760
        %4512 = vmatpush.msra.mxu0 %v4511
        %v4513 = vand.u32 %v2515, 4294901760
        %v4514 = vsub.f32 %v2515, %v4513
        %v4515 = vand.u32 %v4514, 4294901760
        %v4516 = vsub.f32 %v4514, %v4515
        %v4517 = vand.u32 %v4516, 4294901760
        %4518 = vmatpush.msra.mxu0 %v4517
        %v4519 = vand.u32 %v2514, 4294901760
        %v4520 = vsub.f32 %v2514, %v4519
        %v4521 = vand.u32 %v4520, 4294901760
        %v4522 = vsub.f32 %v4520, %v4521
        %v4523 = vand.u32 %v4522, 4294901760
        %4524 = vmatpush.msra.mxu0 %v4523
        %v4525 = vand.u32 %v2513, 4294901760
        %v4526 = vsub.f32 %v2513, %v4525
        %v4527 = vand.u32 %v4526, 4294901760
        %v4528 = vsub.f32 %v4526, %v4527
        %v4529 = vand.u32 %v4528, 4294901760
        %4530 = vmatpush.msra.mxu0 %v4529
        %v4531 = vand.u32 %v2512, 4294901760
        %v4532 = vsub.f32 %v2512, %v4531
        %v4533 = vand.u32 %v4532, 4294901760
        %v4534 = vsub.f32 %v4532, %v4533
        %v4535 = vand.u32 %v4534, 4294901760
        %4536 = vmatpush.msra.mxu0 %v4535
        %v4537 = vand.u32 %v2511, 4294901760
        %v4538 = vsub.f32 %v2511, %v4537
        %v4539 = vand.u32 %v4538, 4294901760
        %v4540 = vsub.f32 %v4538, %v4539
        %v4541 = vand.u32 %v4540, 4294901760
        %4542 = vmatpush.msra.mxu0 %v4541
        %v4543 = vand.u32 %v2510, 4294901760
        %v4544 = vsub.f32 %v2510, %v4543
        %v4545 = vand.u32 %v4544, 4294901760
        %v4546 = vsub.f32 %v4544, %v4545
        %v4547 = vand.u32 %v4546, 4294901760
        %4548 = vmatpush.msra.mxu0 %v4547
        %v4549 = vand.u32 %v2509, 4294901760
        %v4550 = vsub.f32 %v2509, %v4549
        %v4551 = vand.u32 %v4550, 4294901760
        %v4552 = vsub.f32 %v4550, %v4551
        %v4553 = vand.u32 %v4552, 4294901760
        %4554 = vmatpush.msra.mxu0 %v4553
        %v4555 = vand.u32 %v2508, 4294901760
        %v4556 = vsub.f32 %v2508, %v4555
        %v4557 = vand.u32 %v4556, 4294901760
        %v4558 = vsub.f32 %v4556, %v4557
        %v4559 = vand.u32 %v4558, 4294901760
        %4560 = vmatpush.msra.mxu0 %v4559
        %v4561 = vand.u32 %v2417, 4294901760
        %4562 = vmatmul.f32.gmra.mxu0 %v4561
        %v4563 = vpop.f32.mrf.mxu0
        %v4564 = vadd.f32 %v4455, %v4563
        %v4565 = vand.u32 %v2425, 4294901760
        %4566 = vmatmul.f32.gmra.mxu0 %v4565
        %v4567 = vpop.f32.mrf.mxu0
        %v4568 = vadd.f32 %v4463, %v4567
        %4569 = vdwg.mxu0
        %v4570 = vand.u32 %v2523, 4294901760
        %v4571 = vsub.f32 %v2523, %v4570
        %4572 = vmatpush.msra.mxu0 %v4571
        %v4573 = vand.u32 %v2522, 4294901760
        %v4574 = vsub.f32 %v2522, %v4573
        %4575 = vmatpush.msra.mxu0 %v4574
        %v4576 = vand.u32 %v2521, 4294901760
        %v4577 = vsub.f32 %v2521, %v4576
        %4578 = vmatpush.msra.mxu0 %v4577
        %v4579 = vand.u32 %v2520, 4294901760
        %v4580 = vsub.f32 %v2520, %v4579
        %4581 = vmatpush.msra.mxu0 %v4580
        %v4582 = vand.u32 %v2519, 4294901760
        %v4583 = vsub.f32 %v2519, %v4582
        %4584 = vmatpush.msra.mxu0 %v4583
        %v4585 = vand.u32 %v2518, 4294901760
        %v4586 = vsub.f32 %v2518, %v4585
        %4587 = vmatpush.msra.mxu0 %v4586
        %v4588 = vand.u32 %v2517, 4294901760
        %v4589 = vsub.f32 %v2517, %v4588
        %4590 = vmatpush.msra.mxu0 %v4589
        %v4591 = vand.u32 %v2516, 4294901760
        %v4592 = vsub.f32 %v2516, %v4591
        %4593 = vmatpush.msra.mxu0 %v4592
        %v4594 = vand.u32 %v2515, 4294901760
        %v4595 = vsub.f32 %v2515, %v4594
        %4596 = vmatpush.msra.mxu0 %v4595
        %v4597 = vand.u32 %v2514, 4294901760
        %v4598 = vsub.f32 %v2514, %v4597
        %4599 = vmatpush.msra.mxu0 %v4598
        %v4600 = vand.u32 %v2513, 4294901760
        %v4601 = vsub.f32 %v2513, %v4600
        %4602 = vmatpush.msra.mxu0 %v4601
        %v4603 = vand.u32 %v2512, 4294901760
        %v4604 = vsub.f32 %v2512, %v4603
        %4605 = vmatpush.msra.mxu0 %v4604
        %v4606 = vand.u32 %v2511, 4294901760
        %v4607 = vsub.f32 %v2511, %v4606
        %4608 = vmatpush.msra.mxu0 %v4607
        %v4609 = vand.u32 %v2510, 4294901760
        %v4610 = vsub.f32 %v2510, %v4609
        %4611 = vmatpush.msra.mxu0 %v4610
        %v4612 = vand.u32 %v2509, 4294901760
        %v4613 = vsub.f32 %v2509, %v4612
        %4614 = vmatpush.msra.mxu0 %v4613
        %v4615 = vand.u32 %v2508, 4294901760
        %v4616 = vsub.f32 %v2508, %v4615
        %4617 = vmatpush.msra.mxu0 %v4616
        %v4618 = vand.u32 %v2417, 4294901760
        %v4619 = vsub.f32 %v2417, %v4618
        %4620 = vmatmul.f32.gmra.mxu0 %v4619
        %v4621 = vpop.f32.mrf.mxu0
        %v4622 = vadd.f32 %v4564, %v4621
        %v4623 = vand.u32 %v2425, 4294901760
        %v4624 = vsub.f32 %v2425, %v4623
        %4625 = vmatmul.f32.gmra.mxu0 %v4624
        %v4626 = vpop.f32.mrf.mxu0
        %v4627 = vadd.f32 %v4568, %v4626
        %4628 = vdwg.mxu0
        %v4629 = vand.u32 %v2523, 4294901760
        %4630 = vmatpush.msra.mxu0 %v4629
        %v4631 = vand.u32 %v2522, 4294901760
        %4632 = vmatpush.msra.mxu0 %v4631
        %v4633 = vand.u32 %v2521, 4294901760
        %4634 = vmatpush.msra.mxu0 %v4633
        %v4635 = vand.u32 %v2520, 4294901760
        %4636 = vmatpush.msra.mxu0 %v4635
        %v4637 = vand.u32 %v2519, 4294901760
        %4638 = vmatpush.msra.mxu0 %v4637
        %v4639 = vand.u32 %v2518, 4294901760
        %4640 = vmatpush.msra.mxu0 %v4639
        %v4641 = vand.u32 %v2517, 4294901760
        %4642 = vmatpush.msra.mxu0 %v4641
        %v4643 = vand.u32 %v2516, 4294901760
        %4644 = vmatpush.msra.mxu0 %v4643
        %v4645 = vand.u32 %v2515, 4294901760
        %4646 = vmatpush.msra.mxu0 %v4645
        %v4647 = vand.u32 %v2514, 4294901760
        %4648 = vmatpush.msra.mxu0 %v4647
        %v4649 = vand.u32 %v2513, 4294901760
        %4650 = vmatpush.msra.mxu0 %v4649
        %v4651 = vand.u32 %v2512, 4294901760
        %4652 = vmatpush.msra.mxu0 %v4651
        %v4653 = vand.u32 %v2511, 4294901760
        %4654 = vmatpush.msra.mxu0 %v4653
        %v4655 = vand.u32 %v2510, 4294901760
        %4656 = vmatpush.msra.mxu0 %v4655
        %v4657 = vand.u32 %v2509, 4294901760
        %4658 = vmatpush.msra.mxu0 %v4657
        %v4659 = vand.u32 %v2508, 4294901760
        %4660 = vmatpush.msra.mxu0 %v4659
        %v4661 = vand.u32 %v2417, 4294901760
        %v4662 = vsub.f32 %v2417, %v4661
        %v4663 = vand.u32 %v4662, 4294901760
        %4664 = vmatmul.f32.gmra.mxu0 %v4663
        %v4665 = vpop.f32.mrf.mxu0
        %v4666 = vadd.f32 %v4622, %v4665
        %v4667 = vand.u32 %v2425, 4294901760
        %v4668 = vsub.f32 %v2425, %v4667
        %v4669 = vand.u32 %v4668, 4294901760
        %4670 = vmatmul.f32.gmra.mxu0 %v4669
        %v4671 = vpop.f32.mrf.mxu0
        %v4672 = vadd.f32 %v4627, %v4671
        %4673 = vdwg.mxu0
        %v4674 = vand.u32 %v2523, 4294901760
        %v4675 = vsub.f32 %v2523, %v4674
        %v4676 = vand.u32 %v4675, 4294901760
        %4677 = vmatpush.msra.mxu0 %v4676
        %v4678 = vand.u32 %v2522, 4294901760
        %v4679 = vsub.f32 %v2522, %v4678
        %v4680 = vand.u32 %v4679, 4294901760
        %4681 = vmatpush.msra.mxu0 %v4680
        %v4682 = vand.u32 %v2521, 4294901760
        %v4683 = vsub.f32 %v2521, %v4682
        %v4684 = vand.u32 %v4683, 4294901760
        %4685 = vmatpush.msra.mxu0 %v4684
        %v4686 = vand.u32 %v2520, 4294901760
        %v4687 = vsub.f32 %v2520, %v4686
        %v4688 = vand.u32 %v4687, 4294901760
        %4689 = vmatpush.msra.mxu0 %v4688
        %v4690 = vand.u32 %v2519, 4294901760
        %v4691 = vsub.f32 %v2519, %v4690
        %v4692 = vand.u32 %v4691, 4294901760
        %4693 = vmatpush.msra.mxu0 %v4692
        %v4694 = vand.u32 %v2518, 4294901760
        %v4695 = vsub.f32 %v2518, %v4694
        %v4696 = vand.u32 %v4695, 4294901760
        %4697 = vmatpush.msra.mxu0 %v4696
        %v4698 = vand.u32 %v2517, 4294901760
        %v4699 = vsub.f32 %v2517, %v4698
        %v4700 = vand.u32 %v4699, 4294901760
        %4701 = vmatpush.msra.mxu0 %v4700
        %v4702 = vand.u32 %v2516, 4294901760
        %v4703 = vsub.f32 %v2516, %v4702
        %v4704 = vand.u32 %v4703, 4294901760
        %4705 = vmatpush.msra.mxu0 %v4704
        %v4706 = vand.u32 %v2515, 4294901760
        %v4707 = vsub.f32 %v2515, %v4706
        %v4708 = vand.u32 %v4707, 4294901760
        %4709 = vmatpush.msra.mxu0 %v4708
        %v4710 = vand.u32 %v2514, 4294901760
        %v4711 = vsub.f32 %v2514, %v4710
        %v4712 = vand.u32 %v4711, 4294901760
        %4713 = vmatpush.msra.mxu0 %v4712
        %v4714 = vand.u32 %v2513, 4294901760
        %v4715 = vsub.f32 %v2513, %v4714
        %v4716 = vand.u32 %v4715, 4294901760
        %4717 = vmatpush.msra.mxu0 %v4716
        %v4718 = vand.u32 %v2512, 4294901760
        %v4719 = vsub.f32 %v2512, %v4718
        %v4720 = vand.u32 %v4719, 4294901760
        %4721 = vmatpush.msra.mxu0 %v4720
        %v4722 = vand.u32 %v2511, 4294901760
        %v4723 = vsub.f32 %v2511, %v4722
        %v4724 = vand.u32 %v4723, 4294901760
        %4725 = vmatpush.msra.mxu0 %v4724
        %v4726 = vand.u32 %v2510, 4294901760
        %v4727 = vsub.f32 %v2510, %v4726
        %v4728 = vand.u32 %v4727, 4294901760
        %4729 = vmatpush.msra.mxu0 %v4728
        %v4730 = vand.u32 %v2509, 4294901760
        %v4731 = vsub.f32 %v2509, %v4730
        %v4732 = vand.u32 %v4731, 4294901760
        %4733 = vmatpush.msra.mxu0 %v4732
        %v4734 = vand.u32 %v2508, 4294901760
        %v4735 = vsub.f32 %v2508, %v4734
        %v4736 = vand.u32 %v4735, 4294901760
        %4737 = vmatpush.msra.mxu0 %v4736
        %v4738 = vand.u32 %v2417, 4294901760
        %4739 = vmatmul.f32.gmra.mxu0 %v4738
        %v4740 = vpop.f32.mrf.mxu0
        %v4741 = vadd.f32 %v4666, %v4740
        %v4742 = vand.u32 %v2425, 4294901760
        %4743 = vmatmul.f32.gmra.mxu0 %v4742
        %v4744 = vpop.f32.mrf.mxu0
        %v4745 = vadd.f32 %v4672, %v4744
        %4746 = vdwg.mxu0
        %v4747 = vand.u32 %v2523, 4294901760
        %4748 = vmatpush.msra.mxu0 %v4747
        %v4749 = vand.u32 %v2522, 4294901760
        %4750 = vmatpush.msra.mxu0 %v4749
        %v4751 = vand.u32 %v2521, 4294901760
        %4752 = vmatpush.msra.mxu0 %v4751
        %v4753 = vand.u32 %v2520, 4294901760
        %4754 = vmatpush.msra.mxu0 %v4753
        %v4755 = vand.u32 %v2519, 4294901760
        %4756 = vmatpush.msra.mxu0 %v4755
        %v4757 = vand.u32 %v2518, 4294901760
        %4758 = vmatpush.msra.mxu0 %v4757
        %v4759 = vand.u32 %v2517, 4294901760
        %4760 = vmatpush.msra.mxu0 %v4759
        %v4761 = vand.u32 %v2516, 4294901760
        %4762 = vmatpush.msra.mxu0 %v4761
        %v4763 = vand.u32 %v2515, 4294901760
        %4764 = vmatpush.msra.mxu0 %v4763
        %v4765 = vand.u32 %v2514, 4294901760
        %4766 = vmatpush.msra.mxu0 %v4765
        %v4767 = vand.u32 %v2513, 4294901760
        %4768 = vmatpush.msra.mxu0 %v4767
        %v4769 = vand.u32 %v2512, 4294901760
        %4770 = vmatpush.msra.mxu0 %v4769
        %v4771 = vand.u32 %v2511, 4294901760
        %4772 = vmatpush.msra.mxu0 %v4771
        %v4773 = vand.u32 %v2510, 4294901760
        %4774 = vmatpush.msra.mxu0 %v4773
        %v4775 = vand.u32 %v2509, 4294901760
        %4776 = vmatpush.msra.mxu0 %v4775
        %v4777 = vand.u32 %v2508, 4294901760
        %4778 = vmatpush.msra.mxu0 %v4777
        %v4779 = vand.u32 %v2417, 4294901760
        %4780 = vmatmul.f32.gmra.mxu0 %v4779
        %v4781 = vpop.f32.mrf.mxu0
        %v4782 = vadd.f32 %v4741, %v4781
        %v4783 = vand.u32 %v2425, 4294901760
        %4784 = vmatmul.f32.gmra.mxu0 %v4783
        %v4785 = vpop.f32.mrf.mxu0
        %v4786 = vadd.f32 %v4745, %v4785
        %4787 = vdwg.mxu0
        %v4788 = vand.u32 %v2539, 4294901760
        %4789 = vmatpush.msra.mxu0 %v4788
        %v4790 = vand.u32 %v2538, 4294901760
        %4791 = vmatpush.msra.mxu0 %v4790
        %v4792 = vand.u32 %v2537, 4294901760
        %4793 = vmatpush.msra.mxu0 %v4792
        %v4794 = vand.u32 %v2536, 4294901760
        %4795 = vmatpush.msra.mxu0 %v4794
        %v4796 = vand.u32 %v2535, 4294901760
        %4797 = vmatpush.msra.mxu0 %v4796
        %v4798 = vand.u32 %v2534, 4294901760
        %4799 = vmatpush.msra.mxu0 %v4798
        %v4800 = vand.u32 %v2533, 4294901760
        %4801 = vmatpush.msra.mxu0 %v4800
        %v4802 = vand.u32 %v2532, 4294901760
        %4803 = vmatpush.msra.mxu0 %v4802
        %v4804 = vand.u32 %v2531, 4294901760
        %4805 = vmatpush.msra.mxu0 %v4804
        %v4806 = vand.u32 %v2530, 4294901760
        %4807 = vmatpush.msra.mxu0 %v4806
        %v4808 = vand.u32 %v2529, 4294901760
        %4809 = vmatpush.msra.mxu0 %v4808
        %v4810 = vand.u32 %v2528, 4294901760
        %4811 = vmatpush.msra.mxu0 %v4810
        %v4812 = vand.u32 %v2527, 4294901760
        %4813 = vmatpush.msra.mxu0 %v4812
        %v4814 = vand.u32 %v2526, 4294901760
        %4815 = vmatpush.msra.mxu0 %v4814
        %v4816 = vand.u32 %v2525, 4294901760
        %4817 = vmatpush.msra.mxu0 %v4816
        %v4818 = vand.u32 %v2524, 4294901760
        %4819 = vmatpush.msra.mxu0 %v4818
        %v4820 = vand.u32 %v2418, 4294901760
        %v4821 = vsub.f32 %v2418, %v4820
        %v4822 = vand.u32 %v4821, 4294901760
        %v4823 = vsub.f32 %v4821, %v4822
        %v4824 = vand.u32 %v4823, 4294901760
        %4825 = vmatmul.f32.gmra.mxu0 %v4824
        %v4826 = vpop.f32.mrf.mxu0
        %v4827 = vadd.f32 %v4782, %v4826
        %v4828 = vand.u32 %v2426, 4294901760
        %v4829 = vsub.f32 %v2426, %v4828
        %v4830 = vand.u32 %v4829, 4294901760
        %v4831 = vsub.f32 %v4829, %v4830
        %v4832 = vand.u32 %v4831, 4294901760
        %4833 = vmatmul.f32.gmra.mxu0 %v4832
        %v4834 = vpop.f32.mrf.mxu0
        %v4835 = vadd.f32 %v4786, %v4834
        %4836 = vdwg.mxu0
        %v4837 = vand.u32 %v2539, 4294901760
        %v4838 = vsub.f32 %v2539, %v4837
        %v4839 = vand.u32 %v4838, 4294901760
        %v4840 = vsub.f32 %v4838, %v4839
        %v4841 = vand.u32 %v4840, 4294901760
        %4842 = vmatpush.msra.mxu0 %v4841
        %v4843 = vand.u32 %v2538, 4294901760
        %v4844 = vsub.f32 %v2538, %v4843
        %v4845 = vand.u32 %v4844, 4294901760
        %v4846 = vsub.f32 %v4844, %v4845
        %v4847 = vand.u32 %v4846, 4294901760
        %4848 = vmatpush.msra.mxu0 %v4847
        %v4849 = vand.u32 %v2537, 4294901760
        %v4850 = vsub.f32 %v2537, %v4849
        %v4851 = vand.u32 %v4850, 4294901760
        %v4852 = vsub.f32 %v4850, %v4851
        %v4853 = vand.u32 %v4852, 4294901760
        %4854 = vmatpush.msra.mxu0 %v4853
        %v4855 = vand.u32 %v2536, 4294901760
        %v4856 = vsub.f32 %v2536, %v4855
        %v4857 = vand.u32 %v4856, 4294901760
        %v4858 = vsub.f32 %v4856, %v4857
        %v4859 = vand.u32 %v4858, 4294901760
        %4860 = vmatpush.msra.mxu0 %v4859
        %v4861 = vand.u32 %v2535, 4294901760
        %v4862 = vsub.f32 %v2535, %v4861
        %v4863 = vand.u32 %v4862, 4294901760
        %v4864 = vsub.f32 %v4862, %v4863
        %v4865 = vand.u32 %v4864, 4294901760
        %4866 = vmatpush.msra.mxu0 %v4865
        %v4867 = vand.u32 %v2534, 4294901760
        %v4868 = vsub.f32 %v2534, %v4867
        %v4869 = vand.u32 %v4868, 4294901760
        %v4870 = vsub.f32 %v4868, %v4869
        %v4871 = vand.u32 %v4870, 4294901760
        %4872 = vmatpush.msra.mxu0 %v4871
        %v4873 = vand.u32 %v2533, 4294901760
        %v4874 = vsub.f32 %v2533, %v4873
        %v4875 = vand.u32 %v4874, 4294901760
        %v4876 = vsub.f32 %v4874, %v4875
        %v4877 = vand.u32 %v4876, 4294901760
        %4878 = vmatpush.msra.mxu0 %v4877
        %v4879 = vand.u32 %v2532, 4294901760
        %v4880 = vsub.f32 %v2532, %v4879
        %v4881 = vand.u32 %v4880, 4294901760
        %v4882 = vsub.f32 %v4880, %v4881
        %v4883 = vand.u32 %v4882, 4294901760
        %4884 = vmatpush.msra.mxu0 %v4883
        %v4885 = vand.u32 %v2531, 4294901760
        %v4886 = vsub.f32 %v2531, %v4885
        %v4887 = vand.u32 %v4886, 4294901760
        %v4888 = vsub.f32 %v4886, %v4887
        %v4889 = vand.u32 %v4888, 4294901760
        %4890 = vmatpush.msra.mxu0 %v4889
        %v4891 = vand.u32 %v2530, 4294901760
        %v4892 = vsub.f32 %v2530, %v4891
        %v4893 = vand.u32 %v4892, 4294901760
        %v4894 = vsub.f32 %v4892, %v4893
        %v4895 = vand.u32 %v4894, 4294901760
        %4896 = vmatpush.msra.mxu0 %v4895
        %v4897 = vand.u32 %v2529, 4294901760
        %v4898 = vsub.f32 %v2529, %v4897
        %v4899 = vand.u32 %v4898, 4294901760
        %v4900 = vsub.f32 %v4898, %v4899
        %v4901 = vand.u32 %v4900, 4294901760
        %4902 = vmatpush.msra.mxu0 %v4901
        %v4903 = vand.u32 %v2528, 4294901760
        %v4904 = vsub.f32 %v2528, %v4903
        %v4905 = vand.u32 %v4904, 4294901760
        %v4906 = vsub.f32 %v4904, %v4905
        %v4907 = vand.u32 %v4906, 4294901760
        %4908 = vmatpush.msra.mxu0 %v4907
        %v4909 = vand.u32 %v2527, 4294901760
        %v4910 = vsub.f32 %v2527, %v4909
        %v4911 = vand.u32 %v4910, 4294901760
        %v4912 = vsub.f32 %v4910, %v4911
        %v4913 = vand.u32 %v4912, 4294901760
        %4914 = vmatpush.msra.mxu0 %v4913
        %v4915 = vand.u32 %v2526, 4294901760
        %v4916 = vsub.f32 %v2526, %v4915
        %v4917 = vand.u32 %v4916, 4294901760
        %v4918 = vsub.f32 %v4916, %v4917
        %v4919 = vand.u32 %v4918, 4294901760
        %4920 = vmatpush.msra.mxu0 %v4919
        %v4921 = vand.u32 %v2525, 4294901760
        %v4922 = vsub.f32 %v2525, %v4921
        %v4923 = vand.u32 %v4922, 4294901760
        %v4924 = vsub.f32 %v4922, %v4923
        %v4925 = vand.u32 %v4924, 4294901760
        %4926 = vmatpush.msra.mxu0 %v4925
        %v4927 = vand.u32 %v2524, 4294901760
        %v4928 = vsub.f32 %v2524, %v4927
        %v4929 = vand.u32 %v4928, 4294901760
        %v4930 = vsub.f32 %v4928, %v4929
        %v4931 = vand.u32 %v4930, 4294901760
        %4932 = vmatpush.msra.mxu0 %v4931
        %v4933 = vand.u32 %v2418, 4294901760
        %4934 = vmatmul.f32.gmra.mxu0 %v4933
        %v4935 = vpop.f32.mrf.mxu0
        %v4936 = vadd.f32 %v4827, %v4935
        %v4937 = vand.u32 %v2426, 4294901760
        %4938 = vmatmul.f32.gmra.mxu0 %v4937
        %v4939 = vpop.f32.mrf.mxu0
        %v4940 = vadd.f32 %v4835, %v4939
        %4941 = vdwg.mxu0
        %v4942 = vand.u32 %v2539, 4294901760
        %v4943 = vsub.f32 %v2539, %v4942
        %4944 = vmatpush.msra.mxu0 %v4943
        %v4945 = vand.u32 %v2538, 4294901760
        %v4946 = vsub.f32 %v2538, %v4945
        %4947 = vmatpush.msra.mxu0 %v4946
        %v4948 = vand.u32 %v2537, 4294901760
        %v4949 = vsub.f32 %v2537, %v4948
        %4950 = vmatpush.msra.mxu0 %v4949
        %v4951 = vand.u32 %v2536, 4294901760
        %v4952 = vsub.f32 %v2536, %v4951
        %4953 = vmatpush.msra.mxu0 %v4952
        %v4954 = vand.u32 %v2535, 4294901760
        %v4955 = vsub.f32 %v2535, %v4954
        %4956 = vmatpush.msra.mxu0 %v4955
        %v4957 = vand.u32 %v2534, 4294901760
        %v4958 = vsub.f32 %v2534, %v4957
        %4959 = vmatpush.msra.mxu0 %v4958
        %v4960 = vand.u32 %v2533, 4294901760
        %v4961 = vsub.f32 %v2533, %v4960
        %4962 = vmatpush.msra.mxu0 %v4961
        %v4963 = vand.u32 %v2532, 4294901760
        %v4964 = vsub.f32 %v2532, %v4963
        %4965 = vmatpush.msra.mxu0 %v4964
        %v4966 = vand.u32 %v2531, 4294901760
        %v4967 = vsub.f32 %v2531, %v4966
        %4968 = vmatpush.msra.mxu0 %v4967
        %v4969 = vand.u32 %v2530, 4294901760
        %v4970 = vsub.f32 %v2530, %v4969
        %4971 = vmatpush.msra.mxu0 %v4970
        %v4972 = vand.u32 %v2529, 4294901760
        %v4973 = vsub.f32 %v2529, %v4972
        %4974 = vmatpush.msra.mxu0 %v4973
        %v4975 = vand.u32 %v2528, 4294901760
        %v4976 = vsub.f32 %v2528, %v4975
        %4977 = vmatpush.msra.mxu0 %v4976
        %v4978 = vand.u32 %v2527, 4294901760
        %v4979 = vsub.f32 %v2527, %v4978
        %4980 = vmatpush.msra.mxu0 %v4979
        %v4981 = vand.u32 %v2526, 4294901760
        %v4982 = vsub.f32 %v2526, %v4981
        %4983 = vmatpush.msra.mxu0 %v4982
        %v4984 = vand.u32 %v2525, 4294901760
        %v4985 = vsub.f32 %v2525, %v4984
        %4986 = vmatpush.msra.mxu0 %v4985
        %v4987 = vand.u32 %v2524, 4294901760
        %v4988 = vsub.f32 %v2524, %v4987
        %4989 = vmatpush.msra.mxu0 %v4988
        %v4990 = vand.u32 %v2418, 4294901760
        %v4991 = vsub.f32 %v2418, %v4990
        %4992 = vmatmul.f32.gmra.mxu0 %v4991
        %v4993 = vpop.f32.mrf.mxu0
        %v4994 = vadd.f32 %v4936, %v4993
        %v4995 = vand.u32 %v2426, 4294901760
        %v4996 = vsub.f32 %v2426, %v4995
        %4997 = vmatmul.f32.gmra.mxu0 %v4996
        %v4998 = vpop.f32.mrf.mxu0
        %v4999 = vadd.f32 %v4940, %v4998
        %5000 = vdwg.mxu0
        %v5001 = vand.u32 %v2539, 4294901760
        %5002 = vmatpush.msra.mxu0 %v5001
        %v5003 = vand.u32 %v2538, 4294901760
        %5004 = vmatpush.msra.mxu0 %v5003
        %v5005 = vand.u32 %v2537, 4294901760
        %5006 = vmatpush.msra.mxu0 %v5005
        %v5007 = vand.u32 %v2536, 4294901760
        %5008 = vmatpush.msra.mxu0 %v5007
        %v5009 = vand.u32 %v2535, 4294901760
        %5010 = vmatpush.msra.mxu0 %v5009
        %v5011 = vand.u32 %v2534, 4294901760
        %5012 = vmatpush.msra.mxu0 %v5011
        %v5013 = vand.u32 %v2533, 4294901760
        %5014 = vmatpush.msra.mxu0 %v5013
        %v5015 = vand.u32 %v2532, 4294901760
        %5016 = vmatpush.msra.mxu0 %v5015
        %v5017 = vand.u32 %v2531, 4294901760
        %5018 = vmatpush.msra.mxu0 %v5017
        %v5019 = vand.u32 %v2530, 4294901760
        %5020 = vmatpush.msra.mxu0 %v5019
        %v5021 = vand.u32 %v2529, 4294901760
        %5022 = vmatpush.msra.mxu0 %v5021
        %v5023 = vand.u32 %v2528, 4294901760
        %5024 = vmatpush.msra.mxu0 %v5023
        %v5025 = vand.u32 %v2527, 4294901760
        %5026 = vmatpush.msra.mxu0 %v5025
        %v5027 = vand.u32 %v2526, 4294901760
        %5028 = vmatpush.msra.mxu0 %v5027
        %v5029 = vand.u32 %v2525, 4294901760
        %5030 = vmatpush.msra.mxu0 %v5029
        %v5031 = vand.u32 %v2524, 4294901760
        %5032 = vmatpush.msra.mxu0 %v5031
        %v5033 = vand.u32 %v2418, 4294901760
        %v5034 = vsub.f32 %v2418, %v5033
        %v5035 = vand.u32 %v5034, 4294901760
        %5036 = vmatmul.f32.gmra.mxu0 %v5035
        %v5037 = vpop.f32.mrf.mxu0
        %v5038 = vadd.f32 %v4994, %v5037
        %v5039 = vand.u32 %v2426, 4294901760
        %v5040 = vsub.f32 %v2426, %v5039
        %v5041 = vand.u32 %v5040, 4294901760
        %5042 = vmatmul.f32.gmra.mxu0 %v5041
        %v5043 = vpop.f32.mrf.mxu0
        %v5044 = vadd.f32 %v4999, %v5043
        %5045 = vdwg.mxu0
        %v5046 = vand.u32 %v2539, 4294901760
        %v5047 = vsub.f32 %v2539, %v5046
        %v5048 = vand.u32 %v5047, 4294901760
        %5049 = vmatpush.msra.mxu0 %v5048
        %v5050 = vand.u32 %v2538, 4294901760
        %v5051 = vsub.f32 %v2538, %v5050
        %v5052 = vand.u32 %v5051, 4294901760
        %5053 = vmatpush.msra.mxu0 %v5052
        %v5054 = vand.u32 %v2537, 4294901760
        %v5055 = vsub.f32 %v2537, %v5054
        %v5056 = vand.u32 %v5055, 4294901760
        %5057 = vmatpush.msra.mxu0 %v5056
        %v5058 = vand.u32 %v2536, 4294901760
        %v5059 = vsub.f32 %v2536, %v5058
        %v5060 = vand.u32 %v5059, 4294901760
        %5061 = vmatpush.msra.mxu0 %v5060
        %v5062 = vand.u32 %v2535, 4294901760
        %v5063 = vsub.f32 %v2535, %v5062
        %v5064 = vand.u32 %v5063, 4294901760
        %5065 = vmatpush.msra.mxu0 %v5064
        %v5066 = vand.u32 %v2534, 4294901760
        %v5067 = vsub.f32 %v2534, %v5066
        %v5068 = vand.u32 %v5067, 4294901760
        %5069 = vmatpush.msra.mxu0 %v5068
        %v5070 = vand.u32 %v2533, 4294901760
        %v5071 = vsub.f32 %v2533, %v5070
        %v5072 = vand.u32 %v5071, 4294901760
        %5073 = vmatpush.msra.mxu0 %v5072
        %v5074 = vand.u32 %v2532, 4294901760
        %v5075 = vsub.f32 %v2532, %v5074
        %v5076 = vand.u32 %v5075, 4294901760
        %5077 = vmatpush.msra.mxu0 %v5076
        %v5078 = vand.u32 %v2531, 4294901760
        %v5079 = vsub.f32 %v2531, %v5078
        %v5080 = vand.u32 %v5079, 4294901760
        %5081 = vmatpush.msra.mxu0 %v5080
        %v5082 = vand.u32 %v2530, 4294901760
        %v5083 = vsub.f32 %v2530, %v5082
        %v5084 = vand.u32 %v5083, 4294901760
        %5085 = vmatpush.msra.mxu0 %v5084
        %v5086 = vand.u32 %v2529, 4294901760
        %v5087 = vsub.f32 %v2529, %v5086
        %v5088 = vand.u32 %v5087, 4294901760
        %5089 = vmatpush.msra.mxu0 %v5088
        %v5090 = vand.u32 %v2528, 4294901760
        %v5091 = vsub.f32 %v2528, %v5090
        %v5092 = vand.u32 %v5091, 4294901760
        %5093 = vmatpush.msra.mxu0 %v5092
        %v5094 = vand.u32 %v2527, 4294901760
        %v5095 = vsub.f32 %v2527, %v5094
        %v5096 = vand.u32 %v5095, 4294901760
        %5097 = vmatpush.msra.mxu0 %v5096
        %v5098 = vand.u32 %v2526, 4294901760
        %v5099 = vsub.f32 %v2526, %v5098
        %v5100 = vand.u32 %v5099, 4294901760
        %5101 = vmatpush.msra.mxu0 %v5100
        %v5102 = vand.u32 %v2525, 4294901760
        %v5103 = vsub.f32 %v2525, %v5102
        %v5104 = vand.u32 %v5103, 4294901760
        %5105 = vmatpush.msra.mxu0 %v5104
        %v5106 = vand.u32 %v2524, 4294901760
        %v5107 = vsub.f32 %v2524, %v5106
        %v5108 = vand.u32 %v5107, 4294901760
        %5109 = vmatpush.msra.mxu0 %v5108
        %v5110 = vand.u32 %v2418, 4294901760
        %5111 = vmatmul.f32.gmra.mxu0 %v5110
        %v5112 = vpop.f32.mrf.mxu0
        %v5113 = vadd.f32 %v5038, %v5112
        %v5114 = vand.u32 %v2426, 4294901760
        %5115 = vmatmul.f32.gmra.mxu0 %v5114
        %v5116 = vpop.f32.mrf.mxu0
        %v5117 = vadd.f32 %v5044, %v5116
        %5118 = vdwg.mxu0
        %v5119 = vand.u32 %v2539, 4294901760
        %5120 = vmatpush.msra.mxu0 %v5119
        %v5121 = vand.u32 %v2538, 4294901760
        %5122 = vmatpush.msra.mxu0 %v5121
        %v5123 = vand.u32 %v2537, 4294901760
        %5124 = vmatpush.msra.mxu0 %v5123
        %v5125 = vand.u32 %v2536, 4294901760
        %5126 = vmatpush.msra.mxu0 %v5125
        %v5127 = vand.u32 %v2535, 4294901760
        %5128 = vmatpush.msra.mxu0 %v5127
        %v5129 = vand.u32 %v2534, 4294901760
        %5130 = vmatpush.msra.mxu0 %v5129
        %v5131 = vand.u32 %v2533, 4294901760
        %5132 = vmatpush.msra.mxu0 %v5131
        %v5133 = vand.u32 %v2532, 4294901760
        %5134 = vmatpush.msra.mxu0 %v5133
        %v5135 = vand.u32 %v2531, 4294901760
        %5136 = vmatpush.msra.mxu0 %v5135
        %v5137 = vand.u32 %v2530, 4294901760
        %5138 = vmatpush.msra.mxu0 %v5137
        %v5139 = vand.u32 %v2529, 4294901760
        %5140 = vmatpush.msra.mxu0 %v5139
        %v5141 = vand.u32 %v2528, 4294901760
        %5142 = vmatpush.msra.mxu0 %v5141
        %v5143 = vand.u32 %v2527, 4294901760
        %5144 = vmatpush.msra.mxu0 %v5143
        %v5145 = vand.u32 %v2526, 4294901760
        %5146 = vmatpush.msra.mxu0 %v5145
        %v5147 = vand.u32 %v2525, 4294901760
        %5148 = vmatpush.msra.mxu0 %v5147
        %v5149 = vand.u32 %v2524, 4294901760
        %5150 = vmatpush.msra.mxu0 %v5149
        %v5151 = vand.u32 %v2418, 4294901760
        %5152 = vmatmul.f32.gmra.mxu0 %v5151
        %v5153 = vpop.f32.mrf.mxu0
        %v5154 = vadd.f32 %v5113, %v5153
        %v5155 = vand.u32 %v2426, 4294901760
        %5156 = vmatmul.f32.gmra.mxu0 %v5155
        %v5157 = vpop.f32.mrf.mxu0
        %v5158 = vadd.f32 %v5117, %v5157
        %5159 = vdwg.mxu0
        %v5160 = vand.u32 %v2555, 4294901760
        %5161 = vmatpush.msra.mxu0 %v5160
        %v5162 = vand.u32 %v2554, 4294901760
        %5163 = vmatpush.msra.mxu0 %v5162
        %v5164 = vand.u32 %v2553, 4294901760
        %5165 = vmatpush.msra.mxu0 %v5164
        %v5166 = vand.u32 %v2552, 4294901760
        %5167 = vmatpush.msra.mxu0 %v5166
        %v5168 = vand.u32 %v2551, 4294901760
        %5169 = vmatpush.msra.mxu0 %v5168
        %v5170 = vand.u32 %v2550, 4294901760
        %5171 = vmatpush.msra.mxu0 %v5170
        %v5172 = vand.u32 %v2549, 4294901760
        %5173 = vmatpush.msra.mxu0 %v5172
        %v5174 = vand.u32 %v2548, 4294901760
        %5175 = vmatpush.msra.mxu0 %v5174
        %v5176 = vand.u32 %v2547, 4294901760
        %5177 = vmatpush.msra.mxu0 %v5176
        %v5178 = vand.u32 %v2546, 4294901760
        %5179 = vmatpush.msra.mxu0 %v5178
        %v5180 = vand.u32 %v2545, 4294901760
        %5181 = vmatpush.msra.mxu0 %v5180
        %v5182 = vand.u32 %v2544, 4294901760
        %5183 = vmatpush.msra.mxu0 %v5182
        %v5184 = vand.u32 %v2543, 4294901760
        %5185 = vmatpush.msra.mxu0 %v5184
        %v5186 = vand.u32 %v2542, 4294901760
        %5187 = vmatpush.msra.mxu0 %v5186
        %v5188 = vand.u32 %v2541, 4294901760
        %5189 = vmatpush.msra.mxu0 %v5188
        %v5190 = vand.u32 %v2540, 4294901760
        %5191 = vmatpush.msra.mxu0 %v5190
        %v5192 = vand.u32 %v2419, 4294901760
        %v5193 = vsub.f32 %v2419, %v5192
        %v5194 = vand.u32 %v5193, 4294901760
        %v5195 = vsub.f32 %v5193, %v5194
        %v5196 = vand.u32 %v5195, 4294901760
        %5197 = vmatmul.f32.gmra.mxu0 %v5196
        %v5198 = vpop.f32.mrf.mxu0
        %v5199 = vadd.f32 %v5154, %v5198
        %v5200 = vand.u32 %v2427, 4294901760
        %v5201 = vsub.f32 %v2427, %v5200
        %v5202 = vand.u32 %v5201, 4294901760
        %v5203 = vsub.f32 %v5201, %v5202
        %v5204 = vand.u32 %v5203, 4294901760
        %5205 = vmatmul.f32.gmra.mxu0 %v5204
        %v5206 = vpop.f32.mrf.mxu0
        %v5207 = vadd.f32 %v5158, %v5206
        %5208 = vdwg.mxu0
        %v5209 = vand.u32 %v2555, 4294901760
        %v5210 = vsub.f32 %v2555, %v5209
        %v5211 = vand.u32 %v5210, 4294901760
        %v5212 = vsub.f32 %v5210, %v5211
        %v5213 = vand.u32 %v5212, 4294901760
        %5214 = vmatpush.msra.mxu0 %v5213
        %v5215 = vand.u32 %v2554, 4294901760
        %v5216 = vsub.f32 %v2554, %v5215
        %v5217 = vand.u32 %v5216, 4294901760
        %v5218 = vsub.f32 %v5216, %v5217
        %v5219 = vand.u32 %v5218, 4294901760
        %5220 = vmatpush.msra.mxu0 %v5219
        %v5221 = vand.u32 %v2553, 4294901760
        %v5222 = vsub.f32 %v2553, %v5221
        %v5223 = vand.u32 %v5222, 4294901760
        %v5224 = vsub.f32 %v5222, %v5223
        %v5225 = vand.u32 %v5224, 4294901760
        %5226 = vmatpush.msra.mxu0 %v5225
        %v5227 = vand.u32 %v2552, 4294901760
        %v5228 = vsub.f32 %v2552, %v5227
        %v5229 = vand.u32 %v5228, 4294901760
        %v5230 = vsub.f32 %v5228, %v5229
        %v5231 = vand.u32 %v5230, 4294901760
        %5232 = vmatpush.msra.mxu0 %v5231
        %v5233 = vand.u32 %v2551, 4294901760
        %v5234 = vsub.f32 %v2551, %v5233
        %v5235 = vand.u32 %v5234, 4294901760
        %v5236 = vsub.f32 %v5234, %v5235
        %v5237 = vand.u32 %v5236, 4294901760
        %5238 = vmatpush.msra.mxu0 %v5237
        %v5239 = vand.u32 %v2550, 4294901760
        %v5240 = vsub.f32 %v2550, %v5239
        %v5241 = vand.u32 %v5240, 4294901760
        %v5242 = vsub.f32 %v5240, %v5241
        %v5243 = vand.u32 %v5242, 4294901760
        %5244 = vmatpush.msra.mxu0 %v5243
        %v5245 = vand.u32 %v2549, 4294901760
        %v5246 = vsub.f32 %v2549, %v5245
        %v5247 = vand.u32 %v5246, 4294901760
        %v5248 = vsub.f32 %v5246, %v5247
        %v5249 = vand.u32 %v5248, 4294901760
        %5250 = vmatpush.msra.mxu0 %v5249
        %v5251 = vand.u32 %v2548, 4294901760
        %v5252 = vsub.f32 %v2548, %v5251
        %v5253 = vand.u32 %v5252, 4294901760
        %v5254 = vsub.f32 %v5252, %v5253
        %v5255 = vand.u32 %v5254, 4294901760
        %5256 = vmatpush.msra.mxu0 %v5255
        %v5257 = vand.u32 %v2547, 4294901760
        %v5258 = vsub.f32 %v2547, %v5257
        %v5259 = vand.u32 %v5258, 4294901760
        %v5260 = vsub.f32 %v5258, %v5259
        %v5261 = vand.u32 %v5260, 4294901760
        %5262 = vmatpush.msra.mxu0 %v5261
        %v5263 = vand.u32 %v2546, 4294901760
        %v5264 = vsub.f32 %v2546, %v5263
        %v5265 = vand.u32 %v5264, 4294901760
        %v5266 = vsub.f32 %v5264, %v5265
        %v5267 = vand.u32 %v5266, 4294901760
        %5268 = vmatpush.msra.mxu0 %v5267
        %v5269 = vand.u32 %v2545, 4294901760
        %v5270 = vsub.f32 %v2545, %v5269
        %v5271 = vand.u32 %v5270, 4294901760
        %v5272 = vsub.f32 %v5270, %v5271
        %v5273 = vand.u32 %v5272, 4294901760
        %5274 = vmatpush.msra.mxu0 %v5273
        %v5275 = vand.u32 %v2544, 4294901760
        %v5276 = vsub.f32 %v2544, %v5275
        %v5277 = vand.u32 %v5276, 4294901760
        %v5278 = vsub.f32 %v5276, %v5277
        %v5279 = vand.u32 %v5278, 4294901760
        %5280 = vmatpush.msra.mxu0 %v5279
        %v5281 = vand.u32 %v2543, 4294901760
        %v5282 = vsub.f32 %v2543, %v5281
        %v5283 = vand.u32 %v5282, 4294901760
        %v5284 = vsub.f32 %v5282, %v5283
        %v5285 = vand.u32 %v5284, 4294901760
        %5286 = vmatpush.msra.mxu0 %v5285
        %v5287 = vand.u32 %v2542, 4294901760
        %v5288 = vsub.f32 %v2542, %v5287
        %v5289 = vand.u32 %v5288, 4294901760
        %v5290 = vsub.f32 %v5288, %v5289
        %v5291 = vand.u32 %v5290, 4294901760
        %5292 = vmatpush.msra.mxu0 %v5291
        %v5293 = vand.u32 %v2541, 4294901760
        %v5294 = vsub.f32 %v2541, %v5293
        %v5295 = vand.u32 %v5294, 4294901760
        %v5296 = vsub.f32 %v5294, %v5295
        %v5297 = vand.u32 %v5296, 4294901760
        %5298 = vmatpush.msra.mxu0 %v5297
        %v5299 = vand.u32 %v2540, 4294901760
        %v5300 = vsub.f32 %v2540, %v5299
        %v5301 = vand.u32 %v5300, 4294901760
        %v5302 = vsub.f32 %v5300, %v5301
        %v5303 = vand.u32 %v5302, 4294901760
        %5304 = vmatpush.msra.mxu0 %v5303
        %v5305 = vand.u32 %v2419, 4294901760
        %5306 = vmatmul.f32.gmra.mxu0 %v5305
        %v5307 = vpop.f32.mrf.mxu0
        %v5308 = vadd.f32 %v5199, %v5307
        %v5309 = vand.u32 %v2427, 4294901760
        %5310 = vmatmul.f32.gmra.mxu0 %v5309
        %v5311 = vpop.f32.mrf.mxu0
        %v5312 = vadd.f32 %v5207, %v5311
        %5313 = vdwg.mxu0
        %v5314 = vand.u32 %v2555, 4294901760
        %v5315 = vsub.f32 %v2555, %v5314
        %5316 = vmatpush.msra.mxu0 %v5315
        %v5317 = vand.u32 %v2554, 4294901760
        %v5318 = vsub.f32 %v2554, %v5317
        %5319 = vmatpush.msra.mxu0 %v5318
        %v5320 = vand.u32 %v2553, 4294901760
        %v5321 = vsub.f32 %v2553, %v5320
        %5322 = vmatpush.msra.mxu0 %v5321
        %v5323 = vand.u32 %v2552, 4294901760
        %v5324 = vsub.f32 %v2552, %v5323
        %5325 = vmatpush.msra.mxu0 %v5324
        %v5326 = vand.u32 %v2551, 4294901760
        %v5327 = vsub.f32 %v2551, %v5326
        %5328 = vmatpush.msra.mxu0 %v5327
        %v5329 = vand.u32 %v2550, 4294901760
        %v5330 = vsub.f32 %v2550, %v5329
        %5331 = vmatpush.msra.mxu0 %v5330
        %v5332 = vand.u32 %v2549, 4294901760
        %v5333 = vsub.f32 %v2549, %v5332
        %5334 = vmatpush.msra.mxu0 %v5333
        %v5335 = vand.u32 %v2548, 4294901760
        %v5336 = vsub.f32 %v2548, %v5335
        %5337 = vmatpush.msra.mxu0 %v5336
        %v5338 = vand.u32 %v2547, 4294901760
        %v5339 = vsub.f32 %v2547, %v5338
        %5340 = vmatpush.msra.mxu0 %v5339
        %v5341 = vand.u32 %v2546, 4294901760
        %v5342 = vsub.f32 %v2546, %v5341
        %5343 = vmatpush.msra.mxu0 %v5342
        %v5344 = vand.u32 %v2545, 4294901760
        %v5345 = vsub.f32 %v2545, %v5344
        %5346 = vmatpush.msra.mxu0 %v5345
        %v5347 = vand.u32 %v2544, 4294901760
        %v5348 = vsub.f32 %v2544, %v5347
        %5349 = vmatpush.msra.mxu0 %v5348
        %v5350 = vand.u32 %v2543, 4294901760
        %v5351 = vsub.f32 %v2543, %v5350
        %5352 = vmatpush.msra.mxu0 %v5351
        %v5353 = vand.u32 %v2542, 4294901760
        %v5354 = vsub.f32 %v2542, %v5353
        %5355 = vmatpush.msra.mxu0 %v5354
        %v5356 = vand.u32 %v2541, 4294901760
        %v5357 = vsub.f32 %v2541, %v5356
        %5358 = vmatpush.msra.mxu0 %v5357
        %v5359 = vand.u32 %v2540, 4294901760
        %v5360 = vsub.f32 %v2540, %v5359
        %5361 = vmatpush.msra.mxu0 %v5360
        %v5362 = vand.u32 %v2419, 4294901760
        %v5363 = vsub.f32 %v2419, %v5362
        %5364 = vmatmul.f32.gmra.mxu0 %v5363
        %v5365 = vpop.f32.mrf.mxu0
        %v5366 = vadd.f32 %v5308, %v5365
        %v5367 = vand.u32 %v2427, 4294901760
        %v5368 = vsub.f32 %v2427, %v5367
        %5369 = vmatmul.f32.gmra.mxu0 %v5368
        %v5370 = vpop.f32.mrf.mxu0
        %v5371 = vadd.f32 %v5312, %v5370
        %5372 = vdwg.mxu0
        %v5373 = vand.u32 %v2555, 4294901760
        %5374 = vmatpush.msra.mxu0 %v5373
        %v5375 = vand.u32 %v2554, 4294901760
        %5376 = vmatpush.msra.mxu0 %v5375
        %v5377 = vand.u32 %v2553, 4294901760
        %5378 = vmatpush.msra.mxu0 %v5377
        %v5379 = vand.u32 %v2552, 4294901760
        %5380 = vmatpush.msra.mxu0 %v5379
        %v5381 = vand.u32 %v2551, 4294901760
        %5382 = vmatpush.msra.mxu0 %v5381
        %v5383 = vand.u32 %v2550, 4294901760
        %5384 = vmatpush.msra.mxu0 %v5383
        %v5385 = vand.u32 %v2549, 4294901760
        %5386 = vmatpush.msra.mxu0 %v5385
        %v5387 = vand.u32 %v2548, 4294901760
        %5388 = vmatpush.msra.mxu0 %v5387
        %v5389 = vand.u32 %v2547, 4294901760
        %5390 = vmatpush.msra.mxu0 %v5389
        %v5391 = vand.u32 %v2546, 4294901760
        %5392 = vmatpush.msra.mxu0 %v5391
        %v5393 = vand.u32 %v2545, 4294901760
        %5394 = vmatpush.msra.mxu0 %v5393
        %v5395 = vand.u32 %v2544, 4294901760
        %5396 = vmatpush.msra.mxu0 %v5395
        %v5397 = vand.u32 %v2543, 4294901760
        %5398 = vmatpush.msra.mxu0 %v5397
        %v5399 = vand.u32 %v2542, 4294901760
        %5400 = vmatpush.msra.mxu0 %v5399
        %v5401 = vand.u32 %v2541, 4294901760
        %5402 = vmatpush.msra.mxu0 %v5401
        %v5403 = vand.u32 %v2540, 4294901760
        %5404 = vmatpush.msra.mxu0 %v5403
        %v5405 = vand.u32 %v2419, 4294901760
        %v5406 = vsub.f32 %v2419, %v5405
        %v5407 = vand.u32 %v5406, 4294901760
        %5408 = vmatmul.f32.gmra.mxu0 %v5407
        %v5409 = vpop.f32.mrf.mxu0
        %v5410 = vadd.f32 %v5366, %v5409
        %v5411 = vand.u32 %v2427, 4294901760
        %v5412 = vsub.f32 %v2427, %v5411
        %v5413 = vand.u32 %v5412, 4294901760
        %5414 = vmatmul.f32.gmra.mxu0 %v5413
        %v5415 = vpop.f32.mrf.mxu0
        %v5416 = vadd.f32 %v5371, %v5415
        %5417 = vdwg.mxu0
        %v5418 = vand.u32 %v2555, 4294901760
        %v5419 = vsub.f32 %v2555, %v5418
        %v5420 = vand.u32 %v5419, 4294901760
        %5421 = vmatpush.msra.mxu0 %v5420
        %v5422 = vand.u32 %v2554, 4294901760
        %v5423 = vsub.f32 %v2554, %v5422
        %v5424 = vand.u32 %v5423, 4294901760
        %5425 = vmatpush.msra.mxu0 %v5424
        %v5426 = vand.u32 %v2553, 4294901760
        %v5427 = vsub.f32 %v2553, %v5426
        %v5428 = vand.u32 %v5427, 4294901760
        %5429 = vmatpush.msra.mxu0 %v5428
        %v5430 = vand.u32 %v2552, 4294901760
        %v5431 = vsub.f32 %v2552, %v5430
        %v5432 = vand.u32 %v5431, 4294901760
        %5433 = vmatpush.msra.mxu0 %v5432
        %v5434 = vand.u32 %v2551, 4294901760
        %v5435 = vsub.f32 %v2551, %v5434
        %v5436 = vand.u32 %v5435, 4294901760
        %5437 = vmatpush.msra.mxu0 %v5436
        %v5438 = vand.u32 %v2550, 4294901760
        %v5439 = vsub.f32 %v2550, %v5438
        %v5440 = vand.u32 %v5439, 4294901760
        %5441 = vmatpush.msra.mxu0 %v5440
        %v5442 = vand.u32 %v2549, 4294901760
        %v5443 = vsub.f32 %v2549, %v5442
        %v5444 = vand.u32 %v5443, 4294901760
        %5445 = vmatpush.msra.mxu0 %v5444
        %v5446 = vand.u32 %v2548, 4294901760
        %v5447 = vsub.f32 %v2548, %v5446
        %v5448 = vand.u32 %v5447, 4294901760
        %5449 = vmatpush.msra.mxu0 %v5448
        %v5450 = vand.u32 %v2547, 4294901760
        %v5451 = vsub.f32 %v2547, %v5450
        %v5452 = vand.u32 %v5451, 4294901760
        %5453 = vmatpush.msra.mxu0 %v5452
        %v5454 = vand.u32 %v2546, 4294901760
        %v5455 = vsub.f32 %v2546, %v5454
        %v5456 = vand.u32 %v5455, 4294901760
        %5457 = vmatpush.msra.mxu0 %v5456
        %v5458 = vand.u32 %v2545, 4294901760
        %v5459 = vsub.f32 %v2545, %v5458
        %v5460 = vand.u32 %v5459, 4294901760
        %5461 = vmatpush.msra.mxu0 %v5460
        %v5462 = vand.u32 %v2544, 4294901760
        %v5463 = vsub.f32 %v2544, %v5462
        %v5464 = vand.u32 %v5463, 4294901760
        %5465 = vmatpush.msra.mxu0 %v5464
        %v5466 = vand.u32 %v2543, 4294901760
        %v5467 = vsub.f32 %v2543, %v5466
        %v5468 = vand.u32 %v5467, 4294901760
        %5469 = vmatpush.msra.mxu0 %v5468
        %v5470 = vand.u32 %v2542, 4294901760
        %v5471 = vsub.f32 %v2542, %v5470
        %v5472 = vand.u32 %v5471, 4294901760
        %5473 = vmatpush.msra.mxu0 %v5472
        %v5474 = vand.u32 %v2541, 4294901760
        %v5475 = vsub.f32 %v2541, %v5474
        %v5476 = vand.u32 %v5475, 4294901760
        %5477 = vmatpush.msra.mxu0 %v5476
        %v5478 = vand.u32 %v2540, 4294901760
        %v5479 = vsub.f32 %v2540, %v5478
        %v5480 = vand.u32 %v5479, 4294901760
        %5481 = vmatpush.msra.mxu0 %v5480
        %v5482 = vand.u32 %v2419, 4294901760
        %5483 = vmatmul.f32.gmra.mxu0 %v5482
        %v5484 = vpop.f32.mrf.mxu0
        %v5485 = vadd.f32 %v5410, %v5484
        %v5486 = vand.u32 %v2427, 4294901760
        %5487 = vmatmul.f32.gmra.mxu0 %v5486
        %v5488 = vpop.f32.mrf.mxu0
        %v5489 = vadd.f32 %v5416, %v5488
        %5490 = vdwg.mxu0
        %v5491 = vand.u32 %v2555, 4294901760
        %5492 = vmatpush.msra.mxu0 %v5491
        %v5493 = vand.u32 %v2554, 4294901760
        %5494 = vmatpush.msra.mxu0 %v5493
        %v5495 = vand.u32 %v2553, 4294901760
        %5496 = vmatpush.msra.mxu0 %v5495
        %v5497 = vand.u32 %v2552, 4294901760
        %5498 = vmatpush.msra.mxu0 %v5497
        %v5499 = vand.u32 %v2551, 4294901760
        %5500 = vmatpush.msra.mxu0 %v5499
        %v5501 = vand.u32 %v2550, 4294901760
        %5502 = vmatpush.msra.mxu0 %v5501
        %v5503 = vand.u32 %v2549, 4294901760
        %5504 = vmatpush.msra.mxu0 %v5503
        %v5505 = vand.u32 %v2548, 4294901760
        %5506 = vmatpush.msra.mxu0 %v5505
        %v5507 = vand.u32 %v2547, 4294901760
        %5508 = vmatpush.msra.mxu0 %v5507
        %v5509 = vand.u32 %v2546, 4294901760
        %5510 = vmatpush.msra.mxu0 %v5509
        %v5511 = vand.u32 %v2545, 4294901760
        %5512 = vmatpush.msra.mxu0 %v5511
        %v5513 = vand.u32 %v2544, 4294901760
        %5514 = vmatpush.msra.mxu0 %v5513
        %v5515 = vand.u32 %v2543, 4294901760
        %5516 = vmatpush.msra.mxu0 %v5515
        %v5517 = vand.u32 %v2542, 4294901760
        %5518 = vmatpush.msra.mxu0 %v5517
        %v5519 = vand.u32 %v2541, 4294901760
        %5520 = vmatpush.msra.mxu0 %v5519
        %v5521 = vand.u32 %v2540, 4294901760
        %5522 = vmatpush.msra.mxu0 %v5521
        %v5523 = vand.u32 %v2419, 4294901760
        %5524 = vmatmul.f32.gmra.mxu0 %v5523
        %v5525 = vpop.f32.mrf.mxu0
        %v5526 = vadd.f32 %v5485, %v5525
        %v5527 = vand.u32 %v2427, 4294901760
        %5528 = vmatmul.f32.gmra.mxu0 %v5527
        %v5529 = vpop.f32.mrf.mxu0
        %v5530 = vadd.f32 %v5489, %v5529
        %5531 = vdwg.mxu0
        %v5532 = vrcp.pop %v5526
        %v5533 = vmul.f32 %v5526, %v5532
        %v5534 = vsub.f32 1.0, %v5533
        %v5535 = vmul.f32 %v5532, %v5534
        %v5536 = vadd.f32 %v5532, %v5535
        %vm5537 = vweird.f32 %v5526
        %vm5538 = vweird.f32 %v5532
        %vm5539 = vmor %vm5537, %vm5538
        %v5540 = vsel %vm5539, %v5532, %v5536
        %v5541 = vand.u32 2147483647, %v5526
        %vm5542 = vcmp.eq.f32.partialorder %v5541, 8.507059e+37
        %v5543 = vand.u32 %v5526, 2147483648
        %v5544 = vor.u32 1.1754944e-38, %v5543
        %v5545 = vsel %vm5542, %v5544, %v5540
        %v5546 = vrcp.pop %v5530
        %v5547 = vmul.f32 %v5530, %v5546
        %v5548 = vsub.f32 1.0, %v5547
        %v5549 = vmul.f32 %v5546, %v5548
        %v5550 = vadd.f32 %v5546, %v5549
        %vm5551 = vweird.f32 %v5530
        %vm5552 = vweird.f32 %v5546
        %vm5553 = vmor %vm5551, %vm5552
        %v5554 = vsel %vm5553, %v5546, %v5550
        %v5555 = vand.u32 2147483647, %v5530
        %vm5556 = vcmp.eq.f32.partialorder %v5555, 8.507059e+37
        %v5557 = vand.u32 %v5530, 2147483648
        %v5558 = vor.u32 1.1754944e-38, %v5557
        %v5559 = vsel %vm5556, %v5558, %v5554
        %v5560 = vld [vmem:[%s3] sm:$0xff]
        %v5561 = vld [vmem:[%s3 + $0x8] sm:$0xff]
        %v5562 = vld [vmem:[%s3 + $0x10] sm:$0xff]
        %v5563 = vld [vmem:[%s3 + $0x18] sm:$0xff]
        %v5564 = vld [vmem:[%s3 + $0x20] sm:$0xff]
        %v5565 = vld [vmem:[%s3 + $0x28] sm:$0xff]
        %v5566 = vld [vmem:[%s3 + $0x30] sm:$0xff]
        %v5567 = vld [vmem:[%s3 + $0x38] sm:$0xff]
        %v5568 = vld [vmem:[%s3 + $0x40] sm:$0xff]
        %v5569 = vld [vmem:[%s3 + $0x48] sm:$0xff]
        %v5570 = vld [vmem:[%s3 + $0x50] sm:$0xff]
        %v5571 = vld [vmem:[%s3 + $0x58] sm:$0xff]
        %v5572 = vld [vmem:[%s3 + $0x60] sm:$0xff]
        %v5573 = vld [vmem:[%s3 + $0x68] sm:$0xff]
        %v5574 = vld [vmem:[%s3 + $0x70] sm:$0xff]
        %v5575 = vld [vmem:[%s3 + $0x78] sm:$0xff]
        %v5576 = vld [vmem:[%s3 + $0x80] sm:$0xff]
        %v5577 = vld [vmem:[%s3 + $0x88] sm:$0xff]
        %v5578 = vld [vmem:[%s3 + $0x90] sm:$0xff]
        %v5579 = vld [vmem:[%s3 + $0x98] sm:$0xff]
        %v5580 = vld [vmem:[%s3 + $0xa0] sm:$0xff]
        %v5581 = vld [vmem:[%s3 + $0xa8] sm:$0xff]
        %v5582 = vld [vmem:[%s3 + $0xb0] sm:$0xff]
        %v5583 = vld [vmem:[%s3 + $0xb8] sm:$0xff]
        %v5584 = vld [vmem:[%s3 + $0xc0] sm:$0xff]
        %v5585 = vld [vmem:[%s3 + $0xc8] sm:$0xff]
        %v5586 = vld [vmem:[%s3 + $0xd0] sm:$0xff]
        %v5587 = vld [vmem:[%s3 + $0xd8] sm:$0xff]
        %v5588 = vld [vmem:[%s3 + $0xe0] sm:$0xff]
        %v5589 = vld [vmem:[%s3 + $0xe8] sm:$0xff]
        %v5590 = vld [vmem:[%s3 + $0xf0] sm:$0xff]
        %v5591 = vld [vmem:[%s3 + $0xf8] sm:$0xff]
        %v5593 = vsel %vm293, %v5545, 0
        %v5596 = vsel %vm293, %v5559, 0
        %5598 = vmatpush.msra.mxu0 0.0
        %5599 = vmatpush.msra.mxu0 0.0
        %5600 = vmatpush.msra.mxu0 0.0
        %5601 = vmatpush.msra.mxu0 0.0
        %5602 = vmatpush.msra.mxu0 0.0
        %5603 = vmatpush.msra.mxu0 0.0
        %5604 = vmatpush.msra.mxu0 0.0
        %5605 = vmatpush.msra.mxu0 0.0
        %5606 = vmatpush.msra.mxu0 0.0
        %5607 = vmatpush.msra.mxu0 0.0
        %5608 = vmatpush.msra.mxu0 0.0
        %5609 = vmatpush.msra.mxu0 0.0
        %v5610 = vand.u32 %v5584, 4294901760
        %5611 = vmatpush.msra.mxu0 %v5610
        %v5612 = vand.u32 %v5576, 4294901760
        %5613 = vmatpush.msra.mxu0 %v5612
        %v5614 = vand.u32 %v5568, 4294901760
        %5615 = vmatpush.msra.mxu0 %v5614
        %v5616 = vand.u32 %v5560, 4294901760
        %5617 = vmatpush.msra.mxu0 %v5616
        %v5618 = vand.u32 %v5593, 4294901760
        %v5619 = vsub.f32 %v5593, %v5618
        %v5620 = vand.u32 %v5619, 4294901760
        %v5621 = vsub.f32 %v5619, %v5620
        %v5622 = vand.u32 %v5621, 4294901760
        %5623 = vmatmul.f32.gmra.mxu0 %v5622
        %v5624 = vpop.f32.mrf.mxu0
        %v5625 = vadd.f32 0.0, %v5624
        %v5626 = vand.u32 %v5596, 4294901760
        %v5627 = vsub.f32 %v5596, %v5626
        %v5628 = vand.u32 %v5627, 4294901760
        %v5629 = vsub.f32 %v5627, %v5628
        %v5630 = vand.u32 %v5629, 4294901760
        %5631 = vmatmul.f32.gmra.mxu0 %v5630
        %v5632 = vpop.f32.mrf.mxu0
        %v5633 = vadd.f32 0.0, %v5632
        %5634 = vdwg.mxu0
        %5635 = vmatpush.msra.mxu0 0.0
        %5636 = vmatpush.msra.mxu0 0.0
        %5637 = vmatpush.msra.mxu0 0.0
        %5638 = vmatpush.msra.mxu0 0.0
        %5639 = vmatpush.msra.mxu0 0.0
        %5640 = vmatpush.msra.mxu0 0.0
        %5641 = vmatpush.msra.mxu0 0.0
        %5642 = vmatpush.msra.mxu0 0.0
        %5643 = vmatpush.msra.mxu0 0.0
        %5644 = vmatpush.msra.mxu0 0.0
        %5645 = vmatpush.msra.mxu0 0.0
        %5646 = vmatpush.msra.mxu0 0.0
        %v5647 = vand.u32 %v5584, 4294901760
        %v5648 = vsub.f32 %v5584, %v5647
        %v5649 = vand.u32 %v5648, 4294901760
        %v5650 = vsub.f32 %v5648, %v5649
        %v5651 = vand.u32 %v5650, 4294901760
        %5652 = vmatpush.msra.mxu0 %v5651
        %v5653 = vand.u32 %v5576, 4294901760
        %v5654 = vsub.f32 %v5576, %v5653
        %v5655 = vand.u32 %v5654, 4294901760
        %v5656 = vsub.f32 %v5654, %v5655
        %v5657 = vand.u32 %v5656, 4294901760
        %5658 = vmatpush.msra.mxu0 %v5657
        %v5659 = vand.u32 %v5568, 4294901760
        %v5660 = vsub.f32 %v5568, %v5659
        %v5661 = vand.u32 %v5660, 4294901760
        %v5662 = vsub.f32 %v5660, %v5661
        %v5663 = vand.u32 %v5662, 4294901760
        %5664 = vmatpush.msra.mxu0 %v5663
        %v5665 = vand.u32 %v5560, 4294901760
        %v5666 = vsub.f32 %v5560, %v5665
        %v5667 = vand.u32 %v5666, 4294901760
        %v5668 = vsub.f32 %v5666, %v5667
        %v5669 = vand.u32 %v5668, 4294901760
        %5670 = vmatpush.msra.mxu0 %v5669
        %v5671 = vand.u32 %v5593, 4294901760
        %5672 = vmatmul.f32.gmra.mxu0 %v5671
        %v5673 = vpop.f32.mrf.mxu0
        %v5674 = vadd.f32 %v5625, %v5673
        %v5675 = vand.u32 %v5596, 4294901760
        %5676 = vmatmul.f32.gmra.mxu0 %v5675
        %v5677 = vpop.f32.mrf.mxu0
        %v5678 = vadd.f32 %v5633, %v5677
        %5679 = vdwg.mxu0
        %5680 = vmatpush.msra.mxu0 0.0
        %5681 = vmatpush.msra.mxu0 0.0
        %5682 = vmatpush.msra.mxu0 0.0
        %5683 = vmatpush.msra.mxu0 0.0
        %5684 = vmatpush.msra.mxu0 0.0
        %5685 = vmatpush.msra.mxu0 0.0
        %5686 = vmatpush.msra.mxu0 0.0
        %5687 = vmatpush.msra.mxu0 0.0
        %5688 = vmatpush.msra.mxu0 0.0
        %5689 = vmatpush.msra.mxu0 0.0
        %5690 = vmatpush.msra.mxu0 0.0
        %5691 = vmatpush.msra.mxu0 0.0
        %v5692 = vand.u32 %v5584, 4294901760
        %v5693 = vsub.f32 %v5584, %v5692
        %5694 = vmatpush.msra.mxu0 %v5693
        %v5695 = vand.u32 %v5576, 4294901760
        %v5696 = vsub.f32 %v5576, %v5695
        %5697 = vmatpush.msra.mxu0 %v5696
        %v5698 = vand.u32 %v5568, 4294901760
        %v5699 = vsub.f32 %v5568, %v5698
        %5700 = vmatpush.msra.mxu0 %v5699
        %v5701 = vand.u32 %v5560, 4294901760
        %v5702 = vsub.f32 %v5560, %v5701
        %5703 = vmatpush.msra.mxu0 %v5702
        %v5704 = vand.u32 %v5593, 4294901760
        %v5705 = vsub.f32 %v5593, %v5704
        %5706 = vmatmul.f32.gmra.mxu0 %v5705
        %v5707 = vpop.f32.mrf.mxu0
        %v5708 = vadd.f32 %v5674, %v5707
        %v5709 = vand.u32 %v5596, 4294901760
        %v5710 = vsub.f32 %v5596, %v5709
        %5711 = vmatmul.f32.gmra.mxu0 %v5710
        %v5712 = vpop.f32.mrf.mxu0
        %v5713 = vadd.f32 %v5678, %v5712
        %5714 = vdwg.mxu0
        %5715 = vmatpush.msra.mxu0 0.0
        %5716 = vmatpush.msra.mxu0 0.0
        %5717 = vmatpush.msra.mxu0 0.0
        %5718 = vmatpush.msra.mxu0 0.0
        %5719 = vmatpush.msra.mxu0 0.0
        %5720 = vmatpush.msra.mxu0 0.0
        %5721 = vmatpush.msra.mxu0 0.0
        %5722 = vmatpush.msra.mxu0 0.0
        %5723 = vmatpush.msra.mxu0 0.0
        %5724 = vmatpush.msra.mxu0 0.0
        %5725 = vmatpush.msra.mxu0 0.0
        %5726 = vmatpush.msra.mxu0 0.0
        %v5727 = vand.u32 %v5584, 4294901760
        %5728 = vmatpush.msra.mxu0 %v5727
        %v5729 = vand.u32 %v5576, 4294901760
        %5730 = vmatpush.msra.mxu0 %v5729
        %v5731 = vand.u32 %v5568, 4294901760
        %5732 = vmatpush.msra.mxu0 %v5731
        %v5733 = vand.u32 %v5560, 4294901760
        %5734 = vmatpush.msra.mxu0 %v5733
        %v5735 = vand.u32 %v5593, 4294901760
        %v5736 = vsub.f32 %v5593, %v5735
        %v5737 = vand.u32 %v5736, 4294901760
        %5738 = vmatmul.f32.gmra.mxu0 %v5737
        %v5739 = vpop.f32.mrf.mxu0
        %v5740 = vadd.f32 %v5708, %v5739
        %v5741 = vand.u32 %v5596, 4294901760
        %v5742 = vsub.f32 %v5596, %v5741
        %v5743 = vand.u32 %v5742, 4294901760
        %5744 = vmatmul.f32.gmra.mxu0 %v5743
        %v5745 = vpop.f32.mrf.mxu0
        %v5746 = vadd.f32 %v5713, %v5745
        %5747 = vdwg.mxu0
        %5748 = vmatpush.msra.mxu0 0.0
        %5749 = vmatpush.msra.mxu0 0.0
        %5750 = vmatpush.msra.mxu0 0.0
        %5751 = vmatpush.msra.mxu0 0.0
        %5752 = vmatpush.msra.mxu0 0.0
        %5753 = vmatpush.msra.mxu0 0.0
        %5754 = vmatpush.msra.mxu0 0.0
        %5755 = vmatpush.msra.mxu0 0.0
        %5756 = vmatpush.msra.mxu0 0.0
        %5757 = vmatpush.msra.mxu0 0.0
        %5758 = vmatpush.msra.mxu0 0.0
        %5759 = vmatpush.msra.mxu0 0.0
        %v5760 = vand.u32 %v5584, 4294901760
        %v5761 = vsub.f32 %v5584, %v5760
        %v5762 = vand.u32 %v5761, 4294901760
        %5763 = vmatpush.msra.mxu0 %v5762
        %v5764 = vand.u32 %v5576, 4294901760
        %v5765 = vsub.f32 %v5576, %v5764
        %v5766 = vand.u32 %v5765, 4294901760
        %5767 = vmatpush.msra.mxu0 %v5766
        %v5768 = vand.u32 %v5568, 4294901760
        %v5769 = vsub.f32 %v5568, %v5768
        %v5770 = vand.u32 %v5769, 4294901760
        %5771 = vmatpush.msra.mxu0 %v5770
        %v5772 = vand.u32 %v5560, 4294901760
        %v5773 = vsub.f32 %v5560, %v5772
        %v5774 = vand.u32 %v5773, 4294901760
        %5775 = vmatpush.msra.mxu0 %v5774
        %v5776 = vand.u32 %v5593, 4294901760
        %5777 = vmatmul.f32.gmra.mxu0 %v5776
        %v5778 = vpop.f32.mrf.mxu0
        %v5779 = vadd.f32 %v5740, %v5778
        %v5780 = vand.u32 %v5596, 4294901760
        %5781 = vmatmul.f32.gmra.mxu0 %v5780
        %v5782 = vpop.f32.mrf.mxu0
        %v5783 = vadd.f32 %v5746, %v5782
        %5784 = vdwg.mxu0
        %5785 = vmatpush.msra.mxu0 0.0
        %5786 = vmatpush.msra.mxu0 0.0
        %5787 = vmatpush.msra.mxu0 0.0
        %5788 = vmatpush.msra.mxu0 0.0
        %5789 = vmatpush.msra.mxu0 0.0
        %5790 = vmatpush.msra.mxu0 0.0
        %5791 = vmatpush.msra.mxu0 0.0
        %5792 = vmatpush.msra.mxu0 0.0
        %5793 = vmatpush.msra.mxu0 0.0
        %5794 = vmatpush.msra.mxu0 0.0
        %5795 = vmatpush.msra.mxu0 0.0
        %5796 = vmatpush.msra.mxu0 0.0
        %v5797 = vand.u32 %v5584, 4294901760
        %5798 = vmatpush.msra.mxu0 %v5797
        %v5799 = vand.u32 %v5576, 4294901760
        %5800 = vmatpush.msra.mxu0 %v5799
        %v5801 = vand.u32 %v5568, 4294901760
        %5802 = vmatpush.msra.mxu0 %v5801
        %v5803 = vand.u32 %v5560, 4294901760
        %5804 = vmatpush.msra.mxu0 %v5803
        %v5805 = vand.u32 %v5593, 4294901760
        %5806 = vmatmul.f32.gmra.mxu0 %v5805
        %v5807 = vpop.f32.mrf.mxu0
        %v5808 = vadd.f32 %v5779, %v5807
        %v5809 = vand.u32 %v5596, 4294901760
        %5810 = vmatmul.f32.gmra.mxu0 %v5809
        %v5811 = vpop.f32.mrf.mxu0
        %v5812 = vadd.f32 %v5783, %v5811
        %5813 = vdwg.mxu0
        %5814 = vmatpush.msra.mxu0 0.0
        %5815 = vmatpush.msra.mxu0 0.0
        %5816 = vmatpush.msra.mxu0 0.0
        %5817 = vmatpush.msra.mxu0 0.0
        %5818 = vmatpush.msra.mxu0 0.0
        %5819 = vmatpush.msra.mxu0 0.0
        %5820 = vmatpush.msra.mxu0 0.0
        %5821 = vmatpush.msra.mxu0 0.0
        %5822 = vmatpush.msra.mxu0 0.0
        %5823 = vmatpush.msra.mxu0 0.0
        %5824 = vmatpush.msra.mxu0 0.0
        %5825 = vmatpush.msra.mxu0 0.0
        %v5826 = vand.u32 %v5585, 4294901760
        %5827 = vmatpush.msra.mxu0 %v5826
        %v5828 = vand.u32 %v5577, 4294901760
        %5829 = vmatpush.msra.mxu0 %v5828
        %v5830 = vand.u32 %v5569, 4294901760
        %5831 = vmatpush.msra.mxu0 %v5830
        %v5832 = vand.u32 %v5561, 4294901760
        %5833 = vmatpush.msra.mxu0 %v5832
        %v5834 = vand.u32 %v5593, 4294901760
        %v5835 = vsub.f32 %v5593, %v5834
        %v5836 = vand.u32 %v5835, 4294901760
        %v5837 = vsub.f32 %v5835, %v5836
        %v5838 = vand.u32 %v5837, 4294901760
        %5839 = vmatmul.f32.gmra.mxu0 %v5838
        %v5840 = vpop.f32.mrf.mxu0
        %v5841 = vadd.f32 0.0, %v5840
        %v5842 = vand.u32 %v5596, 4294901760
        %v5843 = vsub.f32 %v5596, %v5842
        %v5844 = vand.u32 %v5843, 4294901760
        %v5845 = vsub.f32 %v5843, %v5844
        %v5846 = vand.u32 %v5845, 4294901760
        %5847 = vmatmul.f32.gmra.mxu0 %v5846
        %v5848 = vpop.f32.mrf.mxu0
        %v5849 = vadd.f32 0.0, %v5848
        %5850 = vdwg.mxu0
        %5851 = vmatpush.msra.mxu0 0.0
        %5852 = vmatpush.msra.mxu0 0.0
        %5853 = vmatpush.msra.mxu0 0.0
        %5854 = vmatpush.msra.mxu0 0.0
        %5855 = vmatpush.msra.mxu0 0.0
        %5856 = vmatpush.msra.mxu0 0.0
        %5857 = vmatpush.msra.mxu0 0.0
        %5858 = vmatpush.msra.mxu0 0.0
        %5859 = vmatpush.msra.mxu0 0.0
        %5860 = vmatpush.msra.mxu0 0.0
        %5861 = vmatpush.msra.mxu0 0.0
        %5862 = vmatpush.msra.mxu0 0.0
        %v5863 = vand.u32 %v5585, 4294901760
        %v5864 = vsub.f32 %v5585, %v5863
        %v5865 = vand.u32 %v5864, 4294901760
        %v5866 = vsub.f32 %v5864, %v5865
        %v5867 = vand.u32 %v5866, 4294901760
        %5868 = vmatpush.msra.mxu0 %v5867
        %v5869 = vand.u32 %v5577, 4294901760
        %v5870 = vsub.f32 %v5577, %v5869
        %v5871 = vand.u32 %v5870, 4294901760
        %v5872 = vsub.f32 %v5870, %v5871
        %v5873 = vand.u32 %v5872, 4294901760
        %5874 = vmatpush.msra.mxu0 %v5873
        %v5875 = vand.u32 %v5569, 4294901760
        %v5876 = vsub.f32 %v5569, %v5875
        %v5877 = vand.u32 %v5876, 4294901760
        %v5878 = vsub.f32 %v5876, %v5877
        %v5879 = vand.u32 %v5878, 4294901760
        %5880 = vmatpush.msra.mxu0 %v5879
        %v5881 = vand.u32 %v5561, 4294901760
        %v5882 = vsub.f32 %v5561, %v5881
        %v5883 = vand.u32 %v5882, 4294901760
        %v5884 = vsub.f32 %v5882, %v5883
        %v5885 = vand.u32 %v5884, 4294901760
        %5886 = vmatpush.msra.mxu0 %v5885
        %v5887 = vand.u32 %v5593, 4294901760
        %5888 = vmatmul.f32.gmra.mxu0 %v5887
        %v5889 = vpop.f32.mrf.mxu0
        %v5890 = vadd.f32 %v5841, %v5889
        %v5891 = vand.u32 %v5596, 4294901760
        %5892 = vmatmul.f32.gmra.mxu0 %v5891
        %v5893 = vpop.f32.mrf.mxu0
        %v5894 = vadd.f32 %v5849, %v5893
        %5895 = vdwg.mxu0
        %5896 = vmatpush.msra.mxu0 0.0
        %5897 = vmatpush.msra.mxu0 0.0
        %5898 = vmatpush.msra.mxu0 0.0
        %5899 = vmatpush.msra.mxu0 0.0
        %5900 = vmatpush.msra.mxu0 0.0
        %5901 = vmatpush.msra.mxu0 0.0
        %5902 = vmatpush.msra.mxu0 0.0
        %5903 = vmatpush.msra.mxu0 0.0
        %5904 = vmatpush.msra.mxu0 0.0
        %5905 = vmatpush.msra.mxu0 0.0
        %5906 = vmatpush.msra.mxu0 0.0
        %5907 = vmatpush.msra.mxu0 0.0
        %v5908 = vand.u32 %v5585, 4294901760
        %v5909 = vsub.f32 %v5585, %v5908
        %5910 = vmatpush.msra.mxu0 %v5909
        %v5911 = vand.u32 %v5577, 4294901760
        %v5912 = vsub.f32 %v5577, %v5911
        %5913 = vmatpush.msra.mxu0 %v5912
        %v5914 = vand.u32 %v5569, 4294901760
        %v5915 = vsub.f32 %v5569, %v5914
        %5916 = vmatpush.msra.mxu0 %v5915
        %v5917 = vand.u32 %v5561, 4294901760
        %v5918 = vsub.f32 %v5561, %v5917
        %5919 = vmatpush.msra.mxu0 %v5918
        %v5920 = vand.u32 %v5593, 4294901760
        %v5921 = vsub.f32 %v5593, %v5920
        %5922 = vmatmul.f32.gmra.mxu0 %v5921
        %v5923 = vpop.f32.mrf.mxu0
        %v5924 = vadd.f32 %v5890, %v5923
        %v5925 = vand.u32 %v5596, 4294901760
        %v5926 = vsub.f32 %v5596, %v5925
        %5927 = vmatmul.f32.gmra.mxu0 %v5926
        %v5928 = vpop.f32.mrf.mxu0
        %v5929 = vadd.f32 %v5894, %v5928
        %5930 = vdwg.mxu0
        %5931 = vmatpush.msra.mxu0 0.0
        %5932 = vmatpush.msra.mxu0 0.0
        %5933 = vmatpush.msra.mxu0 0.0
        %5934 = vmatpush.msra.mxu0 0.0
        %5935 = vmatpush.msra.mxu0 0.0
        %5936 = vmatpush.msra.mxu0 0.0
        %5937 = vmatpush.msra.mxu0 0.0
        %5938 = vmatpush.msra.mxu0 0.0
        %5939 = vmatpush.msra.mxu0 0.0
        %5940 = vmatpush.msra.mxu0 0.0
        %5941 = vmatpush.msra.mxu0 0.0
        %5942 = vmatpush.msra.mxu0 0.0
        %v5943 = vand.u32 %v5585, 4294901760
        %5944 = vmatpush.msra.mxu0 %v5943
        %v5945 = vand.u32 %v5577, 4294901760
        %5946 = vmatpush.msra.mxu0 %v5945
        %v5947 = vand.u32 %v5569, 4294901760
        %5948 = vmatpush.msra.mxu0 %v5947
        %v5949 = vand.u32 %v5561, 4294901760
        %5950 = vmatpush.msra.mxu0 %v5949
        %v5951 = vand.u32 %v5593, 4294901760
        %v5952 = vsub.f32 %v5593, %v5951
        %v5953 = vand.u32 %v5952, 4294901760
        %5954 = vmatmul.f32.gmra.mxu0 %v5953
        %v5955 = vpop.f32.mrf.mxu0
        %v5956 = vadd.f32 %v5924, %v5955
        %v5957 = vand.u32 %v5596, 4294901760
        %v5958 = vsub.f32 %v5596, %v5957
        %v5959 = vand.u32 %v5958, 4294901760
        %5960 = vmatmul.f32.gmra.mxu0 %v5959
        %v5961 = vpop.f32.mrf.mxu0
        %v5962 = vadd.f32 %v5929, %v5961
        %5963 = vdwg.mxu0
        %5964 = vmatpush.msra.mxu0 0.0
        %5965 = vmatpush.msra.mxu0 0.0
        %5966 = vmatpush.msra.mxu0 0.0
        %5967 = vmatpush.msra.mxu0 0.0
        %5968 = vmatpush.msra.mxu0 0.0
        %5969 = vmatpush.msra.mxu0 0.0
        %5970 = vmatpush.msra.mxu0 0.0
        %5971 = vmatpush.msra.mxu0 0.0
        %5972 = vmatpush.msra.mxu0 0.0
        %5973 = vmatpush.msra.mxu0 0.0
        %5974 = vmatpush.msra.mxu0 0.0
        %5975 = vmatpush.msra.mxu0 0.0
        %v5976 = vand.u32 %v5585, 4294901760
        %v5977 = vsub.f32 %v5585, %v5976
        %v5978 = vand.u32 %v5977, 4294901760
        %5979 = vmatpush.msra.mxu0 %v5978
        %v5980 = vand.u32 %v5577, 4294901760
        %v5981 = vsub.f32 %v5577, %v5980
        %v5982 = vand.u32 %v5981, 4294901760
        %5983 = vmatpush.msra.mxu0 %v5982
        %v5984 = vand.u32 %v5569, 4294901760
        %v5985 = vsub.f32 %v5569, %v5984
        %v5986 = vand.u32 %v5985, 4294901760
        %5987 = vmatpush.msra.mxu0 %v5986
        %v5988 = vand.u32 %v5561, 4294901760
        %v5989 = vsub.f32 %v5561, %v5988
        %v5990 = vand.u32 %v5989, 4294901760
        %5991 = vmatpush.msra.mxu0 %v5990
        %v5992 = vand.u32 %v5593, 4294901760
        %5993 = vmatmul.f32.gmra.mxu0 %v5992
        %v5994 = vpop.f32.mrf.mxu0
        %v5995 = vadd.f32 %v5956, %v5994
        %v5996 = vand.u32 %v5596, 4294901760
        %5997 = vmatmul.f32.gmra.mxu0 %v5996
        %v5998 = vpop.f32.mrf.mxu0
        %v5999 = vadd.f32 %v5962, %v5998
        %6000 = vdwg.mxu0
        %6001 = vmatpush.msra.mxu0 0.0
        %6002 = vmatpush.msra.mxu0 0.0
        %6003 = vmatpush.msra.mxu0 0.0
        %6004 = vmatpush.msra.mxu0 0.0
        %6005 = vmatpush.msra.mxu0 0.0
        %6006 = vmatpush.msra.mxu0 0.0
        %6007 = vmatpush.msra.mxu0 0.0
        %6008 = vmatpush.msra.mxu0 0.0
        %6009 = vmatpush.msra.mxu0 0.0
        %6010 = vmatpush.msra.mxu0 0.0
        %6011 = vmatpush.msra.mxu0 0.0
        %6012 = vmatpush.msra.mxu0 0.0
        %v6013 = vand.u32 %v5585, 4294901760
        %6014 = vmatpush.msra.mxu0 %v6013
        %v6015 = vand.u32 %v5577, 4294901760
        %6016 = vmatpush.msra.mxu0 %v6015
        %v6017 = vand.u32 %v5569, 4294901760
        %6018 = vmatpush.msra.mxu0 %v6017
        %v6019 = vand.u32 %v5561, 4294901760
        %6020 = vmatpush.msra.mxu0 %v6019
        %v6021 = vand.u32 %v5593, 4294901760
        %6022 = vmatmul.f32.gmra.mxu0 %v6021
        %v6023 = vpop.f32.mrf.mxu0
        %v6024 = vadd.f32 %v5995, %v6023
        %v6025 = vand.u32 %v5596, 4294901760
        %6026 = vmatmul.f32.gmra.mxu0 %v6025
        %v6027 = vpop.f32.mrf.mxu0
        %v6028 = vadd.f32 %v5999, %v6027
        %6029 = vdwg.mxu0
        %6030 = vmatpush.msra.mxu0 0.0
        %6031 = vmatpush.msra.mxu0 0.0
        %6032 = vmatpush.msra.mxu0 0.0
        %6033 = vmatpush.msra.mxu0 0.0
        %6034 = vmatpush.msra.mxu0 0.0
        %6035 = vmatpush.msra.mxu0 0.0
        %6036 = vmatpush.msra.mxu0 0.0
        %6037 = vmatpush.msra.mxu0 0.0
        %6038 = vmatpush.msra.mxu0 0.0
        %6039 = vmatpush.msra.mxu0 0.0
        %6040 = vmatpush.msra.mxu0 0.0
        %6041 = vmatpush.msra.mxu0 0.0
        %v6042 = vand.u32 %v5586, 4294901760
        %6043 = vmatpush.msra.mxu0 %v6042
        %v6044 = vand.u32 %v5578, 4294901760
        %6045 = vmatpush.msra.mxu0 %v6044
        %v6046 = vand.u32 %v5570, 4294901760
        %6047 = vmatpush.msra.mxu0 %v6046
        %v6048 = vand.u32 %v5562, 4294901760
        %6049 = vmatpush.msra.mxu0 %v6048
        %v6050 = vand.u32 %v5593, 4294901760
        %v6051 = vsub.f32 %v5593, %v6050
        %v6052 = vand.u32 %v6051, 4294901760
        %v6053 = vsub.f32 %v6051, %v6052
        %v6054 = vand.u32 %v6053, 4294901760
        %6055 = vmatmul.f32.gmra.mxu0 %v6054
        %v6056 = vpop.f32.mrf.mxu0
        %v6057 = vadd.f32 0.0, %v6056
        %v6058 = vand.u32 %v5596, 4294901760
        %v6059 = vsub.f32 %v5596, %v6058
        %v6060 = vand.u32 %v6059, 4294901760
        %v6061 = vsub.f32 %v6059, %v6060
        %v6062 = vand.u32 %v6061, 4294901760
        %6063 = vmatmul.f32.gmra.mxu0 %v6062
        %v6064 = vpop.f32.mrf.mxu0
        %v6065 = vadd.f32 0.0, %v6064
        %6066 = vdwg.mxu0
        %6067 = vmatpush.msra.mxu0 0.0
        %6068 = vmatpush.msra.mxu0 0.0
        %6069 = vmatpush.msra.mxu0 0.0
        %6070 = vmatpush.msra.mxu0 0.0
        %6071 = vmatpush.msra.mxu0 0.0
        %6072 = vmatpush.msra.mxu0 0.0
        %6073 = vmatpush.msra.mxu0 0.0
        %6074 = vmatpush.msra.mxu0 0.0
        %6075 = vmatpush.msra.mxu0 0.0
        %6076 = vmatpush.msra.mxu0 0.0
        %6077 = vmatpush.msra.mxu0 0.0
        %6078 = vmatpush.msra.mxu0 0.0
        %v6079 = vand.u32 %v5586, 4294901760
        %v6080 = vsub.f32 %v5586, %v6079
        %v6081 = vand.u32 %v6080, 4294901760
        %v6082 = vsub.f32 %v6080, %v6081
        %v6083 = vand.u32 %v6082, 4294901760
        %6084 = vmatpush.msra.mxu0 %v6083
        %v6085 = vand.u32 %v5578, 4294901760
        %v6086 = vsub.f32 %v5578, %v6085
        %v6087 = vand.u32 %v6086, 4294901760
        %v6088 = vsub.f32 %v6086, %v6087
        %v6089 = vand.u32 %v6088, 4294901760
        %6090 = vmatpush.msra.mxu0 %v6089
        %v6091 = vand.u32 %v5570, 4294901760
        %v6092 = vsub.f32 %v5570, %v6091
        %v6093 = vand.u32 %v6092, 4294901760
        %v6094 = vsub.f32 %v6092, %v6093
        %v6095 = vand.u32 %v6094, 4294901760
        %6096 = vmatpush.msra.mxu0 %v6095
        %v6097 = vand.u32 %v5562, 4294901760
        %v6098 = vsub.f32 %v5562, %v6097
        %v6099 = vand.u32 %v6098, 4294901760
        %v6100 = vsub.f32 %v6098, %v6099
        %v6101 = vand.u32 %v6100, 4294901760
        %6102 = vmatpush.msra.mxu0 %v6101
        %v6103 = vand.u32 %v5593, 4294901760
        %6104 = vmatmul.f32.gmra.mxu0 %v6103
        %v6105 = vpop.f32.mrf.mxu0
        %v6106 = vadd.f32 %v6057, %v6105
        %v6107 = vand.u32 %v5596, 4294901760
        %6108 = vmatmul.f32.gmra.mxu0 %v6107
        %v6109 = vpop.f32.mrf.mxu0
        %v6110 = vadd.f32 %v6065, %v6109
        %6111 = vdwg.mxu0
        %6112 = vmatpush.msra.mxu0 0.0
        %6113 = vmatpush.msra.mxu0 0.0
        %6114 = vmatpush.msra.mxu0 0.0
        %6115 = vmatpush.msra.mxu0 0.0
        %6116 = vmatpush.msra.mxu0 0.0
        %6117 = vmatpush.msra.mxu0 0.0
        %6118 = vmatpush.msra.mxu0 0.0
        %6119 = vmatpush.msra.mxu0 0.0
        %6120 = vmatpush.msra.mxu0 0.0
        %6121 = vmatpush.msra.mxu0 0.0
        %6122 = vmatpush.msra.mxu0 0.0
        %6123 = vmatpush.msra.mxu0 0.0
        %v6124 = vand.u32 %v5586, 4294901760
        %v6125 = vsub.f32 %v5586, %v6124
        %6126 = vmatpush.msra.mxu0 %v6125
        %v6127 = vand.u32 %v5578, 4294901760
        %v6128 = vsub.f32 %v5578, %v6127
        %6129 = vmatpush.msra.mxu0 %v6128
        %v6130 = vand.u32 %v5570, 4294901760
        %v6131 = vsub.f32 %v5570, %v6130
        %6132 = vmatpush.msra.mxu0 %v6131
        %v6133 = vand.u32 %v5562, 4294901760
        %v6134 = vsub.f32 %v5562, %v6133
        %6135 = vmatpush.msra.mxu0 %v6134
        %v6136 = vand.u32 %v5593, 4294901760
        %v6137 = vsub.f32 %v5593, %v6136
        %6138 = vmatmul.f32.gmra.mxu0 %v6137
        %v6139 = vpop.f32.mrf.mxu0
        %v6140 = vadd.f32 %v6106, %v6139
        %v6141 = vand.u32 %v5596, 4294901760
        %v6142 = vsub.f32 %v5596, %v6141
        %6143 = vmatmul.f32.gmra.mxu0 %v6142
        %v6144 = vpop.f32.mrf.mxu0
        %v6145 = vadd.f32 %v6110, %v6144
        %6146 = vdwg.mxu0
        %6147 = vmatpush.msra.mxu0 0.0
        %6148 = vmatpush.msra.mxu0 0.0
        %6149 = vmatpush.msra.mxu0 0.0
        %6150 = vmatpush.msra.mxu0 0.0
        %6151 = vmatpush.msra.mxu0 0.0
        %6152 = vmatpush.msra.mxu0 0.0
        %6153 = vmatpush.msra.mxu0 0.0
        %6154 = vmatpush.msra.mxu0 0.0
        %6155 = vmatpush.msra.mxu0 0.0
        %6156 = vmatpush.msra.mxu0 0.0
        %6157 = vmatpush.msra.mxu0 0.0
        %6158 = vmatpush.msra.mxu0 0.0
        %v6159 = vand.u32 %v5586, 4294901760
        %6160 = vmatpush.msra.mxu0 %v6159
        %v6161 = vand.u32 %v5578, 4294901760
        %6162 = vmatpush.msra.mxu0 %v6161
        %v6163 = vand.u32 %v5570, 4294901760
        %6164 = vmatpush.msra.mxu0 %v6163
        %v6165 = vand.u32 %v5562, 4294901760
        %6166 = vmatpush.msra.mxu0 %v6165
        %v6167 = vand.u32 %v5593, 4294901760
        %v6168 = vsub.f32 %v5593, %v6167
        %v6169 = vand.u32 %v6168, 4294901760
        %6170 = vmatmul.f32.gmra.mxu0 %v6169
        %v6171 = vpop.f32.mrf.mxu0
        %v6172 = vadd.f32 %v6140, %v6171
        %v6173 = vand.u32 %v5596, 4294901760
        %v6174 = vsub.f32 %v5596, %v6173
        %v6175 = vand.u32 %v6174, 4294901760
        %6176 = vmatmul.f32.gmra.mxu0 %v6175
        %v6177 = vpop.f32.mrf.mxu0
        %v6178 = vadd.f32 %v6145, %v6177
        %6179 = vdwg.mxu0
        %6180 = vmatpush.msra.mxu0 0.0
        %6181 = vmatpush.msra.mxu0 0.0
        %6182 = vmatpush.msra.mxu0 0.0
        %6183 = vmatpush.msra.mxu0 0.0
        %6184 = vmatpush.msra.mxu0 0.0
        %6185 = vmatpush.msra.mxu0 0.0
        %6186 = vmatpush.msra.mxu0 0.0
        %6187 = vmatpush.msra.mxu0 0.0
        %6188 = vmatpush.msra.mxu0 0.0
        %6189 = vmatpush.msra.mxu0 0.0
        %6190 = vmatpush.msra.mxu0 0.0
        %6191 = vmatpush.msra.mxu0 0.0
        %v6192 = vand.u32 %v5586, 4294901760
        %v6193 = vsub.f32 %v5586, %v6192
        %v6194 = vand.u32 %v6193, 4294901760
        %6195 = vmatpush.msra.mxu0 %v6194
        %v6196 = vand.u32 %v5578, 4294901760
        %v6197 = vsub.f32 %v5578, %v6196
        %v6198 = vand.u32 %v6197, 4294901760
        %6199 = vmatpush.msra.mxu0 %v6198
        %v6200 = vand.u32 %v5570, 4294901760
        %v6201 = vsub.f32 %v5570, %v6200
        %v6202 = vand.u32 %v6201, 4294901760
        %6203 = vmatpush.msra.mxu0 %v6202
        %v6204 = vand.u32 %v5562, 4294901760
        %v6205 = vsub.f32 %v5562, %v6204
        %v6206 = vand.u32 %v6205, 4294901760
        %6207 = vmatpush.msra.mxu0 %v6206
        %v6208 = vand.u32 %v5593, 4294901760
        %6209 = vmatmul.f32.gmra.mxu0 %v6208
        %v6210 = vpop.f32.mrf.mxu0
        %v6211 = vadd.f32 %v6172, %v6210
        %v6212 = vand.u32 %v5596, 4294901760
        %6213 = vmatmul.f32.gmra.mxu0 %v6212
        %v6214 = vpop.f32.mrf.mxu0
        %v6215 = vadd.f32 %v6178, %v6214
        %6216 = vdwg.mxu0
        %6217 = vmatpush.msra.mxu0 0.0
        %6218 = vmatpush.msra.mxu0 0.0
        %6219 = vmatpush.msra.mxu0 0.0
        %6220 = vmatpush.msra.mxu0 0.0
        %6221 = vmatpush.msra.mxu0 0.0
        %6222 = vmatpush.msra.mxu0 0.0
        %6223 = vmatpush.msra.mxu0 0.0
        %6224 = vmatpush.msra.mxu0 0.0
        %6225 = vmatpush.msra.mxu0 0.0
        %6226 = vmatpush.msra.mxu0 0.0
        %6227 = vmatpush.msra.mxu0 0.0
        %6228 = vmatpush.msra.mxu0 0.0
        %v6229 = vand.u32 %v5586, 4294901760
        %6230 = vmatpush.msra.mxu0 %v6229
        %v6231 = vand.u32 %v5578, 4294901760
        %6232 = vmatpush.msra.mxu0 %v6231
        %v6233 = vand.u32 %v5570, 4294901760
        %6234 = vmatpush.msra.mxu0 %v6233
        %v6235 = vand.u32 %v5562, 4294901760
        %6236 = vmatpush.msra.mxu0 %v6235
        %v6237 = vand.u32 %v5593, 4294901760
        %6238 = vmatmul.f32.gmra.mxu0 %v6237
        %v6239 = vpop.f32.mrf.mxu0
        %v6240 = vadd.f32 %v6211, %v6239
        %v6241 = vand.u32 %v5596, 4294901760
        %6242 = vmatmul.f32.gmra.mxu0 %v6241
        %v6243 = vpop.f32.mrf.mxu0
        %v6244 = vadd.f32 %v6215, %v6243
        %6245 = vdwg.mxu0
        %6246 = vmatpush.msra.mxu0 0.0
        %6247 = vmatpush.msra.mxu0 0.0
        %6248 = vmatpush.msra.mxu0 0.0
        %6249 = vmatpush.msra.mxu0 0.0
        %6250 = vmatpush.msra.mxu0 0.0
        %6251 = vmatpush.msra.mxu0 0.0
        %6252 = vmatpush.msra.mxu0 0.0
        %6253 = vmatpush.msra.mxu0 0.0
        %6254 = vmatpush.msra.mxu0 0.0
        %6255 = vmatpush.msra.mxu0 0.0
        %6256 = vmatpush.msra.mxu0 0.0
        %6257 = vmatpush.msra.mxu0 0.0
        %v6258 = vand.u32 %v5587, 4294901760
        %6259 = vmatpush.msra.mxu0 %v6258
        %v6260 = vand.u32 %v5579, 4294901760
        %6261 = vmatpush.msra.mxu0 %v6260
        %v6262 = vand.u32 %v5571, 4294901760
        %6263 = vmatpush.msra.mxu0 %v6262
        %v6264 = vand.u32 %v5563, 4294901760
        %6265 = vmatpush.msra.mxu0 %v6264
        %v6266 = vand.u32 %v5593, 4294901760
        %v6267 = vsub.f32 %v5593, %v6266
        %v6268 = vand.u32 %v6267, 4294901760
        %v6269 = vsub.f32 %v6267, %v6268
        %v6270 = vand.u32 %v6269, 4294901760
        %6271 = vmatmul.f32.gmra.mxu0 %v6270
        %v6272 = vpop.f32.mrf.mxu0
        %v6273 = vadd.f32 0.0, %v6272
        %v6274 = vand.u32 %v5596, 4294901760
        %v6275 = vsub.f32 %v5596, %v6274
        %v6276 = vand.u32 %v6275, 4294901760
        %v6277 = vsub.f32 %v6275, %v6276
        %v6278 = vand.u32 %v6277, 4294901760
        %6279 = vmatmul.f32.gmra.mxu0 %v6278
        %v6280 = vpop.f32.mrf.mxu0
        %v6281 = vadd.f32 0.0, %v6280
        %6282 = vdwg.mxu0
        %6283 = vmatpush.msra.mxu0 0.0
        %6284 = vmatpush.msra.mxu0 0.0
        %6285 = vmatpush.msra.mxu0 0.0
        %6286 = vmatpush.msra.mxu0 0.0
        %6287 = vmatpush.msra.mxu0 0.0
        %6288 = vmatpush.msra.mxu0 0.0
        %6289 = vmatpush.msra.mxu0 0.0
        %6290 = vmatpush.msra.mxu0 0.0
        %6291 = vmatpush.msra.mxu0 0.0
        %6292 = vmatpush.msra.mxu0 0.0
        %6293 = vmatpush.msra.mxu0 0.0
        %6294 = vmatpush.msra.mxu0 0.0
        %v6295 = vand.u32 %v5587, 4294901760
        %v6296 = vsub.f32 %v5587, %v6295
        %v6297 = vand.u32 %v6296, 4294901760
        %v6298 = vsub.f32 %v6296, %v6297
        %v6299 = vand.u32 %v6298, 4294901760
        %6300 = vmatpush.msra.mxu0 %v6299
        %v6301 = vand.u32 %v5579, 4294901760
        %v6302 = vsub.f32 %v5579, %v6301
        %v6303 = vand.u32 %v6302, 4294901760
        %v6304 = vsub.f32 %v6302, %v6303
        %v6305 = vand.u32 %v6304, 4294901760
        %6306 = vmatpush.msra.mxu0 %v6305
        %v6307 = vand.u32 %v5571, 4294901760
        %v6308 = vsub.f32 %v5571, %v6307
        %v6309 = vand.u32 %v6308, 4294901760
        %v6310 = vsub.f32 %v6308, %v6309
        %v6311 = vand.u32 %v6310, 4294901760
        %6312 = vmatpush.msra.mxu0 %v6311
        %v6313 = vand.u32 %v5563, 4294901760
        %v6314 = vsub.f32 %v5563, %v6313
        %v6315 = vand.u32 %v6314, 4294901760
        %v6316 = vsub.f32 %v6314, %v6315
        %v6317 = vand.u32 %v6316, 4294901760
        %6318 = vmatpush.msra.mxu0 %v6317
        %v6319 = vand.u32 %v5593, 4294901760
        %6320 = vmatmul.f32.gmra.mxu0 %v6319
        %v6321 = vpop.f32.mrf.mxu0
        %v6322 = vadd.f32 %v6273, %v6321
        %v6323 = vand.u32 %v5596, 4294901760
        %6324 = vmatmul.f32.gmra.mxu0 %v6323
        %v6325 = vpop.f32.mrf.mxu0
        %v6326 = vadd.f32 %v6281, %v6325
        %6327 = vdwg.mxu0
        %6328 = vmatpush.msra.mxu0 0.0
        %6329 = vmatpush.msra.mxu0 0.0
        %6330 = vmatpush.msra.mxu0 0.0
        %6331 = vmatpush.msra.mxu0 0.0
        %6332 = vmatpush.msra.mxu0 0.0
        %6333 = vmatpush.msra.mxu0 0.0
        %6334 = vmatpush.msra.mxu0 0.0
        %6335 = vmatpush.msra.mxu0 0.0
        %6336 = vmatpush.msra.mxu0 0.0
        %6337 = vmatpush.msra.mxu0 0.0
        %6338 = vmatpush.msra.mxu0 0.0
        %6339 = vmatpush.msra.mxu0 0.0
        %v6340 = vand.u32 %v5587, 4294901760
        %v6341 = vsub.f32 %v5587, %v6340
        %6342 = vmatpush.msra.mxu0 %v6341
        %v6343 = vand.u32 %v5579, 4294901760
        %v6344 = vsub.f32 %v5579, %v6343
        %6345 = vmatpush.msra.mxu0 %v6344
        %v6346 = vand.u32 %v5571, 4294901760
        %v6347 = vsub.f32 %v5571, %v6346
        %6348 = vmatpush.msra.mxu0 %v6347
        %v6349 = vand.u32 %v5563, 4294901760
        %v6350 = vsub.f32 %v5563, %v6349
        %6351 = vmatpush.msra.mxu0 %v6350
        %v6352 = vand.u32 %v5593, 4294901760
        %v6353 = vsub.f32 %v5593, %v6352
        %6354 = vmatmul.f32.gmra.mxu0 %v6353
        %v6355 = vpop.f32.mrf.mxu0
        %v6356 = vadd.f32 %v6322, %v6355
        %v6357 = vand.u32 %v5596, 4294901760
        %v6358 = vsub.f32 %v5596, %v6357
        %6359 = vmatmul.f32.gmra.mxu0 %v6358
        %v6360 = vpop.f32.mrf.mxu0
        %v6361 = vadd.f32 %v6326, %v6360
        %6362 = vdwg.mxu0
        %6363 = vmatpush.msra.mxu0 0.0
        %6364 = vmatpush.msra.mxu0 0.0
        %6365 = vmatpush.msra.mxu0 0.0
        %6366 = vmatpush.msra.mxu0 0.0
        %6367 = vmatpush.msra.mxu0 0.0
        %6368 = vmatpush.msra.mxu0 0.0
        %6369 = vmatpush.msra.mxu0 0.0
        %6370 = vmatpush.msra.mxu0 0.0
        %6371 = vmatpush.msra.mxu0 0.0
        %6372 = vmatpush.msra.mxu0 0.0
        %6373 = vmatpush.msra.mxu0 0.0
        %6374 = vmatpush.msra.mxu0 0.0
        %v6375 = vand.u32 %v5587, 4294901760
        %6376 = vmatpush.msra.mxu0 %v6375
        %v6377 = vand.u32 %v5579, 4294901760
        %6378 = vmatpush.msra.mxu0 %v6377
        %v6379 = vand.u32 %v5571, 4294901760
        %6380 = vmatpush.msra.mxu0 %v6379
        %v6381 = vand.u32 %v5563, 4294901760
        %6382 = vmatpush.msra.mxu0 %v6381
        %v6383 = vand.u32 %v5593, 4294901760
        %v6384 = vsub.f32 %v5593, %v6383
        %v6385 = vand.u32 %v6384, 4294901760
        %6386 = vmatmul.f32.gmra.mxu0 %v6385
        %v6387 = vpop.f32.mrf.mxu0
        %v6388 = vadd.f32 %v6356, %v6387
        %v6389 = vand.u32 %v5596, 4294901760
        %v6390 = vsub.f32 %v5596, %v6389
        %v6391 = vand.u32 %v6390, 4294901760
        %6392 = vmatmul.f32.gmra.mxu0 %v6391
        %v6393 = vpop.f32.mrf.mxu0
        %v6394 = vadd.f32 %v6361, %v6393
        %6395 = vdwg.mxu0
        %6396 = vmatpush.msra.mxu0 0.0
        %6397 = vmatpush.msra.mxu0 0.0
        %6398 = vmatpush.msra.mxu0 0.0
        %6399 = vmatpush.msra.mxu0 0.0
        %6400 = vmatpush.msra.mxu0 0.0
        %6401 = vmatpush.msra.mxu0 0.0
        %6402 = vmatpush.msra.mxu0 0.0
        %6403 = vmatpush.msra.mxu0 0.0
        %6404 = vmatpush.msra.mxu0 0.0
        %6405 = vmatpush.msra.mxu0 0.0
        %6406 = vmatpush.msra.mxu0 0.0
        %6407 = vmatpush.msra.mxu0 0.0
        %v6408 = vand.u32 %v5587, 4294901760
        %v6409 = vsub.f32 %v5587, %v6408
        %v6410 = vand.u32 %v6409, 4294901760
        %6411 = vmatpush.msra.mxu0 %v6410
        %v6412 = vand.u32 %v5579, 4294901760
        %v6413 = vsub.f32 %v5579, %v6412
        %v6414 = vand.u32 %v6413, 4294901760
        %6415 = vmatpush.msra.mxu0 %v6414
        %v6416 = vand.u32 %v5571, 4294901760
        %v6417 = vsub.f32 %v5571, %v6416
        %v6418 = vand.u32 %v6417, 4294901760
        %6419 = vmatpush.msra.mxu0 %v6418
        %v6420 = vand.u32 %v5563, 4294901760
        %v6421 = vsub.f32 %v5563, %v6420
        %v6422 = vand.u32 %v6421, 4294901760
        %6423 = vmatpush.msra.mxu0 %v6422
        %v6424 = vand.u32 %v5593, 4294901760
        %6425 = vmatmul.f32.gmra.mxu0 %v6424
        %v6426 = vpop.f32.mrf.mxu0
        %v6427 = vadd.f32 %v6388, %v6426
        %v6428 = vand.u32 %v5596, 4294901760
        %6429 = vmatmul.f32.gmra.mxu0 %v6428
        %v6430 = vpop.f32.mrf.mxu0
        %v6431 = vadd.f32 %v6394, %v6430
        %6432 = vdwg.mxu0
        %6433 = vmatpush.msra.mxu0 0.0
        %6434 = vmatpush.msra.mxu0 0.0
        %6435 = vmatpush.msra.mxu0 0.0
        %6436 = vmatpush.msra.mxu0 0.0
        %6437 = vmatpush.msra.mxu0 0.0
        %6438 = vmatpush.msra.mxu0 0.0
        %6439 = vmatpush.msra.mxu0 0.0
        %6440 = vmatpush.msra.mxu0 0.0
        %6441 = vmatpush.msra.mxu0 0.0
        %6442 = vmatpush.msra.mxu0 0.0
        %6443 = vmatpush.msra.mxu0 0.0
        %6444 = vmatpush.msra.mxu0 0.0
        %v6445 = vand.u32 %v5587, 4294901760
        %6446 = vmatpush.msra.mxu0 %v6445
        %v6447 = vand.u32 %v5579, 4294901760
        %6448 = vmatpush.msra.mxu0 %v6447
        %v6449 = vand.u32 %v5571, 4294901760
        %6450 = vmatpush.msra.mxu0 %v6449
        %v6451 = vand.u32 %v5563, 4294901760
        %6452 = vmatpush.msra.mxu0 %v6451
        %v6453 = vand.u32 %v5593, 4294901760
        %6454 = vmatmul.f32.gmra.mxu0 %v6453
        %v6455 = vpop.f32.mrf.mxu0
        %v6456 = vadd.f32 %v6427, %v6455
        %v6457 = vand.u32 %v5596, 4294901760
        %6458 = vmatmul.f32.gmra.mxu0 %v6457
        %v6459 = vpop.f32.mrf.mxu0
        %v6460 = vadd.f32 %v6431, %v6459
        %6461 = vdwg.mxu0
        %6462 = vmatpush.msra.mxu0 0.0
        %6463 = vmatpush.msra.mxu0 0.0
        %6464 = vmatpush.msra.mxu0 0.0
        %6465 = vmatpush.msra.mxu0 0.0
        %6466 = vmatpush.msra.mxu0 0.0
        %6467 = vmatpush.msra.mxu0 0.0
        %6468 = vmatpush.msra.mxu0 0.0
        %6469 = vmatpush.msra.mxu0 0.0
        %6470 = vmatpush.msra.mxu0 0.0
        %6471 = vmatpush.msra.mxu0 0.0
        %6472 = vmatpush.msra.mxu0 0.0
        %6473 = vmatpush.msra.mxu0 0.0
        %v6474 = vand.u32 %v5588, 4294901760
        %6475 = vmatpush.msra.mxu0 %v6474
        %v6476 = vand.u32 %v5580, 4294901760
        %6477 = vmatpush.msra.mxu0 %v6476
        %v6478 = vand.u32 %v5572, 4294901760
        %6479 = vmatpush.msra.mxu0 %v6478
        %v6480 = vand.u32 %v5564, 4294901760
        %6481 = vmatpush.msra.mxu0 %v6480
        %v6482 = vand.u32 %v5593, 4294901760
        %v6483 = vsub.f32 %v5593, %v6482
        %v6484 = vand.u32 %v6483, 4294901760
        %v6485 = vsub.f32 %v6483, %v6484
        %v6486 = vand.u32 %v6485, 4294901760
        %6487 = vmatmul.f32.gmra.mxu0 %v6486
        %v6488 = vpop.f32.mrf.mxu0
        %v6489 = vadd.f32 0.0, %v6488
        %v6490 = vand.u32 %v5596, 4294901760
        %v6491 = vsub.f32 %v5596, %v6490
        %v6492 = vand.u32 %v6491, 4294901760
        %v6493 = vsub.f32 %v6491, %v6492
        %v6494 = vand.u32 %v6493, 4294901760
        %6495 = vmatmul.f32.gmra.mxu0 %v6494
        %v6496 = vpop.f32.mrf.mxu0
        %v6497 = vadd.f32 0.0, %v6496
        %6498 = vdwg.mxu0
        %6499 = vmatpush.msra.mxu0 0.0
        %6500 = vmatpush.msra.mxu0 0.0
        %6501 = vmatpush.msra.mxu0 0.0
        %6502 = vmatpush.msra.mxu0 0.0
        %6503 = vmatpush.msra.mxu0 0.0
        %6504 = vmatpush.msra.mxu0 0.0
        %6505 = vmatpush.msra.mxu0 0.0
        %6506 = vmatpush.msra.mxu0 0.0
        %6507 = vmatpush.msra.mxu0 0.0
        %6508 = vmatpush.msra.mxu0 0.0
        %6509 = vmatpush.msra.mxu0 0.0
        %6510 = vmatpush.msra.mxu0 0.0
        %v6511 = vand.u32 %v5588, 4294901760
        %v6512 = vsub.f32 %v5588, %v6511
        %v6513 = vand.u32 %v6512, 4294901760
        %v6514 = vsub.f32 %v6512, %v6513
        %v6515 = vand.u32 %v6514, 4294901760
        %6516 = vmatpush.msra.mxu0 %v6515
        %v6517 = vand.u32 %v5580, 4294901760
        %v6518 = vsub.f32 %v5580, %v6517
        %v6519 = vand.u32 %v6518, 4294901760
        %v6520 = vsub.f32 %v6518, %v6519
        %v6521 = vand.u32 %v6520, 4294901760
        %6522 = vmatpush.msra.mxu0 %v6521
        %v6523 = vand.u32 %v5572, 4294901760
        %v6524 = vsub.f32 %v5572, %v6523
        %v6525 = vand.u32 %v6524, 4294901760
        %v6526 = vsub.f32 %v6524, %v6525
        %v6527 = vand.u32 %v6526, 4294901760
        %6528 = vmatpush.msra.mxu0 %v6527
        %v6529 = vand.u32 %v5564, 4294901760
        %v6530 = vsub.f32 %v5564, %v6529
        %v6531 = vand.u32 %v6530, 4294901760
        %v6532 = vsub.f32 %v6530, %v6531
        %v6533 = vand.u32 %v6532, 4294901760
        %6534 = vmatpush.msra.mxu0 %v6533
        %v6535 = vand.u32 %v5593, 4294901760
        %6536 = vmatmul.f32.gmra.mxu0 %v6535
        %v6537 = vpop.f32.mrf.mxu0
        %v6538 = vadd.f32 %v6489, %v6537
        %v6539 = vand.u32 %v5596, 4294901760
        %6540 = vmatmul.f32.gmra.mxu0 %v6539
        %v6541 = vpop.f32.mrf.mxu0
        %v6542 = vadd.f32 %v6497, %v6541
        %6543 = vdwg.mxu0
        %6544 = vmatpush.msra.mxu0 0.0
        %6545 = vmatpush.msra.mxu0 0.0
        %6546 = vmatpush.msra.mxu0 0.0
        %6547 = vmatpush.msra.mxu0 0.0
        %6548 = vmatpush.msra.mxu0 0.0
        %6549 = vmatpush.msra.mxu0 0.0
        %6550 = vmatpush.msra.mxu0 0.0
        %6551 = vmatpush.msra.mxu0 0.0
        %6552 = vmatpush.msra.mxu0 0.0
        %6553 = vmatpush.msra.mxu0 0.0
        %6554 = vmatpush.msra.mxu0 0.0
        %6555 = vmatpush.msra.mxu0 0.0
        %v6556 = vand.u32 %v5588, 4294901760
        %v6557 = vsub.f32 %v5588, %v6556
        %6558 = vmatpush.msra.mxu0 %v6557
        %v6559 = vand.u32 %v5580, 4294901760
        %v6560 = vsub.f32 %v5580, %v6559
        %6561 = vmatpush.msra.mxu0 %v6560
        %v6562 = vand.u32 %v5572, 4294901760
        %v6563 = vsub.f32 %v5572, %v6562
        %6564 = vmatpush.msra.mxu0 %v6563
        %v6565 = vand.u32 %v5564, 4294901760
        %v6566 = vsub.f32 %v5564, %v6565
        %6567 = vmatpush.msra.mxu0 %v6566
        %v6568 = vand.u32 %v5593, 4294901760
        %v6569 = vsub.f32 %v5593, %v6568
        %6570 = vmatmul.f32.gmra.mxu0 %v6569
        %v6571 = vpop.f32.mrf.mxu0
        %v6572 = vadd.f32 %v6538, %v6571
        %v6573 = vand.u32 %v5596, 4294901760
        %v6574 = vsub.f32 %v5596, %v6573
        %6575 = vmatmul.f32.gmra.mxu0 %v6574
        %v6576 = vpop.f32.mrf.mxu0
        %v6577 = vadd.f32 %v6542, %v6576
        %6578 = vdwg.mxu0
        %6579 = vmatpush.msra.mxu0 0.0
        %6580 = vmatpush.msra.mxu0 0.0
        %6581 = vmatpush.msra.mxu0 0.0
        %6582 = vmatpush.msra.mxu0 0.0
        %6583 = vmatpush.msra.mxu0 0.0
        %6584 = vmatpush.msra.mxu0 0.0
        %6585 = vmatpush.msra.mxu0 0.0
        %6586 = vmatpush.msra.mxu0 0.0
        %6587 = vmatpush.msra.mxu0 0.0
        %6588 = vmatpush.msra.mxu0 0.0
        %6589 = vmatpush.msra.mxu0 0.0
        %6590 = vmatpush.msra.mxu0 0.0
        %v6591 = vand.u32 %v5588, 4294901760
        %6592 = vmatpush.msra.mxu0 %v6591
        %v6593 = vand.u32 %v5580, 4294901760
        %6594 = vmatpush.msra.mxu0 %v6593
        %v6595 = vand.u32 %v5572, 4294901760
        %6596 = vmatpush.msra.mxu0 %v6595
        %v6597 = vand.u32 %v5564, 4294901760
        %6598 = vmatpush.msra.mxu0 %v6597
        %v6599 = vand.u32 %v5593, 4294901760
        %v6600 = vsub.f32 %v5593, %v6599
        %v6601 = vand.u32 %v6600, 4294901760
        %6602 = vmatmul.f32.gmra.mxu0 %v6601
        %v6603 = vpop.f32.mrf.mxu0
        %v6604 = vadd.f32 %v6572, %v6603
        %v6605 = vand.u32 %v5596, 4294901760
        %v6606 = vsub.f32 %v5596, %v6605
        %v6607 = vand.u32 %v6606, 4294901760
        %6608 = vmatmul.f32.gmra.mxu0 %v6607
        %v6609 = vpop.f32.mrf.mxu0
        %v6610 = vadd.f32 %v6577, %v6609
        %6611 = vdwg.mxu0
        %6612 = vmatpush.msra.mxu0 0.0
        %6613 = vmatpush.msra.mxu0 0.0
        %6614 = vmatpush.msra.mxu0 0.0
        %6615 = vmatpush.msra.mxu0 0.0
        %6616 = vmatpush.msra.mxu0 0.0
        %6617 = vmatpush.msra.mxu0 0.0
        %6618 = vmatpush.msra.mxu0 0.0
        %6619 = vmatpush.msra.mxu0 0.0
        %6620 = vmatpush.msra.mxu0 0.0
        %6621 = vmatpush.msra.mxu0 0.0
        %6622 = vmatpush.msra.mxu0 0.0
        %6623 = vmatpush.msra.mxu0 0.0
        %v6624 = vand.u32 %v5588, 4294901760
        %v6625 = vsub.f32 %v5588, %v6624
        %v6626 = vand.u32 %v6625, 4294901760
        %6627 = vmatpush.msra.mxu0 %v6626
        %v6628 = vand.u32 %v5580, 4294901760
        %v6629 = vsub.f32 %v5580, %v6628
        %v6630 = vand.u32 %v6629, 4294901760
        %6631 = vmatpush.msra.mxu0 %v6630
        %v6632 = vand.u32 %v5572, 4294901760
        %v6633 = vsub.f32 %v5572, %v6632
        %v6634 = vand.u32 %v6633, 4294901760
        %6635 = vmatpush.msra.mxu0 %v6634
        %v6636 = vand.u32 %v5564, 4294901760
        %v6637 = vsub.f32 %v5564, %v6636
        %v6638 = vand.u32 %v6637, 4294901760
        %6639 = vmatpush.msra.mxu0 %v6638
        %v6640 = vand.u32 %v5593, 4294901760
        %6641 = vmatmul.f32.gmra.mxu0 %v6640
        %v6642 = vpop.f32.mrf.mxu0
        %v6643 = vadd.f32 %v6604, %v6642
        %v6644 = vand.u32 %v5596, 4294901760
        %6645 = vmatmul.f32.gmra.mxu0 %v6644
        %v6646 = vpop.f32.mrf.mxu0
        %v6647 = vadd.f32 %v6610, %v6646
        %6648 = vdwg.mxu0
        %6649 = vmatpush.msra.mxu0 0.0
        %6650 = vmatpush.msra.mxu0 0.0
        %6651 = vmatpush.msra.mxu0 0.0
        %6652 = vmatpush.msra.mxu0 0.0
        %6653 = vmatpush.msra.mxu0 0.0
        %6654 = vmatpush.msra.mxu0 0.0
        %6655 = vmatpush.msra.mxu0 0.0
        %6656 = vmatpush.msra.mxu0 0.0
        %6657 = vmatpush.msra.mxu0 0.0
        %6658 = vmatpush.msra.mxu0 0.0
        %6659 = vmatpush.msra.mxu0 0.0
        %6660 = vmatpush.msra.mxu0 0.0
        %v6661 = vand.u32 %v5588, 4294901760
        %6662 = vmatpush.msra.mxu0 %v6661
        %v6663 = vand.u32 %v5580, 4294901760
        %6664 = vmatpush.msra.mxu0 %v6663
        %v6665 = vand.u32 %v5572, 4294901760
        %6666 = vmatpush.msra.mxu0 %v6665
        %v6667 = vand.u32 %v5564, 4294901760
        %6668 = vmatpush.msra.mxu0 %v6667
        %v6669 = vand.u32 %v5593, 4294901760
        %6670 = vmatmul.f32.gmra.mxu0 %v6669
        %v6671 = vpop.f32.mrf.mxu0
        %v6672 = vadd.f32 %v6643, %v6671
        %v6673 = vand.u32 %v5596, 4294901760
        %6674 = vmatmul.f32.gmra.mxu0 %v6673
        %v6675 = vpop.f32.mrf.mxu0
        %v6676 = vadd.f32 %v6647, %v6675
        %6677 = vdwg.mxu0
        %6678 = vmatpush.msra.mxu0 0.0
        %6679 = vmatpush.msra.mxu0 0.0
        %6680 = vmatpush.msra.mxu0 0.0
        %6681 = vmatpush.msra.mxu0 0.0
        %6682 = vmatpush.msra.mxu0 0.0
        %6683 = vmatpush.msra.mxu0 0.0
        %6684 = vmatpush.msra.mxu0 0.0
        %6685 = vmatpush.msra.mxu0 0.0
        %6686 = vmatpush.msra.mxu0 0.0
        %6687 = vmatpush.msra.mxu0 0.0
        %6688 = vmatpush.msra.mxu0 0.0
        %6689 = vmatpush.msra.mxu0 0.0
        %v6690 = vand.u32 %v5589, 4294901760
        %6691 = vmatpush.msra.mxu0 %v6690
        %v6692 = vand.u32 %v5581, 4294901760
        %6693 = vmatpush.msra.mxu0 %v6692
        %v6694 = vand.u32 %v5573, 4294901760
        %6695 = vmatpush.msra.mxu0 %v6694
        %v6696 = vand.u32 %v5565, 4294901760
        %6697 = vmatpush.msra.mxu0 %v6696
        %v6698 = vand.u32 %v5593, 4294901760
        %v6699 = vsub.f32 %v5593, %v6698
        %v6700 = vand.u32 %v6699, 4294901760
        %v6701 = vsub.f32 %v6699, %v6700
        %v6702 = vand.u32 %v6701, 4294901760
        %6703 = vmatmul.f32.gmra.mxu0 %v6702
        %v6704 = vpop.f32.mrf.mxu0
        %v6705 = vadd.f32 0.0, %v6704
        %v6706 = vand.u32 %v5596, 4294901760
        %v6707 = vsub.f32 %v5596, %v6706
        %v6708 = vand.u32 %v6707, 4294901760
        %v6709 = vsub.f32 %v6707, %v6708
        %v6710 = vand.u32 %v6709, 4294901760
        %6711 = vmatmul.f32.gmra.mxu0 %v6710
        %v6712 = vpop.f32.mrf.mxu0
        %v6713 = vadd.f32 0.0, %v6712
        %6714 = vdwg.mxu0
        %6715 = vmatpush.msra.mxu0 0.0
        %6716 = vmatpush.msra.mxu0 0.0
        %6717 = vmatpush.msra.mxu0 0.0
        %6718 = vmatpush.msra.mxu0 0.0
        %6719 = vmatpush.msra.mxu0 0.0
        %6720 = vmatpush.msra.mxu0 0.0
        %6721 = vmatpush.msra.mxu0 0.0
        %6722 = vmatpush.msra.mxu0 0.0
        %6723 = vmatpush.msra.mxu0 0.0
        %6724 = vmatpush.msra.mxu0 0.0
        %6725 = vmatpush.msra.mxu0 0.0
        %6726 = vmatpush.msra.mxu0 0.0
        %v6727 = vand.u32 %v5589, 4294901760
        %v6728 = vsub.f32 %v5589, %v6727
        %v6729 = vand.u32 %v6728, 4294901760
        %v6730 = vsub.f32 %v6728, %v6729
        %v6731 = vand.u32 %v6730, 4294901760
        %6732 = vmatpush.msra.mxu0 %v6731
        %v6733 = vand.u32 %v5581, 4294901760
        %v6734 = vsub.f32 %v5581, %v6733
        %v6735 = vand.u32 %v6734, 4294901760
        %v6736 = vsub.f32 %v6734, %v6735
        %v6737 = vand.u32 %v6736, 4294901760
        %6738 = vmatpush.msra.mxu0 %v6737
        %v6739 = vand.u32 %v5573, 4294901760
        %v6740 = vsub.f32 %v5573, %v6739
        %v6741 = vand.u32 %v6740, 4294901760
        %v6742 = vsub.f32 %v6740, %v6741
        %v6743 = vand.u32 %v6742, 4294901760
        %6744 = vmatpush.msra.mxu0 %v6743
        %v6745 = vand.u32 %v5565, 4294901760
        %v6746 = vsub.f32 %v5565, %v6745
        %v6747 = vand.u32 %v6746, 4294901760
        %v6748 = vsub.f32 %v6746, %v6747
        %v6749 = vand.u32 %v6748, 4294901760
        %6750 = vmatpush.msra.mxu0 %v6749
        %v6751 = vand.u32 %v5593, 4294901760
        %6752 = vmatmul.f32.gmra.mxu0 %v6751
        %v6753 = vpop.f32.mrf.mxu0
        %v6754 = vadd.f32 %v6705, %v6753
        %v6755 = vand.u32 %v5596, 4294901760
        %6756 = vmatmul.f32.gmra.mxu0 %v6755
        %v6757 = vpop.f32.mrf.mxu0
        %v6758 = vadd.f32 %v6713, %v6757
        %6759 = vdwg.mxu0
        %6760 = vmatpush.msra.mxu0 0.0
        %6761 = vmatpush.msra.mxu0 0.0
        %6762 = vmatpush.msra.mxu0 0.0
        %6763 = vmatpush.msra.mxu0 0.0
        %6764 = vmatpush.msra.mxu0 0.0
        %6765 = vmatpush.msra.mxu0 0.0
        %6766 = vmatpush.msra.mxu0 0.0
        %6767 = vmatpush.msra.mxu0 0.0
        %6768 = vmatpush.msra.mxu0 0.0
        %6769 = vmatpush.msra.mxu0 0.0
        %6770 = vmatpush.msra.mxu0 0.0
        %6771 = vmatpush.msra.mxu0 0.0
        %v6772 = vand.u32 %v5589, 4294901760
        %v6773 = vsub.f32 %v5589, %v6772
        %6774 = vmatpush.msra.mxu0 %v6773
        %v6775 = vand.u32 %v5581, 4294901760
        %v6776 = vsub.f32 %v5581, %v6775
        %6777 = vmatpush.msra.mxu0 %v6776
        %v6778 = vand.u32 %v5573, 4294901760
        %v6779 = vsub.f32 %v5573, %v6778
        %6780 = vmatpush.msra.mxu0 %v6779
        %v6781 = vand.u32 %v5565, 4294901760
        %v6782 = vsub.f32 %v5565, %v6781
        %6783 = vmatpush.msra.mxu0 %v6782
        %v6784 = vand.u32 %v5593, 4294901760
        %v6785 = vsub.f32 %v5593, %v6784
        %6786 = vmatmul.f32.gmra.mxu0 %v6785
        %v6787 = vpop.f32.mrf.mxu0
        %v6788 = vadd.f32 %v6754, %v6787
        %v6789 = vand.u32 %v5596, 4294901760
        %v6790 = vsub.f32 %v5596, %v6789
        %6791 = vmatmul.f32.gmra.mxu0 %v6790
        %v6792 = vpop.f32.mrf.mxu0
        %v6793 = vadd.f32 %v6758, %v6792
        %6794 = vdwg.mxu0
        %6795 = vmatpush.msra.mxu0 0.0
        %6796 = vmatpush.msra.mxu0 0.0
        %6797 = vmatpush.msra.mxu0 0.0
        %6798 = vmatpush.msra.mxu0 0.0
        %6799 = vmatpush.msra.mxu0 0.0
        %6800 = vmatpush.msra.mxu0 0.0
        %6801 = vmatpush.msra.mxu0 0.0
        %6802 = vmatpush.msra.mxu0 0.0
        %6803 = vmatpush.msra.mxu0 0.0
        %6804 = vmatpush.msra.mxu0 0.0
        %6805 = vmatpush.msra.mxu0 0.0
        %6806 = vmatpush.msra.mxu0 0.0
        %v6807 = vand.u32 %v5589, 4294901760
        %6808 = vmatpush.msra.mxu0 %v6807
        %v6809 = vand.u32 %v5581, 4294901760
        %6810 = vmatpush.msra.mxu0 %v6809
        %v6811 = vand.u32 %v5573, 4294901760
        %6812 = vmatpush.msra.mxu0 %v6811
        %v6813 = vand.u32 %v5565, 4294901760
        %6814 = vmatpush.msra.mxu0 %v6813
        %v6815 = vand.u32 %v5593, 4294901760
        %v6816 = vsub.f32 %v5593, %v6815
        %v6817 = vand.u32 %v6816, 4294901760
        %6818 = vmatmul.f32.gmra.mxu0 %v6817
        %v6819 = vpop.f32.mrf.mxu0
        %v6820 = vadd.f32 %v6788, %v6819
        %v6821 = vand.u32 %v5596, 4294901760
        %v6822 = vsub.f32 %v5596, %v6821
        %v6823 = vand.u32 %v6822, 4294901760
        %6824 = vmatmul.f32.gmra.mxu0 %v6823
        %v6825 = vpop.f32.mrf.mxu0
        %v6826 = vadd.f32 %v6793, %v6825
        %6827 = vdwg.mxu0
        %6828 = vmatpush.msra.mxu0 0.0
        %6829 = vmatpush.msra.mxu0 0.0
        %6830 = vmatpush.msra.mxu0 0.0
        %6831 = vmatpush.msra.mxu0 0.0
        %6832 = vmatpush.msra.mxu0 0.0
        %6833 = vmatpush.msra.mxu0 0.0
        %6834 = vmatpush.msra.mxu0 0.0
        %6835 = vmatpush.msra.mxu0 0.0
        %6836 = vmatpush.msra.mxu0 0.0
        %6837 = vmatpush.msra.mxu0 0.0
        %6838 = vmatpush.msra.mxu0 0.0
        %6839 = vmatpush.msra.mxu0 0.0
        %v6840 = vand.u32 %v5589, 4294901760
        %v6841 = vsub.f32 %v5589, %v6840
        %v6842 = vand.u32 %v6841, 4294901760
        %6843 = vmatpush.msra.mxu0 %v6842
        %v6844 = vand.u32 %v5581, 4294901760
        %v6845 = vsub.f32 %v5581, %v6844
        %v6846 = vand.u32 %v6845, 4294901760
        %6847 = vmatpush.msra.mxu0 %v6846
        %v6848 = vand.u32 %v5573, 4294901760
        %v6849 = vsub.f32 %v5573, %v6848
        %v6850 = vand.u32 %v6849, 4294901760
        %6851 = vmatpush.msra.mxu0 %v6850
        %v6852 = vand.u32 %v5565, 4294901760
        %v6853 = vsub.f32 %v5565, %v6852
        %v6854 = vand.u32 %v6853, 4294901760
        %6855 = vmatpush.msra.mxu0 %v6854
        %v6856 = vand.u32 %v5593, 4294901760
        %6857 = vmatmul.f32.gmra.mxu0 %v6856
        %v6858 = vpop.f32.mrf.mxu0
        %v6859 = vadd.f32 %v6820, %v6858
        %v6860 = vand.u32 %v5596, 4294901760
        %6861 = vmatmul.f32.gmra.mxu0 %v6860
        %v6862 = vpop.f32.mrf.mxu0
        %v6863 = vadd.f32 %v6826, %v6862
        %6864 = vdwg.mxu0
        %6865 = vmatpush.msra.mxu0 0.0
        %6866 = vmatpush.msra.mxu0 0.0
        %6867 = vmatpush.msra.mxu0 0.0
        %6868 = vmatpush.msra.mxu0 0.0
        %6869 = vmatpush.msra.mxu0 0.0
        %6870 = vmatpush.msra.mxu0 0.0
        %6871 = vmatpush.msra.mxu0 0.0
        %6872 = vmatpush.msra.mxu0 0.0
        %6873 = vmatpush.msra.mxu0 0.0
        %6874 = vmatpush.msra.mxu0 0.0
        %6875 = vmatpush.msra.mxu0 0.0
        %6876 = vmatpush.msra.mxu0 0.0
        %v6877 = vand.u32 %v5589, 4294901760
        %6878 = vmatpush.msra.mxu0 %v6877
        %v6879 = vand.u32 %v5581, 4294901760
        %6880 = vmatpush.msra.mxu0 %v6879
        %v6881 = vand.u32 %v5573, 4294901760
        %6882 = vmatpush.msra.mxu0 %v6881
        %v6883 = vand.u32 %v5565, 4294901760
        %6884 = vmatpush.msra.mxu0 %v6883
        %v6885 = vand.u32 %v5593, 4294901760
        %6886 = vmatmul.f32.gmra.mxu0 %v6885
        %v6887 = vpop.f32.mrf.mxu0
        %v6888 = vadd.f32 %v6859, %v6887
        %v6889 = vand.u32 %v5596, 4294901760
        %6890 = vmatmul.f32.gmra.mxu0 %v6889
        %v6891 = vpop.f32.mrf.mxu0
        %v6892 = vadd.f32 %v6863, %v6891
        %6893 = vdwg.mxu0
        %6894 = vmatpush.msra.mxu0 0.0
        %6895 = vmatpush.msra.mxu0 0.0
        %6896 = vmatpush.msra.mxu0 0.0
        %6897 = vmatpush.msra.mxu0 0.0
        %6898 = vmatpush.msra.mxu0 0.0
        %6899 = vmatpush.msra.mxu0 0.0
        %6900 = vmatpush.msra.mxu0 0.0
        %6901 = vmatpush.msra.mxu0 0.0
        %6902 = vmatpush.msra.mxu0 0.0
        %6903 = vmatpush.msra.mxu0 0.0
        %6904 = vmatpush.msra.mxu0 0.0
        %6905 = vmatpush.msra.mxu0 0.0
        %v6906 = vand.u32 %v5590, 4294901760
        %6907 = vmatpush.msra.mxu0 %v6906
        %v6908 = vand.u32 %v5582, 4294901760
        %6909 = vmatpush.msra.mxu0 %v6908
        %v6910 = vand.u32 %v5574, 4294901760
        %6911 = vmatpush.msra.mxu0 %v6910
        %v6912 = vand.u32 %v5566, 4294901760
        %6913 = vmatpush.msra.mxu0 %v6912
        %v6914 = vand.u32 %v5593, 4294901760
        %v6915 = vsub.f32 %v5593, %v6914
        %v6916 = vand.u32 %v6915, 4294901760
        %v6917 = vsub.f32 %v6915, %v6916
        %v6918 = vand.u32 %v6917, 4294901760
        %6919 = vmatmul.f32.gmra.mxu0 %v6918
        %v6920 = vpop.f32.mrf.mxu0
        %v6921 = vadd.f32 0.0, %v6920
        %v6922 = vand.u32 %v5596, 4294901760
        %v6923 = vsub.f32 %v5596, %v6922
        %v6924 = vand.u32 %v6923, 4294901760
        %v6925 = vsub.f32 %v6923, %v6924
        %v6926 = vand.u32 %v6925, 4294901760
        %6927 = vmatmul.f32.gmra.mxu0 %v6926
        %v6928 = vpop.f32.mrf.mxu0
        %v6929 = vadd.f32 0.0, %v6928
        %6930 = vdwg.mxu0
        %6931 = vmatpush.msra.mxu0 0.0
        %6932 = vmatpush.msra.mxu0 0.0
        %6933 = vmatpush.msra.mxu0 0.0
        %6934 = vmatpush.msra.mxu0 0.0
        %6935 = vmatpush.msra.mxu0 0.0
        %6936 = vmatpush.msra.mxu0 0.0
        %6937 = vmatpush.msra.mxu0 0.0
        %6938 = vmatpush.msra.mxu0 0.0
        %6939 = vmatpush.msra.mxu0 0.0
        %6940 = vmatpush.msra.mxu0 0.0
        %6941 = vmatpush.msra.mxu0 0.0
        %6942 = vmatpush.msra.mxu0 0.0
        %v6943 = vand.u32 %v5590, 4294901760
        %v6944 = vsub.f32 %v5590, %v6943
        %v6945 = vand.u32 %v6944, 4294901760
        %v6946 = vsub.f32 %v6944, %v6945
        %v6947 = vand.u32 %v6946, 4294901760
        %6948 = vmatpush.msra.mxu0 %v6947
        %v6949 = vand.u32 %v5582, 4294901760
        %v6950 = vsub.f32 %v5582, %v6949
        %v6951 = vand.u32 %v6950, 4294901760
        %v6952 = vsub.f32 %v6950, %v6951
        %v6953 = vand.u32 %v6952, 4294901760
        %6954 = vmatpush.msra.mxu0 %v6953
        %v6955 = vand.u32 %v5574, 4294901760
        %v6956 = vsub.f32 %v5574, %v6955
        %v6957 = vand.u32 %v6956, 4294901760
        %v6958 = vsub.f32 %v6956, %v6957
        %v6959 = vand.u32 %v6958, 4294901760
        %6960 = vmatpush.msra.mxu0 %v6959
        %v6961 = vand.u32 %v5566, 4294901760
        %v6962 = vsub.f32 %v5566, %v6961
        %v6963 = vand.u32 %v6962, 4294901760
        %v6964 = vsub.f32 %v6962, %v6963
        %v6965 = vand.u32 %v6964, 4294901760
        %6966 = vmatpush.msra.mxu0 %v6965
        %v6967 = vand.u32 %v5593, 4294901760
        %6968 = vmatmul.f32.gmra.mxu0 %v6967
        %v6969 = vpop.f32.mrf.mxu0
        %v6970 = vadd.f32 %v6921, %v6969
        %v6971 = vand.u32 %v5596, 4294901760
        %6972 = vmatmul.f32.gmra.mxu0 %v6971
        %v6973 = vpop.f32.mrf.mxu0
        %v6974 = vadd.f32 %v6929, %v6973
        %6975 = vdwg.mxu0
        %6976 = vmatpush.msra.mxu0 0.0
        %6977 = vmatpush.msra.mxu0 0.0
        %6978 = vmatpush.msra.mxu0 0.0
        %6979 = vmatpush.msra.mxu0 0.0
        %6980 = vmatpush.msra.mxu0 0.0
        %6981 = vmatpush.msra.mxu0 0.0
        %6982 = vmatpush.msra.mxu0 0.0
        %6983 = vmatpush.msra.mxu0 0.0
        %6984 = vmatpush.msra.mxu0 0.0
        %6985 = vmatpush.msra.mxu0 0.0
        %6986 = vmatpush.msra.mxu0 0.0
        %6987 = vmatpush.msra.mxu0 0.0
        %v6988 = vand.u32 %v5590, 4294901760
        %v6989 = vsub.f32 %v5590, %v6988
        %6990 = vmatpush.msra.mxu0 %v6989
        %v6991 = vand.u32 %v5582, 4294901760
        %v6992 = vsub.f32 %v5582, %v6991
        %6993 = vmatpush.msra.mxu0 %v6992
        %v6994 = vand.u32 %v5574, 4294901760
        %v6995 = vsub.f32 %v5574, %v6994
        %6996 = vmatpush.msra.mxu0 %v6995
        %v6997 = vand.u32 %v5566, 4294901760
        %v6998 = vsub.f32 %v5566, %v6997
        %6999 = vmatpush.msra.mxu0 %v6998
        %v7000 = vand.u32 %v5593, 4294901760
        %v7001 = vsub.f32 %v5593, %v7000
        %7002 = vmatmul.f32.gmra.mxu0 %v7001
        %v7003 = vpop.f32.mrf.mxu0
        %v7004 = vadd.f32 %v6970, %v7003
        %v7005 = vand.u32 %v5596, 4294901760
        %v7006 = vsub.f32 %v5596, %v7005
        %7007 = vmatmul.f32.gmra.mxu0 %v7006
        %v7008 = vpop.f32.mrf.mxu0
        %v7009 = vadd.f32 %v6974, %v7008
        %7010 = vdwg.mxu0
        %7011 = vmatpush.msra.mxu0 0.0
        %7012 = vmatpush.msra.mxu0 0.0
        %7013 = vmatpush.msra.mxu0 0.0
        %7014 = vmatpush.msra.mxu0 0.0
        %7015 = vmatpush.msra.mxu0 0.0
        %7016 = vmatpush.msra.mxu0 0.0
        %7017 = vmatpush.msra.mxu0 0.0
        %7018 = vmatpush.msra.mxu0 0.0
        %7019 = vmatpush.msra.mxu0 0.0
        %7020 = vmatpush.msra.mxu0 0.0
        %7021 = vmatpush.msra.mxu0 0.0
        %7022 = vmatpush.msra.mxu0 0.0
        %v7023 = vand.u32 %v5590, 4294901760
        %7024 = vmatpush.msra.mxu0 %v7023
        %v7025 = vand.u32 %v5582, 4294901760
        %7026 = vmatpush.msra.mxu0 %v7025
        %v7027 = vand.u32 %v5574, 4294901760
        %7028 = vmatpush.msra.mxu0 %v7027
        %v7029 = vand.u32 %v5566, 4294901760
        %7030 = vmatpush.msra.mxu0 %v7029
        %v7031 = vand.u32 %v5593, 4294901760
        %v7032 = vsub.f32 %v5593, %v7031
        %v7033 = vand.u32 %v7032, 4294901760
        %7034 = vmatmul.f32.gmra.mxu0 %v7033
        %v7035 = vpop.f32.mrf.mxu0
        %v7036 = vadd.f32 %v7004, %v7035
        %v7037 = vand.u32 %v5596, 4294901760
        %v7038 = vsub.f32 %v5596, %v7037
        %v7039 = vand.u32 %v7038, 4294901760
        %7040 = vmatmul.f32.gmra.mxu0 %v7039
        %v7041 = vpop.f32.mrf.mxu0
        %v7042 = vadd.f32 %v7009, %v7041
        %7043 = vdwg.mxu0
        %7044 = vmatpush.msra.mxu0 0.0
        %7045 = vmatpush.msra.mxu0 0.0
        %7046 = vmatpush.msra.mxu0 0.0
        %7047 = vmatpush.msra.mxu0 0.0
        %7048 = vmatpush.msra.mxu0 0.0
        %7049 = vmatpush.msra.mxu0 0.0
        %7050 = vmatpush.msra.mxu0 0.0
        %7051 = vmatpush.msra.mxu0 0.0
        %7052 = vmatpush.msra.mxu0 0.0
        %7053 = vmatpush.msra.mxu0 0.0
        %7054 = vmatpush.msra.mxu0 0.0
        %7055 = vmatpush.msra.mxu0 0.0
        %v7056 = vand.u32 %v5590, 4294901760
        %v7057 = vsub.f32 %v5590, %v7056
        %v7058 = vand.u32 %v7057, 4294901760
        %7059 = vmatpush.msra.mxu0 %v7058
        %v7060 = vand.u32 %v5582, 4294901760
        %v7061 = vsub.f32 %v5582, %v7060
        %v7062 = vand.u32 %v7061, 4294901760
        %7063 = vmatpush.msra.mxu0 %v7062
        %v7064 = vand.u32 %v5574, 4294901760
        %v7065 = vsub.f32 %v5574, %v7064
        %v7066 = vand.u32 %v7065, 4294901760
        %7067 = vmatpush.msra.mxu0 %v7066
        %v7068 = vand.u32 %v5566, 4294901760
        %v7069 = vsub.f32 %v5566, %v7068
        %v7070 = vand.u32 %v7069, 4294901760
        %7071 = vmatpush.msra.mxu0 %v7070
        %v7072 = vand.u32 %v5593, 4294901760
        %7073 = vmatmul.f32.gmra.mxu0 %v7072
        %v7074 = vpop.f32.mrf.mxu0
        %v7075 = vadd.f32 %v7036, %v7074
        %v7076 = vand.u32 %v5596, 4294901760
        %7077 = vmatmul.f32.gmra.mxu0 %v7076
        %v7078 = vpop.f32.mrf.mxu0
        %v7079 = vadd.f32 %v7042, %v7078
        %7080 = vdwg.mxu0
        %7081 = vmatpush.msra.mxu0 0.0
        %7082 = vmatpush.msra.mxu0 0.0
        %7083 = vmatpush.msra.mxu0 0.0
        %7084 = vmatpush.msra.mxu0 0.0
        %7085 = vmatpush.msra.mxu0 0.0
        %7086 = vmatpush.msra.mxu0 0.0
        %7087 = vmatpush.msra.mxu0 0.0
        %7088 = vmatpush.msra.mxu0 0.0
        %7089 = vmatpush.msra.mxu0 0.0
        %7090 = vmatpush.msra.mxu0 0.0
        %7091 = vmatpush.msra.mxu0 0.0
        %7092 = vmatpush.msra.mxu0 0.0
        %v7093 = vand.u32 %v5590, 4294901760
        %7094 = vmatpush.msra.mxu0 %v7093
        %v7095 = vand.u32 %v5582, 4294901760
        %7096 = vmatpush.msra.mxu0 %v7095
        %v7097 = vand.u32 %v5574, 4294901760
        %7098 = vmatpush.msra.mxu0 %v7097
        %v7099 = vand.u32 %v5566, 4294901760
        %7100 = vmatpush.msra.mxu0 %v7099
        %v7101 = vand.u32 %v5593, 4294901760
        %7102 = vmatmul.f32.gmra.mxu0 %v7101
        %v7103 = vpop.f32.mrf.mxu0
        %v7104 = vadd.f32 %v7075, %v7103
        %v7105 = vand.u32 %v5596, 4294901760
        %7106 = vmatmul.f32.gmra.mxu0 %v7105
        %v7107 = vpop.f32.mrf.mxu0
        %v7108 = vadd.f32 %v7079, %v7107
        %7109 = vdwg.mxu0
        %7110 = vmatpush.msra.mxu0 0.0
        %7111 = vmatpush.msra.mxu0 0.0
        %7112 = vmatpush.msra.mxu0 0.0
        %7113 = vmatpush.msra.mxu0 0.0
        %7114 = vmatpush.msra.mxu0 0.0
        %7115 = vmatpush.msra.mxu0 0.0
        %7116 = vmatpush.msra.mxu0 0.0
        %7117 = vmatpush.msra.mxu0 0.0
        %7118 = vmatpush.msra.mxu0 0.0
        %7119 = vmatpush.msra.mxu0 0.0
        %7120 = vmatpush.msra.mxu0 0.0
        %7121 = vmatpush.msra.mxu0 0.0
        %v7122 = vand.u32 %v5591, 4294901760
        %7123 = vmatpush.msra.mxu0 %v7122
        %v7124 = vand.u32 %v5583, 4294901760
        %7125 = vmatpush.msra.mxu0 %v7124
        %v7126 = vand.u32 %v5575, 4294901760
        %7127 = vmatpush.msra.mxu0 %v7126
        %v7128 = vand.u32 %v5567, 4294901760
        %7129 = vmatpush.msra.mxu0 %v7128
        %v7130 = vand.u32 %v5593, 4294901760
        %v7131 = vsub.f32 %v5593, %v7130
        %v7132 = vand.u32 %v7131, 4294901760
        %v7133 = vsub.f32 %v7131, %v7132
        %v7134 = vand.u32 %v7133, 4294901760
        %7135 = vmatmul.f32.gmra.mxu0 %v7134
        %v7136 = vpop.f32.mrf.mxu0
        %v7137 = vadd.f32 0.0, %v7136
        %v7138 = vand.u32 %v5596, 4294901760
        %v7139 = vsub.f32 %v5596, %v7138
        %v7140 = vand.u32 %v7139, 4294901760
        %v7141 = vsub.f32 %v7139, %v7140
        %v7142 = vand.u32 %v7141, 4294901760
        %7143 = vmatmul.f32.gmra.mxu0 %v7142
        %v7144 = vpop.f32.mrf.mxu0
        %v7145 = vadd.f32 0.0, %v7144
        %7146 = vdwg.mxu0
        %7147 = vmatpush.msra.mxu0 0.0
        %7148 = vmatpush.msra.mxu0 0.0
        %7149 = vmatpush.msra.mxu0 0.0
        %7150 = vmatpush.msra.mxu0 0.0
        %7151 = vmatpush.msra.mxu0 0.0
        %7152 = vmatpush.msra.mxu0 0.0
        %7153 = vmatpush.msra.mxu0 0.0
        %7154 = vmatpush.msra.mxu0 0.0
        %7155 = vmatpush.msra.mxu0 0.0
        %7156 = vmatpush.msra.mxu0 0.0
        %7157 = vmatpush.msra.mxu0 0.0
        %7158 = vmatpush.msra.mxu0 0.0
        %v7159 = vand.u32 %v5591, 4294901760
        %v7160 = vsub.f32 %v5591, %v7159
        %v7161 = vand.u32 %v7160, 4294901760
        %v7162 = vsub.f32 %v7160, %v7161
        %v7163 = vand.u32 %v7162, 4294901760
        %7164 = vmatpush.msra.mxu0 %v7163
        %v7165 = vand.u32 %v5583, 4294901760
        %v7166 = vsub.f32 %v5583, %v7165
        %v7167 = vand.u32 %v7166, 4294901760
        %v7168 = vsub.f32 %v7166, %v7167
        %v7169 = vand.u32 %v7168, 4294901760
        %7170 = vmatpush.msra.mxu0 %v7169
        %v7171 = vand.u32 %v5575, 4294901760
        %v7172 = vsub.f32 %v5575, %v7171
        %v7173 = vand.u32 %v7172, 4294901760
        %v7174 = vsub.f32 %v7172, %v7173
        %v7175 = vand.u32 %v7174, 4294901760
        %7176 = vmatpush.msra.mxu0 %v7175
        %v7177 = vand.u32 %v5567, 4294901760
        %v7178 = vsub.f32 %v5567, %v7177
        %v7179 = vand.u32 %v7178, 4294901760
        %v7180 = vsub.f32 %v7178, %v7179
        %v7181 = vand.u32 %v7180, 4294901760
        %7182 = vmatpush.msra.mxu0 %v7181
        %v7183 = vand.u32 %v5593, 4294901760
        %7184 = vmatmul.f32.gmra.mxu0 %v7183
        %v7185 = vpop.f32.mrf.mxu0
        %v7186 = vadd.f32 %v7137, %v7185
        %v7187 = vand.u32 %v5596, 4294901760
        %7188 = vmatmul.f32.gmra.mxu0 %v7187
        %v7189 = vpop.f32.mrf.mxu0
        %v7190 = vadd.f32 %v7145, %v7189
        %7191 = vdwg.mxu0
        %7192 = vmatpush.msra.mxu0 0.0
        %7193 = vmatpush.msra.mxu0 0.0
        %7194 = vmatpush.msra.mxu0 0.0
        %7195 = vmatpush.msra.mxu0 0.0
        %7196 = vmatpush.msra.mxu0 0.0
        %7197 = vmatpush.msra.mxu0 0.0
        %7198 = vmatpush.msra.mxu0 0.0
        %7199 = vmatpush.msra.mxu0 0.0
        %7200 = vmatpush.msra.mxu0 0.0
        %7201 = vmatpush.msra.mxu0 0.0
        %7202 = vmatpush.msra.mxu0 0.0
        %7203 = vmatpush.msra.mxu0 0.0
        %v7204 = vand.u32 %v5591, 4294901760
        %v7205 = vsub.f32 %v5591, %v7204
        %7206 = vmatpush.msra.mxu0 %v7205
        %v7207 = vand.u32 %v5583, 4294901760
        %v7208 = vsub.f32 %v5583, %v7207
        %7209 = vmatpush.msra.mxu0 %v7208
        %v7210 = vand.u32 %v5575, 4294901760
        %v7211 = vsub.f32 %v5575, %v7210
        %7212 = vmatpush.msra.mxu0 %v7211
        %v7213 = vand.u32 %v5567, 4294901760
        %v7214 = vsub.f32 %v5567, %v7213
        %7215 = vmatpush.msra.mxu0 %v7214
        %v7216 = vand.u32 %v5593, 4294901760
        %v7217 = vsub.f32 %v5593, %v7216
        %7218 = vmatmul.f32.gmra.mxu0 %v7217
        %v7219 = vpop.f32.mrf.mxu0
        %v7220 = vadd.f32 %v7186, %v7219
        %v7221 = vand.u32 %v5596, 4294901760
        %v7222 = vsub.f32 %v5596, %v7221
        %7223 = vmatmul.f32.gmra.mxu0 %v7222
        %v7224 = vpop.f32.mrf.mxu0
        %v7225 = vadd.f32 %v7190, %v7224
        %7226 = vdwg.mxu0
        %7227 = vmatpush.msra.mxu0 0.0
        %7228 = vmatpush.msra.mxu0 0.0
        %7229 = vmatpush.msra.mxu0 0.0
        %7230 = vmatpush.msra.mxu0 0.0
        %7231 = vmatpush.msra.mxu0 0.0
        %7232 = vmatpush.msra.mxu0 0.0
        %7233 = vmatpush.msra.mxu0 0.0
        %7234 = vmatpush.msra.mxu0 0.0
        %7235 = vmatpush.msra.mxu0 0.0
        %7236 = vmatpush.msra.mxu0 0.0
        %7237 = vmatpush.msra.mxu0 0.0
        %7238 = vmatpush.msra.mxu0 0.0
        %v7239 = vand.u32 %v5591, 4294901760
        %7240 = vmatpush.msra.mxu0 %v7239
        %v7241 = vand.u32 %v5583, 4294901760
        %7242 = vmatpush.msra.mxu0 %v7241
        %v7243 = vand.u32 %v5575, 4294901760
        %7244 = vmatpush.msra.mxu0 %v7243
        %v7245 = vand.u32 %v5567, 4294901760
        %7246 = vmatpush.msra.mxu0 %v7245
        %v7247 = vand.u32 %v5593, 4294901760
        %v7248 = vsub.f32 %v5593, %v7247
        %v7249 = vand.u32 %v7248, 4294901760
        %7250 = vmatmul.f32.gmra.mxu0 %v7249
        %v7251 = vpop.f32.mrf.mxu0
        %v7252 = vadd.f32 %v7220, %v7251
        %v7253 = vand.u32 %v5596, 4294901760
        %v7254 = vsub.f32 %v5596, %v7253
        %v7255 = vand.u32 %v7254, 4294901760
        %7256 = vmatmul.f32.gmra.mxu0 %v7255
        %v7257 = vpop.f32.mrf.mxu0
        %v7258 = vadd.f32 %v7225, %v7257
        %7259 = vdwg.mxu0
        %7260 = vmatpush.msra.mxu0 0.0
        %7261 = vmatpush.msra.mxu0 0.0
        %7262 = vmatpush.msra.mxu0 0.0
        %7263 = vmatpush.msra.mxu0 0.0
        %7264 = vmatpush.msra.mxu0 0.0
        %7265 = vmatpush.msra.mxu0 0.0
        %7266 = vmatpush.msra.mxu0 0.0
        %7267 = vmatpush.msra.mxu0 0.0
        %7268 = vmatpush.msra.mxu0 0.0
        %7269 = vmatpush.msra.mxu0 0.0
        %7270 = vmatpush.msra.mxu0 0.0
        %7271 = vmatpush.msra.mxu0 0.0
        %v7272 = vand.u32 %v5591, 4294901760
        %v7273 = vsub.f32 %v5591, %v7272
        %v7274 = vand.u32 %v7273, 4294901760
        %7275 = vmatpush.msra.mxu0 %v7274
        %v7276 = vand.u32 %v5583, 4294901760
        %v7277 = vsub.f32 %v5583, %v7276
        %v7278 = vand.u32 %v7277, 4294901760
        %7279 = vmatpush.msra.mxu0 %v7278
        %v7280 = vand.u32 %v5575, 4294901760
        %v7281 = vsub.f32 %v5575, %v7280
        %v7282 = vand.u32 %v7281, 4294901760
        %7283 = vmatpush.msra.mxu0 %v7282
        %v7284 = vand.u32 %v5567, 4294901760
        %v7285 = vsub.f32 %v5567, %v7284
        %v7286 = vand.u32 %v7285, 4294901760
        %7287 = vmatpush.msra.mxu0 %v7286
        %v7288 = vand.u32 %v5593, 4294901760
        %7289 = vmatmul.f32.gmra.mxu0 %v7288
        %v7290 = vpop.f32.mrf.mxu0
        %v7291 = vadd.f32 %v7252, %v7290
        %v7292 = vand.u32 %v5596, 4294901760
        %7293 = vmatmul.f32.gmra.mxu0 %v7292
        %v7294 = vpop.f32.mrf.mxu0
        %v7295 = vadd.f32 %v7258, %v7294
        %7296 = vdwg.mxu0
        %7297 = vmatpush.msra.mxu0 0.0
        %7298 = vmatpush.msra.mxu0 0.0
        %7299 = vmatpush.msra.mxu0 0.0
        %7300 = vmatpush.msra.mxu0 0.0
        %7301 = vmatpush.msra.mxu0 0.0
        %7302 = vmatpush.msra.mxu0 0.0
        %7303 = vmatpush.msra.mxu0 0.0
        %7304 = vmatpush.msra.mxu0 0.0
        %7305 = vmatpush.msra.mxu0 0.0
        %7306 = vmatpush.msra.mxu0 0.0
        %7307 = vmatpush.msra.mxu0 0.0
        %7308 = vmatpush.msra.mxu0 0.0
        %v7309 = vand.u32 %v5591, 4294901760
        %7310 = vmatpush.msra.mxu0 %v7309
        %v7311 = vand.u32 %v5583, 4294901760
        %7312 = vmatpush.msra.mxu0 %v7311
        %v7313 = vand.u32 %v5575, 4294901760
        %7314 = vmatpush.msra.mxu0 %v7313
        %v7315 = vand.u32 %v5567, 4294901760
        %7316 = vmatpush.msra.mxu0 %v7315
        %v7317 = vand.u32 %v5593, 4294901760
        %7318 = vmatmul.f32.gmra.mxu0 %v7317
        %v7319 = vpop.f32.mrf.mxu0
        %v7320 = vadd.f32 %v7291, %v7319
        %v7321 = vand.u32 %v5596, 4294901760
        %7322 = vmatmul.f32.gmra.mxu0 %v7321
        %v7323 = vpop.f32.mrf.mxu0
        %v7324 = vadd.f32 %v7295, %v7323
        %7325 = vdwg.mxu0
        %v7326 = vmul.f32 %v2412, %v5808
        %v7327 = vmul.f32 %v2413, %v6024
        %v7328 = vmul.f32 %v2414, %v6240
        %v7329 = vmul.f32 %v2415, %v6456
        %v7330 = vmul.f32 %v2416, %v6672
        %v7331 = vmul.f32 %v2417, %v6888
        %v7332 = vmul.f32 %v2418, %v7104
        %v7333 = vmul.f32 %v2419, %v7320
        %v7334 = vmul.f32 %v2420, %v5812
        %v7335 = vmul.f32 %v2421, %v6028
        %v7336 = vmul.f32 %v2422, %v6244
        %v7337 = vmul.f32 %v2423, %v6460
        %v7338 = vmul.f32 %v2424, %v6676
        %v7339 = vmul.f32 %v2425, %v6892
        %v7340 = vmul.f32 %v2426, %v7108
        %v7341 = vmul.f32 %v2427, %v7324
        %v7342 = vld [vmem:[%s4] sm:$0xff]
        %v7343 = vld [vmem:[%s4 + $0x8] sm:$0xff]
        %v7344 = vld [vmem:[%s4 + $0x10] sm:$0xff]
        %v7345 = vld [vmem:[%s4 + $0x18] sm:$0xff]
        %v7346 = vld [vmem:[%s4 + $0x20] sm:$0xff]
        %v7347 = vld [vmem:[%s4 + $0x28] sm:$0xff]
        %v7348 = vld [vmem:[%s4 + $0x30] sm:$0xff]
        %v7349 = vld [vmem:[%s4 + $0x38] sm:$0xff]
        %v7350 = vld [vmem:[%s4 + $0x40] sm:$0xff]
        %v7351 = vld [vmem:[%s4 + $0x48] sm:$0xff]
        %v7352 = vld [vmem:[%s4 + $0x50] sm:$0xff]
        %v7353 = vld [vmem:[%s4 + $0x58] sm:$0xff]
        %v7354 = vld [vmem:[%s4 + $0x60] sm:$0xff]
        %v7355 = vld [vmem:[%s4 + $0x68] sm:$0xff]
        %v7356 = vld [vmem:[%s4 + $0x70] sm:$0xff]
        %v7357 = vld [vmem:[%s4 + $0x78] sm:$0xff]
        %v7358 = vld [vmem:[%s4 + $0x80] sm:$0xff]
        %v7359 = vld [vmem:[%s4 + $0x88] sm:$0xff]
        %v7360 = vld [vmem:[%s4 + $0x90] sm:$0xff]
        %v7361 = vld [vmem:[%s4 + $0x98] sm:$0xff]
        %v7362 = vld [vmem:[%s4 + $0xa0] sm:$0xff]
        %v7363 = vld [vmem:[%s4 + $0xa8] sm:$0xff]
        %v7364 = vld [vmem:[%s4 + $0xb0] sm:$0xff]
        %v7365 = vld [vmem:[%s4 + $0xb8] sm:$0xff]
        %v7366 = vld [vmem:[%s4 + $0xc0] sm:$0xff]
        %v7367 = vld [vmem:[%s4 + $0xc8] sm:$0xff]
        %v7368 = vld [vmem:[%s4 + $0xd0] sm:$0xff]
        %v7369 = vld [vmem:[%s4 + $0xd8] sm:$0xff]
        %v7370 = vld [vmem:[%s4 + $0xe0] sm:$0xff]
        %v7371 = vld [vmem:[%s4 + $0xe8] sm:$0xff]
        %v7372 = vld [vmem:[%s4 + $0xf0] sm:$0xff]
        %v7373 = vld [vmem:[%s4 + $0xf8] sm:$0xff]
        %v7374 = vld [vmem:[%s4 + $0x100] sm:$0xff]
        %v7375 = vld [vmem:[%s4 + $0x108] sm:$0xff]
        %v7376 = vld [vmem:[%s4 + $0x110] sm:$0xff]
        %v7377 = vld [vmem:[%s4 + $0x118] sm:$0xff]
        %v7378 = vld [vmem:[%s4 + $0x120] sm:$0xff]
        %v7379 = vld [vmem:[%s4 + $0x128] sm:$0xff]
        %v7380 = vld [vmem:[%s4 + $0x130] sm:$0xff]
        %v7381 = vld [vmem:[%s4 + $0x138] sm:$0xff]
        %v7382 = vld [vmem:[%s4 + $0x140] sm:$0xff]
        %v7383 = vld [vmem:[%s4 + $0x148] sm:$0xff]
        %v7384 = vld [vmem:[%s4 + $0x150] sm:$0xff]
        %v7385 = vld [vmem:[%s4 + $0x158] sm:$0xff]
        %v7386 = vld [vmem:[%s4 + $0x160] sm:$0xff]
        %v7387 = vld [vmem:[%s4 + $0x168] sm:$0xff]
        %v7388 = vld [vmem:[%s4 + $0x170] sm:$0xff]
        %v7389 = vld [vmem:[%s4 + $0x178] sm:$0xff]
        %v7390 = vld [vmem:[%s4 + $0x180] sm:$0xff]
        %v7391 = vld [vmem:[%s4 + $0x188] sm:$0xff]
        %v7392 = vld [vmem:[%s4 + $0x190] sm:$0xff]
        %v7393 = vld [vmem:[%s4 + $0x198] sm:$0xff]
        %v7394 = vld [vmem:[%s4 + $0x1a0] sm:$0xff]
        %v7395 = vld [vmem:[%s4 + $0x1a8] sm:$0xff]
        %v7396 = vld [vmem:[%s4 + $0x1b0] sm:$0xff]
        %v7397 = vld [vmem:[%s4 + $0x1b8] sm:$0xff]
        %v7398 = vld [vmem:[%s4 + $0x1c0] sm:$0xff]
        %v7399 = vld [vmem:[%s4 + $0x1c8] sm:$0xff]
        %v7400 = vld [vmem:[%s4 + $0x1d0] sm:$0xff]
        %v7401 = vld [vmem:[%s4 + $0x1d8] sm:$0xff]
        %v7402 = vld [vmem:[%s4 + $0x1e0] sm:$0xff]
        %v7403 = vld [vmem:[%s4 + $0x1e8] sm:$0xff]
        %v7404 = vld [vmem:[%s4 + $0x1f0] sm:$0xff]
        %v7405 = vld [vmem:[%s4 + $0x1f8] sm:$0xff]
        %v7406 = vld [vmem:[%s4 + $0x200] sm:$0xff]
        %v7407 = vld [vmem:[%s4 + $0x208] sm:$0xff]
        %v7408 = vld [vmem:[%s4 + $0x210] sm:$0xff]
        %v7409 = vld [vmem:[%s4 + $0x218] sm:$0xff]
        %v7410 = vld [vmem:[%s4 + $0x220] sm:$0xff]
        %v7411 = vld [vmem:[%s4 + $0x228] sm:$0xff]
        %v7412 = vld [vmem:[%s4 + $0x230] sm:$0xff]
        %v7413 = vld [vmem:[%s4 + $0x238] sm:$0xff]
        %v7414 = vld [vmem:[%s4 + $0x240] sm:$0xff]
        %v7415 = vld [vmem:[%s4 + $0x248] sm:$0xff]
        %v7416 = vld [vmem:[%s4 + $0x250] sm:$0xff]
        %v7417 = vld [vmem:[%s4 + $0x258] sm:$0xff]
        %v7418 = vld [vmem:[%s4 + $0x260] sm:$0xff]
        %v7419 = vld [vmem:[%s4 + $0x268] sm:$0xff]
        %v7420 = vld [vmem:[%s4 + $0x270] sm:$0xff]
        %v7421 = vld [vmem:[%s4 + $0x278] sm:$0xff]
        %v7422 = vld [vmem:[%s4 + $0x280] sm:$0xff]
        %v7423 = vld [vmem:[%s4 + $0x288] sm:$0xff]
        %v7424 = vld [vmem:[%s4 + $0x290] sm:$0xff]
        %v7425 = vld [vmem:[%s4 + $0x298] sm:$0xff]
        %v7426 = vld [vmem:[%s4 + $0x2a0] sm:$0xff]
        %v7427 = vld [vmem:[%s4 + $0x2a8] sm:$0xff]
        %v7428 = vld [vmem:[%s4 + $0x2b0] sm:$0xff]
        %v7429 = vld [vmem:[%s4 + $0x2b8] sm:$0xff]
        %v7430 = vld [vmem:[%s4 + $0x2c0] sm:$0xff]
        %v7431 = vld [vmem:[%s4 + $0x2c8] sm:$0xff]
        %v7432 = vld [vmem:[%s4 + $0x2d0] sm:$0xff]
        %v7433 = vld [vmem:[%s4 + $0x2d8] sm:$0xff]
        %v7434 = vld [vmem:[%s4 + $0x2e0] sm:$0xff]
        %v7435 = vld [vmem:[%s4 + $0x2e8] sm:$0xff]
        %v7436 = vld [vmem:[%s4 + $0x2f0] sm:$0xff]
        %v7437 = vld [vmem:[%s4 + $0x2f8] sm:$0xff]
        %v7438 = vld [vmem:[%s4 + $0x300] sm:$0xff]
        %v7439 = vld [vmem:[%s4 + $0x308] sm:$0xff]
        %v7440 = vld [vmem:[%s4 + $0x310] sm:$0xff]
        %v7441 = vld [vmem:[%s4 + $0x318] sm:$0xff]
        %v7442 = vld [vmem:[%s4 + $0x320] sm:$0xff]
        %v7443 = vld [vmem:[%s4 + $0x328] sm:$0xff]
        %v7444 = vld [vmem:[%s4 + $0x330] sm:$0xff]
        %v7445 = vld [vmem:[%s4 + $0x338] sm:$0xff]
        %v7446 = vld [vmem:[%s4 + $0x340] sm:$0xff]
        %v7447 = vld [vmem:[%s4 + $0x348] sm:$0xff]
        %v7448 = vld [vmem:[%s4 + $0x350] sm:$0xff]
        %v7449 = vld [vmem:[%s4 + $0x358] sm:$0xff]
        %v7450 = vld [vmem:[%s4 + $0x360] sm:$0xff]
        %v7451 = vld [vmem:[%s4 + $0x368] sm:$0xff]
        %v7452 = vld [vmem:[%s4 + $0x370] sm:$0xff]
        %v7453 = vld [vmem:[%s4 + $0x378] sm:$0xff]
        %v7454 = vld [vmem:[%s4 + $0x380] sm:$0xff]
        %v7455 = vld [vmem:[%s4 + $0x388] sm:$0xff]
        %v7456 = vld [vmem:[%s4 + $0x390] sm:$0xff]
        %v7457 = vld [vmem:[%s4 + $0x398] sm:$0xff]
        %v7458 = vld [vmem:[%s4 + $0x3a0] sm:$0xff]
        %v7459 = vld [vmem:[%s4 + $0x3a8] sm:$0xff]
        %v7460 = vld [vmem:[%s4 + $0x3b0] sm:$0xff]
        %v7461 = vld [vmem:[%s4 + $0x3b8] sm:$0xff]
        %v7462 = vld [vmem:[%s4 + $0x3c0] sm:$0xff]
        %v7463 = vld [vmem:[%s4 + $0x3c8] sm:$0xff]
        %v7464 = vld [vmem:[%s4 + $0x3d0] sm:$0xff]
        %v7465 = vld [vmem:[%s4 + $0x3d8] sm:$0xff]
        %v7466 = vld [vmem:[%s4 + $0x3e0] sm:$0xff]
        %v7467 = vld [vmem:[%s4 + $0x3e8] sm:$0xff]
        %v7468 = vld [vmem:[%s4 + $0x3f0] sm:$0xff]
        %v7469 = vld [vmem:[%s4 + $0x3f8] sm:$0xff]
        %v7470 = vand.u32 %v7357, 4294901760
        %7471 = vmatpush.msra.mxu0 %v7470
        %v7472 = vand.u32 %v7356, 4294901760
        %7473 = vmatpush.msra.mxu0 %v7472
        %v7474 = vand.u32 %v7355, 4294901760
        %7475 = vmatpush.msra.mxu0 %v7474
        %v7476 = vand.u32 %v7354, 4294901760
        %7477 = vmatpush.msra.mxu0 %v7476
        %v7478 = vand.u32 %v7353, 4294901760
        %7479 = vmatpush.msra.mxu0 %v7478
        %v7480 = vand.u32 %v7352, 4294901760
        %7481 = vmatpush.msra.mxu0 %v7480
        %v7482 = vand.u32 %v7351, 4294901760
        %7483 = vmatpush.msra.mxu0 %v7482
        %v7484 = vand.u32 %v7350, 4294901760
        %7485 = vmatpush.msra.mxu0 %v7484
        %v7486 = vand.u32 %v7349, 4294901760
        %7487 = vmatpush.msra.mxu0 %v7486
        %v7488 = vand.u32 %v7348, 4294901760
        %7489 = vmatpush.msra.mxu0 %v7488
        %v7490 = vand.u32 %v7347, 4294901760
        %7491 = vmatpush.msra.mxu0 %v7490
        %v7492 = vand.u32 %v7346, 4294901760
        %7493 = vmatpush.msra.mxu0 %v7492
        %v7494 = vand.u32 %v7345, 4294901760
        %7495 = vmatpush.msra.mxu0 %v7494
        %v7496 = vand.u32 %v7344, 4294901760
        %7497 = vmatpush.msra.mxu0 %v7496
        %v7498 = vand.u32 %v7343, 4294901760
        %7499 = vmatpush.msra.mxu0 %v7498
        %v7500 = vand.u32 %v7342, 4294901760
        %7501 = vmatpush.msra.mxu0 %v7500
        %v7502 = vand.u32 %v7326, 4294901760
        %v7503 = vsub.f32 %v7326, %v7502
        %v7504 = vand.u32 %v7503, 4294901760
        %v7505 = vsub.f32 %v7503, %v7504
        %v7506 = vand.u32 %v7505, 4294901760
        %7507 = vmatmul.f32.gmra.mxu0 %v7506
        %v7508 = vpop.f32.mrf.mxu0
        %v7509 = vadd.f32 0.0, %v7508
        %v7510 = vand.u32 %v7334, 4294901760
        %v7511 = vsub.f32 %v7334, %v7510
        %v7512 = vand.u32 %v7511, 4294901760
        %v7513 = vsub.f32 %v7511, %v7512
        %v7514 = vand.u32 %v7513, 4294901760
        %7515 = vmatmul.f32.gmra.mxu0 %v7514
        %v7516 = vpop.f32.mrf.mxu0
        %v7517 = vadd.f32 0.0, %v7516
        %7518 = vdwg.mxu0
        %v7519 = vand.u32 %v7357, 4294901760
        %v7520 = vsub.f32 %v7357, %v7519
        %v7521 = vand.u32 %v7520, 4294901760
        %v7522 = vsub.f32 %v7520, %v7521
        %v7523 = vand.u32 %v7522, 4294901760
        %7524 = vmatpush.msra.mxu0 %v7523
        %v7525 = vand.u32 %v7356, 4294901760
        %v7526 = vsub.f32 %v7356, %v7525
        %v7527 = vand.u32 %v7526, 4294901760
        %v7528 = vsub.f32 %v7526, %v7527
        %v7529 = vand.u32 %v7528, 4294901760
        %7530 = vmatpush.msra.mxu0 %v7529
        %v7531 = vand.u32 %v7355, 4294901760
        %v7532 = vsub.f32 %v7355, %v7531
        %v7533 = vand.u32 %v7532, 4294901760
        %v7534 = vsub.f32 %v7532, %v7533
        %v7535 = vand.u32 %v7534, 4294901760
        %7536 = vmatpush.msra.mxu0 %v7535
        %v7537 = vand.u32 %v7354, 4294901760
        %v7538 = vsub.f32 %v7354, %v7537
        %v7539 = vand.u32 %v7538, 4294901760
        %v7540 = vsub.f32 %v7538, %v7539
        %v7541 = vand.u32 %v7540, 4294901760
        %7542 = vmatpush.msra.mxu0 %v7541
        %v7543 = vand.u32 %v7353, 4294901760
        %v7544 = vsub.f32 %v7353, %v7543
        %v7545 = vand.u32 %v7544, 4294901760
        %v7546 = vsub.f32 %v7544, %v7545
        %v7547 = vand.u32 %v7546, 4294901760
        %7548 = vmatpush.msra.mxu0 %v7547
        %v7549 = vand.u32 %v7352, 4294901760
        %v7550 = vsub.f32 %v7352, %v7549
        %v7551 = vand.u32 %v7550, 4294901760
        %v7552 = vsub.f32 %v7550, %v7551
        %v7553 = vand.u32 %v7552, 4294901760
        %7554 = vmatpush.msra.mxu0 %v7553
        %v7555 = vand.u32 %v7351, 4294901760
        %v7556 = vsub.f32 %v7351, %v7555
        %v7557 = vand.u32 %v7556, 4294901760
        %v7558 = vsub.f32 %v7556, %v7557
        %v7559 = vand.u32 %v7558, 4294901760
        %7560 = vmatpush.msra.mxu0 %v7559
        %v7561 = vand.u32 %v7350, 4294901760
        %v7562 = vsub.f32 %v7350, %v7561
        %v7563 = vand.u32 %v7562, 4294901760
        %v7564 = vsub.f32 %v7562, %v7563
        %v7565 = vand.u32 %v7564, 4294901760
        %7566 = vmatpush.msra.mxu0 %v7565
        %v7567 = vand.u32 %v7349, 4294901760
        %v7568 = vsub.f32 %v7349, %v7567
        %v7569 = vand.u32 %v7568, 4294901760
        %v7570 = vsub.f32 %v7568, %v7569
        %v7571 = vand.u32 %v7570, 4294901760
        %7572 = vmatpush.msra.mxu0 %v7571
        %v7573 = vand.u32 %v7348, 4294901760
        %v7574 = vsub.f32 %v7348, %v7573
        %v7575 = vand.u32 %v7574, 4294901760
        %v7576 = vsub.f32 %v7574, %v7575
        %v7577 = vand.u32 %v7576, 4294901760
        %7578 = vmatpush.msra.mxu0 %v7577
        %v7579 = vand.u32 %v7347, 4294901760
        %v7580 = vsub.f32 %v7347, %v7579
        %v7581 = vand.u32 %v7580, 4294901760
        %v7582 = vsub.f32 %v7580, %v7581
        %v7583 = vand.u32 %v7582, 4294901760
        %7584 = vmatpush.msra.mxu0 %v7583
        %v7585 = vand.u32 %v7346, 4294901760
        %v7586 = vsub.f32 %v7346, %v7585
        %v7587 = vand.u32 %v7586, 4294901760
        %v7588 = vsub.f32 %v7586, %v7587
        %v7589 = vand.u32 %v7588, 4294901760
        %7590 = vmatpush.msra.mxu0 %v7589
        %v7591 = vand.u32 %v7345, 4294901760
        %v7592 = vsub.f32 %v7345, %v7591
        %v7593 = vand.u32 %v7592, 4294901760
        %v7594 = vsub.f32 %v7592, %v7593
        %v7595 = vand.u32 %v7594, 4294901760
        %7596 = vmatpush.msra.mxu0 %v7595
        %v7597 = vand.u32 %v7344, 4294901760
        %v7598 = vsub.f32 %v7344, %v7597
        %v7599 = vand.u32 %v7598, 4294901760
        %v7600 = vsub.f32 %v7598, %v7599
        %v7601 = vand.u32 %v7600, 4294901760
        %7602 = vmatpush.msra.mxu0 %v7601
        %v7603 = vand.u32 %v7343, 4294901760
        %v7604 = vsub.f32 %v7343, %v7603
        %v7605 = vand.u32 %v7604, 4294901760
        %v7606 = vsub.f32 %v7604, %v7605
        %v7607 = vand.u32 %v7606, 4294901760
        %7608 = vmatpush.msra.mxu0 %v7607
        %v7609 = vand.u32 %v7342, 4294901760
        %v7610 = vsub.f32 %v7342, %v7609
        %v7611 = vand.u32 %v7610, 4294901760
        %v7612 = vsub.f32 %v7610, %v7611
        %v7613 = vand.u32 %v7612, 4294901760
        %7614 = vmatpush.msra.mxu0 %v7613
        %v7615 = vand.u32 %v7326, 4294901760
        %7616 = vmatmul.f32.gmra.mxu0 %v7615
        %v7617 = vpop.f32.mrf.mxu0
        %v7618 = vadd.f32 %v7509, %v7617
        %v7619 = vand.u32 %v7334, 4294901760
        %7620 = vmatmul.f32.gmra.mxu0 %v7619
        %v7621 = vpop.f32.mrf.mxu0
        %v7622 = vadd.f32 %v7517, %v7621
        %7623 = vdwg.mxu0
        %v7624 = vand.u32 %v7357, 4294901760
        %v7625 = vsub.f32 %v7357, %v7624
        %7626 = vmatpush.msra.mxu0 %v7625
        %v7627 = vand.u32 %v7356, 4294901760
        %v7628 = vsub.f32 %v7356, %v7627
        %7629 = vmatpush.msra.mxu0 %v7628
        %v7630 = vand.u32 %v7355, 4294901760
        %v7631 = vsub.f32 %v7355, %v7630
        %7632 = vmatpush.msra.mxu0 %v7631
        %v7633 = vand.u32 %v7354, 4294901760
        %v7634 = vsub.f32 %v7354, %v7633
        %7635 = vmatpush.msra.mxu0 %v7634
        %v7636 = vand.u32 %v7353, 4294901760
        %v7637 = vsub.f32 %v7353, %v7636
        %7638 = vmatpush.msra.mxu0 %v7637
        %v7639 = vand.u32 %v7352, 4294901760
        %v7640 = vsub.f32 %v7352, %v7639
        %7641 = vmatpush.msra.mxu0 %v7640
        %v7642 = vand.u32 %v7351, 4294901760
        %v7643 = vsub.f32 %v7351, %v7642
        %7644 = vmatpush.msra.mxu0 %v7643
        %v7645 = vand.u32 %v7350, 4294901760
        %v7646 = vsub.f32 %v7350, %v7645
        %7647 = vmatpush.msra.mxu0 %v7646
        %v7648 = vand.u32 %v7349, 4294901760
        %v7649 = vsub.f32 %v7349, %v7648
        %7650 = vmatpush.msra.mxu0 %v7649
        %v7651 = vand.u32 %v7348, 4294901760
        %v7652 = vsub.f32 %v7348, %v7651
        %7653 = vmatpush.msra.mxu0 %v7652
        %v7654 = vand.u32 %v7347, 4294901760
        %v7655 = vsub.f32 %v7347, %v7654
        %7656 = vmatpush.msra.mxu0 %v7655
        %v7657 = vand.u32 %v7346, 4294901760
        %v7658 = vsub.f32 %v7346, %v7657
        %7659 = vmatpush.msra.mxu0 %v7658
        %v7660 = vand.u32 %v7345, 4294901760
        %v7661 = vsub.f32 %v7345, %v7660
        %7662 = vmatpush.msra.mxu0 %v7661
        %v7663 = vand.u32 %v7344, 4294901760
        %v7664 = vsub.f32 %v7344, %v7663
        %7665 = vmatpush.msra.mxu0 %v7664
        %v7666 = vand.u32 %v7343, 4294901760
        %v7667 = vsub.f32 %v7343, %v7666
        %7668 = vmatpush.msra.mxu0 %v7667
        %v7669 = vand.u32 %v7342, 4294901760
        %v7670 = vsub.f32 %v7342, %v7669
        %7671 = vmatpush.msra.mxu0 %v7670
        %v7672 = vand.u32 %v7326, 4294901760
        %v7673 = vsub.f32 %v7326, %v7672
        %7674 = vmatmul.f32.gmra.mxu0 %v7673
        %v7675 = vpop.f32.mrf.mxu0
        %v7676 = vadd.f32 %v7618, %v7675
        %v7677 = vand.u32 %v7334, 4294901760
        %v7678 = vsub.f32 %v7334, %v7677
        %7679 = vmatmul.f32.gmra.mxu0 %v7678
        %v7680 = vpop.f32.mrf.mxu0
        %v7681 = vadd.f32 %v7622, %v7680
        %7682 = vdwg.mxu0
        %v7683 = vand.u32 %v7357, 4294901760
        %7684 = vmatpush.msra.mxu0 %v7683
        %v7685 = vand.u32 %v7356, 4294901760
        %7686 = vmatpush.msra.mxu0 %v7685
        %v7687 = vand.u32 %v7355, 4294901760
        %7688 = vmatpush.msra.mxu0 %v7687
        %v7689 = vand.u32 %v7354, 4294901760
        %7690 = vmatpush.msra.mxu0 %v7689
        %v7691 = vand.u32 %v7353, 4294901760
        %7692 = vmatpush.msra.mxu0 %v7691
        %v7693 = vand.u32 %v7352, 4294901760
        %7694 = vmatpush.msra.mxu0 %v7693
        %v7695 = vand.u32 %v7351, 4294901760
        %7696 = vmatpush.msra.mxu0 %v7695
        %v7697 = vand.u32 %v7350, 4294901760
        %7698 = vmatpush.msra.mxu0 %v7697
        %v7699 = vand.u32 %v7349, 4294901760
        %7700 = vmatpush.msra.mxu0 %v7699
        %v7701 = vand.u32 %v7348, 4294901760
        %7702 = vmatpush.msra.mxu0 %v7701
        %v7703 = vand.u32 %v7347, 4294901760
        %7704 = vmatpush.msra.mxu0 %v7703
        %v7705 = vand.u32 %v7346, 4294901760
        %7706 = vmatpush.msra.mxu0 %v7705
        %v7707 = vand.u32 %v7345, 4294901760
        %7708 = vmatpush.msra.mxu0 %v7707
        %v7709 = vand.u32 %v7344, 4294901760
        %7710 = vmatpush.msra.mxu0 %v7709
        %v7711 = vand.u32 %v7343, 4294901760
        %7712 = vmatpush.msra.mxu0 %v7711
        %v7713 = vand.u32 %v7342, 4294901760
        %7714 = vmatpush.msra.mxu0 %v7713
        %v7715 = vand.u32 %v7326, 4294901760
        %v7716 = vsub.f32 %v7326, %v7715
        %v7717 = vand.u32 %v7716, 4294901760
        %7718 = vmatmul.f32.gmra.mxu0 %v7717
        %v7719 = vpop.f32.mrf.mxu0
        %v7720 = vadd.f32 %v7676, %v7719
        %v7721 = vand.u32 %v7334, 4294901760
        %v7722 = vsub.f32 %v7334, %v7721
        %v7723 = vand.u32 %v7722, 4294901760
        %7724 = vmatmul.f32.gmra.mxu0 %v7723
        %v7725 = vpop.f32.mrf.mxu0
        %v7726 = vadd.f32 %v7681, %v7725
        %7727 = vdwg.mxu0
        %v7728 = vand.u32 %v7357, 4294901760
        %v7729 = vsub.f32 %v7357, %v7728
        %v7730 = vand.u32 %v7729, 4294901760
        %7731 = vmatpush.msra.mxu0 %v7730
        %v7732 = vand.u32 %v7356, 4294901760
        %v7733 = vsub.f32 %v7356, %v7732
        %v7734 = vand.u32 %v7733, 4294901760
        %7735 = vmatpush.msra.mxu0 %v7734
        %v7736 = vand.u32 %v7355, 4294901760
        %v7737 = vsub.f32 %v7355, %v7736
        %v7738 = vand.u32 %v7737, 4294901760
        %7739 = vmatpush.msra.mxu0 %v7738
        %v7740 = vand.u32 %v7354, 4294901760
        %v7741 = vsub.f32 %v7354, %v7740
        %v7742 = vand.u32 %v7741, 4294901760
        %7743 = vmatpush.msra.mxu0 %v7742
        %v7744 = vand.u32 %v7353, 4294901760
        %v7745 = vsub.f32 %v7353, %v7744
        %v7746 = vand.u32 %v7745, 4294901760
        %7747 = vmatpush.msra.mxu0 %v7746
        %v7748 = vand.u32 %v7352, 4294901760
        %v7749 = vsub.f32 %v7352, %v7748
        %v7750 = vand.u32 %v7749, 4294901760
        %7751 = vmatpush.msra.mxu0 %v7750
        %v7752 = vand.u32 %v7351, 4294901760
        %v7753 = vsub.f32 %v7351, %v7752
        %v7754 = vand.u32 %v7753, 4294901760
        %7755 = vmatpush.msra.mxu0 %v7754
        %v7756 = vand.u32 %v7350, 4294901760
        %v7757 = vsub.f32 %v7350, %v7756
        %v7758 = vand.u32 %v7757, 4294901760
        %7759 = vmatpush.msra.mxu0 %v7758
        %v7760 = vand.u32 %v7349, 4294901760
        %v7761 = vsub.f32 %v7349, %v7760
        %v7762 = vand.u32 %v7761, 4294901760
        %7763 = vmatpush.msra.mxu0 %v7762
        %v7764 = vand.u32 %v7348, 4294901760
        %v7765 = vsub.f32 %v7348, %v7764
        %v7766 = vand.u32 %v7765, 4294901760
        %7767 = vmatpush.msra.mxu0 %v7766
        %v7768 = vand.u32 %v7347, 4294901760
        %v7769 = vsub.f32 %v7347, %v7768
        %v7770 = vand.u32 %v7769, 4294901760
        %7771 = vmatpush.msra.mxu0 %v7770
        %v7772 = vand.u32 %v7346, 4294901760
        %v7773 = vsub.f32 %v7346, %v7772
        %v7774 = vand.u32 %v7773, 4294901760
        %7775 = vmatpush.msra.mxu0 %v7774
        %v7776 = vand.u32 %v7345, 4294901760
        %v7777 = vsub.f32 %v7345, %v7776
        %v7778 = vand.u32 %v7777, 4294901760
        %7779 = vmatpush.msra.mxu0 %v7778
        %v7780 = vand.u32 %v7344, 4294901760
        %v7781 = vsub.f32 %v7344, %v7780
        %v7782 = vand.u32 %v7781, 4294901760
        %7783 = vmatpush.msra.mxu0 %v7782
        %v7784 = vand.u32 %v7343, 4294901760
        %v7785 = vsub.f32 %v7343, %v7784
        %v7786 = vand.u32 %v7785, 4294901760
        %7787 = vmatpush.msra.mxu0 %v7786
        %v7788 = vand.u32 %v7342, 4294901760
        %v7789 = vsub.f32 %v7342, %v7788
        %v7790 = vand.u32 %v7789, 4294901760
        %7791 = vmatpush.msra.mxu0 %v7790
        %v7792 = vand.u32 %v7326, 4294901760
        %7793 = vmatmul.f32.gmra.mxu0 %v7792
        %v7794 = vpop.f32.mrf.mxu0
        %v7795 = vadd.f32 %v7720, %v7794
        %v7796 = vand.u32 %v7334, 4294901760
        %7797 = vmatmul.f32.gmra.mxu0 %v7796
        %v7798 = vpop.f32.mrf.mxu0
        %v7799 = vadd.f32 %v7726, %v7798
        %7800 = vdwg.mxu0
        %v7801 = vand.u32 %v7357, 4294901760
        %7802 = vmatpush.msra.mxu0 %v7801
        %v7803 = vand.u32 %v7356, 4294901760
        %7804 = vmatpush.msra.mxu0 %v7803
        %v7805 = vand.u32 %v7355, 4294901760
        %7806 = vmatpush.msra.mxu0 %v7805
        %v7807 = vand.u32 %v7354, 4294901760
        %7808 = vmatpush.msra.mxu0 %v7807
        %v7809 = vand.u32 %v7353, 4294901760
        %7810 = vmatpush.msra.mxu0 %v7809
        %v7811 = vand.u32 %v7352, 4294901760
        %7812 = vmatpush.msra.mxu0 %v7811
        %v7813 = vand.u32 %v7351, 4294901760
        %7814 = vmatpush.msra.mxu0 %v7813
        %v7815 = vand.u32 %v7350, 4294901760
        %7816 = vmatpush.msra.mxu0 %v7815
        %v7817 = vand.u32 %v7349, 4294901760
        %7818 = vmatpush.msra.mxu0 %v7817
        %v7819 = vand.u32 %v7348, 4294901760
        %7820 = vmatpush.msra.mxu0 %v7819
        %v7821 = vand.u32 %v7347, 4294901760
        %7822 = vmatpush.msra.mxu0 %v7821
        %v7823 = vand.u32 %v7346, 4294901760
        %7824 = vmatpush.msra.mxu0 %v7823
        %v7825 = vand.u32 %v7345, 4294901760
        %7826 = vmatpush.msra.mxu0 %v7825
        %v7827 = vand.u32 %v7344, 4294901760
        %7828 = vmatpush.msra.mxu0 %v7827
        %v7829 = vand.u32 %v7343, 4294901760
        %7830 = vmatpush.msra.mxu0 %v7829
        %v7831 = vand.u32 %v7342, 4294901760
        %7832 = vmatpush.msra.mxu0 %v7831
        %v7833 = vand.u32 %v7326, 4294901760
        %7834 = vmatmul.f32.gmra.mxu0 %v7833
        %v7835 = vpop.f32.mrf.mxu0
        %v7836 = vadd.f32 %v7795, %v7835
        %v7837 = vand.u32 %v7334, 4294901760
        %7838 = vmatmul.f32.gmra.mxu0 %v7837
        %v7839 = vpop.f32.mrf.mxu0
        %v7840 = vadd.f32 %v7799, %v7839
        %7841 = vdwg.mxu0
        %v7842 = vand.u32 %v7373, 4294901760
        %7843 = vmatpush.msra.mxu0 %v7842
        %v7844 = vand.u32 %v7372, 4294901760
        %7845 = vmatpush.msra.mxu0 %v7844
        %v7846 = vand.u32 %v7371, 4294901760
        %7847 = vmatpush.msra.mxu0 %v7846
        %v7848 = vand.u32 %v7370, 4294901760
        %7849 = vmatpush.msra.mxu0 %v7848
        %v7850 = vand.u32 %v7369, 4294901760
        %7851 = vmatpush.msra.mxu0 %v7850
        %v7852 = vand.u32 %v7368, 4294901760
        %7853 = vmatpush.msra.mxu0 %v7852
        %v7854 = vand.u32 %v7367, 4294901760
        %7855 = vmatpush.msra.mxu0 %v7854
        %v7856 = vand.u32 %v7366, 4294901760
        %7857 = vmatpush.msra.mxu0 %v7856
        %v7858 = vand.u32 %v7365, 4294901760
        %7859 = vmatpush.msra.mxu0 %v7858
        %v7860 = vand.u32 %v7364, 4294901760
        %7861 = vmatpush.msra.mxu0 %v7860
        %v7862 = vand.u32 %v7363, 4294901760
        %7863 = vmatpush.msra.mxu0 %v7862
        %v7864 = vand.u32 %v7362, 4294901760
        %7865 = vmatpush.msra.mxu0 %v7864
        %v7866 = vand.u32 %v7361, 4294901760
        %7867 = vmatpush.msra.mxu0 %v7866
        %v7868 = vand.u32 %v7360, 4294901760
        %7869 = vmatpush.msra.mxu0 %v7868
        %v7870 = vand.u32 %v7359, 4294901760
        %7871 = vmatpush.msra.mxu0 %v7870
        %v7872 = vand.u32 %v7358, 4294901760
        %7873 = vmatpush.msra.mxu0 %v7872
        %v7874 = vand.u32 %v7327, 4294901760
        %v7875 = vsub.f32 %v7327, %v7874
        %v7876 = vand.u32 %v7875, 4294901760
        %v7877 = vsub.f32 %v7875, %v7876
        %v7878 = vand.u32 %v7877, 4294901760
        %7879 = vmatmul.f32.gmra.mxu0 %v7878
        %v7880 = vpop.f32.mrf.mxu0
        %v7881 = vadd.f32 %v7836, %v7880
        %v7882 = vand.u32 %v7335, 4294901760
        %v7883 = vsub.f32 %v7335, %v7882
        %v7884 = vand.u32 %v7883, 4294901760
        %v7885 = vsub.f32 %v7883, %v7884
        %v7886 = vand.u32 %v7885, 4294901760
        %7887 = vmatmul.f32.gmra.mxu0 %v7886
        %v7888 = vpop.f32.mrf.mxu0
        %v7889 = vadd.f32 %v7840, %v7888
        %7890 = vdwg.mxu0
        %v7891 = vand.u32 %v7373, 4294901760
        %v7892 = vsub.f32 %v7373, %v7891
        %v7893 = vand.u32 %v7892, 4294901760
        %v7894 = vsub.f32 %v7892, %v7893
        %v7895 = vand.u32 %v7894, 4294901760
        %7896 = vmatpush.msra.mxu0 %v7895
        %v7897 = vand.u32 %v7372, 4294901760
        %v7898 = vsub.f32 %v7372, %v7897
        %v7899 = vand.u32 %v7898, 4294901760
        %v7900 = vsub.f32 %v7898, %v7899
        %v7901 = vand.u32 %v7900, 4294901760
        %7902 = vmatpush.msra.mxu0 %v7901
        %v7903 = vand.u32 %v7371, 4294901760
        %v7904 = vsub.f32 %v7371, %v7903
        %v7905 = vand.u32 %v7904, 4294901760
        %v7906 = vsub.f32 %v7904, %v7905
        %v7907 = vand.u32 %v7906, 4294901760
        %7908 = vmatpush.msra.mxu0 %v7907
        %v7909 = vand.u32 %v7370, 4294901760
        %v7910 = vsub.f32 %v7370, %v7909
        %v7911 = vand.u32 %v7910, 4294901760
        %v7912 = vsub.f32 %v7910, %v7911
        %v7913 = vand.u32 %v7912, 4294901760
        %7914 = vmatpush.msra.mxu0 %v7913
        %v7915 = vand.u32 %v7369, 4294901760
        %v7916 = vsub.f32 %v7369, %v7915
        %v7917 = vand.u32 %v7916, 4294901760
        %v7918 = vsub.f32 %v7916, %v7917
        %v7919 = vand.u32 %v7918, 4294901760
        %7920 = vmatpush.msra.mxu0 %v7919
        %v7921 = vand.u32 %v7368, 4294901760
        %v7922 = vsub.f32 %v7368, %v7921
        %v7923 = vand.u32 %v7922, 4294901760
        %v7924 = vsub.f32 %v7922, %v7923
        %v7925 = vand.u32 %v7924, 4294901760
        %7926 = vmatpush.msra.mxu0 %v7925
        %v7927 = vand.u32 %v7367, 4294901760
        %v7928 = vsub.f32 %v7367, %v7927
        %v7929 = vand.u32 %v7928, 4294901760
        %v7930 = vsub.f32 %v7928, %v7929
        %v7931 = vand.u32 %v7930, 4294901760
        %7932 = vmatpush.msra.mxu0 %v7931
        %v7933 = vand.u32 %v7366, 4294901760
        %v7934 = vsub.f32 %v7366, %v7933
        %v7935 = vand.u32 %v7934, 4294901760
        %v7936 = vsub.f32 %v7934, %v7935
        %v7937 = vand.u32 %v7936, 4294901760
        %7938 = vmatpush.msra.mxu0 %v7937
        %v7939 = vand.u32 %v7365, 4294901760
        %v7940 = vsub.f32 %v7365, %v7939
        %v7941 = vand.u32 %v7940, 4294901760
        %v7942 = vsub.f32 %v7940, %v7941
        %v7943 = vand.u32 %v7942, 4294901760
        %7944 = vmatpush.msra.mxu0 %v7943
        %v7945 = vand.u32 %v7364, 4294901760
        %v7946 = vsub.f32 %v7364, %v7945
        %v7947 = vand.u32 %v7946, 4294901760
        %v7948 = vsub.f32 %v7946, %v7947
        %v7949 = vand.u32 %v7948, 4294901760
        %7950 = vmatpush.msra.mxu0 %v7949
        %v7951 = vand.u32 %v7363, 4294901760
        %v7952 = vsub.f32 %v7363, %v7951
        %v7953 = vand.u32 %v7952, 4294901760
        %v7954 = vsub.f32 %v7952, %v7953
        %v7955 = vand.u32 %v7954, 4294901760
        %7956 = vmatpush.msra.mxu0 %v7955
        %v7957 = vand.u32 %v7362, 4294901760
        %v7958 = vsub.f32 %v7362, %v7957
        %v7959 = vand.u32 %v7958, 4294901760
        %v7960 = vsub.f32 %v7958, %v7959
        %v7961 = vand.u32 %v7960, 4294901760
        %7962 = vmatpush.msra.mxu0 %v7961
        %v7963 = vand.u32 %v7361, 4294901760
        %v7964 = vsub.f32 %v7361, %v7963
        %v7965 = vand.u32 %v7964, 4294901760
        %v7966 = vsub.f32 %v7964, %v7965
        %v7967 = vand.u32 %v7966, 4294901760
        %7968 = vmatpush.msra.mxu0 %v7967
        %v7969 = vand.u32 %v7360, 4294901760
        %v7970 = vsub.f32 %v7360, %v7969
        %v7971 = vand.u32 %v7970, 4294901760
        %v7972 = vsub.f32 %v7970, %v7971
        %v7973 = vand.u32 %v7972, 4294901760
        %7974 = vmatpush.msra.mxu0 %v7973
        %v7975 = vand.u32 %v7359, 4294901760
        %v7976 = vsub.f32 %v7359, %v7975
        %v7977 = vand.u32 %v7976, 4294901760
        %v7978 = vsub.f32 %v7976, %v7977
        %v7979 = vand.u32 %v7978, 4294901760
        %7980 = vmatpush.msra.mxu0 %v7979
        %v7981 = vand.u32 %v7358, 4294901760
        %v7982 = vsub.f32 %v7358, %v7981
        %v7983 = vand.u32 %v7982, 4294901760
        %v7984 = vsub.f32 %v7982, %v7983
        %v7985 = vand.u32 %v7984, 4294901760
        %7986 = vmatpush.msra.mxu0 %v7985
        %v7987 = vand.u32 %v7327, 4294901760
        %7988 = vmatmul.f32.gmra.mxu0 %v7987
        %v7989 = vpop.f32.mrf.mxu0
        %v7990 = vadd.f32 %v7881, %v7989
        %v7991 = vand.u32 %v7335, 4294901760
        %7992 = vmatmul.f32.gmra.mxu0 %v7991
        %v7993 = vpop.f32.mrf.mxu0
        %v7994 = vadd.f32 %v7889, %v7993
        %7995 = vdwg.mxu0
        %v7996 = vand.u32 %v7373, 4294901760
        %v7997 = vsub.f32 %v7373, %v7996
        %7998 = vmatpush.msra.mxu0 %v7997
        %v7999 = vand.u32 %v7372, 4294901760
        %v8000 = vsub.f32 %v7372, %v7999
        %8001 = vmatpush.msra.mxu0 %v8000
        %v8002 = vand.u32 %v7371, 4294901760
        %v8003 = vsub.f32 %v7371, %v8002
        %8004 = vmatpush.msra.mxu0 %v8003
        %v8005 = vand.u32 %v7370, 4294901760
        %v8006 = vsub.f32 %v7370, %v8005
        %8007 = vmatpush.msra.mxu0 %v8006
        %v8008 = vand.u32 %v7369, 4294901760
        %v8009 = vsub.f32 %v7369, %v8008
        %8010 = vmatpush.msra.mxu0 %v8009
        %v8011 = vand.u32 %v7368, 4294901760
        %v8012 = vsub.f32 %v7368, %v8011
        %8013 = vmatpush.msra.mxu0 %v8012
        %v8014 = vand.u32 %v7367, 4294901760
        %v8015 = vsub.f32 %v7367, %v8014
        %8016 = vmatpush.msra.mxu0 %v8015
        %v8017 = vand.u32 %v7366, 4294901760
        %v8018 = vsub.f32 %v7366, %v8017
        %8019 = vmatpush.msra.mxu0 %v8018
        %v8020 = vand.u32 %v7365, 4294901760
        %v8021 = vsub.f32 %v7365, %v8020
        %8022 = vmatpush.msra.mxu0 %v8021
        %v8023 = vand.u32 %v7364, 4294901760
        %v8024 = vsub.f32 %v7364, %v8023
        %8025 = vmatpush.msra.mxu0 %v8024
        %v8026 = vand.u32 %v7363, 4294901760
        %v8027 = vsub.f32 %v7363, %v8026
        %8028 = vmatpush.msra.mxu0 %v8027
        %v8029 = vand.u32 %v7362, 4294901760
        %v8030 = vsub.f32 %v7362, %v8029
        %8031 = vmatpush.msra.mxu0 %v8030
        %v8032 = vand.u32 %v7361, 4294901760
        %v8033 = vsub.f32 %v7361, %v8032
        %8034 = vmatpush.msra.mxu0 %v8033
        %v8035 = vand.u32 %v7360, 4294901760
        %v8036 = vsub.f32 %v7360, %v8035
        %8037 = vmatpush.msra.mxu0 %v8036
        %v8038 = vand.u32 %v7359, 4294901760
        %v8039 = vsub.f32 %v7359, %v8038
        %8040 = vmatpush.msra.mxu0 %v8039
        %v8041 = vand.u32 %v7358, 4294901760
        %v8042 = vsub.f32 %v7358, %v8041
        %8043 = vmatpush.msra.mxu0 %v8042
        %v8044 = vand.u32 %v7327, 4294901760
        %v8045 = vsub.f32 %v7327, %v8044
        %8046 = vmatmul.f32.gmra.mxu0 %v8045
        %v8047 = vpop.f32.mrf.mxu0
        %v8048 = vadd.f32 %v7990, %v8047
        %v8049 = vand.u32 %v7335, 4294901760
        %v8050 = vsub.f32 %v7335, %v8049
        %8051 = vmatmul.f32.gmra.mxu0 %v8050
        %v8052 = vpop.f32.mrf.mxu0
        %v8053 = vadd.f32 %v7994, %v8052
        %8054 = vdwg.mxu0
        %v8055 = vand.u32 %v7373, 4294901760
        %8056 = vmatpush.msra.mxu0 %v8055
        %v8057 = vand.u32 %v7372, 4294901760
        %8058 = vmatpush.msra.mxu0 %v8057
        %v8059 = vand.u32 %v7371, 4294901760
        %8060 = vmatpush.msra.mxu0 %v8059
        %v8061 = vand.u32 %v7370, 4294901760
        %8062 = vmatpush.msra.mxu0 %v8061
        %v8063 = vand.u32 %v7369, 4294901760
        %8064 = vmatpush.msra.mxu0 %v8063
        %v8065 = vand.u32 %v7368, 4294901760
        %8066 = vmatpush.msra.mxu0 %v8065
        %v8067 = vand.u32 %v7367, 4294901760
        %8068 = vmatpush.msra.mxu0 %v8067
        %v8069 = vand.u32 %v7366, 4294901760
        %8070 = vmatpush.msra.mxu0 %v8069
        %v8071 = vand.u32 %v7365, 4294901760
        %8072 = vmatpush.msra.mxu0 %v8071
        %v8073 = vand.u32 %v7364, 4294901760
        %8074 = vmatpush.msra.mxu0 %v8073
        %v8075 = vand.u32 %v7363, 4294901760
        %8076 = vmatpush.msra.mxu0 %v8075
        %v8077 = vand.u32 %v7362, 4294901760
        %8078 = vmatpush.msra.mxu0 %v8077
        %v8079 = vand.u32 %v7361, 4294901760
        %8080 = vmatpush.msra.mxu0 %v8079
        %v8081 = vand.u32 %v7360, 4294901760
        %8082 = vmatpush.msra.mxu0 %v8081
        %v8083 = vand.u32 %v7359, 4294901760
        %8084 = vmatpush.msra.mxu0 %v8083
        %v8085 = vand.u32 %v7358, 4294901760
        %8086 = vmatpush.msra.mxu0 %v8085
        %v8087 = vand.u32 %v7327, 4294901760
        %v8088 = vsub.f32 %v7327, %v8087
        %v8089 = vand.u32 %v8088, 4294901760
        %8090 = vmatmul.f32.gmra.mxu0 %v8089
        %v8091 = vpop.f32.mrf.mxu0
        %v8092 = vadd.f32 %v8048, %v8091
        %v8093 = vand.u32 %v7335, 4294901760
        %v8094 = vsub.f32 %v7335, %v8093
        %v8095 = vand.u32 %v8094, 4294901760
        %8096 = vmatmul.f32.gmra.mxu0 %v8095
        %v8097 = vpop.f32.mrf.mxu0
        %v8098 = vadd.f32 %v8053, %v8097
        %8099 = vdwg.mxu0
        %v8100 = vand.u32 %v7373, 4294901760
        %v8101 = vsub.f32 %v7373, %v8100
        %v8102 = vand.u32 %v8101, 4294901760
        %8103 = vmatpush.msra.mxu0 %v8102
        %v8104 = vand.u32 %v7372, 4294901760
        %v8105 = vsub.f32 %v7372, %v8104
        %v8106 = vand.u32 %v8105, 4294901760
        %8107 = vmatpush.msra.mxu0 %v8106
        %v8108 = vand.u32 %v7371, 4294901760
        %v8109 = vsub.f32 %v7371, %v8108
        %v8110 = vand.u32 %v8109, 4294901760
        %8111 = vmatpush.msra.mxu0 %v8110
        %v8112 = vand.u32 %v7370, 4294901760
        %v8113 = vsub.f32 %v7370, %v8112
        %v8114 = vand.u32 %v8113, 4294901760
        %8115 = vmatpush.msra.mxu0 %v8114
        %v8116 = vand.u32 %v7369, 4294901760
        %v8117 = vsub.f32 %v7369, %v8116
        %v8118 = vand.u32 %v8117, 4294901760
        %8119 = vmatpush.msra.mxu0 %v8118
        %v8120 = vand.u32 %v7368, 4294901760
        %v8121 = vsub.f32 %v7368, %v8120
        %v8122 = vand.u32 %v8121, 4294901760
        %8123 = vmatpush.msra.mxu0 %v8122
        %v8124 = vand.u32 %v7367, 4294901760
        %v8125 = vsub.f32 %v7367, %v8124
        %v8126 = vand.u32 %v8125, 4294901760
        %8127 = vmatpush.msra.mxu0 %v8126
        %v8128 = vand.u32 %v7366, 4294901760
        %v8129 = vsub.f32 %v7366, %v8128
        %v8130 = vand.u32 %v8129, 4294901760
        %8131 = vmatpush.msra.mxu0 %v8130
        %v8132 = vand.u32 %v7365, 4294901760
        %v8133 = vsub.f32 %v7365, %v8132
        %v8134 = vand.u32 %v8133, 4294901760
        %8135 = vmatpush.msra.mxu0 %v8134
        %v8136 = vand.u32 %v7364, 4294901760
        %v8137 = vsub.f32 %v7364, %v8136
        %v8138 = vand.u32 %v8137, 4294901760
        %8139 = vmatpush.msra.mxu0 %v8138
        %v8140 = vand.u32 %v7363, 4294901760
        %v8141 = vsub.f32 %v7363, %v8140
        %v8142 = vand.u32 %v8141, 4294901760
        %8143 = vmatpush.msra.mxu0 %v8142
        %v8144 = vand.u32 %v7362, 4294901760
        %v8145 = vsub.f32 %v7362, %v8144
        %v8146 = vand.u32 %v8145, 4294901760
        %8147 = vmatpush.msra.mxu0 %v8146
        %v8148 = vand.u32 %v7361, 4294901760
        %v8149 = vsub.f32 %v7361, %v8148
        %v8150 = vand.u32 %v8149, 4294901760
        %8151 = vmatpush.msra.mxu0 %v8150
        %v8152 = vand.u32 %v7360, 4294901760
        %v8153 = vsub.f32 %v7360, %v8152
        %v8154 = vand.u32 %v8153, 4294901760
        %8155 = vmatpush.msra.mxu0 %v8154
        %v8156 = vand.u32 %v7359, 4294901760
        %v8157 = vsub.f32 %v7359, %v8156
        %v8158 = vand.u32 %v8157, 4294901760
        %8159 = vmatpush.msra.mxu0 %v8158
        %v8160 = vand.u32 %v7358, 4294901760
        %v8161 = vsub.f32 %v7358, %v8160
        %v8162 = vand.u32 %v8161, 4294901760
        %8163 = vmatpush.msra.mxu0 %v8162
        %v8164 = vand.u32 %v7327, 4294901760
        %8165 = vmatmul.f32.gmra.mxu0 %v8164
        %v8166 = vpop.f32.mrf.mxu0
        %v8167 = vadd.f32 %v8092, %v8166
        %v8168 = vand.u32 %v7335, 4294901760
        %8169 = vmatmul.f32.gmra.mxu0 %v8168
        %v8170 = vpop.f32.mrf.mxu0
        %v8171 = vadd.f32 %v8098, %v8170
        %8172 = vdwg.mxu0
        %v8173 = vand.u32 %v7373, 4294901760
        %8174 = vmatpush.msra.mxu0 %v8173
        %v8175 = vand.u32 %v7372, 4294901760
        %8176 = vmatpush.msra.mxu0 %v8175
        %v8177 = vand.u32 %v7371, 4294901760
        %8178 = vmatpush.msra.mxu0 %v8177
        %v8179 = vand.u32 %v7370, 4294901760
        %8180 = vmatpush.msra.mxu0 %v8179
        %v8181 = vand.u32 %v7369, 4294901760
        %8182 = vmatpush.msra.mxu0 %v8181
        %v8183 = vand.u32 %v7368, 4294901760
        %8184 = vmatpush.msra.mxu0 %v8183
        %v8185 = vand.u32 %v7367, 4294901760
        %8186 = vmatpush.msra.mxu0 %v8185
        %v8187 = vand.u32 %v7366, 4294901760
        %8188 = vmatpush.msra.mxu0 %v8187
        %v8189 = vand.u32 %v7365, 4294901760
        %8190 = vmatpush.msra.mxu0 %v8189
        %v8191 = vand.u32 %v7364, 4294901760
        %8192 = vmatpush.msra.mxu0 %v8191
        %v8193 = vand.u32 %v7363, 4294901760
        %8194 = vmatpush.msra.mxu0 %v8193
        %v8195 = vand.u32 %v7362, 4294901760
        %8196 = vmatpush.msra.mxu0 %v8195
        %v8197 = vand.u32 %v7361, 4294901760
        %8198 = vmatpush.msra.mxu0 %v8197
        %v8199 = vand.u32 %v7360, 4294901760
        %8200 = vmatpush.msra.mxu0 %v8199
        %v8201 = vand.u32 %v7359, 4294901760
        %8202 = vmatpush.msra.mxu0 %v8201
        %v8203 = vand.u32 %v7358, 4294901760
        %8204 = vmatpush.msra.mxu0 %v8203
        %v8205 = vand.u32 %v7327, 4294901760
        %8206 = vmatmul.f32.gmra.mxu0 %v8205
        %v8207 = vpop.f32.mrf.mxu0
        %v8208 = vadd.f32 %v8167, %v8207
        %v8209 = vand.u32 %v7335, 4294901760
        %8210 = vmatmul.f32.gmra.mxu0 %v8209
        %v8211 = vpop.f32.mrf.mxu0
        %v8212 = vadd.f32 %v8171, %v8211
        %8213 = vdwg.mxu0
        %v8214 = vand.u32 %v7389, 4294901760
        %8215 = vmatpush.msra.mxu0 %v8214
        %v8216 = vand.u32 %v7388, 4294901760
        %8217 = vmatpush.msra.mxu0 %v8216
        %v8218 = vand.u32 %v7387, 4294901760
        %8219 = vmatpush.msra.mxu0 %v8218
        %v8220 = vand.u32 %v7386, 4294901760
        %8221 = vmatpush.msra.mxu0 %v8220
        %v8222 = vand.u32 %v7385, 4294901760
        %8223 = vmatpush.msra.mxu0 %v8222
        %v8224 = vand.u32 %v7384, 4294901760
        %8225 = vmatpush.msra.mxu0 %v8224
        %v8226 = vand.u32 %v7383, 4294901760
        %8227 = vmatpush.msra.mxu0 %v8226
        %v8228 = vand.u32 %v7382, 4294901760
        %8229 = vmatpush.msra.mxu0 %v8228
        %v8230 = vand.u32 %v7381, 4294901760
        %8231 = vmatpush.msra.mxu0 %v8230
        %v8232 = vand.u32 %v7380, 4294901760
        %8233 = vmatpush.msra.mxu0 %v8232
        %v8234 = vand.u32 %v7379, 4294901760
        %8235 = vmatpush.msra.mxu0 %v8234
        %v8236 = vand.u32 %v7378, 4294901760
        %8237 = vmatpush.msra.mxu0 %v8236
        %v8238 = vand.u32 %v7377, 4294901760
        %8239 = vmatpush.msra.mxu0 %v8238
        %v8240 = vand.u32 %v7376, 4294901760
        %8241 = vmatpush.msra.mxu0 %v8240
        %v8242 = vand.u32 %v7375, 4294901760
        %8243 = vmatpush.msra.mxu0 %v8242
        %v8244 = vand.u32 %v7374, 4294901760
        %8245 = vmatpush.msra.mxu0 %v8244
        %v8246 = vand.u32 %v7328, 4294901760
        %v8247 = vsub.f32 %v7328, %v8246
        %v8248 = vand.u32 %v8247, 4294901760
        %v8249 = vsub.f32 %v8247, %v8248
        %v8250 = vand.u32 %v8249, 4294901760
        %8251 = vmatmul.f32.gmra.mxu0 %v8250
        %v8252 = vpop.f32.mrf.mxu0
        %v8253 = vadd.f32 %v8208, %v8252
        %v8254 = vand.u32 %v7336, 4294901760
        %v8255 = vsub.f32 %v7336, %v8254
        %v8256 = vand.u32 %v8255, 4294901760
        %v8257 = vsub.f32 %v8255, %v8256
        %v8258 = vand.u32 %v8257, 4294901760
        %8259 = vmatmul.f32.gmra.mxu0 %v8258
        %v8260 = vpop.f32.mrf.mxu0
        %v8261 = vadd.f32 %v8212, %v8260
        %8262 = vdwg.mxu0
        %v8263 = vand.u32 %v7389, 4294901760
        %v8264 = vsub.f32 %v7389, %v8263
        %v8265 = vand.u32 %v8264, 4294901760
        %v8266 = vsub.f32 %v8264, %v8265
        %v8267 = vand.u32 %v8266, 4294901760
        %8268 = vmatpush.msra.mxu0 %v8267
        %v8269 = vand.u32 %v7388, 4294901760
        %v8270 = vsub.f32 %v7388, %v8269
        %v8271 = vand.u32 %v8270, 4294901760
        %v8272 = vsub.f32 %v8270, %v8271
        %v8273 = vand.u32 %v8272, 4294901760
        %8274 = vmatpush.msra.mxu0 %v8273
        %v8275 = vand.u32 %v7387, 4294901760
        %v8276 = vsub.f32 %v7387, %v8275
        %v8277 = vand.u32 %v8276, 4294901760
        %v8278 = vsub.f32 %v8276, %v8277
        %v8279 = vand.u32 %v8278, 4294901760
        %8280 = vmatpush.msra.mxu0 %v8279
        %v8281 = vand.u32 %v7386, 4294901760
        %v8282 = vsub.f32 %v7386, %v8281
        %v8283 = vand.u32 %v8282, 4294901760
        %v8284 = vsub.f32 %v8282, %v8283
        %v8285 = vand.u32 %v8284, 4294901760
        %8286 = vmatpush.msra.mxu0 %v8285
        %v8287 = vand.u32 %v7385, 4294901760
        %v8288 = vsub.f32 %v7385, %v8287
        %v8289 = vand.u32 %v8288, 4294901760
        %v8290 = vsub.f32 %v8288, %v8289
        %v8291 = vand.u32 %v8290, 4294901760
        %8292 = vmatpush.msra.mxu0 %v8291
        %v8293 = vand.u32 %v7384, 4294901760
        %v8294 = vsub.f32 %v7384, %v8293
        %v8295 = vand.u32 %v8294, 4294901760
        %v8296 = vsub.f32 %v8294, %v8295
        %v8297 = vand.u32 %v8296, 4294901760
        %8298 = vmatpush.msra.mxu0 %v8297
        %v8299 = vand.u32 %v7383, 4294901760
        %v8300 = vsub.f32 %v7383, %v8299
        %v8301 = vand.u32 %v8300, 4294901760
        %v8302 = vsub.f32 %v8300, %v8301
        %v8303 = vand.u32 %v8302, 4294901760
        %8304 = vmatpush.msra.mxu0 %v8303
        %v8305 = vand.u32 %v7382, 4294901760
        %v8306 = vsub.f32 %v7382, %v8305
        %v8307 = vand.u32 %v8306, 4294901760
        %v8308 = vsub.f32 %v8306, %v8307
        %v8309 = vand.u32 %v8308, 4294901760
        %8310 = vmatpush.msra.mxu0 %v8309
        %v8311 = vand.u32 %v7381, 4294901760
        %v8312 = vsub.f32 %v7381, %v8311
        %v8313 = vand.u32 %v8312, 4294901760
        %v8314 = vsub.f32 %v8312, %v8313
        %v8315 = vand.u32 %v8314, 4294901760
        %8316 = vmatpush.msra.mxu0 %v8315
        %v8317 = vand.u32 %v7380, 4294901760
        %v8318 = vsub.f32 %v7380, %v8317
        %v8319 = vand.u32 %v8318, 4294901760
        %v8320 = vsub.f32 %v8318, %v8319
        %v8321 = vand.u32 %v8320, 4294901760
        %8322 = vmatpush.msra.mxu0 %v8321
        %v8323 = vand.u32 %v7379, 4294901760
        %v8324 = vsub.f32 %v7379, %v8323
        %v8325 = vand.u32 %v8324, 4294901760
        %v8326 = vsub.f32 %v8324, %v8325
        %v8327 = vand.u32 %v8326, 4294901760
        %8328 = vmatpush.msra.mxu0 %v8327
        %v8329 = vand.u32 %v7378, 4294901760
        %v8330 = vsub.f32 %v7378, %v8329
        %v8331 = vand.u32 %v8330, 4294901760
        %v8332 = vsub.f32 %v8330, %v8331
        %v8333 = vand.u32 %v8332, 4294901760
        %8334 = vmatpush.msra.mxu0 %v8333
        %v8335 = vand.u32 %v7377, 4294901760
        %v8336 = vsub.f32 %v7377, %v8335
        %v8337 = vand.u32 %v8336, 4294901760
        %v8338 = vsub.f32 %v8336, %v8337
        %v8339 = vand.u32 %v8338, 4294901760
        %8340 = vmatpush.msra.mxu0 %v8339
        %v8341 = vand.u32 %v7376, 4294901760
        %v8342 = vsub.f32 %v7376, %v8341
        %v8343 = vand.u32 %v8342, 4294901760
        %v8344 = vsub.f32 %v8342, %v8343
        %v8345 = vand.u32 %v8344, 4294901760
        %8346 = vmatpush.msra.mxu0 %v8345
        %v8347 = vand.u32 %v7375, 4294901760
        %v8348 = vsub.f32 %v7375, %v8347
        %v8349 = vand.u32 %v8348, 4294901760
        %v8350 = vsub.f32 %v8348, %v8349
        %v8351 = vand.u32 %v8350, 4294901760
        %8352 = vmatpush.msra.mxu0 %v8351
        %v8353 = vand.u32 %v7374, 4294901760
        %v8354 = vsub.f32 %v7374, %v8353
        %v8355 = vand.u32 %v8354, 4294901760
        %v8356 = vsub.f32 %v8354, %v8355
        %v8357 = vand.u32 %v8356, 4294901760
        %8358 = vmatpush.msra.mxu0 %v8357
        %v8359 = vand.u32 %v7328, 4294901760
        %8360 = vmatmul.f32.gmra.mxu0 %v8359
        %v8361 = vpop.f32.mrf.mxu0
        %v8362 = vadd.f32 %v8253, %v8361
        %v8363 = vand.u32 %v7336, 4294901760
        %8364 = vmatmul.f32.gmra.mxu0 %v8363
        %v8365 = vpop.f32.mrf.mxu0
        %v8366 = vadd.f32 %v8261, %v8365
        %8367 = vdwg.mxu0
        %v8368 = vand.u32 %v7389, 4294901760
        %v8369 = vsub.f32 %v7389, %v8368
        %8370 = vmatpush.msra.mxu0 %v8369
        %v8371 = vand.u32 %v7388, 4294901760
        %v8372 = vsub.f32 %v7388, %v8371
        %8373 = vmatpush.msra.mxu0 %v8372
        %v8374 = vand.u32 %v7387, 4294901760
        %v8375 = vsub.f32 %v7387, %v8374
        %8376 = vmatpush.msra.mxu0 %v8375
        %v8377 = vand.u32 %v7386, 4294901760
        %v8378 = vsub.f32 %v7386, %v8377
        %8379 = vmatpush.msra.mxu0 %v8378
        %v8380 = vand.u32 %v7385, 4294901760
        %v8381 = vsub.f32 %v7385, %v8380
        %8382 = vmatpush.msra.mxu0 %v8381
        %v8383 = vand.u32 %v7384, 4294901760
        %v8384 = vsub.f32 %v7384, %v8383
        %8385 = vmatpush.msra.mxu0 %v8384
        %v8386 = vand.u32 %v7383, 4294901760
        %v8387 = vsub.f32 %v7383, %v8386
        %8388 = vmatpush.msra.mxu0 %v8387
        %v8389 = vand.u32 %v7382, 4294901760
        %v8390 = vsub.f32 %v7382, %v8389
        %8391 = vmatpush.msra.mxu0 %v8390
        %v8392 = vand.u32 %v7381, 4294901760
        %v8393 = vsub.f32 %v7381, %v8392
        %8394 = vmatpush.msra.mxu0 %v8393
        %v8395 = vand.u32 %v7380, 4294901760
        %v8396 = vsub.f32 %v7380, %v8395
        %8397 = vmatpush.msra.mxu0 %v8396
        %v8398 = vand.u32 %v7379, 4294901760
        %v8399 = vsub.f32 %v7379, %v8398
        %8400 = vmatpush.msra.mxu0 %v8399
        %v8401 = vand.u32 %v7378, 4294901760
        %v8402 = vsub.f32 %v7378, %v8401
        %8403 = vmatpush.msra.mxu0 %v8402
        %v8404 = vand.u32 %v7377, 4294901760
        %v8405 = vsub.f32 %v7377, %v8404
        %8406 = vmatpush.msra.mxu0 %v8405
        %v8407 = vand.u32 %v7376, 4294901760
        %v8408 = vsub.f32 %v7376, %v8407
        %8409 = vmatpush.msra.mxu0 %v8408
        %v8410 = vand.u32 %v7375, 4294901760
        %v8411 = vsub.f32 %v7375, %v8410
        %8412 = vmatpush.msra.mxu0 %v8411
        %v8413 = vand.u32 %v7374, 4294901760
        %v8414 = vsub.f32 %v7374, %v8413
        %8415 = vmatpush.msra.mxu0 %v8414
        %v8416 = vand.u32 %v7328, 4294901760
        %v8417 = vsub.f32 %v7328, %v8416
        %8418 = vmatmul.f32.gmra.mxu0 %v8417
        %v8419 = vpop.f32.mrf.mxu0
        %v8420 = vadd.f32 %v8362, %v8419
        %v8421 = vand.u32 %v7336, 4294901760
        %v8422 = vsub.f32 %v7336, %v8421
        %8423 = vmatmul.f32.gmra.mxu0 %v8422
        %v8424 = vpop.f32.mrf.mxu0
        %v8425 = vadd.f32 %v8366, %v8424
        %8426 = vdwg.mxu0
        %v8427 = vand.u32 %v7389, 4294901760
        %8428 = vmatpush.msra.mxu0 %v8427
        %v8429 = vand.u32 %v7388, 4294901760
        %8430 = vmatpush.msra.mxu0 %v8429
        %v8431 = vand.u32 %v7387, 4294901760
        %8432 = vmatpush.msra.mxu0 %v8431
        %v8433 = vand.u32 %v7386, 4294901760
        %8434 = vmatpush.msra.mxu0 %v8433
        %v8435 = vand.u32 %v7385, 4294901760
        %8436 = vmatpush.msra.mxu0 %v8435
        %v8437 = vand.u32 %v7384, 4294901760
        %8438 = vmatpush.msra.mxu0 %v8437
        %v8439 = vand.u32 %v7383, 4294901760
        %8440 = vmatpush.msra.mxu0 %v8439
        %v8441 = vand.u32 %v7382, 4294901760
        %8442 = vmatpush.msra.mxu0 %v8441
        %v8443 = vand.u32 %v7381, 4294901760
        %8444 = vmatpush.msra.mxu0 %v8443
        %v8445 = vand.u32 %v7380, 4294901760
        %8446 = vmatpush.msra.mxu0 %v8445
        %v8447 = vand.u32 %v7379, 4294901760
        %8448 = vmatpush.msra.mxu0 %v8447
        %v8449 = vand.u32 %v7378, 4294901760
        %8450 = vmatpush.msra.mxu0 %v8449
        %v8451 = vand.u32 %v7377, 4294901760
        %8452 = vmatpush.msra.mxu0 %v8451
        %v8453 = vand.u32 %v7376, 4294901760
        %8454 = vmatpush.msra.mxu0 %v8453
        %v8455 = vand.u32 %v7375, 4294901760
        %8456 = vmatpush.msra.mxu0 %v8455
        %v8457 = vand.u32 %v7374, 4294901760
        %8458 = vmatpush.msra.mxu0 %v8457
        %v8459 = vand.u32 %v7328, 4294901760
        %v8460 = vsub.f32 %v7328, %v8459
        %v8461 = vand.u32 %v8460, 4294901760
        %8462 = vmatmul.f32.gmra.mxu0 %v8461
        %v8463 = vpop.f32.mrf.mxu0
        %v8464 = vadd.f32 %v8420, %v8463
        %v8465 = vand.u32 %v7336, 4294901760
        %v8466 = vsub.f32 %v7336, %v8465
        %v8467 = vand.u32 %v8466, 4294901760
        %8468 = vmatmul.f32.gmra.mxu0 %v8467
        %v8469 = vpop.f32.mrf.mxu0
        %v8470 = vadd.f32 %v8425, %v8469
        %8471 = vdwg.mxu0
        %v8472 = vand.u32 %v7389, 4294901760
        %v8473 = vsub.f32 %v7389, %v8472
        %v8474 = vand.u32 %v8473, 4294901760
        %8475 = vmatpush.msra.mxu0 %v8474
        %v8476 = vand.u32 %v7388, 4294901760
        %v8477 = vsub.f32 %v7388, %v8476
        %v8478 = vand.u32 %v8477, 4294901760
        %8479 = vmatpush.msra.mxu0 %v8478
        %v8480 = vand.u32 %v7387, 4294901760
        %v8481 = vsub.f32 %v7387, %v8480
        %v8482 = vand.u32 %v8481, 4294901760
        %8483 = vmatpush.msra.mxu0 %v8482
        %v8484 = vand.u32 %v7386, 4294901760
        %v8485 = vsub.f32 %v7386, %v8484
        %v8486 = vand.u32 %v8485, 4294901760
        %8487 = vmatpush.msra.mxu0 %v8486
        %v8488 = vand.u32 %v7385, 4294901760
        %v8489 = vsub.f32 %v7385, %v8488
        %v8490 = vand.u32 %v8489, 4294901760
        %8491 = vmatpush.msra.mxu0 %v8490
        %v8492 = vand.u32 %v7384, 4294901760
        %v8493 = vsub.f32 %v7384, %v8492
        %v8494 = vand.u32 %v8493, 4294901760
        %8495 = vmatpush.msra.mxu0 %v8494
        %v8496 = vand.u32 %v7383, 4294901760
        %v8497 = vsub.f32 %v7383, %v8496
        %v8498 = vand.u32 %v8497, 4294901760
        %8499 = vmatpush.msra.mxu0 %v8498
        %v8500 = vand.u32 %v7382, 4294901760
        %v8501 = vsub.f32 %v7382, %v8500
        %v8502 = vand.u32 %v8501, 4294901760
        %8503 = vmatpush.msra.mxu0 %v8502
        %v8504 = vand.u32 %v7381, 4294901760
        %v8505 = vsub.f32 %v7381, %v8504
        %v8506 = vand.u32 %v8505, 4294901760
        %8507 = vmatpush.msra.mxu0 %v8506
        %v8508 = vand.u32 %v7380, 4294901760
        %v8509 = vsub.f32 %v7380, %v8508
        %v8510 = vand.u32 %v8509, 4294901760
        %8511 = vmatpush.msra.mxu0 %v8510
        %v8512 = vand.u32 %v7379, 4294901760
        %v8513 = vsub.f32 %v7379, %v8512
        %v8514 = vand.u32 %v8513, 4294901760
        %8515 = vmatpush.msra.mxu0 %v8514
        %v8516 = vand.u32 %v7378, 4294901760
        %v8517 = vsub.f32 %v7378, %v8516
        %v8518 = vand.u32 %v8517, 4294901760
        %8519 = vmatpush.msra.mxu0 %v8518
        %v8520 = vand.u32 %v7377, 4294901760
        %v8521 = vsub.f32 %v7377, %v8520
        %v8522 = vand.u32 %v8521, 4294901760
        %8523 = vmatpush.msra.mxu0 %v8522
        %v8524 = vand.u32 %v7376, 4294901760
        %v8525 = vsub.f32 %v7376, %v8524
        %v8526 = vand.u32 %v8525, 4294901760
        %8527 = vmatpush.msra.mxu0 %v8526
        %v8528 = vand.u32 %v7375, 4294901760
        %v8529 = vsub.f32 %v7375, %v8528
        %v8530 = vand.u32 %v8529, 4294901760
        %8531 = vmatpush.msra.mxu0 %v8530
        %v8532 = vand.u32 %v7374, 4294901760
        %v8533 = vsub.f32 %v7374, %v8532
        %v8534 = vand.u32 %v8533, 4294901760
        %8535 = vmatpush.msra.mxu0 %v8534
        %v8536 = vand.u32 %v7328, 4294901760
        %8537 = vmatmul.f32.gmra.mxu0 %v8536
        %v8538 = vpop.f32.mrf.mxu0
        %v8539 = vadd.f32 %v8464, %v8538
        %v8540 = vand.u32 %v7336, 4294901760
        %8541 = vmatmul.f32.gmra.mxu0 %v8540
        %v8542 = vpop.f32.mrf.mxu0
        %v8543 = vadd.f32 %v8470, %v8542
        %8544 = vdwg.mxu0
        %v8545 = vand.u32 %v7389, 4294901760
        %8546 = vmatpush.msra.mxu0 %v8545
        %v8547 = vand.u32 %v7388, 4294901760
        %8548 = vmatpush.msra.mxu0 %v8547
        %v8549 = vand.u32 %v7387, 4294901760
        %8550 = vmatpush.msra.mxu0 %v8549
        %v8551 = vand.u32 %v7386, 4294901760
        %8552 = vmatpush.msra.mxu0 %v8551
        %v8553 = vand.u32 %v7385, 4294901760
        %8554 = vmatpush.msra.mxu0 %v8553
        %v8555 = vand.u32 %v7384, 4294901760
        %8556 = vmatpush.msra.mxu0 %v8555
        %v8557 = vand.u32 %v7383, 4294901760
        %8558 = vmatpush.msra.mxu0 %v8557
        %v8559 = vand.u32 %v7382, 4294901760
        %8560 = vmatpush.msra.mxu0 %v8559
        %v8561 = vand.u32 %v7381, 4294901760
        %8562 = vmatpush.msra.mxu0 %v8561
        %v8563 = vand.u32 %v7380, 4294901760
        %8564 = vmatpush.msra.mxu0 %v8563
        %v8565 = vand.u32 %v7379, 4294901760
        %8566 = vmatpush.msra.mxu0 %v8565
        %v8567 = vand.u32 %v7378, 4294901760
        %8568 = vmatpush.msra.mxu0 %v8567
        %v8569 = vand.u32 %v7377, 4294901760
        %8570 = vmatpush.msra.mxu0 %v8569
        %v8571 = vand.u32 %v7376, 4294901760
        %8572 = vmatpush.msra.mxu0 %v8571
        %v8573 = vand.u32 %v7375, 4294901760
        %8574 = vmatpush.msra.mxu0 %v8573
        %v8575 = vand.u32 %v7374, 4294901760
        %8576 = vmatpush.msra.mxu0 %v8575
        %v8577 = vand.u32 %v7328, 4294901760
        %8578 = vmatmul.f32.gmra.mxu0 %v8577
        %v8579 = vpop.f32.mrf.mxu0
        %v8580 = vadd.f32 %v8539, %v8579
        %v8581 = vand.u32 %v7336, 4294901760
        %8582 = vmatmul.f32.gmra.mxu0 %v8581
        %v8583 = vpop.f32.mrf.mxu0
        %v8584 = vadd.f32 %v8543, %v8583
        %8585 = vdwg.mxu0
        %v8586 = vand.u32 %v7405, 4294901760
        %8587 = vmatpush.msra.mxu0 %v8586
        %v8588 = vand.u32 %v7404, 4294901760
        %8589 = vmatpush.msra.mxu0 %v8588
        %v8590 = vand.u32 %v7403, 4294901760
        %8591 = vmatpush.msra.mxu0 %v8590
        %v8592 = vand.u32 %v7402, 4294901760
        %8593 = vmatpush.msra.mxu0 %v8592
        %v8594 = vand.u32 %v7401, 4294901760
        %8595 = vmatpush.msra.mxu0 %v8594
        %v8596 = vand.u32 %v7400, 4294901760
        %8597 = vmatpush.msra.mxu0 %v8596
        %v8598 = vand.u32 %v7399, 4294901760
        %8599 = vmatpush.msra.mxu0 %v8598
        %v8600 = vand.u32 %v7398, 4294901760
        %8601 = vmatpush.msra.mxu0 %v8600
        %v8602 = vand.u32 %v7397, 4294901760
        %8603 = vmatpush.msra.mxu0 %v8602
        %v8604 = vand.u32 %v7396, 4294901760
        %8605 = vmatpush.msra.mxu0 %v8604
        %v8606 = vand.u32 %v7395, 4294901760
        %8607 = vmatpush.msra.mxu0 %v8606
        %v8608 = vand.u32 %v7394, 4294901760
        %8609 = vmatpush.msra.mxu0 %v8608
        %v8610 = vand.u32 %v7393, 4294901760
        %8611 = vmatpush.msra.mxu0 %v8610
        %v8612 = vand.u32 %v7392, 4294901760
        %8613 = vmatpush.msra.mxu0 %v8612
        %v8614 = vand.u32 %v7391, 4294901760
        %8615 = vmatpush.msra.mxu0 %v8614
        %v8616 = vand.u32 %v7390, 4294901760
        %8617 = vmatpush.msra.mxu0 %v8616
        %v8618 = vand.u32 %v7329, 4294901760
        %v8619 = vsub.f32 %v7329, %v8618
        %v8620 = vand.u32 %v8619, 4294901760
        %v8621 = vsub.f32 %v8619, %v8620
        %v8622 = vand.u32 %v8621, 4294901760
        %8623 = vmatmul.f32.gmra.mxu0 %v8622
        %v8624 = vpop.f32.mrf.mxu0
        %v8625 = vadd.f32 %v8580, %v8624
        %v8626 = vand.u32 %v7337, 4294901760
        %v8627 = vsub.f32 %v7337, %v8626
        %v8628 = vand.u32 %v8627, 4294901760
        %v8629 = vsub.f32 %v8627, %v8628
        %v8630 = vand.u32 %v8629, 4294901760
        %8631 = vmatmul.f32.gmra.mxu0 %v8630
        %v8632 = vpop.f32.mrf.mxu0
        %v8633 = vadd.f32 %v8584, %v8632
        %8634 = vdwg.mxu0
        %v8635 = vand.u32 %v7405, 4294901760
        %v8636 = vsub.f32 %v7405, %v8635
        %v8637 = vand.u32 %v8636, 4294901760
        %v8638 = vsub.f32 %v8636, %v8637
        %v8639 = vand.u32 %v8638, 4294901760
        %8640 = vmatpush.msra.mxu0 %v8639
        %v8641 = vand.u32 %v7404, 4294901760
        %v8642 = vsub.f32 %v7404, %v8641
        %v8643 = vand.u32 %v8642, 4294901760
        %v8644 = vsub.f32 %v8642, %v8643
        %v8645 = vand.u32 %v8644, 4294901760
        %8646 = vmatpush.msra.mxu0 %v8645
        %v8647 = vand.u32 %v7403, 4294901760
        %v8648 = vsub.f32 %v7403, %v8647
        %v8649 = vand.u32 %v8648, 4294901760
        %v8650 = vsub.f32 %v8648, %v8649
        %v8651 = vand.u32 %v8650, 4294901760
        %8652 = vmatpush.msra.mxu0 %v8651
        %v8653 = vand.u32 %v7402, 4294901760
        %v8654 = vsub.f32 %v7402, %v8653
        %v8655 = vand.u32 %v8654, 4294901760
        %v8656 = vsub.f32 %v8654, %v8655
        %v8657 = vand.u32 %v8656, 4294901760
        %8658 = vmatpush.msra.mxu0 %v8657
        %v8659 = vand.u32 %v7401, 4294901760
        %v8660 = vsub.f32 %v7401, %v8659
        %v8661 = vand.u32 %v8660, 4294901760
        %v8662 = vsub.f32 %v8660, %v8661
        %v8663 = vand.u32 %v8662, 4294901760
        %8664 = vmatpush.msra.mxu0 %v8663
        %v8665 = vand.u32 %v7400, 4294901760
        %v8666 = vsub.f32 %v7400, %v8665
        %v8667 = vand.u32 %v8666, 4294901760
        %v8668 = vsub.f32 %v8666, %v8667
        %v8669 = vand.u32 %v8668, 4294901760
        %8670 = vmatpush.msra.mxu0 %v8669
        %v8671 = vand.u32 %v7399, 4294901760
        %v8672 = vsub.f32 %v7399, %v8671
        %v8673 = vand.u32 %v8672, 4294901760
        %v8674 = vsub.f32 %v8672, %v8673
        %v8675 = vand.u32 %v8674, 4294901760
        %8676 = vmatpush.msra.mxu0 %v8675
        %v8677 = vand.u32 %v7398, 4294901760
        %v8678 = vsub.f32 %v7398, %v8677
        %v8679 = vand.u32 %v8678, 4294901760
        %v8680 = vsub.f32 %v8678, %v8679
        %v8681 = vand.u32 %v8680, 4294901760
        %8682 = vmatpush.msra.mxu0 %v8681
        %v8683 = vand.u32 %v7397, 4294901760
        %v8684 = vsub.f32 %v7397, %v8683
        %v8685 = vand.u32 %v8684, 4294901760
        %v8686 = vsub.f32 %v8684, %v8685
        %v8687 = vand.u32 %v8686, 4294901760
        %8688 = vmatpush.msra.mxu0 %v8687
        %v8689 = vand.u32 %v7396, 4294901760
        %v8690 = vsub.f32 %v7396, %v8689
        %v8691 = vand.u32 %v8690, 4294901760
        %v8692 = vsub.f32 %v8690, %v8691
        %v8693 = vand.u32 %v8692, 4294901760
        %8694 = vmatpush.msra.mxu0 %v8693
        %v8695 = vand.u32 %v7395, 4294901760
        %v8696 = vsub.f32 %v7395, %v8695
        %v8697 = vand.u32 %v8696, 4294901760
        %v8698 = vsub.f32 %v8696, %v8697
        %v8699 = vand.u32 %v8698, 4294901760
        %8700 = vmatpush.msra.mxu0 %v8699
        %v8701 = vand.u32 %v7394, 4294901760
        %v8702 = vsub.f32 %v7394, %v8701
        %v8703 = vand.u32 %v8702, 4294901760
        %v8704 = vsub.f32 %v8702, %v8703
        %v8705 = vand.u32 %v8704, 4294901760
        %8706 = vmatpush.msra.mxu0 %v8705
        %v8707 = vand.u32 %v7393, 4294901760
        %v8708 = vsub.f32 %v7393, %v8707
        %v8709 = vand.u32 %v8708, 4294901760
        %v8710 = vsub.f32 %v8708, %v8709
        %v8711 = vand.u32 %v8710, 4294901760
        %8712 = vmatpush.msra.mxu0 %v8711
        %v8713 = vand.u32 %v7392, 4294901760
        %v8714 = vsub.f32 %v7392, %v8713
        %v8715 = vand.u32 %v8714, 4294901760
        %v8716 = vsub.f32 %v8714, %v8715
        %v8717 = vand.u32 %v8716, 4294901760
        %8718 = vmatpush.msra.mxu0 %v8717
        %v8719 = vand.u32 %v7391, 4294901760
        %v8720 = vsub.f32 %v7391, %v8719
        %v8721 = vand.u32 %v8720, 4294901760
        %v8722 = vsub.f32 %v8720, %v8721
        %v8723 = vand.u32 %v8722, 4294901760
        %8724 = vmatpush.msra.mxu0 %v8723
        %v8725 = vand.u32 %v7390, 4294901760
        %v8726 = vsub.f32 %v7390, %v8725
        %v8727 = vand.u32 %v8726, 4294901760
        %v8728 = vsub.f32 %v8726, %v8727
        %v8729 = vand.u32 %v8728, 4294901760
        %8730 = vmatpush.msra.mxu0 %v8729
        %v8731 = vand.u32 %v7329, 4294901760
        %8732 = vmatmul.f32.gmra.mxu0 %v8731
        %v8733 = vpop.f32.mrf.mxu0
        %v8734 = vadd.f32 %v8625, %v8733
        %v8735 = vand.u32 %v7337, 4294901760
        %8736 = vmatmul.f32.gmra.mxu0 %v8735
        %v8737 = vpop.f32.mrf.mxu0
        %v8738 = vadd.f32 %v8633, %v8737
        %8739 = vdwg.mxu0
        %v8740 = vand.u32 %v7405, 4294901760
        %v8741 = vsub.f32 %v7405, %v8740
        %8742 = vmatpush.msra.mxu0 %v8741
        %v8743 = vand.u32 %v7404, 4294901760
        %v8744 = vsub.f32 %v7404, %v8743
        %8745 = vmatpush.msra.mxu0 %v8744
        %v8746 = vand.u32 %v7403, 4294901760
        %v8747 = vsub.f32 %v7403, %v8746
        %8748 = vmatpush.msra.mxu0 %v8747
        %v8749 = vand.u32 %v7402, 4294901760
        %v8750 = vsub.f32 %v7402, %v8749
        %8751 = vmatpush.msra.mxu0 %v8750
        %v8752 = vand.u32 %v7401, 4294901760
        %v8753 = vsub.f32 %v7401, %v8752
        %8754 = vmatpush.msra.mxu0 %v8753
        %v8755 = vand.u32 %v7400, 4294901760
        %v8756 = vsub.f32 %v7400, %v8755
        %8757 = vmatpush.msra.mxu0 %v8756
        %v8758 = vand.u32 %v7399, 4294901760
        %v8759 = vsub.f32 %v7399, %v8758
        %8760 = vmatpush.msra.mxu0 %v8759
        %v8761 = vand.u32 %v7398, 4294901760
        %v8762 = vsub.f32 %v7398, %v8761
        %8763 = vmatpush.msra.mxu0 %v8762
        %v8764 = vand.u32 %v7397, 4294901760
        %v8765 = vsub.f32 %v7397, %v8764
        %8766 = vmatpush.msra.mxu0 %v8765
        %v8767 = vand.u32 %v7396, 4294901760
        %v8768 = vsub.f32 %v7396, %v8767
        %8769 = vmatpush.msra.mxu0 %v8768
        %v8770 = vand.u32 %v7395, 4294901760
        %v8771 = vsub.f32 %v7395, %v8770
        %8772 = vmatpush.msra.mxu0 %v8771
        %v8773 = vand.u32 %v7394, 4294901760
        %v8774 = vsub.f32 %v7394, %v8773
        %8775 = vmatpush.msra.mxu0 %v8774
        %v8776 = vand.u32 %v7393, 4294901760
        %v8777 = vsub.f32 %v7393, %v8776
        %8778 = vmatpush.msra.mxu0 %v8777
        %v8779 = vand.u32 %v7392, 4294901760
        %v8780 = vsub.f32 %v7392, %v8779
        %8781 = vmatpush.msra.mxu0 %v8780
        %v8782 = vand.u32 %v7391, 4294901760
        %v8783 = vsub.f32 %v7391, %v8782
        %8784 = vmatpush.msra.mxu0 %v8783
        %v8785 = vand.u32 %v7390, 4294901760
        %v8786 = vsub.f32 %v7390, %v8785
        %8787 = vmatpush.msra.mxu0 %v8786
        %v8788 = vand.u32 %v7329, 4294901760
        %v8789 = vsub.f32 %v7329, %v8788
        %8790 = vmatmul.f32.gmra.mxu0 %v8789
        %v8791 = vpop.f32.mrf.mxu0
        %v8792 = vadd.f32 %v8734, %v8791
        %v8793 = vand.u32 %v7337, 4294901760
        %v8794 = vsub.f32 %v7337, %v8793
        %8795 = vmatmul.f32.gmra.mxu0 %v8794
        %v8796 = vpop.f32.mrf.mxu0
        %v8797 = vadd.f32 %v8738, %v8796
        %8798 = vdwg.mxu0
        %v8799 = vand.u32 %v7405, 4294901760
        %8800 = vmatpush.msra.mxu0 %v8799
        %v8801 = vand.u32 %v7404, 4294901760
        %8802 = vmatpush.msra.mxu0 %v8801
        %v8803 = vand.u32 %v7403, 4294901760
        %8804 = vmatpush.msra.mxu0 %v8803
        %v8805 = vand.u32 %v7402, 4294901760
        %8806 = vmatpush.msra.mxu0 %v8805
        %v8807 = vand.u32 %v7401, 4294901760
        %8808 = vmatpush.msra.mxu0 %v8807
        %v8809 = vand.u32 %v7400, 4294901760
        %8810 = vmatpush.msra.mxu0 %v8809
        %v8811 = vand.u32 %v7399, 4294901760
        %8812 = vmatpush.msra.mxu0 %v8811
        %v8813 = vand.u32 %v7398, 4294901760
        %8814 = vmatpush.msra.mxu0 %v8813
        %v8815 = vand.u32 %v7397, 4294901760
        %8816 = vmatpush.msra.mxu0 %v8815
        %v8817 = vand.u32 %v7396, 4294901760
        %8818 = vmatpush.msra.mxu0 %v8817
        %v8819 = vand.u32 %v7395, 4294901760
        %8820 = vmatpush.msra.mxu0 %v8819
        %v8821 = vand.u32 %v7394, 4294901760
        %8822 = vmatpush.msra.mxu0 %v8821
        %v8823 = vand.u32 %v7393, 4294901760
        %8824 = vmatpush.msra.mxu0 %v8823
        %v8825 = vand.u32 %v7392, 4294901760
        %8826 = vmatpush.msra.mxu0 %v8825
        %v8827 = vand.u32 %v7391, 4294901760
        %8828 = vmatpush.msra.mxu0 %v8827
        %v8829 = vand.u32 %v7390, 4294901760
        %8830 = vmatpush.msra.mxu0 %v8829
        %v8831 = vand.u32 %v7329, 4294901760
        %v8832 = vsub.f32 %v7329, %v8831
        %v8833 = vand.u32 %v8832, 4294901760
        %8834 = vmatmul.f32.gmra.mxu0 %v8833
        %v8835 = vpop.f32.mrf.mxu0
        %v8836 = vadd.f32 %v8792, %v8835
        %v8837 = vand.u32 %v7337, 4294901760
        %v8838 = vsub.f32 %v7337, %v8837
        %v8839 = vand.u32 %v8838, 4294901760
        %8840 = vmatmul.f32.gmra.mxu0 %v8839
        %v8841 = vpop.f32.mrf.mxu0
        %v8842 = vadd.f32 %v8797, %v8841
        %8843 = vdwg.mxu0
        %v8844 = vand.u32 %v7405, 4294901760
        %v8845 = vsub.f32 %v7405, %v8844
        %v8846 = vand.u32 %v8845, 4294901760
        %8847 = vmatpush.msra.mxu0 %v8846
        %v8848 = vand.u32 %v7404, 4294901760
        %v8849 = vsub.f32 %v7404, %v8848
        %v8850 = vand.u32 %v8849, 4294901760
        %8851 = vmatpush.msra.mxu0 %v8850
        %v8852 = vand.u32 %v7403, 4294901760
        %v8853 = vsub.f32 %v7403, %v8852
        %v8854 = vand.u32 %v8853, 4294901760
        %8855 = vmatpush.msra.mxu0 %v8854
        %v8856 = vand.u32 %v7402, 4294901760
        %v8857 = vsub.f32 %v7402, %v8856
        %v8858 = vand.u32 %v8857, 4294901760
        %8859 = vmatpush.msra.mxu0 %v8858
        %v8860 = vand.u32 %v7401, 4294901760
        %v8861 = vsub.f32 %v7401, %v8860
        %v8862 = vand.u32 %v8861, 4294901760
        %8863 = vmatpush.msra.mxu0 %v8862
        %v8864 = vand.u32 %v7400, 4294901760
        %v8865 = vsub.f32 %v7400, %v8864
        %v8866 = vand.u32 %v8865, 4294901760
        %8867 = vmatpush.msra.mxu0 %v8866
        %v8868 = vand.u32 %v7399, 4294901760
        %v8869 = vsub.f32 %v7399, %v8868
        %v8870 = vand.u32 %v8869, 4294901760
        %8871 = vmatpush.msra.mxu0 %v8870
        %v8872 = vand.u32 %v7398, 4294901760
        %v8873 = vsub.f32 %v7398, %v8872
        %v8874 = vand.u32 %v8873, 4294901760
        %8875 = vmatpush.msra.mxu0 %v8874
        %v8876 = vand.u32 %v7397, 4294901760
        %v8877 = vsub.f32 %v7397, %v8876
        %v8878 = vand.u32 %v8877, 4294901760
        %8879 = vmatpush.msra.mxu0 %v8878
        %v8880 = vand.u32 %v7396, 4294901760
        %v8881 = vsub.f32 %v7396, %v8880
        %v8882 = vand.u32 %v8881, 4294901760
        %8883 = vmatpush.msra.mxu0 %v8882
        %v8884 = vand.u32 %v7395, 4294901760
        %v8885 = vsub.f32 %v7395, %v8884
        %v8886 = vand.u32 %v8885, 4294901760
        %8887 = vmatpush.msra.mxu0 %v8886
        %v8888 = vand.u32 %v7394, 4294901760
        %v8889 = vsub.f32 %v7394, %v8888
        %v8890 = vand.u32 %v8889, 4294901760
        %8891 = vmatpush.msra.mxu0 %v8890
        %v8892 = vand.u32 %v7393, 4294901760
        %v8893 = vsub.f32 %v7393, %v8892
        %v8894 = vand.u32 %v8893, 4294901760
        %8895 = vmatpush.msra.mxu0 %v8894
        %v8896 = vand.u32 %v7392, 4294901760
        %v8897 = vsub.f32 %v7392, %v8896
        %v8898 = vand.u32 %v8897, 4294901760
        %8899 = vmatpush.msra.mxu0 %v8898
        %v8900 = vand.u32 %v7391, 4294901760
        %v8901 = vsub.f32 %v7391, %v8900
        %v8902 = vand.u32 %v8901, 4294901760
        %8903 = vmatpush.msra.mxu0 %v8902
        %v8904 = vand.u32 %v7390, 4294901760
        %v8905 = vsub.f32 %v7390, %v8904
        %v8906 = vand.u32 %v8905, 4294901760
        %8907 = vmatpush.msra.mxu0 %v8906
        %v8908 = vand.u32 %v7329, 4294901760
        %8909 = vmatmul.f32.gmra.mxu0 %v8908
        %v8910 = vpop.f32.mrf.mxu0
        %v8911 = vadd.f32 %v8836, %v8910
        %v8912 = vand.u32 %v7337, 4294901760
        %8913 = vmatmul.f32.gmra.mxu0 %v8912
        %v8914 = vpop.f32.mrf.mxu0
        %v8915 = vadd.f32 %v8842, %v8914
        %8916 = vdwg.mxu0
        %v8917 = vand.u32 %v7405, 4294901760
        %8918 = vmatpush.msra.mxu0 %v8917
        %v8919 = vand.u32 %v7404, 4294901760
        %8920 = vmatpush.msra.mxu0 %v8919
        %v8921 = vand.u32 %v7403, 4294901760
        %8922 = vmatpush.msra.mxu0 %v8921
        %v8923 = vand.u32 %v7402, 4294901760
        %8924 = vmatpush.msra.mxu0 %v8923
        %v8925 = vand.u32 %v7401, 4294901760
        %8926 = vmatpush.msra.mxu0 %v8925
        %v8927 = vand.u32 %v7400, 4294901760
        %8928 = vmatpush.msra.mxu0 %v8927
        %v8929 = vand.u32 %v7399, 4294901760
        %8930 = vmatpush.msra.mxu0 %v8929
        %v8931 = vand.u32 %v7398, 4294901760
        %8932 = vmatpush.msra.mxu0 %v8931
        %v8933 = vand.u32 %v7397, 4294901760
        %8934 = vmatpush.msra.mxu0 %v8933
        %v8935 = vand.u32 %v7396, 4294901760
        %8936 = vmatpush.msra.mxu0 %v8935
        %v8937 = vand.u32 %v7395, 4294901760
        %8938 = vmatpush.msra.mxu0 %v8937
        %v8939 = vand.u32 %v7394, 4294901760
        %8940 = vmatpush.msra.mxu0 %v8939
        %v8941 = vand.u32 %v7393, 4294901760
        %8942 = vmatpush.msra.mxu0 %v8941
        %v8943 = vand.u32 %v7392, 4294901760
        %8944 = vmatpush.msra.mxu0 %v8943
        %v8945 = vand.u32 %v7391, 4294901760
        %8946 = vmatpush.msra.mxu0 %v8945
        %v8947 = vand.u32 %v7390, 4294901760
        %8948 = vmatpush.msra.mxu0 %v8947
        %v8949 = vand.u32 %v7329, 4294901760
        %8950 = vmatmul.f32.gmra.mxu0 %v8949
        %v8951 = vpop.f32.mrf.mxu0
        %v8952 = vadd.f32 %v8911, %v8951
        %v8953 = vand.u32 %v7337, 4294901760
        %8954 = vmatmul.f32.gmra.mxu0 %v8953
        %v8955 = vpop.f32.mrf.mxu0
        %v8956 = vadd.f32 %v8915, %v8955
        %8957 = vdwg.mxu0
        %v8958 = vand.u32 %v7421, 4294901760
        %8959 = vmatpush.msra.mxu0 %v8958
        %v8960 = vand.u32 %v7420, 4294901760
        %8961 = vmatpush.msra.mxu0 %v8960
        %v8962 = vand.u32 %v7419, 4294901760
        %8963 = vmatpush.msra.mxu0 %v8962
        %v8964 = vand.u32 %v7418, 4294901760
        %8965 = vmatpush.msra.mxu0 %v8964
        %v8966 = vand.u32 %v7417, 4294901760
        %8967 = vmatpush.msra.mxu0 %v8966
        %v8968 = vand.u32 %v7416, 4294901760
        %8969 = vmatpush.msra.mxu0 %v8968
        %v8970 = vand.u32 %v7415, 4294901760
        %8971 = vmatpush.msra.mxu0 %v8970
        %v8972 = vand.u32 %v7414, 4294901760
        %8973 = vmatpush.msra.mxu0 %v8972
        %v8974 = vand.u32 %v7413, 4294901760
        %8975 = vmatpush.msra.mxu0 %v8974
        %v8976 = vand.u32 %v7412, 4294901760
        %8977 = vmatpush.msra.mxu0 %v8976
        %v8978 = vand.u32 %v7411, 4294901760
        %8979 = vmatpush.msra.mxu0 %v8978
        %v8980 = vand.u32 %v7410, 4294901760
        %8981 = vmatpush.msra.mxu0 %v8980
        %v8982 = vand.u32 %v7409, 4294901760
        %8983 = vmatpush.msra.mxu0 %v8982
        %v8984 = vand.u32 %v7408, 4294901760
        %8985 = vmatpush.msra.mxu0 %v8984
        %v8986 = vand.u32 %v7407, 4294901760
        %8987 = vmatpush.msra.mxu0 %v8986
        %v8988 = vand.u32 %v7406, 4294901760
        %8989 = vmatpush.msra.mxu0 %v8988
        %v8990 = vand.u32 %v7330, 4294901760
        %v8991 = vsub.f32 %v7330, %v8990
        %v8992 = vand.u32 %v8991, 4294901760
        %v8993 = vsub.f32 %v8991, %v8992
        %v8994 = vand.u32 %v8993, 4294901760
        %8995 = vmatmul.f32.gmra.mxu0 %v8994
        %v8996 = vpop.f32.mrf.mxu0
        %v8997 = vadd.f32 %v8952, %v8996
        %v8998 = vand.u32 %v7338, 4294901760
        %v8999 = vsub.f32 %v7338, %v8998
        %v9000 = vand.u32 %v8999, 4294901760
        %v9001 = vsub.f32 %v8999, %v9000
        %v9002 = vand.u32 %v9001, 4294901760
        %9003 = vmatmul.f32.gmra.mxu0 %v9002
        %v9004 = vpop.f32.mrf.mxu0
        %v9005 = vadd.f32 %v8956, %v9004
        %9006 = vdwg.mxu0
        %v9007 = vand.u32 %v7421, 4294901760
        %v9008 = vsub.f32 %v7421, %v9007
        %v9009 = vand.u32 %v9008, 4294901760
        %v9010 = vsub.f32 %v9008, %v9009
        %v9011 = vand.u32 %v9010, 4294901760
        %9012 = vmatpush.msra.mxu0 %v9011
        %v9013 = vand.u32 %v7420, 4294901760
        %v9014 = vsub.f32 %v7420, %v9013
        %v9015 = vand.u32 %v9014, 4294901760
        %v9016 = vsub.f32 %v9014, %v9015
        %v9017 = vand.u32 %v9016, 4294901760
        %9018 = vmatpush.msra.mxu0 %v9017
        %v9019 = vand.u32 %v7419, 4294901760
        %v9020 = vsub.f32 %v7419, %v9019
        %v9021 = vand.u32 %v9020, 4294901760
        %v9022 = vsub.f32 %v9020, %v9021
        %v9023 = vand.u32 %v9022, 4294901760
        %9024 = vmatpush.msra.mxu0 %v9023
        %v9025 = vand.u32 %v7418, 4294901760
        %v9026 = vsub.f32 %v7418, %v9025
        %v9027 = vand.u32 %v9026, 4294901760
        %v9028 = vsub.f32 %v9026, %v9027
        %v9029 = vand.u32 %v9028, 4294901760
        %9030 = vmatpush.msra.mxu0 %v9029
        %v9031 = vand.u32 %v7417, 4294901760
        %v9032 = vsub.f32 %v7417, %v9031
        %v9033 = vand.u32 %v9032, 4294901760
        %v9034 = vsub.f32 %v9032, %v9033
        %v9035 = vand.u32 %v9034, 4294901760
        %9036 = vmatpush.msra.mxu0 %v9035
        %v9037 = vand.u32 %v7416, 4294901760
        %v9038 = vsub.f32 %v7416, %v9037
        %v9039 = vand.u32 %v9038, 4294901760
        %v9040 = vsub.f32 %v9038, %v9039
        %v9041 = vand.u32 %v9040, 4294901760
        %9042 = vmatpush.msra.mxu0 %v9041
        %v9043 = vand.u32 %v7415, 4294901760
        %v9044 = vsub.f32 %v7415, %v9043
        %v9045 = vand.u32 %v9044, 4294901760
        %v9046 = vsub.f32 %v9044, %v9045
        %v9047 = vand.u32 %v9046, 4294901760
        %9048 = vmatpush.msra.mxu0 %v9047
        %v9049 = vand.u32 %v7414, 4294901760
        %v9050 = vsub.f32 %v7414, %v9049
        %v9051 = vand.u32 %v9050, 4294901760
        %v9052 = vsub.f32 %v9050, %v9051
        %v9053 = vand.u32 %v9052, 4294901760
        %9054 = vmatpush.msra.mxu0 %v9053
        %v9055 = vand.u32 %v7413, 4294901760
        %v9056 = vsub.f32 %v7413, %v9055
        %v9057 = vand.u32 %v9056, 4294901760
        %v9058 = vsub.f32 %v9056, %v9057
        %v9059 = vand.u32 %v9058, 4294901760
        %9060 = vmatpush.msra.mxu0 %v9059
        %v9061 = vand.u32 %v7412, 4294901760
        %v9062 = vsub.f32 %v7412, %v9061
        %v9063 = vand.u32 %v9062, 4294901760
        %v9064 = vsub.f32 %v9062, %v9063
        %v9065 = vand.u32 %v9064, 4294901760
        %9066 = vmatpush.msra.mxu0 %v9065
        %v9067 = vand.u32 %v7411, 4294901760
        %v9068 = vsub.f32 %v7411, %v9067
        %v9069 = vand.u32 %v9068, 4294901760
        %v9070 = vsub.f32 %v9068, %v9069
        %v9071 = vand.u32 %v9070, 4294901760
        %9072 = vmatpush.msra.mxu0 %v9071
        %v9073 = vand.u32 %v7410, 4294901760
        %v9074 = vsub.f32 %v7410, %v9073
        %v9075 = vand.u32 %v9074, 4294901760
        %v9076 = vsub.f32 %v9074, %v9075
        %v9077 = vand.u32 %v9076, 4294901760
        %9078 = vmatpush.msra.mxu0 %v9077
        %v9079 = vand.u32 %v7409, 4294901760
        %v9080 = vsub.f32 %v7409, %v9079
        %v9081 = vand.u32 %v9080, 4294901760
        %v9082 = vsub.f32 %v9080, %v9081
        %v9083 = vand.u32 %v9082, 4294901760
        %9084 = vmatpush.msra.mxu0 %v9083
        %v9085 = vand.u32 %v7408, 4294901760
        %v9086 = vsub.f32 %v7408, %v9085
        %v9087 = vand.u32 %v9086, 4294901760
        %v9088 = vsub.f32 %v9086, %v9087
        %v9089 = vand.u32 %v9088, 4294901760
        %9090 = vmatpush.msra.mxu0 %v9089
        %v9091 = vand.u32 %v7407, 4294901760
        %v9092 = vsub.f32 %v7407, %v9091
        %v9093 = vand.u32 %v9092, 4294901760
        %v9094 = vsub.f32 %v9092, %v9093
        %v9095 = vand.u32 %v9094, 4294901760
        %9096 = vmatpush.msra.mxu0 %v9095
        %v9097 = vand.u32 %v7406, 4294901760
        %v9098 = vsub.f32 %v7406, %v9097
        %v9099 = vand.u32 %v9098, 4294901760
        %v9100 = vsub.f32 %v9098, %v9099
        %v9101 = vand.u32 %v9100, 4294901760
        %9102 = vmatpush.msra.mxu0 %v9101
        %v9103 = vand.u32 %v7330, 4294901760
        %9104 = vmatmul.f32.gmra.mxu0 %v9103
        %v9105 = vpop.f32.mrf.mxu0
        %v9106 = vadd.f32 %v8997, %v9105
        %v9107 = vand.u32 %v7338, 4294901760
        %9108 = vmatmul.f32.gmra.mxu0 %v9107
        %v9109 = vpop.f32.mrf.mxu0
        %v9110 = vadd.f32 %v9005, %v9109
        %9111 = vdwg.mxu0
        %v9112 = vand.u32 %v7421, 4294901760
        %v9113 = vsub.f32 %v7421, %v9112
        %9114 = vmatpush.msra.mxu0 %v9113
        %v9115 = vand.u32 %v7420, 4294901760
        %v9116 = vsub.f32 %v7420, %v9115
        %9117 = vmatpush.msra.mxu0 %v9116
        %v9118 = vand.u32 %v7419, 4294901760
        %v9119 = vsub.f32 %v7419, %v9118
        %9120 = vmatpush.msra.mxu0 %v9119
        %v9121 = vand.u32 %v7418, 4294901760
        %v9122 = vsub.f32 %v7418, %v9121
        %9123 = vmatpush.msra.mxu0 %v9122
        %v9124 = vand.u32 %v7417, 4294901760
        %v9125 = vsub.f32 %v7417, %v9124
        %9126 = vmatpush.msra.mxu0 %v9125
        %v9127 = vand.u32 %v7416, 4294901760
        %v9128 = vsub.f32 %v7416, %v9127
        %9129 = vmatpush.msra.mxu0 %v9128
        %v9130 = vand.u32 %v7415, 4294901760
        %v9131 = vsub.f32 %v7415, %v9130
        %9132 = vmatpush.msra.mxu0 %v9131
        %v9133 = vand.u32 %v7414, 4294901760
        %v9134 = vsub.f32 %v7414, %v9133
        %9135 = vmatpush.msra.mxu0 %v9134
        %v9136 = vand.u32 %v7413, 4294901760
        %v9137 = vsub.f32 %v7413, %v9136
        %9138 = vmatpush.msra.mxu0 %v9137
        %v9139 = vand.u32 %v7412, 4294901760
        %v9140 = vsub.f32 %v7412, %v9139
        %9141 = vmatpush.msra.mxu0 %v9140
        %v9142 = vand.u32 %v7411, 4294901760
        %v9143 = vsub.f32 %v7411, %v9142
        %9144 = vmatpush.msra.mxu0 %v9143
        %v9145 = vand.u32 %v7410, 4294901760
        %v9146 = vsub.f32 %v7410, %v9145
        %9147 = vmatpush.msra.mxu0 %v9146
        %v9148 = vand.u32 %v7409, 4294901760
        %v9149 = vsub.f32 %v7409, %v9148
        %9150 = vmatpush.msra.mxu0 %v9149
        %v9151 = vand.u32 %v7408, 4294901760
        %v9152 = vsub.f32 %v7408, %v9151
        %9153 = vmatpush.msra.mxu0 %v9152
        %v9154 = vand.u32 %v7407, 4294901760
        %v9155 = vsub.f32 %v7407, %v9154
        %9156 = vmatpush.msra.mxu0 %v9155
        %v9157 = vand.u32 %v7406, 4294901760
        %v9158 = vsub.f32 %v7406, %v9157
        %9159 = vmatpush.msra.mxu0 %v9158
        %v9160 = vand.u32 %v7330, 4294901760
        %v9161 = vsub.f32 %v7330, %v9160
        %9162 = vmatmul.f32.gmra.mxu0 %v9161
        %v9163 = vpop.f32.mrf.mxu0
        %v9164 = vadd.f32 %v9106, %v9163
        %v9165 = vand.u32 %v7338, 4294901760
        %v9166 = vsub.f32 %v7338, %v9165
        %9167 = vmatmul.f32.gmra.mxu0 %v9166
        %v9168 = vpop.f32.mrf.mxu0
        %v9169 = vadd.f32 %v9110, %v9168
        %9170 = vdwg.mxu0
        %v9171 = vand.u32 %v7421, 4294901760
        %9172 = vmatpush.msra.mxu0 %v9171
        %v9173 = vand.u32 %v7420, 4294901760
        %9174 = vmatpush.msra.mxu0 %v9173
        %v9175 = vand.u32 %v7419, 4294901760
        %9176 = vmatpush.msra.mxu0 %v9175
        %v9177 = vand.u32 %v7418, 4294901760
        %9178 = vmatpush.msra.mxu0 %v9177
        %v9179 = vand.u32 %v7417, 4294901760
        %9180 = vmatpush.msra.mxu0 %v9179
        %v9181 = vand.u32 %v7416, 4294901760
        %9182 = vmatpush.msra.mxu0 %v9181
        %v9183 = vand.u32 %v7415, 4294901760
        %9184 = vmatpush.msra.mxu0 %v9183
        %v9185 = vand.u32 %v7414, 4294901760
        %9186 = vmatpush.msra.mxu0 %v9185
        %v9187 = vand.u32 %v7413, 4294901760
        %9188 = vmatpush.msra.mxu0 %v9187
        %v9189 = vand.u32 %v7412, 4294901760
        %9190 = vmatpush.msra.mxu0 %v9189
        %v9191 = vand.u32 %v7411, 4294901760
        %9192 = vmatpush.msra.mxu0 %v9191
        %v9193 = vand.u32 %v7410, 4294901760
        %9194 = vmatpush.msra.mxu0 %v9193
        %v9195 = vand.u32 %v7409, 4294901760
        %9196 = vmatpush.msra.mxu0 %v9195
        %v9197 = vand.u32 %v7408, 4294901760
        %9198 = vmatpush.msra.mxu0 %v9197
        %v9199 = vand.u32 %v7407, 4294901760
        %9200 = vmatpush.msra.mxu0 %v9199
        %v9201 = vand.u32 %v7406, 4294901760
        %9202 = vmatpush.msra.mxu0 %v9201
        %v9203 = vand.u32 %v7330, 4294901760
        %v9204 = vsub.f32 %v7330, %v9203
        %v9205 = vand.u32 %v9204, 4294901760
        %9206 = vmatmul.f32.gmra.mxu0 %v9205
        %v9207 = vpop.f32.mrf.mxu0
        %v9208 = vadd.f32 %v9164, %v9207
        %v9209 = vand.u32 %v7338, 4294901760
        %v9210 = vsub.f32 %v7338, %v9209
        %v9211 = vand.u32 %v9210, 4294901760
        %9212 = vmatmul.f32.gmra.mxu0 %v9211
        %v9213 = vpop.f32.mrf.mxu0
        %v9214 = vadd.f32 %v9169, %v9213
        %9215 = vdwg.mxu0
        %v9216 = vand.u32 %v7421, 4294901760
        %v9217 = vsub.f32 %v7421, %v9216
        %v9218 = vand.u32 %v9217, 4294901760
        %9219 = vmatpush.msra.mxu0 %v9218
        %v9220 = vand.u32 %v7420, 4294901760
        %v9221 = vsub.f32 %v7420, %v9220
        %v9222 = vand.u32 %v9221, 4294901760
        %9223 = vmatpush.msra.mxu0 %v9222
        %v9224 = vand.u32 %v7419, 4294901760
        %v9225 = vsub.f32 %v7419, %v9224
        %v9226 = vand.u32 %v9225, 4294901760
        %9227 = vmatpush.msra.mxu0 %v9226
        %v9228 = vand.u32 %v7418, 4294901760
        %v9229 = vsub.f32 %v7418, %v9228
        %v9230 = vand.u32 %v9229, 4294901760
        %9231 = vmatpush.msra.mxu0 %v9230
        %v9232 = vand.u32 %v7417, 4294901760
        %v9233 = vsub.f32 %v7417, %v9232
        %v9234 = vand.u32 %v9233, 4294901760
        %9235 = vmatpush.msra.mxu0 %v9234
        %v9236 = vand.u32 %v7416, 4294901760
        %v9237 = vsub.f32 %v7416, %v9236
        %v9238 = vand.u32 %v9237, 4294901760
        %9239 = vmatpush.msra.mxu0 %v9238
        %v9240 = vand.u32 %v7415, 4294901760
        %v9241 = vsub.f32 %v7415, %v9240
        %v9242 = vand.u32 %v9241, 4294901760
        %9243 = vmatpush.msra.mxu0 %v9242
        %v9244 = vand.u32 %v7414, 4294901760
        %v9245 = vsub.f32 %v7414, %v9244
        %v9246 = vand.u32 %v9245, 4294901760
        %9247 = vmatpush.msra.mxu0 %v9246
        %v9248 = vand.u32 %v7413, 4294901760
        %v9249 = vsub.f32 %v7413, %v9248
        %v9250 = vand.u32 %v9249, 4294901760
        %9251 = vmatpush.msra.mxu0 %v9250
        %v9252 = vand.u32 %v7412, 4294901760
        %v9253 = vsub.f32 %v7412, %v9252
        %v9254 = vand.u32 %v9253, 4294901760
        %9255 = vmatpush.msra.mxu0 %v9254
        %v9256 = vand.u32 %v7411, 4294901760
        %v9257 = vsub.f32 %v7411, %v9256
        %v9258 = vand.u32 %v9257, 4294901760
        %9259 = vmatpush.msra.mxu0 %v9258
        %v9260 = vand.u32 %v7410, 4294901760
        %v9261 = vsub.f32 %v7410, %v9260
        %v9262 = vand.u32 %v9261, 4294901760
        %9263 = vmatpush.msra.mxu0 %v9262
        %v9264 = vand.u32 %v7409, 4294901760
        %v9265 = vsub.f32 %v7409, %v9264
        %v9266 = vand.u32 %v9265, 4294901760
        %9267 = vmatpush.msra.mxu0 %v9266
        %v9268 = vand.u32 %v7408, 4294901760
        %v9269 = vsub.f32 %v7408, %v9268
        %v9270 = vand.u32 %v9269, 4294901760
        %9271 = vmatpush.msra.mxu0 %v9270
        %v9272 = vand.u32 %v7407, 4294901760
        %v9273 = vsub.f32 %v7407, %v9272
        %v9274 = vand.u32 %v9273, 4294901760
        %9275 = vmatpush.msra.mxu0 %v9274
        %v9276 = vand.u32 %v7406, 4294901760
        %v9277 = vsub.f32 %v7406, %v9276
        %v9278 = vand.u32 %v9277, 4294901760
        %9279 = vmatpush.msra.mxu0 %v9278
        %v9280 = vand.u32 %v7330, 4294901760
        %9281 = vmatmul.f32.gmra.mxu0 %v9280
        %v9282 = vpop.f32.mrf.mxu0
        %v9283 = vadd.f32 %v9208, %v9282
        %v9284 = vand.u32 %v7338, 4294901760
        %9285 = vmatmul.f32.gmra.mxu0 %v9284
        %v9286 = vpop.f32.mrf.mxu0
        %v9287 = vadd.f32 %v9214, %v9286
        %9288 = vdwg.mxu0
        %v9289 = vand.u32 %v7421, 4294901760
        %9290 = vmatpush.msra.mxu0 %v9289
        %v9291 = vand.u32 %v7420, 4294901760
        %9292 = vmatpush.msra.mxu0 %v9291
        %v9293 = vand.u32 %v7419, 4294901760
        %9294 = vmatpush.msra.mxu0 %v9293
        %v9295 = vand.u32 %v7418, 4294901760
        %9296 = vmatpush.msra.mxu0 %v9295
        %v9297 = vand.u32 %v7417, 4294901760
        %9298 = vmatpush.msra.mxu0 %v9297
        %v9299 = vand.u32 %v7416, 4294901760
        %9300 = vmatpush.msra.mxu0 %v9299
        %v9301 = vand.u32 %v7415, 4294901760
        %9302 = vmatpush.msra.mxu0 %v9301
        %v9303 = vand.u32 %v7414, 4294901760
        %9304 = vmatpush.msra.mxu0 %v9303
        %v9305 = vand.u32 %v7413, 4294901760
        %9306 = vmatpush.msra.mxu0 %v9305
        %v9307 = vand.u32 %v7412, 4294901760
        %9308 = vmatpush.msra.mxu0 %v9307
        %v9309 = vand.u32 %v7411, 4294901760
        %9310 = vmatpush.msra.mxu0 %v9309
        %v9311 = vand.u32 %v7410, 4294901760
        %9312 = vmatpush.msra.mxu0 %v9311
        %v9313 = vand.u32 %v7409, 4294901760
        %9314 = vmatpush.msra.mxu0 %v9313
        %v9315 = vand.u32 %v7408, 4294901760
        %9316 = vmatpush.msra.mxu0 %v9315
        %v9317 = vand.u32 %v7407, 4294901760
        %9318 = vmatpush.msra.mxu0 %v9317
        %v9319 = vand.u32 %v7406, 4294901760
        %9320 = vmatpush.msra.mxu0 %v9319
        %v9321 = vand.u32 %v7330, 4294901760
        %9322 = vmatmul.f32.gmra.mxu0 %v9321
        %v9323 = vpop.f32.mrf.mxu0
        %v9324 = vadd.f32 %v9283, %v9323
        %v9325 = vand.u32 %v7338, 4294901760
        %9326 = vmatmul.f32.gmra.mxu0 %v9325
        %v9327 = vpop.f32.mrf.mxu0
        %v9328 = vadd.f32 %v9287, %v9327
        %9329 = vdwg.mxu0
        %v9330 = vand.u32 %v7437, 4294901760
        %9331 = vmatpush.msra.mxu0 %v9330
        %v9332 = vand.u32 %v7436, 4294901760
        %9333 = vmatpush.msra.mxu0 %v9332
        %v9334 = vand.u32 %v7435, 4294901760
        %9335 = vmatpush.msra.mxu0 %v9334
        %v9336 = vand.u32 %v7434, 4294901760
        %9337 = vmatpush.msra.mxu0 %v9336
        %v9338 = vand.u32 %v7433, 4294901760
        %9339 = vmatpush.msra.mxu0 %v9338
        %v9340 = vand.u32 %v7432, 4294901760
        %9341 = vmatpush.msra.mxu0 %v9340
        %v9342 = vand.u32 %v7431, 4294901760
        %9343 = vmatpush.msra.mxu0 %v9342
        %v9344 = vand.u32 %v7430, 4294901760
        %9345 = vmatpush.msra.mxu0 %v9344
        %v9346 = vand.u32 %v7429, 4294901760
        %9347 = vmatpush.msra.mxu0 %v9346
        %v9348 = vand.u32 %v7428, 4294901760
        %9349 = vmatpush.msra.mxu0 %v9348
        %v9350 = vand.u32 %v7427, 4294901760
        %9351 = vmatpush.msra.mxu0 %v9350
        %v9352 = vand.u32 %v7426, 4294901760
        %9353 = vmatpush.msra.mxu0 %v9352
        %v9354 = vand.u32 %v7425, 4294901760
        %9355 = vmatpush.msra.mxu0 %v9354
        %v9356 = vand.u32 %v7424, 4294901760
        %9357 = vmatpush.msra.mxu0 %v9356
        %v9358 = vand.u32 %v7423, 4294901760
        %9359 = vmatpush.msra.mxu0 %v9358
        %v9360 = vand.u32 %v7422, 4294901760
        %9361 = vmatpush.msra.mxu0 %v9360
        %v9362 = vand.u32 %v7331, 4294901760
        %v9363 = vsub.f32 %v7331, %v9362
        %v9364 = vand.u32 %v9363, 4294901760
        %v9365 = vsub.f32 %v9363, %v9364
        %v9366 = vand.u32 %v9365, 4294901760
        %9367 = vmatmul.f32.gmra.mxu0 %v9366
        %v9368 = vpop.f32.mrf.mxu0
        %v9369 = vadd.f32 %v9324, %v9368
        %v9370 = vand.u32 %v7339, 4294901760
        %v9371 = vsub.f32 %v7339, %v9370
        %v9372 = vand.u32 %v9371, 4294901760
        %v9373 = vsub.f32 %v9371, %v9372
        %v9374 = vand.u32 %v9373, 4294901760
        %9375 = vmatmul.f32.gmra.mxu0 %v9374
        %v9376 = vpop.f32.mrf.mxu0
        %v9377 = vadd.f32 %v9328, %v9376
        %9378 = vdwg.mxu0
        %v9379 = vand.u32 %v7437, 4294901760
        %v9380 = vsub.f32 %v7437, %v9379
        %v9381 = vand.u32 %v9380, 4294901760
        %v9382 = vsub.f32 %v9380, %v9381
        %v9383 = vand.u32 %v9382, 4294901760
        %9384 = vmatpush.msra.mxu0 %v9383
        %v9385 = vand.u32 %v7436, 4294901760
        %v9386 = vsub.f32 %v7436, %v9385
        %v9387 = vand.u32 %v9386, 4294901760
        %v9388 = vsub.f32 %v9386, %v9387
        %v9389 = vand.u32 %v9388, 4294901760
        %9390 = vmatpush.msra.mxu0 %v9389
        %v9391 = vand.u32 %v7435, 4294901760
        %v9392 = vsub.f32 %v7435, %v9391
        %v9393 = vand.u32 %v9392, 4294901760
        %v9394 = vsub.f32 %v9392, %v9393
        %v9395 = vand.u32 %v9394, 4294901760
        %9396 = vmatpush.msra.mxu0 %v9395
        %v9397 = vand.u32 %v7434, 4294901760
        %v9398 = vsub.f32 %v7434, %v9397
        %v9399 = vand.u32 %v9398, 4294901760
        %v9400 = vsub.f32 %v9398, %v9399
        %v9401 = vand.u32 %v9400, 4294901760
        %9402 = vmatpush.msra.mxu0 %v9401
        %v9403 = vand.u32 %v7433, 4294901760
        %v9404 = vsub.f32 %v7433, %v9403
        %v9405 = vand.u32 %v9404, 4294901760
        %v9406 = vsub.f32 %v9404, %v9405
        %v9407 = vand.u32 %v9406, 4294901760
        %9408 = vmatpush.msra.mxu0 %v9407
        %v9409 = vand.u32 %v7432, 4294901760
        %v9410 = vsub.f32 %v7432, %v9409
        %v9411 = vand.u32 %v9410, 4294901760
        %v9412 = vsub.f32 %v9410, %v9411
        %v9413 = vand.u32 %v9412, 4294901760
        %9414 = vmatpush.msra.mxu0 %v9413
        %v9415 = vand.u32 %v7431, 4294901760
        %v9416 = vsub.f32 %v7431, %v9415
        %v9417 = vand.u32 %v9416, 4294901760
        %v9418 = vsub.f32 %v9416, %v9417
        %v9419 = vand.u32 %v9418, 4294901760
        %9420 = vmatpush.msra.mxu0 %v9419
        %v9421 = vand.u32 %v7430, 4294901760
        %v9422 = vsub.f32 %v7430, %v9421
        %v9423 = vand.u32 %v9422, 4294901760
        %v9424 = vsub.f32 %v9422, %v9423
        %v9425 = vand.u32 %v9424, 4294901760
        %9426 = vmatpush.msra.mxu0 %v9425
        %v9427 = vand.u32 %v7429, 4294901760
        %v9428 = vsub.f32 %v7429, %v9427
        %v9429 = vand.u32 %v9428, 4294901760
        %v9430 = vsub.f32 %v9428, %v9429
        %v9431 = vand.u32 %v9430, 4294901760
        %9432 = vmatpush.msra.mxu0 %v9431
        %v9433 = vand.u32 %v7428, 4294901760
        %v9434 = vsub.f32 %v7428, %v9433
        %v9435 = vand.u32 %v9434, 4294901760
        %v9436 = vsub.f32 %v9434, %v9435
        %v9437 = vand.u32 %v9436, 4294901760
        %9438 = vmatpush.msra.mxu0 %v9437
        %v9439 = vand.u32 %v7427, 4294901760
        %v9440 = vsub.f32 %v7427, %v9439
        %v9441 = vand.u32 %v9440, 4294901760
        %v9442 = vsub.f32 %v9440, %v9441
        %v9443 = vand.u32 %v9442, 4294901760
        %9444 = vmatpush.msra.mxu0 %v9443
        %v9445 = vand.u32 %v7426, 4294901760
        %v9446 = vsub.f32 %v7426, %v9445
        %v9447 = vand.u32 %v9446, 4294901760
        %v9448 = vsub.f32 %v9446, %v9447
        %v9449 = vand.u32 %v9448, 4294901760
        %9450 = vmatpush.msra.mxu0 %v9449
        %v9451 = vand.u32 %v7425, 4294901760
        %v9452 = vsub.f32 %v7425, %v9451
        %v9453 = vand.u32 %v9452, 4294901760
        %v9454 = vsub.f32 %v9452, %v9453
        %v9455 = vand.u32 %v9454, 4294901760
        %9456 = vmatpush.msra.mxu0 %v9455
        %v9457 = vand.u32 %v7424, 4294901760
        %v9458 = vsub.f32 %v7424, %v9457
        %v9459 = vand.u32 %v9458, 4294901760
        %v9460 = vsub.f32 %v9458, %v9459
        %v9461 = vand.u32 %v9460, 4294901760
        %9462 = vmatpush.msra.mxu0 %v9461
        %v9463 = vand.u32 %v7423, 4294901760
        %v9464 = vsub.f32 %v7423, %v9463
        %v9465 = vand.u32 %v9464, 4294901760
        %v9466 = vsub.f32 %v9464, %v9465
        %v9467 = vand.u32 %v9466, 4294901760
        %9468 = vmatpush.msra.mxu0 %v9467
        %v9469 = vand.u32 %v7422, 4294901760
        %v9470 = vsub.f32 %v7422, %v9469
        %v9471 = vand.u32 %v9470, 4294901760
        %v9472 = vsub.f32 %v9470, %v9471
        %v9473 = vand.u32 %v9472, 4294901760
        %9474 = vmatpush.msra.mxu0 %v9473
        %v9475 = vand.u32 %v7331, 4294901760
        %9476 = vmatmul.f32.gmra.mxu0 %v9475
        %v9477 = vpop.f32.mrf.mxu0
        %v9478 = vadd.f32 %v9369, %v9477
        %v9479 = vand.u32 %v7339, 4294901760
        %9480 = vmatmul.f32.gmra.mxu0 %v9479
        %v9481 = vpop.f32.mrf.mxu0
        %v9482 = vadd.f32 %v9377, %v9481
        %9483 = vdwg.mxu0
        %v9484 = vand.u32 %v7437, 4294901760
        %v9485 = vsub.f32 %v7437, %v9484
        %9486 = vmatpush.msra.mxu0 %v9485
        %v9487 = vand.u32 %v7436, 4294901760
        %v9488 = vsub.f32 %v7436, %v9487
        %9489 = vmatpush.msra.mxu0 %v9488
        %v9490 = vand.u32 %v7435, 4294901760
        %v9491 = vsub.f32 %v7435, %v9490
        %9492 = vmatpush.msra.mxu0 %v9491
        %v9493 = vand.u32 %v7434, 4294901760
        %v9494 = vsub.f32 %v7434, %v9493
        %9495 = vmatpush.msra.mxu0 %v9494
        %v9496 = vand.u32 %v7433, 4294901760
        %v9497 = vsub.f32 %v7433, %v9496
        %9498 = vmatpush.msra.mxu0 %v9497
        %v9499 = vand.u32 %v7432, 4294901760
        %v9500 = vsub.f32 %v7432, %v9499
        %9501 = vmatpush.msra.mxu0 %v9500
        %v9502 = vand.u32 %v7431, 4294901760
        %v9503 = vsub.f32 %v7431, %v9502
        %9504 = vmatpush.msra.mxu0 %v9503
        %v9505 = vand.u32 %v7430, 4294901760
        %v9506 = vsub.f32 %v7430, %v9505
        %9507 = vmatpush.msra.mxu0 %v9506
        %v9508 = vand.u32 %v7429, 4294901760
        %v9509 = vsub.f32 %v7429, %v9508
        %9510 = vmatpush.msra.mxu0 %v9509
        %v9511 = vand.u32 %v7428, 4294901760
        %v9512 = vsub.f32 %v7428, %v9511
        %9513 = vmatpush.msra.mxu0 %v9512
        %v9514 = vand.u32 %v7427, 4294901760
        %v9515 = vsub.f32 %v7427, %v9514
        %9516 = vmatpush.msra.mxu0 %v9515
        %v9517 = vand.u32 %v7426, 4294901760
        %v9518 = vsub.f32 %v7426, %v9517
        %9519 = vmatpush.msra.mxu0 %v9518
        %v9520 = vand.u32 %v7425, 4294901760
        %v9521 = vsub.f32 %v7425, %v9520
        %9522 = vmatpush.msra.mxu0 %v9521
        %v9523 = vand.u32 %v7424, 4294901760
        %v9524 = vsub.f32 %v7424, %v9523
        %9525 = vmatpush.msra.mxu0 %v9524
        %v9526 = vand.u32 %v7423, 4294901760
        %v9527 = vsub.f32 %v7423, %v9526
        %9528 = vmatpush.msra.mxu0 %v9527
        %v9529 = vand.u32 %v7422, 4294901760
        %v9530 = vsub.f32 %v7422, %v9529
        %9531 = vmatpush.msra.mxu0 %v9530
        %v9532 = vand.u32 %v7331, 4294901760
        %v9533 = vsub.f32 %v7331, %v9532
        %9534 = vmatmul.f32.gmra.mxu0 %v9533
        %v9535 = vpop.f32.mrf.mxu0
        %v9536 = vadd.f32 %v9478, %v9535
        %v9537 = vand.u32 %v7339, 4294901760
        %v9538 = vsub.f32 %v7339, %v9537
        %9539 = vmatmul.f32.gmra.mxu0 %v9538
        %v9540 = vpop.f32.mrf.mxu0
        %v9541 = vadd.f32 %v9482, %v9540
        %9542 = vdwg.mxu0
        %v9543 = vand.u32 %v7437, 4294901760
        %9544 = vmatpush.msra.mxu0 %v9543
        %v9545 = vand.u32 %v7436, 4294901760
        %9546 = vmatpush.msra.mxu0 %v9545
        %v9547 = vand.u32 %v7435, 4294901760
        %9548 = vmatpush.msra.mxu0 %v9547
        %v9549 = vand.u32 %v7434, 4294901760
        %9550 = vmatpush.msra.mxu0 %v9549
        %v9551 = vand.u32 %v7433, 4294901760
        %9552 = vmatpush.msra.mxu0 %v9551
        %v9553 = vand.u32 %v7432, 4294901760
        %9554 = vmatpush.msra.mxu0 %v9553
        %v9555 = vand.u32 %v7431, 4294901760
        %9556 = vmatpush.msra.mxu0 %v9555
        %v9557 = vand.u32 %v7430, 4294901760
        %9558 = vmatpush.msra.mxu0 %v9557
        %v9559 = vand.u32 %v7429, 4294901760
        %9560 = vmatpush.msra.mxu0 %v9559
        %v9561 = vand.u32 %v7428, 4294901760
        %9562 = vmatpush.msra.mxu0 %v9561
        %v9563 = vand.u32 %v7427, 4294901760
        %9564 = vmatpush.msra.mxu0 %v9563
        %v9565 = vand.u32 %v7426, 4294901760
        %9566 = vmatpush.msra.mxu0 %v9565
        %v9567 = vand.u32 %v7425, 4294901760
        %9568 = vmatpush.msra.mxu0 %v9567
        %v9569 = vand.u32 %v7424, 4294901760
        %9570 = vmatpush.msra.mxu0 %v9569
        %v9571 = vand.u32 %v7423, 4294901760
        %9572 = vmatpush.msra.mxu0 %v9571
        %v9573 = vand.u32 %v7422, 4294901760
        %9574 = vmatpush.msra.mxu0 %v9573
        %v9575 = vand.u32 %v7331, 4294901760
        %v9576 = vsub.f32 %v7331, %v9575
        %v9577 = vand.u32 %v9576, 4294901760
        %9578 = vmatmul.f32.gmra.mxu0 %v9577
        %v9579 = vpop.f32.mrf.mxu0
        %v9580 = vadd.f32 %v9536, %v9579
        %v9581 = vand.u32 %v7339, 4294901760
        %v9582 = vsub.f32 %v7339, %v9581
        %v9583 = vand.u32 %v9582, 4294901760
        %9584 = vmatmul.f32.gmra.mxu0 %v9583
        %v9585 = vpop.f32.mrf.mxu0
        %v9586 = vadd.f32 %v9541, %v9585
        %9587 = vdwg.mxu0
        %v9588 = vand.u32 %v7437, 4294901760
        %v9589 = vsub.f32 %v7437, %v9588
        %v9590 = vand.u32 %v9589, 4294901760
        %9591 = vmatpush.msra.mxu0 %v9590
        %v9592 = vand.u32 %v7436, 4294901760
        %v9593 = vsub.f32 %v7436, %v9592
        %v9594 = vand.u32 %v9593, 4294901760
        %9595 = vmatpush.msra.mxu0 %v9594
        %v9596 = vand.u32 %v7435, 4294901760
        %v9597 = vsub.f32 %v7435, %v9596
        %v9598 = vand.u32 %v9597, 4294901760
        %9599 = vmatpush.msra.mxu0 %v9598
        %v9600 = vand.u32 %v7434, 4294901760
        %v9601 = vsub.f32 %v7434, %v9600
        %v9602 = vand.u32 %v9601, 4294901760
        %9603 = vmatpush.msra.mxu0 %v9602
        %v9604 = vand.u32 %v7433, 4294901760
        %v9605 = vsub.f32 %v7433, %v9604
        %v9606 = vand.u32 %v9605, 4294901760
        %9607 = vmatpush.msra.mxu0 %v9606
        %v9608 = vand.u32 %v7432, 4294901760
        %v9609 = vsub.f32 %v7432, %v9608
        %v9610 = vand.u32 %v9609, 4294901760
        %9611 = vmatpush.msra.mxu0 %v9610
        %v9612 = vand.u32 %v7431, 4294901760
        %v9613 = vsub.f32 %v7431, %v9612
        %v9614 = vand.u32 %v9613, 4294901760
        %9615 = vmatpush.msra.mxu0 %v9614
        %v9616 = vand.u32 %v7430, 4294901760
        %v9617 = vsub.f32 %v7430, %v9616
        %v9618 = vand.u32 %v9617, 4294901760
        %9619 = vmatpush.msra.mxu0 %v9618
        %v9620 = vand.u32 %v7429, 4294901760
        %v9621 = vsub.f32 %v7429, %v9620
        %v9622 = vand.u32 %v9621, 4294901760
        %9623 = vmatpush.msra.mxu0 %v9622
        %v9624 = vand.u32 %v7428, 4294901760
        %v9625 = vsub.f32 %v7428, %v9624
        %v9626 = vand.u32 %v9625, 4294901760
        %9627 = vmatpush.msra.mxu0 %v9626
        %v9628 = vand.u32 %v7427, 4294901760
        %v9629 = vsub.f32 %v7427, %v9628
        %v9630 = vand.u32 %v9629, 4294901760
        %9631 = vmatpush.msra.mxu0 %v9630
        %v9632 = vand.u32 %v7426, 4294901760
        %v9633 = vsub.f32 %v7426, %v9632
        %v9634 = vand.u32 %v9633, 4294901760
        %9635 = vmatpush.msra.mxu0 %v9634
        %v9636 = vand.u32 %v7425, 4294901760
        %v9637 = vsub.f32 %v7425, %v9636
        %v9638 = vand.u32 %v9637, 4294901760
        %9639 = vmatpush.msra.mxu0 %v9638
        %v9640 = vand.u32 %v7424, 4294901760
        %v9641 = vsub.f32 %v7424, %v9640
        %v9642 = vand.u32 %v9641, 4294901760
        %9643 = vmatpush.msra.mxu0 %v9642
        %v9644 = vand.u32 %v7423, 4294901760
        %v9645 = vsub.f32 %v7423, %v9644
        %v9646 = vand.u32 %v9645, 4294901760
        %9647 = vmatpush.msra.mxu0 %v9646
        %v9648 = vand.u32 %v7422, 4294901760
        %v9649 = vsub.f32 %v7422, %v9648
        %v9650 = vand.u32 %v9649, 4294901760
        %9651 = vmatpush.msra.mxu0 %v9650
        %v9652 = vand.u32 %v7331, 4294901760
        %9653 = vmatmul.f32.gmra.mxu0 %v9652
        %v9654 = vpop.f32.mrf.mxu0
        %v9655 = vadd.f32 %v9580, %v9654
        %v9656 = vand.u32 %v7339, 4294901760
        %9657 = vmatmul.f32.gmra.mxu0 %v9656
        %v9658 = vpop.f32.mrf.mxu0
        %v9659 = vadd.f32 %v9586, %v9658
        %9660 = vdwg.mxu0
        %v9661 = vand.u32 %v7437, 4294901760
        %9662 = vmatpush.msra.mxu0 %v9661
        %v9663 = vand.u32 %v7436, 4294901760
        %9664 = vmatpush.msra.mxu0 %v9663
        %v9665 = vand.u32 %v7435, 4294901760
        %9666 = vmatpush.msra.mxu0 %v9665
        %v9667 = vand.u32 %v7434, 4294901760
        %9668 = vmatpush.msra.mxu0 %v9667
        %v9669 = vand.u32 %v7433, 4294901760
        %9670 = vmatpush.msra.mxu0 %v9669
        %v9671 = vand.u32 %v7432, 4294901760
        %9672 = vmatpush.msra.mxu0 %v9671
        %v9673 = vand.u32 %v7431, 4294901760
        %9674 = vmatpush.msra.mxu0 %v9673
        %v9675 = vand.u32 %v7430, 4294901760
        %9676 = vmatpush.msra.mxu0 %v9675
        %v9677 = vand.u32 %v7429, 4294901760
        %9678 = vmatpush.msra.mxu0 %v9677
        %v9679 = vand.u32 %v7428, 4294901760
        %9680 = vmatpush.msra.mxu0 %v9679
        %v9681 = vand.u32 %v7427, 4294901760
        %9682 = vmatpush.msra.mxu0 %v9681
        %v9683 = vand.u32 %v7426, 4294901760
        %9684 = vmatpush.msra.mxu0 %v9683
        %v9685 = vand.u32 %v7425, 4294901760
        %9686 = vmatpush.msra.mxu0 %v9685
        %v9687 = vand.u32 %v7424, 4294901760
        %9688 = vmatpush.msra.mxu0 %v9687
        %v9689 = vand.u32 %v7423, 4294901760
        %9690 = vmatpush.msra.mxu0 %v9689
        %v9691 = vand.u32 %v7422, 4294901760
        %9692 = vmatpush.msra.mxu0 %v9691
        %v9693 = vand.u32 %v7331, 4294901760
        %9694 = vmatmul.f32.gmra.mxu0 %v9693
        %v9695 = vpop.f32.mrf.mxu0
        %v9696 = vadd.f32 %v9655, %v9695
        %v9697 = vand.u32 %v7339, 4294901760
        %9698 = vmatmul.f32.gmra.mxu0 %v9697
        %v9699 = vpop.f32.mrf.mxu0
        %v9700 = vadd.f32 %v9659, %v9699
        %9701 = vdwg.mxu0
        %v9702 = vand.u32 %v7453, 4294901760
        %9703 = vmatpush.msra.mxu0 %v9702
        %v9704 = vand.u32 %v7452, 4294901760
        %9705 = vmatpush.msra.mxu0 %v9704
        %v9706 = vand.u32 %v7451, 4294901760
        %9707 = vmatpush.msra.mxu0 %v9706
        %v9708 = vand.u32 %v7450, 4294901760
        %9709 = vmatpush.msra.mxu0 %v9708
        %v9710 = vand.u32 %v7449, 4294901760
        %9711 = vmatpush.msra.mxu0 %v9710
        %v9712 = vand.u32 %v7448, 4294901760
        %9713 = vmatpush.msra.mxu0 %v9712
        %v9714 = vand.u32 %v7447, 4294901760
        %9715 = vmatpush.msra.mxu0 %v9714
        %v9716 = vand.u32 %v7446, 4294901760
        %9717 = vmatpush.msra.mxu0 %v9716
        %v9718 = vand.u32 %v7445, 4294901760
        %9719 = vmatpush.msra.mxu0 %v9718
        %v9720 = vand.u32 %v7444, 4294901760
        %9721 = vmatpush.msra.mxu0 %v9720
        %v9722 = vand.u32 %v7443, 4294901760
        %9723 = vmatpush.msra.mxu0 %v9722
        %v9724 = vand.u32 %v7442, 4294901760
        %9725 = vmatpush.msra.mxu0 %v9724
        %v9726 = vand.u32 %v7441, 4294901760
        %9727 = vmatpush.msra.mxu0 %v9726
        %v9728 = vand.u32 %v7440, 4294901760
        %9729 = vmatpush.msra.mxu0 %v9728
        %v9730 = vand.u32 %v7439, 4294901760
        %9731 = vmatpush.msra.mxu0 %v9730
        %v9732 = vand.u32 %v7438, 4294901760
        %9733 = vmatpush.msra.mxu0 %v9732
        %v9734 = vand.u32 %v7332, 4294901760
        %v9735 = vsub.f32 %v7332, %v9734
        %v9736 = vand.u32 %v9735, 4294901760
        %v9737 = vsub.f32 %v9735, %v9736
        %v9738 = vand.u32 %v9737, 4294901760
        %9739 = vmatmul.f32.gmra.mxu0 %v9738
        %v9740 = vpop.f32.mrf.mxu0
        %v9741 = vadd.f32 %v9696, %v9740
        %v9742 = vand.u32 %v7340, 4294901760
        %v9743 = vsub.f32 %v7340, %v9742
        %v9744 = vand.u32 %v9743, 4294901760
        %v9745 = vsub.f32 %v9743, %v9744
        %v9746 = vand.u32 %v9745, 4294901760
        %9747 = vmatmul.f32.gmra.mxu0 %v9746
        %v9748 = vpop.f32.mrf.mxu0
        %v9749 = vadd.f32 %v9700, %v9748
        %9750 = vdwg.mxu0
        %v9751 = vand.u32 %v7453, 4294901760
        %v9752 = vsub.f32 %v7453, %v9751
        %v9753 = vand.u32 %v9752, 4294901760
        %v9754 = vsub.f32 %v9752, %v9753
        %v9755 = vand.u32 %v9754, 4294901760
        %9756 = vmatpush.msra.mxu0 %v9755
        %v9757 = vand.u32 %v7452, 4294901760
        %v9758 = vsub.f32 %v7452, %v9757
        %v9759 = vand.u32 %v9758, 4294901760
        %v9760 = vsub.f32 %v9758, %v9759
        %v9761 = vand.u32 %v9760, 4294901760
        %9762 = vmatpush.msra.mxu0 %v9761
        %v9763 = vand.u32 %v7451, 4294901760
        %v9764 = vsub.f32 %v7451, %v9763
        %v9765 = vand.u32 %v9764, 4294901760
        %v9766 = vsub.f32 %v9764, %v9765
        %v9767 = vand.u32 %v9766, 4294901760
        %9768 = vmatpush.msra.mxu0 %v9767
        %v9769 = vand.u32 %v7450, 4294901760
        %v9770 = vsub.f32 %v7450, %v9769
        %v9771 = vand.u32 %v9770, 4294901760
        %v9772 = vsub.f32 %v9770, %v9771
        %v9773 = vand.u32 %v9772, 4294901760
        %9774 = vmatpush.msra.mxu0 %v9773
        %v9775 = vand.u32 %v7449, 4294901760
        %v9776 = vsub.f32 %v7449, %v9775
        %v9777 = vand.u32 %v9776, 4294901760
        %v9778 = vsub.f32 %v9776, %v9777
        %v9779 = vand.u32 %v9778, 4294901760
        %9780 = vmatpush.msra.mxu0 %v9779
        %v9781 = vand.u32 %v7448, 4294901760
        %v9782 = vsub.f32 %v7448, %v9781
        %v9783 = vand.u32 %v9782, 4294901760
        %v9784 = vsub.f32 %v9782, %v9783
        %v9785 = vand.u32 %v9784, 4294901760
        %9786 = vmatpush.msra.mxu0 %v9785
        %v9787 = vand.u32 %v7447, 4294901760
        %v9788 = vsub.f32 %v7447, %v9787
        %v9789 = vand.u32 %v9788, 4294901760
        %v9790 = vsub.f32 %v9788, %v9789
        %v9791 = vand.u32 %v9790, 4294901760
        %9792 = vmatpush.msra.mxu0 %v9791
        %v9793 = vand.u32 %v7446, 4294901760
        %v9794 = vsub.f32 %v7446, %v9793
        %v9795 = vand.u32 %v9794, 4294901760
        %v9796 = vsub.f32 %v9794, %v9795
        %v9797 = vand.u32 %v9796, 4294901760
        %9798 = vmatpush.msra.mxu0 %v9797
        %v9799 = vand.u32 %v7445, 4294901760
        %v9800 = vsub.f32 %v7445, %v9799
        %v9801 = vand.u32 %v9800, 4294901760
        %v9802 = vsub.f32 %v9800, %v9801
        %v9803 = vand.u32 %v9802, 4294901760
        %9804 = vmatpush.msra.mxu0 %v9803
        %v9805 = vand.u32 %v7444, 4294901760
        %v9806 = vsub.f32 %v7444, %v9805
        %v9807 = vand.u32 %v9806, 4294901760
        %v9808 = vsub.f32 %v9806, %v9807
        %v9809 = vand.u32 %v9808, 4294901760
        %9810 = vmatpush.msra.mxu0 %v9809
        %v9811 = vand.u32 %v7443, 4294901760
        %v9812 = vsub.f32 %v7443, %v9811
        %v9813 = vand.u32 %v9812, 4294901760
        %v9814 = vsub.f32 %v9812, %v9813
        %v9815 = vand.u32 %v9814, 4294901760
        %9816 = vmatpush.msra.mxu0 %v9815
        %v9817 = vand.u32 %v7442, 4294901760
        %v9818 = vsub.f32 %v7442, %v9817
        %v9819 = vand.u32 %v9818, 4294901760
        %v9820 = vsub.f32 %v9818, %v9819
        %v9821 = vand.u32 %v9820, 4294901760
        %9822 = vmatpush.msra.mxu0 %v9821
        %v9823 = vand.u32 %v7441, 4294901760
        %v9824 = vsub.f32 %v7441, %v9823
        %v9825 = vand.u32 %v9824, 4294901760
        %v9826 = vsub.f32 %v9824, %v9825
        %v9827 = vand.u32 %v9826, 4294901760
        %9828 = vmatpush.msra.mxu0 %v9827
        %v9829 = vand.u32 %v7440, 4294901760
        %v9830 = vsub.f32 %v7440, %v9829
        %v9831 = vand.u32 %v9830, 4294901760
        %v9832 = vsub.f32 %v9830, %v9831
        %v9833 = vand.u32 %v9832, 4294901760
        %9834 = vmatpush.msra.mxu0 %v9833
        %v9835 = vand.u32 %v7439, 4294901760
        %v9836 = vsub.f32 %v7439, %v9835
        %v9837 = vand.u32 %v9836, 4294901760
        %v9838 = vsub.f32 %v9836, %v9837
        %v9839 = vand.u32 %v9838, 4294901760
        %9840 = vmatpush.msra.mxu0 %v9839
        %v9841 = vand.u32 %v7438, 4294901760
        %v9842 = vsub.f32 %v7438, %v9841
        %v9843 = vand.u32 %v9842, 4294901760
        %v9844 = vsub.f32 %v9842, %v9843
        %v9845 = vand.u32 %v9844, 4294901760
        %9846 = vmatpush.msra.mxu0 %v9845
        %v9847 = vand.u32 %v7332, 4294901760
        %9848 = vmatmul.f32.gmra.mxu0 %v9847
        %v9849 = vpop.f32.mrf.mxu0
        %v9850 = vadd.f32 %v9741, %v9849
        %v9851 = vand.u32 %v7340, 4294901760
        %9852 = vmatmul.f32.gmra.mxu0 %v9851
        %v9853 = vpop.f32.mrf.mxu0
        %v9854 = vadd.f32 %v9749, %v9853
        %9855 = vdwg.mxu0
        %v9856 = vand.u32 %v7453, 4294901760
        %v9857 = vsub.f32 %v7453, %v9856
        %9858 = vmatpush.msra.mxu0 %v9857
        %v9859 = vand.u32 %v7452, 4294901760
        %v9860 = vsub.f32 %v7452, %v9859
        %9861 = vmatpush.msra.mxu0 %v9860
        %v9862 = vand.u32 %v7451, 4294901760
        %v9863 = vsub.f32 %v7451, %v9862
        %9864 = vmatpush.msra.mxu0 %v9863
        %v9865 = vand.u32 %v7450, 4294901760
        %v9866 = vsub.f32 %v7450, %v9865
        %9867 = vmatpush.msra.mxu0 %v9866
        %v9868 = vand.u32 %v7449, 4294901760
        %v9869 = vsub.f32 %v7449, %v9868
        %9870 = vmatpush.msra.mxu0 %v9869
        %v9871 = vand.u32 %v7448, 4294901760
        %v9872 = vsub.f32 %v7448, %v9871
        %9873 = vmatpush.msra.mxu0 %v9872
        %v9874 = vand.u32 %v7447, 4294901760
        %v9875 = vsub.f32 %v7447, %v9874
        %9876 = vmatpush.msra.mxu0 %v9875
        %v9877 = vand.u32 %v7446, 4294901760
        %v9878 = vsub.f32 %v7446, %v9877
        %9879 = vmatpush.msra.mxu0 %v9878
        %v9880 = vand.u32 %v7445, 4294901760
        %v9881 = vsub.f32 %v7445, %v9880
        %9882 = vmatpush.msra.mxu0 %v9881
        %v9883 = vand.u32 %v7444, 4294901760
        %v9884 = vsub.f32 %v7444, %v9883
        %9885 = vmatpush.msra.mxu0 %v9884
        %v9886 = vand.u32 %v7443, 4294901760
        %v9887 = vsub.f32 %v7443, %v9886
        %9888 = vmatpush.msra.mxu0 %v9887
        %v9889 = vand.u32 %v7442, 4294901760
        %v9890 = vsub.f32 %v7442, %v9889
        %9891 = vmatpush.msra.mxu0 %v9890
        %v9892 = vand.u32 %v7441, 4294901760
        %v9893 = vsub.f32 %v7441, %v9892
        %9894 = vmatpush.msra.mxu0 %v9893
        %v9895 = vand.u32 %v7440, 4294901760
        %v9896 = vsub.f32 %v7440, %v9895
        %9897 = vmatpush.msra.mxu0 %v9896
        %v9898 = vand.u32 %v7439, 4294901760
        %v9899 = vsub.f32 %v7439, %v9898
        %9900 = vmatpush.msra.mxu0 %v9899
        %v9901 = vand.u32 %v7438, 4294901760
        %v9902 = vsub.f32 %v7438, %v9901
        %9903 = vmatpush.msra.mxu0 %v9902
        %v9904 = vand.u32 %v7332, 4294901760
        %v9905 = vsub.f32 %v7332, %v9904
        %9906 = vmatmul.f32.gmra.mxu0 %v9905
        %v9907 = vpop.f32.mrf.mxu0
        %v9908 = vadd.f32 %v9850, %v9907
        %v9909 = vand.u32 %v7340, 4294901760
        %v9910 = vsub.f32 %v7340, %v9909
        %9911 = vmatmul.f32.gmra.mxu0 %v9910
        %v9912 = vpop.f32.mrf.mxu0
        %v9913 = vadd.f32 %v9854, %v9912
        %9914 = vdwg.mxu0
        %v9915 = vand.u32 %v7453, 4294901760
        %9916 = vmatpush.msra.mxu0 %v9915
        %v9917 = vand.u32 %v7452, 4294901760
        %9918 = vmatpush.msra.mxu0 %v9917
        %v9919 = vand.u32 %v7451, 4294901760
        %9920 = vmatpush.msra.mxu0 %v9919
        %v9921 = vand.u32 %v7450, 4294901760
        %9922 = vmatpush.msra.mxu0 %v9921
        %v9923 = vand.u32 %v7449, 4294901760
        %9924 = vmatpush.msra.mxu0 %v9923
        %v9925 = vand.u32 %v7448, 4294901760
        %9926 = vmatpush.msra.mxu0 %v9925
        %v9927 = vand.u32 %v7447, 4294901760
        %9928 = vmatpush.msra.mxu0 %v9927
        %v9929 = vand.u32 %v7446, 4294901760
        %9930 = vmatpush.msra.mxu0 %v9929
        %v9931 = vand.u32 %v7445, 4294901760
        %9932 = vmatpush.msra.mxu0 %v9931
        %v9933 = vand.u32 %v7444, 4294901760
        %9934 = vmatpush.msra.mxu0 %v9933
        %v9935 = vand.u32 %v7443, 4294901760
        %9936 = vmatpush.msra.mxu0 %v9935
        %v9937 = vand.u32 %v7442, 4294901760
        %9938 = vmatpush.msra.mxu0 %v9937
        %v9939 = vand.u32 %v7441, 4294901760
        %9940 = vmatpush.msra.mxu0 %v9939
        %v9941 = vand.u32 %v7440, 4294901760
        %9942 = vmatpush.msra.mxu0 %v9941
        %v9943 = vand.u32 %v7439, 4294901760
        %9944 = vmatpush.msra.mxu0 %v9943
        %v9945 = vand.u32 %v7438, 4294901760
        %9946 = vmatpush.msra.mxu0 %v9945
        %v9947 = vand.u32 %v7332, 4294901760
        %v9948 = vsub.f32 %v7332, %v9947
        %v9949 = vand.u32 %v9948, 4294901760
        %9950 = vmatmul.f32.gmra.mxu0 %v9949
        %v9951 = vpop.f32.mrf.mxu0
        %v9952 = vadd.f32 %v9908, %v9951
        %v9953 = vand.u32 %v7340, 4294901760
        %v9954 = vsub.f32 %v7340, %v9953
        %v9955 = vand.u32 %v9954, 4294901760
        %9956 = vmatmul.f32.gmra.mxu0 %v9955
        %v9957 = vpop.f32.mrf.mxu0
        %v9958 = vadd.f32 %v9913, %v9957
        %9959 = vdwg.mxu0
        %v9960 = vand.u32 %v7453, 4294901760
        %v9961 = vsub.f32 %v7453, %v9960
        %v9962 = vand.u32 %v9961, 4294901760
        %9963 = vmatpush.msra.mxu0 %v9962
        %v9964 = vand.u32 %v7452, 4294901760
        %v9965 = vsub.f32 %v7452, %v9964
        %v9966 = vand.u32 %v9965, 4294901760
        %9967 = vmatpush.msra.mxu0 %v9966
        %v9968 = vand.u32 %v7451, 4294901760
        %v9969 = vsub.f32 %v7451, %v9968
        %v9970 = vand.u32 %v9969, 4294901760
        %9971 = vmatpush.msra.mxu0 %v9970
        %v9972 = vand.u32 %v7450, 4294901760
        %v9973 = vsub.f32 %v7450, %v9972
        %v9974 = vand.u32 %v9973, 4294901760
        %9975 = vmatpush.msra.mxu0 %v9974
        %v9976 = vand.u32 %v7449, 4294901760
        %v9977 = vsub.f32 %v7449, %v9976
        %v9978 = vand.u32 %v9977, 4294901760
        %9979 = vmatpush.msra.mxu0 %v9978
        %v9980 = vand.u32 %v7448, 4294901760
        %v9981 = vsub.f32 %v7448, %v9980
        %v9982 = vand.u32 %v9981, 4294901760
        %9983 = vmatpush.msra.mxu0 %v9982
        %v9984 = vand.u32 %v7447, 4294901760
        %v9985 = vsub.f32 %v7447, %v9984
        %v9986 = vand.u32 %v9985, 4294901760
        %9987 = vmatpush.msra.mxu0 %v9986
        %v9988 = vand.u32 %v7446, 4294901760
        %v9989 = vsub.f32 %v7446, %v9988
        %v9990 = vand.u32 %v9989, 4294901760
        %9991 = vmatpush.msra.mxu0 %v9990
        %v9992 = vand.u32 %v7445, 4294901760
        %v9993 = vsub.f32 %v7445, %v9992
        %v9994 = vand.u32 %v9993, 4294901760
        %9995 = vmatpush.msra.mxu0 %v9994
        %v9996 = vand.u32 %v7444, 4294901760
        %v9997 = vsub.f32 %v7444, %v9996
        %v9998 = vand.u32 %v9997, 4294901760
        %9999 = vmatpush.msra.mxu0 %v9998
        %v10000 = vand.u32 %v7443, 4294901760
        %v10001 = vsub.f32 %v7443, %v10000
        %v10002 = vand.u32 %v10001, 4294901760
        %10003 = vmatpush.msra.mxu0 %v10002
        %v10004 = vand.u32 %v7442, 4294901760
        %v10005 = vsub.f32 %v7442, %v10004
        %v10006 = vand.u32 %v10005, 4294901760
        %10007 = vmatpush.msra.mxu0 %v10006
        %v10008 = vand.u32 %v7441, 4294901760
        %v10009 = vsub.f32 %v7441, %v10008
        %v10010 = vand.u32 %v10009, 4294901760
        %10011 = vmatpush.msra.mxu0 %v10010
        %v10012 = vand.u32 %v7440, 4294901760
        %v10013 = vsub.f32 %v7440, %v10012
        %v10014 = vand.u32 %v10013, 4294901760
        %10015 = vmatpush.msra.mxu0 %v10014
        %v10016 = vand.u32 %v7439, 4294901760
        %v10017 = vsub.f32 %v7439, %v10016
        %v10018 = vand.u32 %v10017, 4294901760
        %10019 = vmatpush.msra.mxu0 %v10018
        %v10020 = vand.u32 %v7438, 4294901760
        %v10021 = vsub.f32 %v7438, %v10020
        %v10022 = vand.u32 %v10021, 4294901760
        %10023 = vmatpush.msra.mxu0 %v10022
        %v10024 = vand.u32 %v7332, 4294901760
        %10025 = vmatmul.f32.gmra.mxu0 %v10024
        %v10026 = vpop.f32.mrf.mxu0
        %v10027 = vadd.f32 %v9952, %v10026
        %v10028 = vand.u32 %v7340, 4294901760
        %10029 = vmatmul.f32.gmra.mxu0 %v10028
        %v10030 = vpop.f32.mrf.mxu0
        %v10031 = vadd.f32 %v9958, %v10030
        %10032 = vdwg.mxu0
        %v10033 = vand.u32 %v7453, 4294901760
        %10034 = vmatpush.msra.mxu0 %v10033
        %v10035 = vand.u32 %v7452, 4294901760
        %10036 = vmatpush.msra.mxu0 %v10035
        %v10037 = vand.u32 %v7451, 4294901760
        %10038 = vmatpush.msra.mxu0 %v10037
        %v10039 = vand.u32 %v7450, 4294901760
        %10040 = vmatpush.msra.mxu0 %v10039
        %v10041 = vand.u32 %v7449, 4294901760
        %10042 = vmatpush.msra.mxu0 %v10041
        %v10043 = vand.u32 %v7448, 4294901760
        %10044 = vmatpush.msra.mxu0 %v10043
        %v10045 = vand.u32 %v7447, 4294901760
        %10046 = vmatpush.msra.mxu0 %v10045
        %v10047 = vand.u32 %v7446, 4294901760
        %10048 = vmatpush.msra.mxu0 %v10047
        %v10049 = vand.u32 %v7445, 4294901760
        %10050 = vmatpush.msra.mxu0 %v10049
        %v10051 = vand.u32 %v7444, 4294901760
        %10052 = vmatpush.msra.mxu0 %v10051
        %v10053 = vand.u32 %v7443, 4294901760
        %10054 = vmatpush.msra.mxu0 %v10053
        %v10055 = vand.u32 %v7442, 4294901760
        %10056 = vmatpush.msra.mxu0 %v10055
        %v10057 = vand.u32 %v7441, 4294901760
        %10058 = vmatpush.msra.mxu0 %v10057
        %v10059 = vand.u32 %v7440, 4294901760
        %10060 = vmatpush.msra.mxu0 %v10059
        %v10061 = vand.u32 %v7439, 4294901760
        %10062 = vmatpush.msra.mxu0 %v10061
        %v10063 = vand.u32 %v7438, 4294901760
        %10064 = vmatpush.msra.mxu0 %v10063
        %v10065 = vand.u32 %v7332, 4294901760
        %10066 = vmatmul.f32.gmra.mxu0 %v10065
        %v10067 = vpop.f32.mrf.mxu0
        %v10068 = vadd.f32 %v10027, %v10067
        %v10069 = vand.u32 %v7340, 4294901760
        %10070 = vmatmul.f32.gmra.mxu0 %v10069
        %v10071 = vpop.f32.mrf.mxu0
        %v10072 = vadd.f32 %v10031, %v10071
        %10073 = vdwg.mxu0
        %v10074 = vand.u32 %v7469, 4294901760
        %10075 = vmatpush.msra.mxu0 %v10074
        %v10076 = vand.u32 %v7468, 4294901760
        %10077 = vmatpush.msra.mxu0 %v10076
        %v10078 = vand.u32 %v7467, 4294901760
        %10079 = vmatpush.msra.mxu0 %v10078
        %v10080 = vand.u32 %v7466, 4294901760
        %10081 = vmatpush.msra.mxu0 %v10080
        %v10082 = vand.u32 %v7465, 4294901760
        %10083 = vmatpush.msra.mxu0 %v10082
        %v10084 = vand.u32 %v7464, 4294901760
        %10085 = vmatpush.msra.mxu0 %v10084
        %v10086 = vand.u32 %v7463, 4294901760
        %10087 = vmatpush.msra.mxu0 %v10086
        %v10088 = vand.u32 %v7462, 4294901760
        %10089 = vmatpush.msra.mxu0 %v10088
        %v10090 = vand.u32 %v7461, 4294901760
        %10091 = vmatpush.msra.mxu0 %v10090
        %v10092 = vand.u32 %v7460, 4294901760
        %10093 = vmatpush.msra.mxu0 %v10092
        %v10094 = vand.u32 %v7459, 4294901760
        %10095 = vmatpush.msra.mxu0 %v10094
        %v10096 = vand.u32 %v7458, 4294901760
        %10097 = vmatpush.msra.mxu0 %v10096
        %v10098 = vand.u32 %v7457, 4294901760
        %10099 = vmatpush.msra.mxu0 %v10098
        %v10100 = vand.u32 %v7456, 4294901760
        %10101 = vmatpush.msra.mxu0 %v10100
        %v10102 = vand.u32 %v7455, 4294901760
        %10103 = vmatpush.msra.mxu0 %v10102
        %v10104 = vand.u32 %v7454, 4294901760
        %10105 = vmatpush.msra.mxu0 %v10104
        %v10106 = vand.u32 %v7333, 4294901760
        %v10107 = vsub.f32 %v7333, %v10106
        %v10108 = vand.u32 %v10107, 4294901760
        %v10109 = vsub.f32 %v10107, %v10108
        %v10110 = vand.u32 %v10109, 4294901760
        %10111 = vmatmul.f32.gmra.mxu0 %v10110
        %v10112 = vpop.f32.mrf.mxu0
        %v10113 = vadd.f32 %v10068, %v10112
        %v10114 = vand.u32 %v7341, 4294901760
        %v10115 = vsub.f32 %v7341, %v10114
        %v10116 = vand.u32 %v10115, 4294901760
        %v10117 = vsub.f32 %v10115, %v10116
        %v10118 = vand.u32 %v10117, 4294901760
        %10119 = vmatmul.f32.gmra.mxu0 %v10118
        %v10120 = vpop.f32.mrf.mxu0
        %v10121 = vadd.f32 %v10072, %v10120
        %10122 = vdwg.mxu0
        %v10123 = vand.u32 %v7469, 4294901760
        %v10124 = vsub.f32 %v7469, %v10123
        %v10125 = vand.u32 %v10124, 4294901760
        %v10126 = vsub.f32 %v10124, %v10125
        %v10127 = vand.u32 %v10126, 4294901760
        %10128 = vmatpush.msra.mxu0 %v10127
        %v10129 = vand.u32 %v7468, 4294901760
        %v10130 = vsub.f32 %v7468, %v10129
        %v10131 = vand.u32 %v10130, 4294901760
        %v10132 = vsub.f32 %v10130, %v10131
        %v10133 = vand.u32 %v10132, 4294901760
        %10134 = vmatpush.msra.mxu0 %v10133
        %v10135 = vand.u32 %v7467, 4294901760
        %v10136 = vsub.f32 %v7467, %v10135
        %v10137 = vand.u32 %v10136, 4294901760
        %v10138 = vsub.f32 %v10136, %v10137
        %v10139 = vand.u32 %v10138, 4294901760
        %10140 = vmatpush.msra.mxu0 %v10139
        %v10141 = vand.u32 %v7466, 4294901760
        %v10142 = vsub.f32 %v7466, %v10141
        %v10143 = vand.u32 %v10142, 4294901760
        %v10144 = vsub.f32 %v10142, %v10143
        %v10145 = vand.u32 %v10144, 4294901760
        %10146 = vmatpush.msra.mxu0 %v10145
        %v10147 = vand.u32 %v7465, 4294901760
        %v10148 = vsub.f32 %v7465, %v10147
        %v10149 = vand.u32 %v10148, 4294901760
        %v10150 = vsub.f32 %v10148, %v10149
        %v10151 = vand.u32 %v10150, 4294901760
        %10152 = vmatpush.msra.mxu0 %v10151
        %v10153 = vand.u32 %v7464, 4294901760
        %v10154 = vsub.f32 %v7464, %v10153
        %v10155 = vand.u32 %v10154, 4294901760
        %v10156 = vsub.f32 %v10154, %v10155
        %v10157 = vand.u32 %v10156, 4294901760
        %10158 = vmatpush.msra.mxu0 %v10157
        %v10159 = vand.u32 %v7463, 4294901760
        %v10160 = vsub.f32 %v7463, %v10159
        %v10161 = vand.u32 %v10160, 4294901760
        %v10162 = vsub.f32 %v10160, %v10161
        %v10163 = vand.u32 %v10162, 4294901760
        %10164 = vmatpush.msra.mxu0 %v10163
        %v10165 = vand.u32 %v7462, 4294901760
        %v10166 = vsub.f32 %v7462, %v10165
        %v10167 = vand.u32 %v10166, 4294901760
        %v10168 = vsub.f32 %v10166, %v10167
        %v10169 = vand.u32 %v10168, 4294901760
        %10170 = vmatpush.msra.mxu0 %v10169
        %v10171 = vand.u32 %v7461, 4294901760
        %v10172 = vsub.f32 %v7461, %v10171
        %v10173 = vand.u32 %v10172, 4294901760
        %v10174 = vsub.f32 %v10172, %v10173
        %v10175 = vand.u32 %v10174, 4294901760
        %10176 = vmatpush.msra.mxu0 %v10175
        %v10177 = vand.u32 %v7460, 4294901760
        %v10178 = vsub.f32 %v7460, %v10177
        %v10179 = vand.u32 %v10178, 4294901760
        %v10180 = vsub.f32 %v10178, %v10179
        %v10181 = vand.u32 %v10180, 4294901760
        %10182 = vmatpush.msra.mxu0 %v10181
        %v10183 = vand.u32 %v7459, 4294901760
        %v10184 = vsub.f32 %v7459, %v10183
        %v10185 = vand.u32 %v10184, 4294901760
        %v10186 = vsub.f32 %v10184, %v10185
        %v10187 = vand.u32 %v10186, 4294901760
        %10188 = vmatpush.msra.mxu0 %v10187
        %v10189 = vand.u32 %v7458, 4294901760
        %v10190 = vsub.f32 %v7458, %v10189
        %v10191 = vand.u32 %v10190, 4294901760
        %v10192 = vsub.f32 %v10190, %v10191
        %v10193 = vand.u32 %v10192, 4294901760
        %10194 = vmatpush.msra.mxu0 %v10193
        %v10195 = vand.u32 %v7457, 4294901760
        %v10196 = vsub.f32 %v7457, %v10195
        %v10197 = vand.u32 %v10196, 4294901760
        %v10198 = vsub.f32 %v10196, %v10197
        %v10199 = vand.u32 %v10198, 4294901760
        %10200 = vmatpush.msra.mxu0 %v10199
        %v10201 = vand.u32 %v7456, 4294901760
        %v10202 = vsub.f32 %v7456, %v10201
        %v10203 = vand.u32 %v10202, 4294901760
        %v10204 = vsub.f32 %v10202, %v10203
        %v10205 = vand.u32 %v10204, 4294901760
        %10206 = vmatpush.msra.mxu0 %v10205
        %v10207 = vand.u32 %v7455, 4294901760
        %v10208 = vsub.f32 %v7455, %v10207
        %v10209 = vand.u32 %v10208, 4294901760
        %v10210 = vsub.f32 %v10208, %v10209
        %v10211 = vand.u32 %v10210, 4294901760
        %10212 = vmatpush.msra.mxu0 %v10211
        %v10213 = vand.u32 %v7454, 4294901760
        %v10214 = vsub.f32 %v7454, %v10213
        %v10215 = vand.u32 %v10214, 4294901760
        %v10216 = vsub.f32 %v10214, %v10215
        %v10217 = vand.u32 %v10216, 4294901760
        %10218 = vmatpush.msra.mxu0 %v10217
        %v10219 = vand.u32 %v7333, 4294901760
        %10220 = vmatmul.f32.gmra.mxu0 %v10219
        %v10221 = vpop.f32.mrf.mxu0
        %v10222 = vadd.f32 %v10113, %v10221
        %v10223 = vand.u32 %v7341, 4294901760
        %10224 = vmatmul.f32.gmra.mxu0 %v10223
        %v10225 = vpop.f32.mrf.mxu0
        %v10226 = vadd.f32 %v10121, %v10225
        %10227 = vdwg.mxu0
        %v10228 = vand.u32 %v7469, 4294901760
        %v10229 = vsub.f32 %v7469, %v10228
        %10230 = vmatpush.msra.mxu0 %v10229
        %v10231 = vand.u32 %v7468, 4294901760
        %v10232 = vsub.f32 %v7468, %v10231
        %10233 = vmatpush.msra.mxu0 %v10232
        %v10234 = vand.u32 %v7467, 4294901760
        %v10235 = vsub.f32 %v7467, %v10234
        %10236 = vmatpush.msra.mxu0 %v10235
        %v10237 = vand.u32 %v7466, 4294901760
        %v10238 = vsub.f32 %v7466, %v10237
        %10239 = vmatpush.msra.mxu0 %v10238
        %v10240 = vand.u32 %v7465, 4294901760
        %v10241 = vsub.f32 %v7465, %v10240
        %10242 = vmatpush.msra.mxu0 %v10241
        %v10243 = vand.u32 %v7464, 4294901760
        %v10244 = vsub.f32 %v7464, %v10243
        %10245 = vmatpush.msra.mxu0 %v10244
        %v10246 = vand.u32 %v7463, 4294901760
        %v10247 = vsub.f32 %v7463, %v10246
        %10248 = vmatpush.msra.mxu0 %v10247
        %v10249 = vand.u32 %v7462, 4294901760
        %v10250 = vsub.f32 %v7462, %v10249
        %10251 = vmatpush.msra.mxu0 %v10250
        %v10252 = vand.u32 %v7461, 4294901760
        %v10253 = vsub.f32 %v7461, %v10252
        %10254 = vmatpush.msra.mxu0 %v10253
        %v10255 = vand.u32 %v7460, 4294901760
        %v10256 = vsub.f32 %v7460, %v10255
        %10257 = vmatpush.msra.mxu0 %v10256
        %v10258 = vand.u32 %v7459, 4294901760
        %v10259 = vsub.f32 %v7459, %v10258
        %10260 = vmatpush.msra.mxu0 %v10259
        %v10261 = vand.u32 %v7458, 4294901760
        %v10262 = vsub.f32 %v7458, %v10261
        %10263 = vmatpush.msra.mxu0 %v10262
        %v10264 = vand.u32 %v7457, 4294901760
        %v10265 = vsub.f32 %v7457, %v10264
        %10266 = vmatpush.msra.mxu0 %v10265
        %v10267 = vand.u32 %v7456, 4294901760
        %v10268 = vsub.f32 %v7456, %v10267
        %10269 = vmatpush.msra.mxu0 %v10268
        %v10270 = vand.u32 %v7455, 4294901760
        %v10271 = vsub.f32 %v7455, %v10270
        %10272 = vmatpush.msra.mxu0 %v10271
        %v10273 = vand.u32 %v7454, 4294901760
        %v10274 = vsub.f32 %v7454, %v10273
        %10275 = vmatpush.msra.mxu0 %v10274
        %v10276 = vand.u32 %v7333, 4294901760
        %v10277 = vsub.f32 %v7333, %v10276
        %10278 = vmatmul.f32.gmra.mxu0 %v10277
        %v10279 = vpop.f32.mrf.mxu0
        %v10280 = vadd.f32 %v10222, %v10279
        %v10281 = vand.u32 %v7341, 4294901760
        %v10282 = vsub.f32 %v7341, %v10281
        %10283 = vmatmul.f32.gmra.mxu0 %v10282
        %v10284 = vpop.f32.mrf.mxu0
        %v10285 = vadd.f32 %v10226, %v10284
        %10286 = vdwg.mxu0
        %v10287 = vand.u32 %v7469, 4294901760
        %10288 = vmatpush.msra.mxu0 %v10287
        %v10289 = vand.u32 %v7468, 4294901760
        %10290 = vmatpush.msra.mxu0 %v10289
        %v10291 = vand.u32 %v7467, 4294901760
        %10292 = vmatpush.msra.mxu0 %v10291
        %v10293 = vand.u32 %v7466, 4294901760
        %10294 = vmatpush.msra.mxu0 %v10293
        %v10295 = vand.u32 %v7465, 4294901760
        %10296 = vmatpush.msra.mxu0 %v10295
        %v10297 = vand.u32 %v7464, 4294901760
        %10298 = vmatpush.msra.mxu0 %v10297
        %v10299 = vand.u32 %v7463, 4294901760
        %10300 = vmatpush.msra.mxu0 %v10299
        %v10301 = vand.u32 %v7462, 4294901760
        %10302 = vmatpush.msra.mxu0 %v10301
        %v10303 = vand.u32 %v7461, 4294901760
        %10304 = vmatpush.msra.mxu0 %v10303
        %v10305 = vand.u32 %v7460, 4294901760
        %10306 = vmatpush.msra.mxu0 %v10305
        %v10307 = vand.u32 %v7459, 4294901760
        %10308 = vmatpush.msra.mxu0 %v10307
        %v10309 = vand.u32 %v7458, 4294901760
        %10310 = vmatpush.msra.mxu0 %v10309
        %v10311 = vand.u32 %v7457, 4294901760
        %10312 = vmatpush.msra.mxu0 %v10311
        %v10313 = vand.u32 %v7456, 4294901760
        %10314 = vmatpush.msra.mxu0 %v10313
        %v10315 = vand.u32 %v7455, 4294901760
        %10316 = vmatpush.msra.mxu0 %v10315
        %v10317 = vand.u32 %v7454, 4294901760
        %10318 = vmatpush.msra.mxu0 %v10317
        %v10319 = vand.u32 %v7333, 4294901760
        %v10320 = vsub.f32 %v7333, %v10319
        %v10321 = vand.u32 %v10320, 4294901760
        %10322 = vmatmul.f32.gmra.mxu0 %v10321
        %v10323 = vpop.f32.mrf.mxu0
        %v10324 = vadd.f32 %v10280, %v10323
        %v10325 = vand.u32 %v7341, 4294901760
        %v10326 = vsub.f32 %v7341, %v10325
        %v10327 = vand.u32 %v10326, 4294901760
        %10328 = vmatmul.f32.gmra.mxu0 %v10327
        %v10329 = vpop.f32.mrf.mxu0
        %v10330 = vadd.f32 %v10285, %v10329
        %10331 = vdwg.mxu0
        %v10332 = vand.u32 %v7469, 4294901760
        %v10333 = vsub.f32 %v7469, %v10332
        %v10334 = vand.u32 %v10333, 4294901760
        %10335 = vmatpush.msra.mxu0 %v10334
        %v10336 = vand.u32 %v7468, 4294901760
        %v10337 = vsub.f32 %v7468, %v10336
        %v10338 = vand.u32 %v10337, 4294901760
        %10339 = vmatpush.msra.mxu0 %v10338
        %v10340 = vand.u32 %v7467, 4294901760
        %v10341 = vsub.f32 %v7467, %v10340
        %v10342 = vand.u32 %v10341, 4294901760
        %10343 = vmatpush.msra.mxu0 %v10342
        %v10344 = vand.u32 %v7466, 4294901760
        %v10345 = vsub.f32 %v7466, %v10344
        %v10346 = vand.u32 %v10345, 4294901760
        %10347 = vmatpush.msra.mxu0 %v10346
        %v10348 = vand.u32 %v7465, 4294901760
        %v10349 = vsub.f32 %v7465, %v10348
        %v10350 = vand.u32 %v10349, 4294901760
        %10351 = vmatpush.msra.mxu0 %v10350
        %v10352 = vand.u32 %v7464, 4294901760
        %v10353 = vsub.f32 %v7464, %v10352
        %v10354 = vand.u32 %v10353, 4294901760
        %10355 = vmatpush.msra.mxu0 %v10354
        %v10356 = vand.u32 %v7463, 4294901760
        %v10357 = vsub.f32 %v7463, %v10356
        %v10358 = vand.u32 %v10357, 4294901760
        %10359 = vmatpush.msra.mxu0 %v10358
        %v10360 = vand.u32 %v7462, 4294901760
        %v10361 = vsub.f32 %v7462, %v10360
        %v10362 = vand.u32 %v10361, 4294901760
        %10363 = vmatpush.msra.mxu0 %v10362
        %v10364 = vand.u32 %v7461, 4294901760
        %v10365 = vsub.f32 %v7461, %v10364
        %v10366 = vand.u32 %v10365, 4294901760
        %10367 = vmatpush.msra.mxu0 %v10366
        %v10368 = vand.u32 %v7460, 4294901760
        %v10369 = vsub.f32 %v7460, %v10368
        %v10370 = vand.u32 %v10369, 4294901760
        %10371 = vmatpush.msra.mxu0 %v10370
        %v10372 = vand.u32 %v7459, 4294901760
        %v10373 = vsub.f32 %v7459, %v10372
        %v10374 = vand.u32 %v10373, 4294901760
        %10375 = vmatpush.msra.mxu0 %v10374
        %v10376 = vand.u32 %v7458, 4294901760
        %v10377 = vsub.f32 %v7458, %v10376
        %v10378 = vand.u32 %v10377, 4294901760
        %10379 = vmatpush.msra.mxu0 %v10378
        %v10380 = vand.u32 %v7457, 4294901760
        %v10381 = vsub.f32 %v7457, %v10380
        %v10382 = vand.u32 %v10381, 4294901760
        %10383 = vmatpush.msra.mxu0 %v10382
        %v10384 = vand.u32 %v7456, 4294901760
        %v10385 = vsub.f32 %v7456, %v10384
        %v10386 = vand.u32 %v10385, 4294901760
        %10387 = vmatpush.msra.mxu0 %v10386
        %v10388 = vand.u32 %v7455, 4294901760
        %v10389 = vsub.f32 %v7455, %v10388
        %v10390 = vand.u32 %v10389, 4294901760
        %10391 = vmatpush.msra.mxu0 %v10390
        %v10392 = vand.u32 %v7454, 4294901760
        %v10393 = vsub.f32 %v7454, %v10392
        %v10394 = vand.u32 %v10393, 4294901760
        %10395 = vmatpush.msra.mxu0 %v10394
        %v10396 = vand.u32 %v7333, 4294901760
        %10397 = vmatmul.f32.gmra.mxu0 %v10396
        %v10398 = vpop.f32.mrf.mxu0
        %v10399 = vadd.f32 %v10324, %v10398
        %v10400 = vand.u32 %v7341, 4294901760
        %10401 = vmatmul.f32.gmra.mxu0 %v10400
        %v10402 = vpop.f32.mrf.mxu0
        %v10403 = vadd.f32 %v10330, %v10402
        %10404 = vdwg.mxu0
        %v10405 = vand.u32 %v7469, 4294901760
        %10406 = vmatpush.msra.mxu0 %v10405
        %v10407 = vand.u32 %v7468, 4294901760
        %10408 = vmatpush.msra.mxu0 %v10407
        %v10409 = vand.u32 %v7467, 4294901760
        %10410 = vmatpush.msra.mxu0 %v10409
        %v10411 = vand.u32 %v7466, 4294901760
        %10412 = vmatpush.msra.mxu0 %v10411
        %v10413 = vand.u32 %v7465, 4294901760
        %10414 = vmatpush.msra.mxu0 %v10413
        %v10415 = vand.u32 %v7464, 4294901760
        %10416 = vmatpush.msra.mxu0 %v10415
        %v10417 = vand.u32 %v7463, 4294901760
        %10418 = vmatpush.msra.mxu0 %v10417
        %v10419 = vand.u32 %v7462, 4294901760
        %10420 = vmatpush.msra.mxu0 %v10419
        %v10421 = vand.u32 %v7461, 4294901760
        %10422 = vmatpush.msra.mxu0 %v10421
        %v10423 = vand.u32 %v7460, 4294901760
        %10424 = vmatpush.msra.mxu0 %v10423
        %v10425 = vand.u32 %v7459, 4294901760
        %10426 = vmatpush.msra.mxu0 %v10425
        %v10427 = vand.u32 %v7458, 4294901760
        %10428 = vmatpush.msra.mxu0 %v10427
        %v10429 = vand.u32 %v7457, 4294901760
        %10430 = vmatpush.msra.mxu0 %v10429
        %v10431 = vand.u32 %v7456, 4294901760
        %10432 = vmatpush.msra.mxu0 %v10431
        %v10433 = vand.u32 %v7455, 4294901760
        %10434 = vmatpush.msra.mxu0 %v10433
        %v10435 = vand.u32 %v7454, 4294901760
        %10436 = vmatpush.msra.mxu0 %v10435
        %v10437 = vand.u32 %v7333, 4294901760
        %10438 = vmatmul.f32.gmra.mxu0 %v10437
        %v10439 = vpop.f32.mrf.mxu0
        %v10440 = vadd.f32 %v10399, %v10439
        %v10441 = vand.u32 %v7341, 4294901760
        %10442 = vmatmul.f32.gmra.mxu0 %v10441
        %v10443 = vpop.f32.mrf.mxu0
        %v10444 = vadd.f32 %v10403, %v10443
        %10445 = vdwg.mxu0
        %10446 = vst.msk [vmem:[%s247] sm:$0xff] %vm293, %v10440
        %10447 = vst.msk [vmem:[%s247 + $0x8] sm:$0xff] %vm293, %v10444
        %s10448 = sand.u32 %s156, 1
        %s10449 = scalar_lea.sflag [#allocation3], %s10448
        %s10450 = sand.u32 %s156, 1
        %s10451 = smul.addr %s10450, 16
        %s10452 = scalar_lea.vmem [#allocation2], %s10451
        // Predicated region
        $region41: #{tpu_custom_call.1} parent=39 // pred_check
          %p10453 = pneg %p166
        $region42: #{tpu_custom_call.1} parent=39 // pred_check_branch
          %10455 = sbr.rel (%p10453) target = $region44
        $region43: #{tpu_custom_call.1} parent=39 // pred_region
          %10457 = vsyncadd %s10449, 0
          %s10458 = smul.addr %s23, 2
          %s10459 = sadd.s32 %s24, %s10458
          %s10460 = smul.addr %s10459, 8
          %s10461 = scalar_lea.hbm %s5, %s10460
          %s10462 = sshll.u32 %s10452, 4
          %s10463 = int_to_ptr.vmem [resolvable:$true] %s10462
          %s10464 = sshll.u32 %s10461, 4
          %s10465 = int_to_ptr.hbm [resolvable:$true] %s10464
          %10470 = dma.vmem_to_hbm [thread:$0]  %s10463, 256, %s10465, %s10449, 128, 128, 8
        $region44: #{tpu_custom_call.1} parent=39 // pred_fallthru
          _
      $region40: #{tpu_custom_call.1} parent=5 // pred_fallthru
        _
      %p10471 = scmp.le.s32.totalorder 2, %s14
      // Predicated region
      $region45: #{tpu_custom_call.1} parent=5 // pred_check
        %p10472 = pneg %p10471
      $region46: #{tpu_custom_call.1} parent=5 // pred_check_branch
        %10474 = sbr.rel (%p10472) target = $region48
      $region47: #{tpu_custom_call.1} parent=5 // pred_region
        %s10475 = ssub.s32 %s14, 2
        // Predicated region
        $region49: #{tpu_custom_call.1} parent=47 // pred_check
          %p10476 = pneg %p172
        $region50: #{tpu_custom_call.1} parent=47 // pred_check_branch
          %10478 = sbr.rel (%p10476) target = $region52
        $region51: #{tpu_custom_call.1} parent=47 // pred_region
          %s10479 = sand.u32 %s157, 1
          %s10480 = scalar_lea.sflag [#allocation3], %s10479
          %s10481 = sand.u32 %s157, 1
          %s10482 = smul.addr %s10481, 16
          %s10483 = scalar_lea.vmem [#allocation2], %s10482
          %10485 = dma.done %s10480, 256
        $region52: #{tpu_custom_call.1} parent=47 // pred_fallthru
          _
      $region48: #{tpu_custom_call.1} parent=5 // pred_fallthru
        _
    $region6: #{tpu_custom_call.1} parent=1 // loop_footer
      %s18 = sadd.s32 1, %s14
    $region7: #{tpu_custom_call.1} parent=1 // loop_footer_branch
      %13 = sbr.rel target = $region3
    $region8: #{tpu_custom_call.1} parent=1 // loop_exit
      _
    %10486 = vsyncpa [#allocation3], 1
    %s10487 = scalar_lea.sflag [#allocation3], 1
    %10488 = vsyncpa %s10487, 1

</llo_original>
